<compile_context>
chip_gen: v7x
topology: tpu7x:2x2x1
jax: 0.10.0
libtpu: 0.0.40
codegen_flags: <defaults>
</compile_context>

<pallas_src>
import functools

import numpy as np
import jax
import jax.numpy as jnp
from jax.experimental import pallas as pl
from jax.experimental.pallas import tpu as pltpu


# ----------------------------- in-kernel helpers -----------------------------

def _mm(a, b):
    return jnp.dot(a, b, preferred_element_type=jnp.float32)


def _mm_t(a, b):
    # a @ b.T (contract last dims of both) without an explicit transpose.
    return jax.lax.dot_general(a, b, (((1,), (1,)), ((), ())),
                               preferred_element_type=jnp.float32)


def _softmax_rows(z):
    m = jnp.max(z, axis=-1, keepdims=True)
    e = jnp.exp(z - m)
    return e / jnp.sum(e, axis=-1, keepdims=True)


def _layer_norm(v, gamma, beta, eps=1e-6):
    # TRAR custom LayerNorm: unbiased std (torch.std), eps added to std.
    n = v.shape[-1]
    mean = jnp.mean(v, axis=-1, keepdims=True)
    d = v - mean
    std = jnp.sqrt(jnp.sum(d * d, axis=-1, keepdims=True) * (1.0 / (n - 1)))
    return gamma * (d / (std + eps)) + beta


def _soft_routing_alphas(feat, w1, w2, b2):
    # SoftRoutingBlock(pooling='avg'): avg-pool over the sequence (incl. padded tokens,
    # as in the reference), Linear(bias=False) -> ReLU -> Linear(+bias) -> softmax.
    pooled = jnp.mean(feat, axis=0, keepdims=True)            # (1, H)
    hdn = jnp.maximum(_mm(pooled, w1), 0.0)
    return _softmax_rows(_mm(hdn, w2) + b2)                   # (1, n_orders)


def _routed_mha(q, k, v, keeps, alphas, num_heads):
    """Multi-head attention with per-order key masks and routing weights.

    q: (Lq, H); k, v: (Lk, H); keeps: list of (1, Lk) float {0,1} keep masks
    (1.0 == attend); alphas: (1, len(keeps)) routing weights (sum to 1).
    Heads are handled by masking the lane (H) dimension -> no (nh, L, dh) transposes;
    the output accumulates lane-dense (Lq, H).
    """
    Lq, H = q.shape
    Lk = k.shape[0]
    dh = H // num_heads
    scale = 1.0 / float(np.sqrt(dh))
    inv_lk = 1.0 / float(Lk)

    col = jax.lax.broadcasted_iota(jnp.int32, (1, H), 1)
    out = jnp.zeros((Lq, H), jnp.float32)
    for h in range(num_heads):                                # static unroll (nh=4)
        head_cols = ((col >= h * dh) & (col < (h + 1) * dh)).astype(jnp.float32)
        # head-h scores: zeroing non-head columns of q makes the 32-wide contraction exact
        s = _mm_t(q * head_cols, k) * scale                   # (Lq, Lk)
        m = jnp.max(s, axis=-1, keepdims=True)
        e = jnp.exp(s - m)                                    # ONE exp shared by all orders
        att = jnp.zeros_like(s)
        for l, keep in enumerate(keeps):                      # static unroll over orders
            num = e * keep                                    # masked keys -> exactly 0
            den = jnp.sum(num, axis=-1, keepdims=True)
            inv = pl.reciprocal(jnp.where(den > 0.0, den, 1.0), approx=True)
            # den == 0 (all keys masked): softmax over all -1e9 == uniform 1/Lk
            att = att + alphas[0, l] * jnp.where(den > 0.0, num * inv, inv_lk)
        out = out + _mm(att, v * head_cols)                   # fills head-h columns only
    return out                                                # (Lq, H) lane-dense


# ----------------------------- the fused kernel -----------------------------

def _make_bi_kernel(num_heads):
    def kernel(x_ref, y_ref, xpad_ref, ypad_ref, yreg_ref, xreg_ref,
               wq1_ref, bq1_ref, wkv1_ref, bkv1_ref, wm1_ref, bm1_ref,
               r1w1_ref, r1w2_ref, r1b2_ref,
               wq2_ref, bq2_ref, wkv2_ref, bkv2_ref, wm2_ref, bm2_ref,
               r2w1_ref, r2w2_ref, r2b2_ref,
               wqkv3_ref, bqkv3_ref, wm3_ref, bm3_ref,
               fw1_ref, fb1_ref, fw2_ref, fb2_ref,
               lng_ref, lnb_ref,
               ox_ref, oy_ref):
        f32 = jnp.float32
        x = x_ref[0]                            # (Lx, H)
        y = y_ref[0]                            # (Ly, H)
        xpad = xpad_ref[0]                      # (1, Lx)   1.0 == padded
        ypad = ypad_ref[0]                      # (1, Ly)
        yreg = yreg_ref[...]                    # (n_ord, Ly) 1.0 == masked
        xreg = xreg_ref[...]                    # (n_ord, Lx)
        gam = lng_ref[...]                      # (4, H)   norm1..norm4 gains
        bet = lnb_ref[...]                      # (4, H)
        Lx, H = x.shape
        n_ord = yreg.shape[0]

        # compact per-order key masks = region OR padding (1.0 == keep after negation)
        keeps_y = [(jnp.maximum(yreg[l:l + 1, :], ypad) <= 0.5).astype(f32)
                   for l in range(n_ord)]
        keeps_x = [(jnp.maximum(xreg[l:l + 1, :], xpad) <= 0.5).astype(f32)
                   for l in range(n_ord)]

        # ---- 1) x = LN1(x + SARouting1(v=y, k=y, q=x, masks=y_masks)) ----------
        alpha1 = _soft_routing_alphas(y, r1w1_ref[...], r1w2_ref[...], r1b2_ref[...])
        q1 = _mm(x, wq1_ref[...]) + bq1_ref[...]
        kv1 = _mm(y, wkv1_ref[...]) + bkv1_ref[...]          # fused K|V projection
        att1 = _routed_mha(q1, kv1[:, :H], kv1[:, H:], keeps_y, alpha1, num_heads)
        x = _layer_norm(x + _mm(att1, wm1_ref[...]) + bm1_ref[...],
                        gam[0:1, :], bet[0:1, :])

        # ---- 2) y = LN2(y + SARouting2(v=x, k=x, q=y, masks=x_masks)) ----------
        alpha2 = _soft_routing_alphas(x, r2w1_ref[...], r2w2_ref[...], r2b2_ref[...])
        q2 = _mm(y, wq2_ref[...]) + bq2_ref[...]
        kv2 = _mm(x, wkv2_ref[...]) + bkv2_ref[...]
        att2 = _routed_mha(q2, kv2[:, :H], kv2[:, H:], keeps_x, alpha2, num_heads)
        y = _layer_norm(y + _mm(att2, wm2_ref[...]) + bm2_ref[...],
                        gam[1:2, :], bet[1:2, :])

        # ---- 3) joint self-attention over [x; y] -------------------------------
        xy = jnp.concatenate([x, y], axis=0)                  # (Lx+Ly, H)
        keep_xy = (jnp.concatenate([xpad, ypad], axis=1) <= 0.5).astype(f32)
        qkv = _mm(xy, wqkv3_ref[...]) + bqkv3_ref[...]        # fused Q|K|V projection
        one = jnp.ones((1, 1), f32)
        att3 = _routed_mha(qkv[:, :H], qkv[:, H:2 * H], qkv[:, 2 * H:],
                           [keep_xy], one, num_heads)
        xy = _layer_norm(xy + _mm(att3, wm3_ref[...]) + bm3_ref[...],
                         gam[2:3, :], bet[2:3, :])

        # ---- 4) FFN -------------------------------------------------------------
        hdn = jnp.maximum(_mm(xy, fw1_ref[...]) + fb1_ref[...], 0.0)
        xy = _layer_norm(xy + _mm(hdn, fw2_ref[...]) + fb2_ref[...],
                         gam[3:4, :], bet[3:4, :])

        ox_ref[0] = xy[:Lx, :]
        oy_ref[0] = xy[Lx:, :]

    return kernel


# ----------------------------- wrapper / pallas_call -----------------------------

def _batch_spec(shape):
    zeros = (0,) * (len(shape) - 1)

    def imap(b):
        return (b,) + zeros

    return pl.BlockSpec((1,) + tuple(shape[1:]), imap)


def _const_spec(shape):
    zeros = (0,) * len(shape)

    def imap(b):
        return zeros

    return pl.BlockSpec(tuple(shape), imap)


def bi_block_apply(params, x, y, x_pad, y_pad, y_regions, x_regions, *, num_heads):
    B, Lx, H = x.shape
    Ly = y.shape[1]
    n_ord = y_regions.shape[0]
    f32 = jnp.float32

    p1 = params['mhatt1']
    p2 = params['mhatt2']
    p3 = params['mhatt3']
    pf = params['ffn']

    def fuse_kv(p):
        return (jnp.concatenate([p['wk'], p['wv']], axis=1),
                jnp.concatenate([p['bk'], p['bv']], axis=0).reshape(1, 2 * H))

    wkv1, bkv1 = fuse_kv(p1)
    wkv2, bkv2 = fuse_kv(p2)
    wqkv3 = jnp.concatenate([p3['wq'], p3['wk'], p3['wv']], axis=1)
    bqkv3 = jnp.concatenate([p3['bq'], p3['bk'], p3['bv']], axis=0).reshape(1, 3 * H)

    operands = [
        x, y,
        x_pad.reshape(B, 1, Lx).astype(f32),
        y_pad.reshape(B, 1, Ly).astype(f32),
        y_regions.astype(f32), x_regions.astype(f32),
        # mhatt1 (q = x, k = v = y, routing on y)
        p1['wq'], p1['bq'].reshape(1, H), wkv1, bkv1, p1['wm'], p1['bm'].reshape(1, H),
        p1['routing']['w1'], p1['routing']['w2'], p1['routing']['b2'].reshape(1, n_ord),
        # mhatt2 (q = y, k = v = x, routing on x)
        p2['wq'], p2['bq'].reshape(1, H), wkv2, bkv2, p2['wm'], p2['bm'].reshape(1, H),
        p2['routing']['w1'], p2['routing']['w2'], p2['routing']['b2'].reshape(1, n_ord),
        # mhatt3 (self-attention over [x; y])
        wqkv3, bqkv3, p3['wm'], p3['bm'].reshape(1, H),
        # FFN
        pf['w1'], pf['b1'].reshape(1, -1), pf['w2'], pf['b2'].reshape(1, H),
        # LayerNorms 1..4 (stacked)
        params['ln_g'], params['ln_b'],
    ]

    in_specs = ([_batch_spec(op.shape) for op in operands[:4]]
                + [_const_spec(op.shape) for op in operands[4:]])

    out_shape = (jax.ShapeDtypeStruct((B, Lx, H), f32),
                 jax.ShapeDtypeStruct((B, Ly, H), f32))
    out_specs = (_batch_spec((B, Lx, H)), _batch_spec((B, Ly, H)))

    return pl.pallas_call(
        _make_bi_kernel(num_heads),
        grid=(B,),
        in_specs=in_specs,
        out_specs=out_specs,
        out_shape=out_shape,
        compiler_params=pltpu.CompilerParams(
            dimension_semantics=("parallel",)),   # batch axis -> v7x megacore sharding
    )(*operands)


# ----------------------------- routing-mask construction -----------------------------

def get_img_masks(scale, order):
    """TRAR getImgMasks: (scale^2, scale^2) local-window masks, 1.0 == masked."""
    assert order < scale
    masks = []
    for i in range(scale):
        for j in range(scale):
            m = np.ones([scale, scale], dtype=np.float32)
            for xx in range(i - order, i + order + 1):
                for yy in range(j - order, j + order + 1):
                    if 0 <= xx < scale and 0 <= yy < scale:
                        m[xx, yy] = 0.0
            masks.append(m.reshape(-1))
    return np.stack(masks)


def build_img_regions(scale, orders):
    # Query-independent routing key regions over the image grid ("routing on span"):
    # order 0 = global; order o > 0 = window of radius o around the grid centre cell.
    centre = (scale // 2) * scale + (scale // 2)
    rows = []
    for o in orders:
        if o == 0:
            rows.append(np.zeros((scale * scale,), np.float32))
        else:
            rows.append(get_img_masks(scale, o)[centre])
    return jnp.asarray(np.stack(rows))            # (n_ord, scale^2), 1.0 == masked


def build_seq_regions(length, orders):
    # Analogous 1-D spans over the text sequence: radius o around the middle token.
    centre = length // 2
    rows = []
    for o in orders:
        if o == 0:
            rows.append(np.zeros((length,), np.float32))
        else:
            rows.append((np.abs(np.arange(length) - centre) > o).astype(np.float32))
    return jnp.asarray(np.stack(rows))            # (n_ord, length), 1.0 == masked


# ----------------------------- parameters -----------------------------

def init_params(key, opt):
    H, F, R = opt['hidden_size'], opt['ffn_size'], opt['orders']
    kiter = iter(jax.random.split(key, 64))

    def w(shape, s=0.1):
        return s * jax.random.normal(next(kiter), shape, jnp.float32)

    def mh():
        return dict(wq=w((H, H)), bq=w((H,)), wk=w((H, H)), bk=w((H,)),
                    wv=w((H, H)), bv=w((H,)), wm=w((H, H)), bm=w((H,)))

    def routing():
        return dict(w1=w((H, H // 2)),             # Linear(H, H//2, bias=False)
                    w2=w((H // 2, R)), b2=w((R,)))  # Linear(H//2, orders)

    return dict(
        mhatt1=dict(**mh(), routing=routing()),
        mhatt2=dict(**mh(), routing=routing()),
        mhatt3=mh(),
        ffn=dict(w1=w((H, F)), b1=w((F,)), w2=w((F, H)), b2=w((H,))),
        ln_g=jnp.ones((4, H), jnp.float32),        # norm1..norm4 gains
        ln_b=jnp.zeros((4, H), jnp.float32),       # norm1..norm4 biases
    )


# ----------------------------- main -----------------------------

if __name__ == "__main__":
    opt = dict(hidden_size=32, ffn_size=64, multihead=4, dropout=0.0,
               routing='soft', pooling='avg', BINARIZE=False, tau_max=10.0,
               ORDERS=[0, 1, 2, 3], IMG_SCALE=4, len=8)
    opt['orders'] = len(opt['ORDERS'])

    B = 2
    Lx = opt['IMG_SCALE'] ** 2      # 16 image-grid tokens
    Ly = opt['len']                 # 8 text tokens
    H = opt['hidden_size']

    key = jax.random.PRNGKey(0)
    kx, ky, kp = jax.random.split(key, 3)
    x = jax.random.normal(kx, (B, Lx, H), jnp.float32)
    y = jax.random.normal(ky, (B, Ly, H), jnp.float32)

    # deterministic padding masks (1.0 == padded / masked)
    x_valid = np.array([Lx, Lx - 4])
    y_valid = np.array([Ly, Ly - 2])
    x_pad = jnp.asarray((np.arange(Lx)[None, :] >= x_valid[:, None]).astype(np.float32))
    y_pad = jnp.asarray((np.arange(Ly)[None, :] >= y_valid[:, None]).astype(np.float32))

    # per-order routing key-region tables (combined with padding inside the kernel)
    x_regions = build_img_regions(opt['IMG_SCALE'], opt['ORDERS'])   # (n_ord, Lx)
    y_regions = build_seq_regions(Ly, opt['ORDERS'])                 # (n_ord, Ly)

    params = init_params(kp, opt)

    fwd = jax.jit(functools.partial(bi_block_apply, num_heads=opt['multihead']))
    x_out, y_out = fwd(params, x, y, x_pad, y_pad, y_regions, x_regions)
    jax.block_until_ready((x_out, y_out))

    assert x_out.shape == (B, Lx, H) and y_out.shape == (B, Ly, H)
    assert np.isfinite(np.asarray(x_out)).all()
    assert np.isfinite(np.asarray(y_out)).all()
    print("KERNEL_OK")
</pallas_src>

<mosaic_0001>
module attributes {stable_mosaic.version = 11 : i64} {
  func.func @kernel(%arg0: i32, %arg1: memref<1x16x32xf32, #tpu.memory_space<vmem>>, %arg2: memref<1x8x32xf32, #tpu.memory_space<vmem>>, %arg3: memref<1x1x16xf32, #tpu.memory_space<vmem>>, %arg4: memref<1x1x8xf32, #tpu.memory_space<vmem>>, %arg5: memref<4x8xf32, #tpu.memory_space<vmem>>, %arg6: memref<4x16xf32, #tpu.memory_space<vmem>>, %arg7: memref<32x32xf32, #tpu.memory_space<vmem>>, %arg8: memref<1x32xf32, #tpu.memory_space<vmem>>, %arg9: memref<32x64xf32, #tpu.memory_space<vmem>>, %arg10: memref<1x64xf32, #tpu.memory_space<vmem>>, %arg11: memref<32x32xf32, #tpu.memory_space<vmem>>, %arg12: memref<1x32xf32, #tpu.memory_space<vmem>>, %arg13: memref<32x16xf32, #tpu.memory_space<vmem>>, %arg14: memref<16x4xf32, #tpu.memory_space<vmem>>, %arg15: memref<1x4xf32, #tpu.memory_space<vmem>>, %arg16: memref<32x32xf32, #tpu.memory_space<vmem>>, %arg17: memref<1x32xf32, #tpu.memory_space<vmem>>, %arg18: memref<32x64xf32, #tpu.memory_space<vmem>>, %arg19: memref<1x64xf32, #tpu.memory_space<vmem>>, %arg20: memref<32x32xf32, #tpu.memory_space<vmem>>, %arg21: memref<1x32xf32, #tpu.memory_space<vmem>>, %arg22: memref<32x16xf32, #tpu.memory_space<vmem>>, %arg23: memref<16x4xf32, #tpu.memory_space<vmem>>, %arg24: memref<1x4xf32, #tpu.memory_space<vmem>>, %arg25: memref<32x96xf32, #tpu.memory_space<vmem>>, %arg26: memref<1x96xf32, #tpu.memory_space<vmem>>, %arg27: memref<32x32xf32, #tpu.memory_space<vmem>>, %arg28: memref<1x32xf32, #tpu.memory_space<vmem>>, %arg29: memref<32x64xf32, #tpu.memory_space<vmem>>, %arg30: memref<1x64xf32, #tpu.memory_space<vmem>>, %arg31: memref<64x32xf32, #tpu.memory_space<vmem>>, %arg32: memref<1x32xf32, #tpu.memory_space<vmem>>, %arg33: memref<4x32xf32, #tpu.memory_space<vmem>>, %arg34: memref<4x32xf32, #tpu.memory_space<vmem>>, %arg35: memref<1x16x32xf32, #tpu.memory_space<vmem>>, %arg36: memref<1x8x32xf32, #tpu.memory_space<vmem>>) attributes {dimension_semantics = [#tpu.dimension_semantics<parallel>], iteration_bounds = array<i64: 2>, scalar_prefetch = 0 : i64, scratch_operands = 0 : i64, tpu.core_type = #tpu.core_type<tc>, window_params = [{transform_indices = @transform_0, window_bounds = array<i64: 1, 16, 32>}, {transform_indices = @transform_1, window_bounds = array<i64: 1, 8, 32>}, {transform_indices = @transform_2, window_bounds = array<i64: 1, 1, 16>}, {transform_indices = @transform_3, window_bounds = array<i64: 1, 1, 8>}, {pipeline_mode = #tpu.pipeline_mode<synchronous>, transform_indices = @transform_4, window_bounds = array<i64: 4, 8>}, {pipeline_mode = #tpu.pipeline_mode<synchronous>, transform_indices = @transform_5, window_bounds = array<i64: 4, 16>}, {pipeline_mode = #tpu.pipeline_mode<synchronous>, transform_indices = @transform_6, window_bounds = array<i64: 32, 32>}, {pipeline_mode = #tpu.pipeline_mode<synchronous>, transform_indices = @transform_7, window_bounds = array<i64: 1, 32>}, {pipeline_mode = #tpu.pipeline_mode<synchronous>, transform_indices = @transform_8, window_bounds = array<i64: 32, 64>}, {pipeline_mode = #tpu.pipeline_mode<synchronous>, transform_indices = @transform_9, window_bounds = array<i64: 1, 64>}, {pipeline_mode = #tpu.pipeline_mode<synchronous>, transform_indices = @transform_10, window_bounds = array<i64: 32, 32>}, {pipeline_mode = #tpu.pipeline_mode<synchronous>, transform_indices = @transform_11, window_bounds = array<i64: 1, 32>}, {pipeline_mode = #tpu.pipeline_mode<synchronous>, transform_indices = @transform_12, window_bounds = array<i64: 32, 16>}, {pipeline_mode = #tpu.pipeline_mode<synchronous>, transform_indices = @transform_13, window_bounds = array<i64: 16, 4>}, {pipeline_mode = #tpu.pipeline_mode<synchronous>, transform_indices = @transform_14, window_bounds = array<i64: 1, 4>}, {pipeline_mode = #tpu.pipeline_mode<synchronous>, transform_indices = @transform_15, window_bounds = array<i64: 32, 32>}, {pipeline_mode = #tpu.pipeline_mode<synchronous>, transform_indices = @transform_16, window_bounds = array<i64: 1, 32>}, {pipeline_mode = #tpu.pipeline_mode<synchronous>, transform_indices = @transform_17, window_bounds = array<i64: 32, 64>}, {pipeline_mode = #tpu.pipeline_mode<synchronous>, transform_indices = @transform_18, window_bounds = array<i64: 1, 64>}, {pipeline_mode = #tpu.pipeline_mode<synchronous>, transform_indices = @transform_19, window_bounds = array<i64: 32, 32>}, {pipeline_mode = #tpu.pipeline_mode<synchronous>, transform_indices = @transform_20, window_bounds = array<i64: 1, 32>}, {pipeline_mode = #tpu.pipeline_mode<synchronous>, transform_indices = @transform_21, window_bounds = array<i64: 32, 16>}, {pipeline_mode = #tpu.pipeline_mode<synchronous>, transform_indices = @transform_22, window_bounds = array<i64: 16, 4>}, {pipeline_mode = #tpu.pipeline_mode<synchronous>, transform_indices = @transform_23, window_bounds = array<i64: 1, 4>}, {pipeline_mode = #tpu.pipeline_mode<synchronous>, transform_indices = @transform_24, window_bounds = array<i64: 32, 96>}, {pipeline_mode = #tpu.pipeline_mode<synchronous>, transform_indices = @transform_25, window_bounds = array<i64: 1, 96>}, {pipeline_mode = #tpu.pipeline_mode<synchronous>, transform_indices = @transform_26, window_bounds = array<i64: 32, 32>}, {pipeline_mode = #tpu.pipeline_mode<synchronous>, transform_indices = @transform_27, window_bounds = array<i64: 1, 32>}, {pipeline_mode = #tpu.pipeline_mode<synchronous>, transform_indices = @transform_28, window_bounds = array<i64: 32, 64>}, {pipeline_mode = #tpu.pipeline_mode<synchronous>, transform_indices = @transform_29, window_bounds = array<i64: 1, 64>}, {pipeline_mode = #tpu.pipeline_mode<synchronous>, transform_indices = @transform_30, window_bounds = array<i64: 64, 32>}, {pipeline_mode = #tpu.pipeline_mode<synchronous>, transform_indices = @transform_31, window_bounds = array<i64: 1, 32>}, {pipeline_mode = #tpu.pipeline_mode<synchronous>, transform_indices = @transform_32, window_bounds = array<i64: 4, 32>}, {pipeline_mode = #tpu.pipeline_mode<synchronous>, transform_indices = @transform_33, window_bounds = array<i64: 4, 32>}, {transform_indices = @transform_34, window_bounds = array<i64: 1, 16, 32>}, {transform_indices = @transform_35, window_bounds = array<i64: 1, 8, 32>}]} {
    %c0 = arith.constant 0 : index
    %c0_0 = arith.constant 0 : index
    %c0_1 = arith.constant 0 : index
    %0 = vector.load %arg1[%c0, %c0_0, %c0_1] : memref<1x16x32xf32, #tpu.memory_space<vmem>>, vector<1x16x32xf32>
    %1 = vector.shape_cast %0 : vector<1x16x32xf32> to vector<16x32xf32>
    %c0_2 = arith.constant 0 : index
    %c0_3 = arith.constant 0 : index
    %c0_4 = arith.constant 0 : index
    %2 = vector.load %arg2[%c0_2, %c0_3, %c0_4] : memref<1x8x32xf32, #tpu.memory_space<vmem>>, vector<1x8x32xf32>
    %3 = vector.shape_cast %2 : vector<1x8x32xf32> to vector<8x32xf32>
    %c0_5 = arith.constant 0 : index
    %c0_6 = arith.constant 0 : index
    %c0_7 = arith.constant 0 : index
    %4 = vector.load %arg3[%c0_5, %c0_6, %c0_7] : memref<1x1x16xf32, #tpu.memory_space<vmem>>, vector<1x1x16xf32>
    %5 = vector.shape_cast %4 : vector<1x1x16xf32> to vector<1x16xf32>
    %c0_8 = arith.constant 0 : index
    %c0_9 = arith.constant 0 : index
    %c0_10 = arith.constant 0 : index
    %6 = vector.load %arg4[%c0_8, %c0_9, %c0_10] : memref<1x1x8xf32, #tpu.memory_space<vmem>>, vector<1x1x8xf32>
    %7 = vector.shape_cast %6 : vector<1x1x8xf32> to vector<1x8xf32>
    %c0_11 = arith.constant 0 : index
    %c0_12 = arith.constant 0 : index
    %8 = vector.load %arg5[%c0_11, %c0_12] : memref<4x8xf32, #tpu.memory_space<vmem>>, vector<4x8xf32>
    %c0_13 = arith.constant 0 : index
    %c0_14 = arith.constant 0 : index
    %9 = vector.load %arg6[%c0_13, %c0_14] : memref<4x16xf32, #tpu.memory_space<vmem>>, vector<4x16xf32>
    %c0_15 = arith.constant 0 : index
    %c0_16 = arith.constant 0 : index
    %10 = vector.load %arg33[%c0_15, %c0_16] : memref<4x32xf32, #tpu.memory_space<vmem>>, vector<4x32xf32>
    %c0_17 = arith.constant 0 : index
    %c0_18 = arith.constant 0 : index
    %11 = vector.load %arg34[%c0_17, %c0_18] : memref<4x32xf32, #tpu.memory_space<vmem>>, vector<4x32xf32>
    %12 = vector.extract_strided_slice %8 {offsets = [0, 0], sizes = [1, 8], strides = [1, 1]} : vector<4x8xf32> to vector<1x8xf32>
    %13 = arith.maximumf %12, %7 : vector<1x8xf32>
    %cst = arith.constant 5.000000e-01 : f32
    %14 = vector.broadcast %cst : f32 to vector<1x8xf32>
    %15 = arith.cmpf ole, %13, %14 : vector<1x8xf32>
    %16 = arith.extui %15 : vector<1x8xi1> to vector<1x8xi32>
    %17 = arith.sitofp %16 : vector<1x8xi32> to vector<1x8xf32>
    %18 = vector.extract_strided_slice %8 {offsets = [1, 0], sizes = [1, 8], strides = [1, 1]} : vector<4x8xf32> to vector<1x8xf32>
    %19 = arith.maximumf %18, %7 : vector<1x8xf32>
    %cst_19 = arith.constant 5.000000e-01 : f32
    %20 = vector.broadcast %cst_19 : f32 to vector<1x8xf32>
    %21 = arith.cmpf ole, %19, %20 : vector<1x8xf32>
    %22 = arith.extui %21 : vector<1x8xi1> to vector<1x8xi32>
    %23 = arith.sitofp %22 : vector<1x8xi32> to vector<1x8xf32>
    %24 = vector.extract_strided_slice %8 {offsets = [2, 0], sizes = [1, 8], strides = [1, 1]} : vector<4x8xf32> to vector<1x8xf32>
    %25 = arith.maximumf %24, %7 : vector<1x8xf32>
    %cst_20 = arith.constant 5.000000e-01 : f32
    %26 = vector.broadcast %cst_20 : f32 to vector<1x8xf32>
    %27 = arith.cmpf ole, %25, %26 : vector<1x8xf32>
    %28 = arith.extui %27 : vector<1x8xi1> to vector<1x8xi32>
    %29 = arith.sitofp %28 : vector<1x8xi32> to vector<1x8xf32>
    %30 = vector.extract_strided_slice %8 {offsets = [3, 0], sizes = [1, 8], strides = [1, 1]} : vector<4x8xf32> to vector<1x8xf32>
    %31 = arith.maximumf %30, %7 : vector<1x8xf32>
    %cst_21 = arith.constant 5.000000e-01 : f32
    %32 = vector.broadcast %cst_21 : f32 to vector<1x8xf32>
    %33 = arith.cmpf ole, %31, %32 : vector<1x8xf32>
    %34 = arith.extui %33 : vector<1x8xi1> to vector<1x8xi32>
    %35 = arith.sitofp %34 : vector<1x8xi32> to vector<1x8xf32>
    %36 = vector.extract_strided_slice %9 {offsets = [0, 0], sizes = [1, 16], strides = [1, 1]} : vector<4x16xf32> to vector<1x16xf32>
    %37 = arith.maximumf %36, %5 : vector<1x16xf32>
    %cst_22 = arith.constant 5.000000e-01 : f32
    %38 = vector.broadcast %cst_22 : f32 to vector<1x16xf32>
    %39 = arith.cmpf ole, %37, %38 : vector<1x16xf32>
    %40 = arith.extui %39 : vector<1x16xi1> to vector<1x16xi32>
    %41 = arith.sitofp %40 : vector<1x16xi32> to vector<1x16xf32>
    %42 = vector.extract_strided_slice %9 {offsets = [1, 0], sizes = [1, 16], strides = [1, 1]} : vector<4x16xf32> to vector<1x16xf32>
    %43 = arith.maximumf %42, %5 : vector<1x16xf32>
    %cst_23 = arith.constant 5.000000e-01 : f32
    %44 = vector.broadcast %cst_23 : f32 to vector<1x16xf32>
    %45 = arith.cmpf ole, %43, %44 : vector<1x16xf32>
    %46 = arith.extui %45 : vector<1x16xi1> to vector<1x16xi32>
    %47 = arith.sitofp %46 : vector<1x16xi32> to vector<1x16xf32>
    %48 = vector.extract_strided_slice %9 {offsets = [2, 0], sizes = [1, 16], strides = [1, 1]} : vector<4x16xf32> to vector<1x16xf32>
    %49 = arith.maximumf %48, %5 : vector<1x16xf32>
    %cst_24 = arith.constant 5.000000e-01 : f32
    %50 = vector.broadcast %cst_24 : f32 to vector<1x16xf32>
    %51 = arith.cmpf ole, %49, %50 : vector<1x16xf32>
    %52 = arith.extui %51 : vector<1x16xi1> to vector<1x16xi32>
    %53 = arith.sitofp %52 : vector<1x16xi32> to vector<1x16xf32>
    %54 = vector.extract_strided_slice %9 {offsets = [3, 0], sizes = [1, 16], strides = [1, 1]} : vector<4x16xf32> to vector<1x16xf32>
    %55 = arith.maximumf %54, %5 : vector<1x16xf32>
    %cst_25 = arith.constant 5.000000e-01 : f32
    %56 = vector.broadcast %cst_25 : f32 to vector<1x16xf32>
    %57 = arith.cmpf ole, %55, %56 : vector<1x16xf32>
    %58 = arith.extui %57 : vector<1x16xi1> to vector<1x16xi32>
    %59 = arith.sitofp %58 : vector<1x16xi32> to vector<1x16xf32>
    %c0_26 = arith.constant 0 : index
    %c0_27 = arith.constant 0 : index
    %60 = vector.load %arg13[%c0_26, %c0_27] : memref<32x16xf32, #tpu.memory_space<vmem>>, vector<32x16xf32>
    %c0_28 = arith.constant 0 : index
    %c0_29 = arith.constant 0 : index
    %61 = vector.load %arg14[%c0_28, %c0_29] : memref<16x4xf32, #tpu.memory_space<vmem>>, vector<16x4xf32>
    %c0_30 = arith.constant 0 : index
    %c0_31 = arith.constant 0 : index
    %62 = vector.load %arg15[%c0_30, %c0_31] : memref<1x4xf32, #tpu.memory_space<vmem>>, vector<1x4xf32>
    %cst_32 = arith.constant dense<0.000000e+00> : vector<32xf32>
    %63 = vector.multi_reduction <add>, %3, %cst_32 [0] : vector<8x32xf32> to vector<32xf32>
    %64 = vector.shape_cast %63 : vector<32xf32> to vector<1x32xf32>
    %cst_33 = arith.constant 8.000000e+00 : f32
    %65 = vector.broadcast %cst_33 : f32 to vector<1x32xf32>
    %66 = arith.divf %64, %65 : vector<1x32xf32>
    %cst_34 = arith.constant dense<0.000000e+00> : vector<1x16xf32>
    %67 = tpu.matmul %66, %60, %cst_34 {dimension_numbers = #tpu.dot_dimension_numbers<[1], [0], [0], [1], [0, 0, 1, 1], [], []>} : vector<1x32xf32>, vector<32x16xf32>, vector<1x16xf32> -> vector<1x16xf32>
    %cst_35 = arith.constant 0.000000e+00 : f32
    %68 = vector.broadcast %cst_35 : f32 to vector<1x16xf32>
    %69 = arith.maximumf %67, %68 : vector<1x16xf32>
    %cst_36 = arith.constant dense<0.000000e+00> : vector<1x4xf32>
    %70 = tpu.matmul %69, %61, %cst_36 {dimension_numbers = #tpu.dot_dimension_numbers<[1], [0], [0], [1], [0, 0, 1, 1], [], []>} : vector<1x16xf32>, vector<16x4xf32>, vector<1x4xf32> -> vector<1x4xf32>
    %71 = arith.addf %70, %62 : vector<1x4xf32>
    %cst_37 = arith.constant dense<0xFF800000> : vector<1xf32>
    %72 = vector.multi_reduction <maximumf>, %71, %cst_37 [1] : vector<1x4xf32> to vector<1xf32>
    %73 = vector.shape_cast %72 : vector<1xf32> to vector<1x1xf32>
    %74 = vector.broadcast %73 : vector<1x1xf32> to vector<1x4xf32>
    %75 = arith.subf %71, %74 : vector<1x4xf32>
    %76 = math.exp %75 : vector<1x4xf32>
    %cst_38 = arith.constant dense<0.000000e+00> : vector<1xf32>
    %77 = vector.multi_reduction <add>, %76, %cst_38 [1] : vector<1x4xf32> to vector<1xf32>
    %78 = vector.shape_cast %77 : vector<1xf32> to vector<1x1xf32>
    %79 = vector.broadcast %78 : vector<1x1xf32> to vector<1x4xf32>
    %80 = arith.divf %76, %79 : vector<1x4xf32>
    %c0_39 = arith.constant 0 : index
    %c0_40 = arith.constant 0 : index
    %81 = vector.load %arg7[%c0_39, %c0_40] : memref<32x32xf32, #tpu.memory_space<vmem>>, vector<32x32xf32>
    %cst_41 = arith.constant dense<0.000000e+00> : vector<16x32xf32>
    %82 = tpu.matmul %1, %81, %cst_41 {dimension_numbers = #tpu.dot_dimension_numbers<[1], [0], [0], [1], [0, 0, 1, 1], [], []>} : vector<16x32xf32>, vector<32x32xf32>, vector<16x32xf32> -> vector<16x32xf32>
    %c0_42 = arith.constant 0 : index
    %c0_43 = arith.constant 0 : index
    %83 = vector.load %arg8[%c0_42, %c0_43] : memref<1x32xf32, #tpu.memory_space<vmem>>, vector<1x32xf32>
    %84 = vector.broadcast %83 : vector<1x32xf32> to vector<16x32xf32>
    %85 = arith.addf %82, %84 : vector<16x32xf32>
    %c0_44 = arith.constant 0 : index
    %c0_45 = arith.constant 0 : index
    %86 = vector.load %arg9[%c0_44, %c0_45] : memref<32x64xf32, #tpu.memory_space<vmem>>, vector<32x64xf32>
    %cst_46 = arith.constant dense<0.000000e+00> : vector<8x64xf32>
    %87 = tpu.matmul %3, %86, %cst_46 {dimension_numbers = #tpu.dot_dimension_numbers<[1], [0], [0], [1], [0, 0, 1, 1], [], []>} : vector<8x32xf32>, vector<32x64xf32>, vector<8x64xf32> -> vector<8x64xf32>
    %c0_47 = arith.constant 0 : index
    %c0_48 = arith.constant 0 : index
    %88 = vector.load %arg10[%c0_47, %c0_48] : memref<1x64xf32, #tpu.memory_space<vmem>>, vector<1x64xf32>
    %89 = vector.broadcast %88 : vector<1x64xf32> to vector<8x64xf32>
    %90 = arith.addf %87, %89 : vector<8x64xf32>
    %91 = vector.extract_strided_slice %90 {offsets = [0, 0], sizes = [8, 32], strides = [1, 1]} : vector<8x64xf32> to vector<8x32xf32>
    %92 = vector.extract_strided_slice %90 {offsets = [0, 32], sizes = [8, 32], strides = [1, 1]} : vector<8x64xf32> to vector<8x32xf32>
    %93 = tpu.iota {dimensions = array<i32: 1>} : vector<1x32xi32>
    %cst_49 = arith.constant 0.000000e+00 : f32
    %94 = vector.broadcast %cst_49 : f32 to vector<16x32xf32>
    %c0_i32 = arith.constant 0 : i32
    %95 = vector.broadcast %c0_i32 : i32 to vector<1x32xi32>
    %96 = arith.cmpi sge, %93, %95 : vector<1x32xi32>
    %c8_i32 = arith.constant 8 : i32
    %97 = vector.broadcast %c8_i32 : i32 to vector<1x32xi32>
    %98 = arith.cmpi slt, %93, %97 : vector<1x32xi32>
    %99 = arith.andi %96, %98 : vector<1x32xi1>
    %100 = arith.extui %99 : vector<1x32xi1> to vector<1x32xi32>
    %101 = arith.sitofp %100 : vector<1x32xi32> to vector<1x32xf32>
    %102 = vector.broadcast %101 : vector<1x32xf32> to vector<16x32xf32>
    %103 = arith.mulf %85, %102 : vector<16x32xf32>
    %cst_50 = arith.constant dense<0.000000e+00> : vector<16x8xf32>
    %104 = tpu.matmul %103, %91, %cst_50 {dimension_numbers = #tpu.dot_dimension_numbers<[1], [1], [0], [0], [0, 0, 1, 0], [], []>} : vector<16x32xf32>, vector<8x32xf32>, vector<16x8xf32> -> vector<16x8xf32>
    %cst_51 = arith.constant 0.353553385 : f32
    %105 = vector.broadcast %cst_51 : f32 to vector<16x8xf32>
    %106 = arith.mulf %104, %105 : vector<16x8xf32>
    %cst_52 = arith.constant dense<0xFF800000> : vector<16xf32>
    %107 = vector.multi_reduction <maximumf>, %106, %cst_52 [1] : vector<16x8xf32> to vector<16xf32>
    %108 = vector.shape_cast %107 : vector<16xf32> to vector<16x1xf32>
    %109 = vector.broadcast %108 : vector<16x1xf32> to vector<16x8xf32>
    %110 = arith.subf %106, %109 : vector<16x8xf32>
    %111 = math.exp %110 : vector<16x8xf32>
    %cst_53 = arith.constant 0.000000e+00 : f32
    %112 = vector.broadcast %cst_53 : f32 to vector<16x8xf32>
    %113 = vector.broadcast %17 : vector<1x8xf32> to vector<16x8xf32>
    %114 = arith.mulf %111, %113 : vector<16x8xf32>
    %cst_54 = arith.constant dense<0.000000e+00> : vector<16xf32>
    %115 = vector.multi_reduction <add>, %114, %cst_54 [1] : vector<16x8xf32> to vector<16xf32>
    %116 = vector.shape_cast %115 : vector<16xf32> to vector<16x1xf32>
    %cst_55 = arith.constant 0.000000e+00 : f32
    %117 = vector.broadcast %cst_55 : f32 to vector<16x1xf32>
    %118 = arith.cmpf ogt, %116, %117 : vector<16x1xf32>
    %cst_56 = arith.constant 1.000000e+00 : f32
    %119 = vector.broadcast %cst_56 : f32 to vector<16x1xf32>
    %120 = arith.select %118, %116, %119 : vector<16x1xi1>, vector<16x1xf32>
    %121 = tpu.reciprocal %120 {approx = true} : vector<16x1xf32> -> vector<16x1xf32>
    %122 = vector.extract_strided_slice %80 {offsets = [0, 0], sizes = [1, 1], strides = [1, 1]} : vector<1x4xf32> to vector<1x1xf32>
    %123 = vector.extract %122[0, 0] : f32 from vector<1x1xf32>
    %cst_57 = arith.constant 0.000000e+00 : f32
    %124 = vector.broadcast %cst_57 : f32 to vector<16x1xf32>
    %125 = arith.cmpf ogt, %116, %124 : vector<16x1xf32>
    %126 = vector.broadcast %121 : vector<16x1xf32> to vector<16x8xf32>
    %127 = arith.mulf %114, %126 : vector<16x8xf32>
    %cst_58 = arith.constant 1.250000e-01 : f32
    %128 = vector.shape_cast %125 : vector<16x1xi1> to vector<16x1xi1>
    %129 = vector.broadcast %128 : vector<16x1xi1> to vector<16x8xi1>
    %130 = vector.broadcast %cst_58 : f32 to vector<16x8xf32>
    %131 = arith.select %129, %127, %130 : vector<16x8xi1>, vector<16x8xf32>
    %132 = vector.broadcast %123 : f32 to vector<16x8xf32>
    %133 = arith.mulf %132, %131 : vector<16x8xf32>
    %134 = arith.addf %112, %133 : vector<16x8xf32>
    %135 = vector.broadcast %23 : vector<1x8xf32> to vector<16x8xf32>
    %136 = arith.mulf %111, %135 : vector<16x8xf32>
    %cst_59 = arith.constant dense<0.000000e+00> : vector<16xf32>
    %137 = vector.multi_reduction <add>, %136, %cst_59 [1] : vector<16x8xf32> to vector<16xf32>
    %138 = vector.shape_cast %137 : vector<16xf32> to vector<16x1xf32>
    %cst_60 = arith.constant 0.000000e+00 : f32
    %139 = vector.broadcast %cst_60 : f32 to vector<16x1xf32>
    %140 = arith.cmpf ogt, %138, %139 : vector<16x1xf32>
    %cst_61 = arith.constant 1.000000e+00 : f32
    %141 = vector.broadcast %cst_61 : f32 to vector<16x1xf32>
    %142 = arith.select %140, %138, %141 : vector<16x1xi1>, vector<16x1xf32>
    %143 = tpu.reciprocal %142 {approx = true} : vector<16x1xf32> -> vector<16x1xf32>
    %144 = vector.extract_strided_slice %80 {offsets = [0, 1], sizes = [1, 1], strides = [1, 1]} : vector<1x4xf32> to vector<1x1xf32>
    %145 = vector.extract %144[0, 0] : f32 from vector<1x1xf32>
    %cst_62 = arith.constant 0.000000e+00 : f32
    %146 = vector.broadcast %cst_62 : f32 to vector<16x1xf32>
    %147 = arith.cmpf ogt, %138, %146 : vector<16x1xf32>
    %148 = vector.broadcast %143 : vector<16x1xf32> to vector<16x8xf32>
    %149 = arith.mulf %136, %148 : vector<16x8xf32>
    %cst_63 = arith.constant 1.250000e-01 : f32
    %150 = vector.shape_cast %147 : vector<16x1xi1> to vector<16x1xi1>
    %151 = vector.broadcast %150 : vector<16x1xi1> to vector<16x8xi1>
    %152 = vector.broadcast %cst_63 : f32 to vector<16x8xf32>
    %153 = arith.select %151, %149, %152 : vector<16x8xi1>, vector<16x8xf32>
    %154 = vector.broadcast %145 : f32 to vector<16x8xf32>
    %155 = arith.mulf %154, %153 : vector<16x8xf32>
    %156 = arith.addf %134, %155 : vector<16x8xf32>
    %157 = vector.broadcast %29 : vector<1x8xf32> to vector<16x8xf32>
    %158 = arith.mulf %111, %157 : vector<16x8xf32>
    %cst_64 = arith.constant dense<0.000000e+00> : vector<16xf32>
    %159 = vector.multi_reduction <add>, %158, %cst_64 [1] : vector<16x8xf32> to vector<16xf32>
    %160 = vector.shape_cast %159 : vector<16xf32> to vector<16x1xf32>
    %cst_65 = arith.constant 0.000000e+00 : f32
    %161 = vector.broadcast %cst_65 : f32 to vector<16x1xf32>
    %162 = arith.cmpf ogt, %160, %161 : vector<16x1xf32>
    %cst_66 = arith.constant 1.000000e+00 : f32
    %163 = vector.broadcast %cst_66 : f32 to vector<16x1xf32>
    %164 = arith.select %162, %160, %163 : vector<16x1xi1>, vector<16x1xf32>
    %165 = tpu.reciprocal %164 {approx = true} : vector<16x1xf32> -> vector<16x1xf32>
    %166 = vector.extract_strided_slice %80 {offsets = [0, 2], sizes = [1, 1], strides = [1, 1]} : vector<1x4xf32> to vector<1x1xf32>
    %167 = vector.extract %166[0, 0] : f32 from vector<1x1xf32>
    %cst_67 = arith.constant 0.000000e+00 : f32
    %168 = vector.broadcast %cst_67 : f32 to vector<16x1xf32>
    %169 = arith.cmpf ogt, %160, %168 : vector<16x1xf32>
    %170 = vector.broadcast %165 : vector<16x1xf32> to vector<16x8xf32>
    %171 = arith.mulf %158, %170 : vector<16x8xf32>
    %cst_68 = arith.constant 1.250000e-01 : f32
    %172 = vector.shape_cast %169 : vector<16x1xi1> to vector<16x1xi1>
    %173 = vector.broadcast %172 : vector<16x1xi1> to vector<16x8xi1>
    %174 = vector.broadcast %cst_68 : f32 to vector<16x8xf32>
    %175 = arith.select %173, %171, %174 : vector<16x8xi1>, vector<16x8xf32>
    %176 = vector.broadcast %167 : f32 to vector<16x8xf32>
    %177 = arith.mulf %176, %175 : vector<16x8xf32>
    %178 = arith.addf %156, %177 : vector<16x8xf32>
    %179 = vector.broadcast %35 : vector<1x8xf32> to vector<16x8xf32>
    %180 = arith.mulf %111, %179 : vector<16x8xf32>
    %cst_69 = arith.constant dense<0.000000e+00> : vector<16xf32>
    %181 = vector.multi_reduction <add>, %180, %cst_69 [1] : vector<16x8xf32> to vector<16xf32>
    %182 = vector.shape_cast %181 : vector<16xf32> to vector<16x1xf32>
    %cst_70 = arith.constant 0.000000e+00 : f32
    %183 = vector.broadcast %cst_70 : f32 to vector<16x1xf32>
    %184 = arith.cmpf ogt, %182, %183 : vector<16x1xf32>
    %cst_71 = arith.constant 1.000000e+00 : f32
    %185 = vector.broadcast %cst_71 : f32 to vector<16x1xf32>
    %186 = arith.select %184, %182, %185 : vector<16x1xi1>, vector<16x1xf32>
    %187 = tpu.reciprocal %186 {approx = true} : vector<16x1xf32> -> vector<16x1xf32>
    %188 = vector.extract_strided_slice %80 {offsets = [0, 3], sizes = [1, 1], strides = [1, 1]} : vector<1x4xf32> to vector<1x1xf32>
    %189 = vector.extract %188[0, 0] : f32 from vector<1x1xf32>
    %cst_72 = arith.constant 0.000000e+00 : f32
    %190 = vector.broadcast %cst_72 : f32 to vector<16x1xf32>
    %191 = arith.cmpf ogt, %182, %190 : vector<16x1xf32>
    %192 = vector.broadcast %187 : vector<16x1xf32> to vector<16x8xf32>
    %193 = arith.mulf %180, %192 : vector<16x8xf32>
    %cst_73 = arith.constant 1.250000e-01 : f32
    %194 = vector.shape_cast %191 : vector<16x1xi1> to vector<16x1xi1>
    %195 = vector.broadcast %194 : vector<16x1xi1> to vector<16x8xi1>
    %196 = vector.broadcast %cst_73 : f32 to vector<16x8xf32>
    %197 = arith.select %195, %193, %196 : vector<16x8xi1>, vector<16x8xf32>
    %198 = vector.broadcast %189 : f32 to vector<16x8xf32>
    %199 = arith.mulf %198, %197 : vector<16x8xf32>
    %200 = arith.addf %178, %199 : vector<16x8xf32>
    %201 = vector.broadcast %101 : vector<1x32xf32> to vector<8x32xf32>
    %202 = arith.mulf %92, %201 : vector<8x32xf32>
    %cst_74 = arith.constant dense<0.000000e+00> : vector<16x32xf32>
    %203 = tpu.matmul %200, %202, %cst_74 {dimension_numbers = #tpu.dot_dimension_numbers<[1], [0], [0], [1], [0, 0, 1, 1], [], []>} : vector<16x8xf32>, vector<8x32xf32>, vector<16x32xf32> -> vector<16x32xf32>
    %204 = arith.addf %94, %203 : vector<16x32xf32>
    %c8_i32_75 = arith.constant 8 : i32
    %205 = vector.broadcast %c8_i32_75 : i32 to vector<1x32xi32>
    %206 = arith.cmpi sge, %93, %205 : vector<1x32xi32>
    %c16_i32 = arith.constant 16 : i32
    %207 = vector.broadcast %c16_i32 : i32 to vector<1x32xi32>
    %208 = arith.cmpi slt, %93, %207 : vector<1x32xi32>
    %209 = arith.andi %206, %208 : vector<1x32xi1>
    %210 = arith.extui %209 : vector<1x32xi1> to vector<1x32xi32>
    %211 = arith.sitofp %210 : vector<1x32xi32> to vector<1x32xf32>
    %212 = vector.broadcast %211 : vector<1x32xf32> to vector<16x32xf32>
    %213 = arith.mulf %85, %212 : vector<16x32xf32>
    %cst_76 = arith.constant dense<0.000000e+00> : vector<16x8xf32>
    %214 = tpu.matmul %213, %91, %cst_76 {dimension_numbers = #tpu.dot_dimension_numbers<[1], [1], [0], [0], [0, 0, 1, 0], [], []>} : vector<16x32xf32>, vector<8x32xf32>, vector<16x8xf32> -> vector<16x8xf32>
    %cst_77 = arith.constant 0.353553385 : f32
    %215 = vector.broadcast %cst_77 : f32 to vector<16x8xf32>
    %216 = arith.mulf %214, %215 : vector<16x8xf32>
    %cst_78 = arith.constant dense<0xFF800000> : vector<16xf32>
    %217 = vector.multi_reduction <maximumf>, %216, %cst_78 [1] : vector<16x8xf32> to vector<16xf32>
    %218 = vector.shape_cast %217 : vector<16xf32> to vector<16x1xf32>
    %219 = vector.broadcast %218 : vector<16x1xf32> to vector<16x8xf32>
    %220 = arith.subf %216, %219 : vector<16x8xf32>
    %221 = math.exp %220 : vector<16x8xf32>
    %cst_79 = arith.constant 0.000000e+00 : f32
    %222 = vector.broadcast %cst_79 : f32 to vector<16x8xf32>
    %223 = vector.broadcast %17 : vector<1x8xf32> to vector<16x8xf32>
    %224 = arith.mulf %221, %223 : vector<16x8xf32>
    %cst_80 = arith.constant dense<0.000000e+00> : vector<16xf32>
    %225 = vector.multi_reduction <add>, %224, %cst_80 [1] : vector<16x8xf32> to vector<16xf32>
    %226 = vector.shape_cast %225 : vector<16xf32> to vector<16x1xf32>
    %cst_81 = arith.constant 0.000000e+00 : f32
    %227 = vector.broadcast %cst_81 : f32 to vector<16x1xf32>
    %228 = arith.cmpf ogt, %226, %227 : vector<16x1xf32>
    %cst_82 = arith.constant 1.000000e+00 : f32
    %229 = vector.broadcast %cst_82 : f32 to vector<16x1xf32>
    %230 = arith.select %228, %226, %229 : vector<16x1xi1>, vector<16x1xf32>
    %231 = tpu.reciprocal %230 {approx = true} : vector<16x1xf32> -> vector<16x1xf32>
    %232 = vector.extract_strided_slice %80 {offsets = [0, 0], sizes = [1, 1], strides = [1, 1]} : vector<1x4xf32> to vector<1x1xf32>
    %233 = vector.extract %232[0, 0] : f32 from vector<1x1xf32>
    %cst_83 = arith.constant 0.000000e+00 : f32
    %234 = vector.broadcast %cst_83 : f32 to vector<16x1xf32>
    %235 = arith.cmpf ogt, %226, %234 : vector<16x1xf32>
    %236 = vector.broadcast %231 : vector<16x1xf32> to vector<16x8xf32>
    %237 = arith.mulf %224, %236 : vector<16x8xf32>
    %cst_84 = arith.constant 1.250000e-01 : f32
    %238 = vector.shape_cast %235 : vector<16x1xi1> to vector<16x1xi1>
    %239 = vector.broadcast %238 : vector<16x1xi1> to vector<16x8xi1>
    %240 = vector.broadcast %cst_84 : f32 to vector<16x8xf32>
    %241 = arith.select %239, %237, %240 : vector<16x8xi1>, vector<16x8xf32>
    %242 = vector.broadcast %233 : f32 to vector<16x8xf32>
    %243 = arith.mulf %242, %241 : vector<16x8xf32>
    %244 = arith.addf %222, %243 : vector<16x8xf32>
    %245 = vector.broadcast %23 : vector<1x8xf32> to vector<16x8xf32>
    %246 = arith.mulf %221, %245 : vector<16x8xf32>
    %cst_85 = arith.constant dense<0.000000e+00> : vector<16xf32>
    %247 = vector.multi_reduction <add>, %246, %cst_85 [1] : vector<16x8xf32> to vector<16xf32>
    %248 = vector.shape_cast %247 : vector<16xf32> to vector<16x1xf32>
    %cst_86 = arith.constant 0.000000e+00 : f32
    %249 = vector.broadcast %cst_86 : f32 to vector<16x1xf32>
    %250 = arith.cmpf ogt, %248, %249 : vector<16x1xf32>
    %cst_87 = arith.constant 1.000000e+00 : f32
    %251 = vector.broadcast %cst_87 : f32 to vector<16x1xf32>
    %252 = arith.select %250, %248, %251 : vector<16x1xi1>, vector<16x1xf32>
    %253 = tpu.reciprocal %252 {approx = true} : vector<16x1xf32> -> vector<16x1xf32>
    %254 = vector.extract_strided_slice %80 {offsets = [0, 1], sizes = [1, 1], strides = [1, 1]} : vector<1x4xf32> to vector<1x1xf32>
    %255 = vector.extract %254[0, 0] : f32 from vector<1x1xf32>
    %cst_88 = arith.constant 0.000000e+00 : f32
    %256 = vector.broadcast %cst_88 : f32 to vector<16x1xf32>
    %257 = arith.cmpf ogt, %248, %256 : vector<16x1xf32>
    %258 = vector.broadcast %253 : vector<16x1xf32> to vector<16x8xf32>
    %259 = arith.mulf %246, %258 : vector<16x8xf32>
    %cst_89 = arith.constant 1.250000e-01 : f32
    %260 = vector.shape_cast %257 : vector<16x1xi1> to vector<16x1xi1>
    %261 = vector.broadcast %260 : vector<16x1xi1> to vector<16x8xi1>
    %262 = vector.broadcast %cst_89 : f32 to vector<16x8xf32>
    %263 = arith.select %261, %259, %262 : vector<16x8xi1>, vector<16x8xf32>
    %264 = vector.broadcast %255 : f32 to vector<16x8xf32>
    %265 = arith.mulf %264, %263 : vector<16x8xf32>
    %266 = arith.addf %244, %265 : vector<16x8xf32>
    %267 = vector.broadcast %29 : vector<1x8xf32> to vector<16x8xf32>
    %268 = arith.mulf %221, %267 : vector<16x8xf32>
    %cst_90 = arith.constant dense<0.000000e+00> : vector<16xf32>
    %269 = vector.multi_reduction <add>, %268, %cst_90 [1] : vector<16x8xf32> to vector<16xf32>
    %270 = vector.shape_cast %269 : vector<16xf32> to vector<16x1xf32>
    %cst_91 = arith.constant 0.000000e+00 : f32
    %271 = vector.broadcast %cst_91 : f32 to vector<16x1xf32>
    %272 = arith.cmpf ogt, %270, %271 : vector<16x1xf32>
    %cst_92 = arith.constant 1.000000e+00 : f32
    %273 = vector.broadcast %cst_92 : f32 to vector<16x1xf32>
    %274 = arith.select %272, %270, %273 : vector<16x1xi1>, vector<16x1xf32>
    %275 = tpu.reciprocal %274 {approx = true} : vector<16x1xf32> -> vector<16x1xf32>
    %276 = vector.extract_strided_slice %80 {offsets = [0, 2], sizes = [1, 1], strides = [1, 1]} : vector<1x4xf32> to vector<1x1xf32>
    %277 = vector.extract %276[0, 0] : f32 from vector<1x1xf32>
    %cst_93 = arith.constant 0.000000e+00 : f32
    %278 = vector.broadcast %cst_93 : f32 to vector<16x1xf32>
    %279 = arith.cmpf ogt, %270, %278 : vector<16x1xf32>
    %280 = vector.broadcast %275 : vector<16x1xf32> to vector<16x8xf32>
    %281 = arith.mulf %268, %280 : vector<16x8xf32>
    %cst_94 = arith.constant 1.250000e-01 : f32
    %282 = vector.shape_cast %279 : vector<16x1xi1> to vector<16x1xi1>
    %283 = vector.broadcast %282 : vector<16x1xi1> to vector<16x8xi1>
    %284 = vector.broadcast %cst_94 : f32 to vector<16x8xf32>
    %285 = arith.select %283, %281, %284 : vector<16x8xi1>, vector<16x8xf32>
    %286 = vector.broadcast %277 : f32 to vector<16x8xf32>
    %287 = arith.mulf %286, %285 : vector<16x8xf32>
    %288 = arith.addf %266, %287 : vector<16x8xf32>
    %289 = vector.broadcast %35 : vector<1x8xf32> to vector<16x8xf32>
    %290 = arith.mulf %221, %289 : vector<16x8xf32>
    %cst_95 = arith.constant dense<0.000000e+00> : vector<16xf32>
    %291 = vector.multi_reduction <add>, %290, %cst_95 [1] : vector<16x8xf32> to vector<16xf32>
    %292 = vector.shape_cast %291 : vector<16xf32> to vector<16x1xf32>
    %cst_96 = arith.constant 0.000000e+00 : f32
    %293 = vector.broadcast %cst_96 : f32 to vector<16x1xf32>
    %294 = arith.cmpf ogt, %292, %293 : vector<16x1xf32>
    %cst_97 = arith.constant 1.000000e+00 : f32
    %295 = vector.broadcast %cst_97 : f32 to vector<16x1xf32>
    %296 = arith.select %294, %292, %295 : vector<16x1xi1>, vector<16x1xf32>
    %297 = tpu.reciprocal %296 {approx = true} : vector<16x1xf32> -> vector<16x1xf32>
    %298 = vector.extract_strided_slice %80 {offsets = [0, 3], sizes = [1, 1], strides = [1, 1]} : vector<1x4xf32> to vector<1x1xf32>
    %299 = vector.extract %298[0, 0] : f32 from vector<1x1xf32>
    %cst_98 = arith.constant 0.000000e+00 : f32
    %300 = vector.broadcast %cst_98 : f32 to vector<16x1xf32>
    %301 = arith.cmpf ogt, %292, %300 : vector<16x1xf32>
    %302 = vector.broadcast %297 : vector<16x1xf32> to vector<16x8xf32>
    %303 = arith.mulf %290, %302 : vector<16x8xf32>
    %cst_99 = arith.constant 1.250000e-01 : f32
    %304 = vector.shape_cast %301 : vector<16x1xi1> to vector<16x1xi1>
    %305 = vector.broadcast %304 : vector<16x1xi1> to vector<16x8xi1>
    %306 = vector.broadcast %cst_99 : f32 to vector<16x8xf32>
    %307 = arith.select %305, %303, %306 : vector<16x8xi1>, vector<16x8xf32>
    %308 = vector.broadcast %299 : f32 to vector<16x8xf32>
    %309 = arith.mulf %308, %307 : vector<16x8xf32>
    %310 = arith.addf %288, %309 : vector<16x8xf32>
    %311 = vector.broadcast %211 : vector<1x32xf32> to vector<8x32xf32>
    %312 = arith.mulf %92, %311 : vector<8x32xf32>
    %cst_100 = arith.constant dense<0.000000e+00> : vector<16x32xf32>
    %313 = tpu.matmul %310, %312, %cst_100 {dimension_numbers = #tpu.dot_dimension_numbers<[1], [0], [0], [1], [0, 0, 1, 1], [], []>} : vector<16x8xf32>, vector<8x32xf32>, vector<16x32xf32> -> vector<16x32xf32>
    %314 = arith.addf %204, %313 : vector<16x32xf32>
    %c16_i32_101 = arith.constant 16 : i32
    %315 = vector.broadcast %c16_i32_101 : i32 to vector<1x32xi32>
    %316 = arith.cmpi sge, %93, %315 : vector<1x32xi32>
    %c24_i32 = arith.constant 24 : i32
    %317 = vector.broadcast %c24_i32 : i32 to vector<1x32xi32>
    %318 = arith.cmpi slt, %93, %317 : vector<1x32xi32>
    %319 = arith.andi %316, %318 : vector<1x32xi1>
    %320 = arith.extui %319 : vector<1x32xi1> to vector<1x32xi32>
    %321 = arith.sitofp %320 : vector<1x32xi32> to vector<1x32xf32>
    %322 = vector.broadcast %321 : vector<1x32xf32> to vector<16x32xf32>
    %323 = arith.mulf %85, %322 : vector<16x32xf32>
    %cst_102 = arith.constant dense<0.000000e+00> : vector<16x8xf32>
    %324 = tpu.matmul %323, %91, %cst_102 {dimension_numbers = #tpu.dot_dimension_numbers<[1], [1], [0], [0], [0, 0, 1, 0], [], []>} : vector<16x32xf32>, vector<8x32xf32>, vector<16x8xf32> -> vector<16x8xf32>
    %cst_103 = arith.constant 0.353553385 : f32
    %325 = vector.broadcast %cst_103 : f32 to vector<16x8xf32>
    %326 = arith.mulf %324, %325 : vector<16x8xf32>
    %cst_104 = arith.constant dense<0xFF800000> : vector<16xf32>
    %327 = vector.multi_reduction <maximumf>, %326, %cst_104 [1] : vector<16x8xf32> to vector<16xf32>
    %328 = vector.shape_cast %327 : vector<16xf32> to vector<16x1xf32>
    %329 = vector.broadcast %328 : vector<16x1xf32> to vector<16x8xf32>
    %330 = arith.subf %326, %329 : vector<16x8xf32>
    %331 = math.exp %330 : vector<16x8xf32>
    %cst_105 = arith.constant 0.000000e+00 : f32
    %332 = vector.broadcast %cst_105 : f32 to vector<16x8xf32>
    %333 = vector.broadcast %17 : vector<1x8xf32> to vector<16x8xf32>
    %334 = arith.mulf %331, %333 : vector<16x8xf32>
    %cst_106 = arith.constant dense<0.000000e+00> : vector<16xf32>
    %335 = vector.multi_reduction <add>, %334, %cst_106 [1] : vector<16x8xf32> to vector<16xf32>
    %336 = vector.shape_cast %335 : vector<16xf32> to vector<16x1xf32>
    %cst_107 = arith.constant 0.000000e+00 : f32
    %337 = vector.broadcast %cst_107 : f32 to vector<16x1xf32>
    %338 = arith.cmpf ogt, %336, %337 : vector<16x1xf32>
    %cst_108 = arith.constant 1.000000e+00 : f32
    %339 = vector.broadcast %cst_108 : f32 to vector<16x1xf32>
    %340 = arith.select %338, %336, %339 : vector<16x1xi1>, vector<16x1xf32>
    %341 = tpu.reciprocal %340 {approx = true} : vector<16x1xf32> -> vector<16x1xf32>
    %342 = vector.extract_strided_slice %80 {offsets = [0, 0], sizes = [1, 1], strides = [1, 1]} : vector<1x4xf32> to vector<1x1xf32>
    %343 = vector.extract %342[0, 0] : f32 from vector<1x1xf32>
    %cst_109 = arith.constant 0.000000e+00 : f32
    %344 = vector.broadcast %cst_109 : f32 to vector<16x1xf32>
    %345 = arith.cmpf ogt, %336, %344 : vector<16x1xf32>
    %346 = vector.broadcast %341 : vector<16x1xf32> to vector<16x8xf32>
    %347 = arith.mulf %334, %346 : vector<16x8xf32>
    %cst_110 = arith.constant 1.250000e-01 : f32
    %348 = vector.shape_cast %345 : vector<16x1xi1> to vector<16x1xi1>
    %349 = vector.broadcast %348 : vector<16x1xi1> to vector<16x8xi1>
    %350 = vector.broadcast %cst_110 : f32 to vector<16x8xf32>
    %351 = arith.select %349, %347, %350 : vector<16x8xi1>, vector<16x8xf32>
    %352 = vector.broadcast %343 : f32 to vector<16x8xf32>
    %353 = arith.mulf %352, %351 : vector<16x8xf32>
    %354 = arith.addf %332, %353 : vector<16x8xf32>
    %355 = vector.broadcast %23 : vector<1x8xf32> to vector<16x8xf32>
    %356 = arith.mulf %331, %355 : vector<16x8xf32>
    %cst_111 = arith.constant dense<0.000000e+00> : vector<16xf32>
    %357 = vector.multi_reduction <add>, %356, %cst_111 [1] : vector<16x8xf32> to vector<16xf32>
    %358 = vector.shape_cast %357 : vector<16xf32> to vector<16x1xf32>
    %cst_112 = arith.constant 0.000000e+00 : f32
    %359 = vector.broadcast %cst_112 : f32 to vector<16x1xf32>
    %360 = arith.cmpf ogt, %358, %359 : vector<16x1xf32>
    %cst_113 = arith.constant 1.000000e+00 : f32
    %361 = vector.broadcast %cst_113 : f32 to vector<16x1xf32>
    %362 = arith.select %360, %358, %361 : vector<16x1xi1>, vector<16x1xf32>
    %363 = tpu.reciprocal %362 {approx = true} : vector<16x1xf32> -> vector<16x1xf32>
    %364 = vector.extract_strided_slice %80 {offsets = [0, 1], sizes = [1, 1], strides = [1, 1]} : vector<1x4xf32> to vector<1x1xf32>
    %365 = vector.extract %364[0, 0] : f32 from vector<1x1xf32>
    %cst_114 = arith.constant 0.000000e+00 : f32
    %366 = vector.broadcast %cst_114 : f32 to vector<16x1xf32>
    %367 = arith.cmpf ogt, %358, %366 : vector<16x1xf32>
    %368 = vector.broadcast %363 : vector<16x1xf32> to vector<16x8xf32>
    %369 = arith.mulf %356, %368 : vector<16x8xf32>
    %cst_115 = arith.constant 1.250000e-01 : f32
    %370 = vector.shape_cast %367 : vector<16x1xi1> to vector<16x1xi1>
    %371 = vector.broadcast %370 : vector<16x1xi1> to vector<16x8xi1>
    %372 = vector.broadcast %cst_115 : f32 to vector<16x8xf32>
    %373 = arith.select %371, %369, %372 : vector<16x8xi1>, vector<16x8xf32>
    %374 = vector.broadcast %365 : f32 to vector<16x8xf32>
    %375 = arith.mulf %374, %373 : vector<16x8xf32>
    %376 = arith.addf %354, %375 : vector<16x8xf32>
    %377 = vector.broadcast %29 : vector<1x8xf32> to vector<16x8xf32>
    %378 = arith.mulf %331, %377 : vector<16x8xf32>
    %cst_116 = arith.constant dense<0.000000e+00> : vector<16xf32>
    %379 = vector.multi_reduction <add>, %378, %cst_116 [1] : vector<16x8xf32> to vector<16xf32>
    %380 = vector.shape_cast %379 : vector<16xf32> to vector<16x1xf32>
    %cst_117 = arith.constant 0.000000e+00 : f32
    %381 = vector.broadcast %cst_117 : f32 to vector<16x1xf32>
    %382 = arith.cmpf ogt, %380, %381 : vector<16x1xf32>
    %cst_118 = arith.constant 1.000000e+00 : f32
    %383 = vector.broadcast %cst_118 : f32 to vector<16x1xf32>
    %384 = arith.select %382, %380, %383 : vector<16x1xi1>, vector<16x1xf32>
    %385 = tpu.reciprocal %384 {approx = true} : vector<16x1xf32> -> vector<16x1xf32>
    %386 = vector.extract_strided_slice %80 {offsets = [0, 2], sizes = [1, 1], strides = [1, 1]} : vector<1x4xf32> to vector<1x1xf32>
    %387 = vector.extract %386[0, 0] : f32 from vector<1x1xf32>
    %cst_119 = arith.constant 0.000000e+00 : f32
    %388 = vector.broadcast %cst_119 : f32 to vector<16x1xf32>
    %389 = arith.cmpf ogt, %380, %388 : vector<16x1xf32>
    %390 = vector.broadcast %385 : vector<16x1xf32> to vector<16x8xf32>
    %391 = arith.mulf %378, %390 : vector<16x8xf32>
    %cst_120 = arith.constant 1.250000e-01 : f32
    %392 = vector.shape_cast %389 : vector<16x1xi1> to vector<16x1xi1>
    %393 = vector.broadcast %392 : vector<16x1xi1> to vector<16x8xi1>
    %394 = vector.broadcast %cst_120 : f32 to vector<16x8xf32>
    %395 = arith.select %393, %391, %394 : vector<16x8xi1>, vector<16x8xf32>
    %396 = vector.broadcast %387 : f32 to vector<16x8xf32>
    %397 = arith.mulf %396, %395 : vector<16x8xf32>
    %398 = arith.addf %376, %397 : vector<16x8xf32>
    %399 = vector.broadcast %35 : vector<1x8xf32> to vector<16x8xf32>
    %400 = arith.mulf %331, %399 : vector<16x8xf32>
    %cst_121 = arith.constant dense<0.000000e+00> : vector<16xf32>
    %401 = vector.multi_reduction <add>, %400, %cst_121 [1] : vector<16x8xf32> to vector<16xf32>
    %402 = vector.shape_cast %401 : vector<16xf32> to vector<16x1xf32>
    %cst_122 = arith.constant 0.000000e+00 : f32
    %403 = vector.broadcast %cst_122 : f32 to vector<16x1xf32>
    %404 = arith.cmpf ogt, %402, %403 : vector<16x1xf32>
    %cst_123 = arith.constant 1.000000e+00 : f32
    %405 = vector.broadcast %cst_123 : f32 to vector<16x1xf32>
    %406 = arith.select %404, %402, %405 : vector<16x1xi1>, vector<16x1xf32>
    %407 = tpu.reciprocal %406 {approx = true} : vector<16x1xf32> -> vector<16x1xf32>
    %408 = vector.extract_strided_slice %80 {offsets = [0, 3], sizes = [1, 1], strides = [1, 1]} : vector<1x4xf32> to vector<1x1xf32>
    %409 = vector.extract %408[0, 0] : f32 from vector<1x1xf32>
    %cst_124 = arith.constant 0.000000e+00 : f32
    %410 = vector.broadcast %cst_124 : f32 to vector<16x1xf32>
    %411 = arith.cmpf ogt, %402, %410 : vector<16x1xf32>
    %412 = vector.broadcast %407 : vector<16x1xf32> to vector<16x8xf32>
    %413 = arith.mulf %400, %412 : vector<16x8xf32>
    %cst_125 = arith.constant 1.250000e-01 : f32
    %414 = vector.shape_cast %411 : vector<16x1xi1> to vector<16x1xi1>
    %415 = vector.broadcast %414 : vector<16x1xi1> to vector<16x8xi1>
    %416 = vector.broadcast %cst_125 : f32 to vector<16x8xf32>
    %417 = arith.select %415, %413, %416 : vector<16x8xi1>, vector<16x8xf32>
    %418 = vector.broadcast %409 : f32 to vector<16x8xf32>
    %419 = arith.mulf %418, %417 : vector<16x8xf32>
    %420 = arith.addf %398, %419 : vector<16x8xf32>
    %421 = vector.broadcast %321 : vector<1x32xf32> to vector<8x32xf32>
    %422 = arith.mulf %92, %421 : vector<8x32xf32>
    %cst_126 = arith.constant dense<0.000000e+00> : vector<16x32xf32>
    %423 = tpu.matmul %420, %422, %cst_126 {dimension_numbers = #tpu.dot_dimension_numbers<[1], [0], [0], [1], [0, 0, 1, 1], [], []>} : vector<16x8xf32>, vector<8x32xf32>, vector<16x32xf32> -> vector<16x32xf32>
    %424 = arith.addf %314, %423 : vector<16x32xf32>
    %c24_i32_127 = arith.constant 24 : i32
    %425 = vector.broadcast %c24_i32_127 : i32 to vector<1x32xi32>
    %426 = arith.cmpi sge, %93, %425 : vector<1x32xi32>
    %c32_i32 = arith.constant 32 : i32
    %427 = vector.broadcast %c32_i32 : i32 to vector<1x32xi32>
    %428 = arith.cmpi slt, %93, %427 : vector<1x32xi32>
    %429 = arith.andi %426, %428 : vector<1x32xi1>
    %430 = arith.extui %429 : vector<1x32xi1> to vector<1x32xi32>
    %431 = arith.sitofp %430 : vector<1x32xi32> to vector<1x32xf32>
    %432 = vector.broadcast %431 : vector<1x32xf32> to vector<16x32xf32>
    %433 = arith.mulf %85, %432 : vector<16x32xf32>
    %cst_128 = arith.constant dense<0.000000e+00> : vector<16x8xf32>
    %434 = tpu.matmul %433, %91, %cst_128 {dimension_numbers = #tpu.dot_dimension_numbers<[1], [1], [0], [0], [0, 0, 1, 0], [], []>} : vector<16x32xf32>, vector<8x32xf32>, vector<16x8xf32> -> vector<16x8xf32>
    %cst_129 = arith.constant 0.353553385 : f32
    %435 = vector.broadcast %cst_129 : f32 to vector<16x8xf32>
    %436 = arith.mulf %434, %435 : vector<16x8xf32>
    %cst_130 = arith.constant dense<0xFF800000> : vector<16xf32>
    %437 = vector.multi_reduction <maximumf>, %436, %cst_130 [1] : vector<16x8xf32> to vector<16xf32>
    %438 = vector.shape_cast %437 : vector<16xf32> to vector<16x1xf32>
    %439 = vector.broadcast %438 : vector<16x1xf32> to vector<16x8xf32>
    %440 = arith.subf %436, %439 : vector<16x8xf32>
    %441 = math.exp %440 : vector<16x8xf32>
    %cst_131 = arith.constant 0.000000e+00 : f32
    %442 = vector.broadcast %cst_131 : f32 to vector<16x8xf32>
    %443 = vector.broadcast %17 : vector<1x8xf32> to vector<16x8xf32>
    %444 = arith.mulf %441, %443 : vector<16x8xf32>
    %cst_132 = arith.constant dense<0.000000e+00> : vector<16xf32>
    %445 = vector.multi_reduction <add>, %444, %cst_132 [1] : vector<16x8xf32> to vector<16xf32>
    %446 = vector.shape_cast %445 : vector<16xf32> to vector<16x1xf32>
    %cst_133 = arith.constant 0.000000e+00 : f32
    %447 = vector.broadcast %cst_133 : f32 to vector<16x1xf32>
    %448 = arith.cmpf ogt, %446, %447 : vector<16x1xf32>
    %cst_134 = arith.constant 1.000000e+00 : f32
    %449 = vector.broadcast %cst_134 : f32 to vector<16x1xf32>
    %450 = arith.select %448, %446, %449 : vector<16x1xi1>, vector<16x1xf32>
    %451 = tpu.reciprocal %450 {approx = true} : vector<16x1xf32> -> vector<16x1xf32>
    %452 = vector.extract_strided_slice %80 {offsets = [0, 0], sizes = [1, 1], strides = [1, 1]} : vector<1x4xf32> to vector<1x1xf32>
    %453 = vector.extract %452[0, 0] : f32 from vector<1x1xf32>
    %cst_135 = arith.constant 0.000000e+00 : f32
    %454 = vector.broadcast %cst_135 : f32 to vector<16x1xf32>
    %455 = arith.cmpf ogt, %446, %454 : vector<16x1xf32>
    %456 = vector.broadcast %451 : vector<16x1xf32> to vector<16x8xf32>
    %457 = arith.mulf %444, %456 : vector<16x8xf32>
    %cst_136 = arith.constant 1.250000e-01 : f32
    %458 = vector.shape_cast %455 : vector<16x1xi1> to vector<16x1xi1>
    %459 = vector.broadcast %458 : vector<16x1xi1> to vector<16x8xi1>
    %460 = vector.broadcast %cst_136 : f32 to vector<16x8xf32>
    %461 = arith.select %459, %457, %460 : vector<16x8xi1>, vector<16x8xf32>
    %462 = vector.broadcast %453 : f32 to vector<16x8xf32>
    %463 = arith.mulf %462, %461 : vector<16x8xf32>
    %464 = arith.addf %442, %463 : vector<16x8xf32>
    %465 = vector.broadcast %23 : vector<1x8xf32> to vector<16x8xf32>
    %466 = arith.mulf %441, %465 : vector<16x8xf32>
    %cst_137 = arith.constant dense<0.000000e+00> : vector<16xf32>
    %467 = vector.multi_reduction <add>, %466, %cst_137 [1] : vector<16x8xf32> to vector<16xf32>
    %468 = vector.shape_cast %467 : vector<16xf32> to vector<16x1xf32>
    %cst_138 = arith.constant 0.000000e+00 : f32
    %469 = vector.broadcast %cst_138 : f32 to vector<16x1xf32>
    %470 = arith.cmpf ogt, %468, %469 : vector<16x1xf32>
    %cst_139 = arith.constant 1.000000e+00 : f32
    %471 = vector.broadcast %cst_139 : f32 to vector<16x1xf32>
    %472 = arith.select %470, %468, %471 : vector<16x1xi1>, vector<16x1xf32>
    %473 = tpu.reciprocal %472 {approx = true} : vector<16x1xf32> -> vector<16x1xf32>
    %474 = vector.extract_strided_slice %80 {offsets = [0, 1], sizes = [1, 1], strides = [1, 1]} : vector<1x4xf32> to vector<1x1xf32>
    %475 = vector.extract %474[0, 0] : f32 from vector<1x1xf32>
    %cst_140 = arith.constant 0.000000e+00 : f32
    %476 = vector.broadcast %cst_140 : f32 to vector<16x1xf32>
    %477 = arith.cmpf ogt, %468, %476 : vector<16x1xf32>
    %478 = vector.broadcast %473 : vector<16x1xf32> to vector<16x8xf32>
    %479 = arith.mulf %466, %478 : vector<16x8xf32>
    %cst_141 = arith.constant 1.250000e-01 : f32
    %480 = vector.shape_cast %477 : vector<16x1xi1> to vector<16x1xi1>
    %481 = vector.broadcast %480 : vector<16x1xi1> to vector<16x8xi1>
    %482 = vector.broadcast %cst_141 : f32 to vector<16x8xf32>
    %483 = arith.select %481, %479, %482 : vector<16x8xi1>, vector<16x8xf32>
    %484 = vector.broadcast %475 : f32 to vector<16x8xf32>
    %485 = arith.mulf %484, %483 : vector<16x8xf32>
    %486 = arith.addf %464, %485 : vector<16x8xf32>
    %487 = vector.broadcast %29 : vector<1x8xf32> to vector<16x8xf32>
    %488 = arith.mulf %441, %487 : vector<16x8xf32>
    %cst_142 = arith.constant dense<0.000000e+00> : vector<16xf32>
    %489 = vector.multi_reduction <add>, %488, %cst_142 [1] : vector<16x8xf32> to vector<16xf32>
    %490 = vector.shape_cast %489 : vector<16xf32> to vector<16x1xf32>
    %cst_143 = arith.constant 0.000000e+00 : f32
    %491 = vector.broadcast %cst_143 : f32 to vector<16x1xf32>
    %492 = arith.cmpf ogt, %490, %491 : vector<16x1xf32>
    %cst_144 = arith.constant 1.000000e+00 : f32
    %493 = vector.broadcast %cst_144 : f32 to vector<16x1xf32>
    %494 = arith.select %492, %490, %493 : vector<16x1xi1>, vector<16x1xf32>
    %495 = tpu.reciprocal %494 {approx = true} : vector<16x1xf32> -> vector<16x1xf32>
    %496 = vector.extract_strided_slice %80 {offsets = [0, 2], sizes = [1, 1], strides = [1, 1]} : vector<1x4xf32> to vector<1x1xf32>
    %497 = vector.extract %496[0, 0] : f32 from vector<1x1xf32>
    %cst_145 = arith.constant 0.000000e+00 : f32
    %498 = vector.broadcast %cst_145 : f32 to vector<16x1xf32>
    %499 = arith.cmpf ogt, %490, %498 : vector<16x1xf32>
    %500 = vector.broadcast %495 : vector<16x1xf32> to vector<16x8xf32>
    %501 = arith.mulf %488, %500 : vector<16x8xf32>
    %cst_146 = arith.constant 1.250000e-01 : f32
    %502 = vector.shape_cast %499 : vector<16x1xi1> to vector<16x1xi1>
    %503 = vector.broadcast %502 : vector<16x1xi1> to vector<16x8xi1>
    %504 = vector.broadcast %cst_146 : f32 to vector<16x8xf32>
    %505 = arith.select %503, %501, %504 : vector<16x8xi1>, vector<16x8xf32>
    %506 = vector.broadcast %497 : f32 to vector<16x8xf32>
    %507 = arith.mulf %506, %505 : vector<16x8xf32>
    %508 = arith.addf %486, %507 : vector<16x8xf32>
    %509 = vector.broadcast %35 : vector<1x8xf32> to vector<16x8xf32>
    %510 = arith.mulf %441, %509 : vector<16x8xf32>
    %cst_147 = arith.constant dense<0.000000e+00> : vector<16xf32>
    %511 = vector.multi_reduction <add>, %510, %cst_147 [1] : vector<16x8xf32> to vector<16xf32>
    %512 = vector.shape_cast %511 : vector<16xf32> to vector<16x1xf32>
    %cst_148 = arith.constant 0.000000e+00 : f32
    %513 = vector.broadcast %cst_148 : f32 to vector<16x1xf32>
    %514 = arith.cmpf ogt, %512, %513 : vector<16x1xf32>
    %cst_149 = arith.constant 1.000000e+00 : f32
    %515 = vector.broadcast %cst_149 : f32 to vector<16x1xf32>
    %516 = arith.select %514, %512, %515 : vector<16x1xi1>, vector<16x1xf32>
    %517 = tpu.reciprocal %516 {approx = true} : vector<16x1xf32> -> vector<16x1xf32>
    %518 = vector.extract_strided_slice %80 {offsets = [0, 3], sizes = [1, 1], strides = [1, 1]} : vector<1x4xf32> to vector<1x1xf32>
    %519 = vector.extract %518[0, 0] : f32 from vector<1x1xf32>
    %cst_150 = arith.constant 0.000000e+00 : f32
    %520 = vector.broadcast %cst_150 : f32 to vector<16x1xf32>
    %521 = arith.cmpf ogt, %512, %520 : vector<16x1xf32>
    %522 = vector.broadcast %517 : vector<16x1xf32> to vector<16x8xf32>
    %523 = arith.mulf %510, %522 : vector<16x8xf32>
    %cst_151 = arith.constant 1.250000e-01 : f32
    %524 = vector.shape_cast %521 : vector<16x1xi1> to vector<16x1xi1>
    %525 = vector.broadcast %524 : vector<16x1xi1> to vector<16x8xi1>
    %526 = vector.broadcast %cst_151 : f32 to vector<16x8xf32>
    %527 = arith.select %525, %523, %526 : vector<16x8xi1>, vector<16x8xf32>
    %528 = vector.broadcast %519 : f32 to vector<16x8xf32>
    %529 = arith.mulf %528, %527 : vector<16x8xf32>
    %530 = arith.addf %508, %529 : vector<16x8xf32>
    %531 = vector.broadcast %431 : vector<1x32xf32> to vector<8x32xf32>
    %532 = arith.mulf %92, %531 : vector<8x32xf32>
    %cst_152 = arith.constant dense<0.000000e+00> : vector<16x32xf32>
    %533 = tpu.matmul %530, %532, %cst_152 {dimension_numbers = #tpu.dot_dimension_numbers<[1], [0], [0], [1], [0, 0, 1, 1], [], []>} : vector<16x8xf32>, vector<8x32xf32>, vector<16x32xf32> -> vector<16x32xf32>
    %534 = arith.addf %424, %533 : vector<16x32xf32>
    %c0_153 = arith.constant 0 : index
    %c0_154 = arith.constant 0 : index
    %535 = vector.load %arg11[%c0_153, %c0_154] : memref<32x32xf32, #tpu.memory_space<vmem>>, vector<32x32xf32>
    %cst_155 = arith.constant dense<0.000000e+00> : vector<16x32xf32>
    %536 = tpu.matmul %534, %535, %cst_155 {dimension_numbers = #tpu.dot_dimension_numbers<[1], [0], [0], [1], [0, 0, 1, 1], [], []>} : vector<16x32xf32>, vector<32x32xf32>, vector<16x32xf32> -> vector<16x32xf32>
    %537 = arith.addf %1, %536 : vector<16x32xf32>
    %c0_156 = arith.constant 0 : index
    %c0_157 = arith.constant 0 : index
    %538 = vector.load %arg12[%c0_156, %c0_157] : memref<1x32xf32, #tpu.memory_space<vmem>>, vector<1x32xf32>
    %539 = vector.broadcast %538 : vector<1x32xf32> to vector<16x32xf32>
    %540 = arith.addf %537, %539 : vector<16x32xf32>
    %541 = vector.extract_strided_slice %10 {offsets = [0, 0], sizes = [1, 32], strides = [1, 1]} : vector<4x32xf32> to vector<1x32xf32>
    %542 = vector.extract_strided_slice %11 {offsets = [0, 0], sizes = [1, 32], strides = [1, 1]} : vector<4x32xf32> to vector<1x32xf32>
    %cst_158 = arith.constant dense<0.000000e+00> : vector<16xf32>
    %543 = vector.multi_reduction <add>, %540, %cst_158 [1] : vector<16x32xf32> to vector<16xf32>
    %544 = vector.shape_cast %543 : vector<16xf32> to vector<16x1xf32>
    %cst_159 = arith.constant 3.200000e+01 : f32
    %545 = vector.broadcast %cst_159 : f32 to vector<16x1xf32>
    %546 = arith.divf %544, %545 : vector<16x1xf32>
    %547 = vector.broadcast %546 : vector<16x1xf32> to vector<16x32xf32>
    %548 = arith.subf %540, %547 : vector<16x32xf32>
    %549 = arith.mulf %548, %548 : vector<16x32xf32>
    %cst_160 = arith.constant dense<0.000000e+00> : vector<16xf32>
    %550 = vector.multi_reduction <add>, %549, %cst_160 [1] : vector<16x32xf32> to vector<16xf32>
    %551 = vector.shape_cast %550 : vector<16xf32> to vector<16x1xf32>
    %cst_161 = arith.constant 0.0322580636 : f32
    %552 = vector.broadcast %cst_161 : f32 to vector<16x1xf32>
    %553 = arith.mulf %551, %552 : vector<16x1xf32>
    %554 = math.sqrt %553 : vector<16x1xf32>
    %cst_162 = arith.constant 9.99999997E-7 : f32
    %555 = vector.broadcast %cst_162 : f32 to vector<16x1xf32>
    %556 = arith.addf %554, %555 : vector<16x1xf32>
    %557 = vector.broadcast %556 : vector<16x1xf32> to vector<16x32xf32>
    %558 = arith.divf %548, %557 : vector<16x32xf32>
    %559 = vector.broadcast %541 : vector<1x32xf32> to vector<16x32xf32>
    %560 = arith.mulf %559, %558 : vector<16x32xf32>
    %561 = vector.broadcast %542 : vector<1x32xf32> to vector<16x32xf32>
    %562 = arith.addf %560, %561 : vector<16x32xf32>
    %c0_163 = arith.constant 0 : index
    %c0_164 = arith.constant 0 : index
    %563 = vector.load %arg22[%c0_163, %c0_164] : memref<32x16xf32, #tpu.memory_space<vmem>>, vector<32x16xf32>
    %c0_165 = arith.constant 0 : index
    %c0_166 = arith.constant 0 : index
    %564 = vector.load %arg23[%c0_165, %c0_166] : memref<16x4xf32, #tpu.memory_space<vmem>>, vector<16x4xf32>
    %c0_167 = arith.constant 0 : index
    %c0_168 = arith.constant 0 : index
    %565 = vector.load %arg24[%c0_167, %c0_168] : memref<1x4xf32, #tpu.memory_space<vmem>>, vector<1x4xf32>
    %cst_169 = arith.constant dense<0.000000e+00> : vector<32xf32>
    %566 = vector.multi_reduction <add>, %562, %cst_169 [0] : vector<16x32xf32> to vector<32xf32>
    %567 = vector.shape_cast %566 : vector<32xf32> to vector<1x32xf32>
    %cst_170 = arith.constant 1.600000e+01 : f32
    %568 = vector.broadcast %cst_170 : f32 to vector<1x32xf32>
    %569 = arith.divf %567, %568 : vector<1x32xf32>
    %cst_171 = arith.constant dense<0.000000e+00> : vector<1x16xf32>
    %570 = tpu.matmul %569, %563, %cst_171 {dimension_numbers = #tpu.dot_dimension_numbers<[1], [0], [0], [1], [0, 0, 1, 1], [], []>} : vector<1x32xf32>, vector<32x16xf32>, vector<1x16xf32> -> vector<1x16xf32>
    %cst_172 = arith.constant 0.000000e+00 : f32
    %571 = vector.broadcast %cst_172 : f32 to vector<1x16xf32>
    %572 = arith.maximumf %570, %571 : vector<1x16xf32>
    %cst_173 = arith.constant dense<0.000000e+00> : vector<1x4xf32>
    %573 = tpu.matmul %572, %564, %cst_173 {dimension_numbers = #tpu.dot_dimension_numbers<[1], [0], [0], [1], [0, 0, 1, 1], [], []>} : vector<1x16xf32>, vector<16x4xf32>, vector<1x4xf32> -> vector<1x4xf32>
    %574 = arith.addf %573, %565 : vector<1x4xf32>
    %cst_174 = arith.constant dense<0xFF800000> : vector<1xf32>
    %575 = vector.multi_reduction <maximumf>, %574, %cst_174 [1] : vector<1x4xf32> to vector<1xf32>
    %576 = vector.shape_cast %575 : vector<1xf32> to vector<1x1xf32>
    %577 = vector.broadcast %576 : vector<1x1xf32> to vector<1x4xf32>
    %578 = arith.subf %574, %577 : vector<1x4xf32>
    %579 = math.exp %578 : vector<1x4xf32>
    %cst_175 = arith.constant dense<0.000000e+00> : vector<1xf32>
    %580 = vector.multi_reduction <add>, %579, %cst_175 [1] : vector<1x4xf32> to vector<1xf32>
    %581 = vector.shape_cast %580 : vector<1xf32> to vector<1x1xf32>
    %582 = vector.broadcast %581 : vector<1x1xf32> to vector<1x4xf32>
    %583 = arith.divf %579, %582 : vector<1x4xf32>
    %c0_176 = arith.constant 0 : index
    %c0_177 = arith.constant 0 : index
    %584 = vector.load %arg16[%c0_176, %c0_177] : memref<32x32xf32, #tpu.memory_space<vmem>>, vector<32x32xf32>
    %cst_178 = arith.constant dense<0.000000e+00> : vector<8x32xf32>
    %585 = tpu.matmul %3, %584, %cst_178 {dimension_numbers = #tpu.dot_dimension_numbers<[1], [0], [0], [1], [0, 0, 1, 1], [], []>} : vector<8x32xf32>, vector<32x32xf32>, vector<8x32xf32> -> vector<8x32xf32>
    %c0_179 = arith.constant 0 : index
    %c0_180 = arith.constant 0 : index
    %586 = vector.load %arg17[%c0_179, %c0_180] : memref<1x32xf32, #tpu.memory_space<vmem>>, vector<1x32xf32>
    %587 = vector.broadcast %586 : vector<1x32xf32> to vector<8x32xf32>
    %588 = arith.addf %585, %587 : vector<8x32xf32>
    %c0_181 = arith.constant 0 : index
    %c0_182 = arith.constant 0 : index
    %589 = vector.load %arg18[%c0_181, %c0_182] : memref<32x64xf32, #tpu.memory_space<vmem>>, vector<32x64xf32>
    %cst_183 = arith.constant dense<0.000000e+00> : vector<16x64xf32>
    %590 = tpu.matmul %562, %589, %cst_183 {dimension_numbers = #tpu.dot_dimension_numbers<[1], [0], [0], [1], [0, 0, 1, 1], [], []>} : vector<16x32xf32>, vector<32x64xf32>, vector<16x64xf32> -> vector<16x64xf32>
    %c0_184 = arith.constant 0 : index
    %c0_185 = arith.constant 0 : index
    %591 = vector.load %arg19[%c0_184, %c0_185] : memref<1x64xf32, #tpu.memory_space<vmem>>, vector<1x64xf32>
    %592 = vector.broadcast %591 : vector<1x64xf32> to vector<16x64xf32>
    %593 = arith.addf %590, %592 : vector<16x64xf32>
    %594 = vector.extract_strided_slice %593 {offsets = [0, 0], sizes = [16, 32], strides = [1, 1]} : vector<16x64xf32> to vector<16x32xf32>
    %595 = vector.extract_strided_slice %593 {offsets = [0, 32], sizes = [16, 32], strides = [1, 1]} : vector<16x64xf32> to vector<16x32xf32>
    %596 = tpu.iota {dimensions = array<i32: 1>} : vector<1x32xi32>
    %cst_186 = arith.constant 0.000000e+00 : f32
    %597 = vector.broadcast %cst_186 : f32 to vector<8x32xf32>
    %c0_i32_187 = arith.constant 0 : i32
    %598 = vector.broadcast %c0_i32_187 : i32 to vector<1x32xi32>
    %599 = arith.cmpi sge, %596, %598 : vector<1x32xi32>
    %c8_i32_188 = arith.constant 8 : i32
    %600 = vector.broadcast %c8_i32_188 : i32 to vector<1x32xi32>
    %601 = arith.cmpi slt, %596, %600 : vector<1x32xi32>
    %602 = arith.andi %599, %601 : vector<1x32xi1>
    %603 = arith.extui %602 : vector<1x32xi1> to vector<1x32xi32>
    %604 = arith.sitofp %603 : vector<1x32xi32> to vector<1x32xf32>
    %605 = vector.broadcast %604 : vector<1x32xf32> to vector<8x32xf32>
    %606 = arith.mulf %588, %605 : vector<8x32xf32>
    %cst_189 = arith.constant dense<0.000000e+00> : vector<8x16xf32>
    %607 = tpu.matmul %606, %594, %cst_189 {dimension_numbers = #tpu.dot_dimension_numbers<[1], [1], [0], [0], [0, 0, 1, 0], [], []>} : vector<8x32xf32>, vector<16x32xf32>, vector<8x16xf32> -> vector<8x16xf32>
    %cst_190 = arith.constant 0.353553385 : f32
    %608 = vector.broadcast %cst_190 : f32 to vector<8x16xf32>
    %609 = arith.mulf %607, %608 : vector<8x16xf32>
    %cst_191 = arith.constant dense<0xFF800000> : vector<8xf32>
    %610 = vector.multi_reduction <maximumf>, %609, %cst_191 [1] : vector<8x16xf32> to vector<8xf32>
    %611 = vector.shape_cast %610 : vector<8xf32> to vector<8x1xf32>
    %612 = vector.broadcast %611 : vector<8x1xf32> to vector<8x16xf32>
    %613 = arith.subf %609, %612 : vector<8x16xf32>
    %614 = math.exp %613 : vector<8x16xf32>
    %cst_192 = arith.constant 0.000000e+00 : f32
    %615 = vector.broadcast %cst_192 : f32 to vector<8x16xf32>
    %616 = vector.broadcast %41 : vector<1x16xf32> to vector<8x16xf32>
    %617 = arith.mulf %614, %616 : vector<8x16xf32>
    %cst_193 = arith.constant dense<0.000000e+00> : vector<8xf32>
    %618 = vector.multi_reduction <add>, %617, %cst_193 [1] : vector<8x16xf32> to vector<8xf32>
    %619 = vector.shape_cast %618 : vector<8xf32> to vector<8x1xf32>
    %cst_194 = arith.constant 0.000000e+00 : f32
    %620 = vector.broadcast %cst_194 : f32 to vector<8x1xf32>
    %621 = arith.cmpf ogt, %619, %620 : vector<8x1xf32>
    %cst_195 = arith.constant 1.000000e+00 : f32
    %622 = vector.broadcast %cst_195 : f32 to vector<8x1xf32>
    %623 = arith.select %621, %619, %622 : vector<8x1xi1>, vector<8x1xf32>
    %624 = tpu.reciprocal %623 {approx = true} : vector<8x1xf32> -> vector<8x1xf32>
    %625 = vector.extract_strided_slice %583 {offsets = [0, 0], sizes = [1, 1], strides = [1, 1]} : vector<1x4xf32> to vector<1x1xf32>
    %626 = vector.extract %625[0, 0] : f32 from vector<1x1xf32>
    %cst_196 = arith.constant 0.000000e+00 : f32
    %627 = vector.broadcast %cst_196 : f32 to vector<8x1xf32>
    %628 = arith.cmpf ogt, %619, %627 : vector<8x1xf32>
    %629 = vector.broadcast %624 : vector<8x1xf32> to vector<8x16xf32>
    %630 = arith.mulf %617, %629 : vector<8x16xf32>
    %cst_197 = arith.constant 6.250000e-02 : f32
    %631 = vector.shape_cast %628 : vector<8x1xi1> to vector<8x1xi1>
    %632 = vector.broadcast %631 : vector<8x1xi1> to vector<8x16xi1>
    %633 = vector.broadcast %cst_197 : f32 to vector<8x16xf32>
    %634 = arith.select %632, %630, %633 : vector<8x16xi1>, vector<8x16xf32>
    %635 = vector.broadcast %626 : f32 to vector<8x16xf32>
    %636 = arith.mulf %635, %634 : vector<8x16xf32>
    %637 = arith.addf %615, %636 : vector<8x16xf32>
    %638 = vector.broadcast %47 : vector<1x16xf32> to vector<8x16xf32>
    %639 = arith.mulf %614, %638 : vector<8x16xf32>
    %cst_198 = arith.constant dense<0.000000e+00> : vector<8xf32>
    %640 = vector.multi_reduction <add>, %639, %cst_198 [1] : vector<8x16xf32> to vector<8xf32>
    %641 = vector.shape_cast %640 : vector<8xf32> to vector<8x1xf32>
    %cst_199 = arith.constant 0.000000e+00 : f32
    %642 = vector.broadcast %cst_199 : f32 to vector<8x1xf32>
    %643 = arith.cmpf ogt, %641, %642 : vector<8x1xf32>
    %cst_200 = arith.constant 1.000000e+00 : f32
    %644 = vector.broadcast %cst_200 : f32 to vector<8x1xf32>
    %645 = arith.select %643, %641, %644 : vector<8x1xi1>, vector<8x1xf32>
    %646 = tpu.reciprocal %645 {approx = true} : vector<8x1xf32> -> vector<8x1xf32>
    %647 = vector.extract_strided_slice %583 {offsets = [0, 1], sizes = [1, 1], strides = [1, 1]} : vector<1x4xf32> to vector<1x1xf32>
    %648 = vector.extract %647[0, 0] : f32 from vector<1x1xf32>
    %cst_201 = arith.constant 0.000000e+00 : f32
    %649 = vector.broadcast %cst_201 : f32 to vector<8x1xf32>
    %650 = arith.cmpf ogt, %641, %649 : vector<8x1xf32>
    %651 = vector.broadcast %646 : vector<8x1xf32> to vector<8x16xf32>
    %652 = arith.mulf %639, %651 : vector<8x16xf32>
    %cst_202 = arith.constant 6.250000e-02 : f32
    %653 = vector.shape_cast %650 : vector<8x1xi1> to vector<8x1xi1>
    %654 = vector.broadcast %653 : vector<8x1xi1> to vector<8x16xi1>
    %655 = vector.broadcast %cst_202 : f32 to vector<8x16xf32>
    %656 = arith.select %654, %652, %655 : vector<8x16xi1>, vector<8x16xf32>
    %657 = vector.broadcast %648 : f32 to vector<8x16xf32>
    %658 = arith.mulf %657, %656 : vector<8x16xf32>
    %659 = arith.addf %637, %658 : vector<8x16xf32>
    %660 = vector.broadcast %53 : vector<1x16xf32> to vector<8x16xf32>
    %661 = arith.mulf %614, %660 : vector<8x16xf32>
    %cst_203 = arith.constant dense<0.000000e+00> : vector<8xf32>
    %662 = vector.multi_reduction <add>, %661, %cst_203 [1] : vector<8x16xf32> to vector<8xf32>
    %663 = vector.shape_cast %662 : vector<8xf32> to vector<8x1xf32>
    %cst_204 = arith.constant 0.000000e+00 : f32
    %664 = vector.broadcast %cst_204 : f32 to vector<8x1xf32>
    %665 = arith.cmpf ogt, %663, %664 : vector<8x1xf32>
    %cst_205 = arith.constant 1.000000e+00 : f32
    %666 = vector.broadcast %cst_205 : f32 to vector<8x1xf32>
    %667 = arith.select %665, %663, %666 : vector<8x1xi1>, vector<8x1xf32>
    %668 = tpu.reciprocal %667 {approx = true} : vector<8x1xf32> -> vector<8x1xf32>
    %669 = vector.extract_strided_slice %583 {offsets = [0, 2], sizes = [1, 1], strides = [1, 1]} : vector<1x4xf32> to vector<1x1xf32>
    %670 = vector.extract %669[0, 0] : f32 from vector<1x1xf32>
    %cst_206 = arith.constant 0.000000e+00 : f32
    %671 = vector.broadcast %cst_206 : f32 to vector<8x1xf32>
    %672 = arith.cmpf ogt, %663, %671 : vector<8x1xf32>
    %673 = vector.broadcast %668 : vector<8x1xf32> to vector<8x16xf32>
    %674 = arith.mulf %661, %673 : vector<8x16xf32>
    %cst_207 = arith.constant 6.250000e-02 : f32
    %675 = vector.shape_cast %672 : vector<8x1xi1> to vector<8x1xi1>
    %676 = vector.broadcast %675 : vector<8x1xi1> to vector<8x16xi1>
    %677 = vector.broadcast %cst_207 : f32 to vector<8x16xf32>
    %678 = arith.select %676, %674, %677 : vector<8x16xi1>, vector<8x16xf32>
    %679 = vector.broadcast %670 : f32 to vector<8x16xf32>
    %680 = arith.mulf %679, %678 : vector<8x16xf32>
    %681 = arith.addf %659, %680 : vector<8x16xf32>
    %682 = vector.broadcast %59 : vector<1x16xf32> to vector<8x16xf32>
    %683 = arith.mulf %614, %682 : vector<8x16xf32>
    %cst_208 = arith.constant dense<0.000000e+00> : vector<8xf32>
    %684 = vector.multi_reduction <add>, %683, %cst_208 [1] : vector<8x16xf32> to vector<8xf32>
    %685 = vector.shape_cast %684 : vector<8xf32> to vector<8x1xf32>
    %cst_209 = arith.constant 0.000000e+00 : f32
    %686 = vector.broadcast %cst_209 : f32 to vector<8x1xf32>
    %687 = arith.cmpf ogt, %685, %686 : vector<8x1xf32>
    %cst_210 = arith.constant 1.000000e+00 : f32
    %688 = vector.broadcast %cst_210 : f32 to vector<8x1xf32>
    %689 = arith.select %687, %685, %688 : vector<8x1xi1>, vector<8x1xf32>
    %690 = tpu.reciprocal %689 {approx = true} : vector<8x1xf32> -> vector<8x1xf32>
    %691 = vector.extract_strided_slice %583 {offsets = [0, 3], sizes = [1, 1], strides = [1, 1]} : vector<1x4xf32> to vector<1x1xf32>
    %692 = vector.extract %691[0, 0] : f32 from vector<1x1xf32>
    %cst_211 = arith.constant 0.000000e+00 : f32
    %693 = vector.broadcast %cst_211 : f32 to vector<8x1xf32>
    %694 = arith.cmpf ogt, %685, %693 : vector<8x1xf32>
    %695 = vector.broadcast %690 : vector<8x1xf32> to vector<8x16xf32>
    %696 = arith.mulf %683, %695 : vector<8x16xf32>
    %cst_212 = arith.constant 6.250000e-02 : f32
    %697 = vector.shape_cast %694 : vector<8x1xi1> to vector<8x1xi1>
    %698 = vector.broadcast %697 : vector<8x1xi1> to vector<8x16xi1>
    %699 = vector.broadcast %cst_212 : f32 to vector<8x16xf32>
    %700 = arith.select %698, %696, %699 : vector<8x16xi1>, vector<8x16xf32>
    %701 = vector.broadcast %692 : f32 to vector<8x16xf32>
    %702 = arith.mulf %701, %700 : vector<8x16xf32>
    %703 = arith.addf %681, %702 : vector<8x16xf32>
    %704 = vector.broadcast %604 : vector<1x32xf32> to vector<16x32xf32>
    %705 = arith.mulf %595, %704 : vector<16x32xf32>
    %cst_213 = arith.constant dense<0.000000e+00> : vector<8x32xf32>
    %706 = tpu.matmul %703, %705, %cst_213 {dimension_numbers = #tpu.dot_dimension_numbers<[1], [0], [0], [1], [0, 0, 1, 1], [], []>} : vector<8x16xf32>, vector<16x32xf32>, vector<8x32xf32> -> vector<8x32xf32>
    %707 = arith.addf %597, %706 : vector<8x32xf32>
    %c8_i32_214 = arith.constant 8 : i32
    %708 = vector.broadcast %c8_i32_214 : i32 to vector<1x32xi32>
    %709 = arith.cmpi sge, %596, %708 : vector<1x32xi32>
    %c16_i32_215 = arith.constant 16 : i32
    %710 = vector.broadcast %c16_i32_215 : i32 to vector<1x32xi32>
    %711 = arith.cmpi slt, %596, %710 : vector<1x32xi32>
    %712 = arith.andi %709, %711 : vector<1x32xi1>
    %713 = arith.extui %712 : vector<1x32xi1> to vector<1x32xi32>
    %714 = arith.sitofp %713 : vector<1x32xi32> to vector<1x32xf32>
    %715 = vector.broadcast %714 : vector<1x32xf32> to vector<8x32xf32>
    %716 = arith.mulf %588, %715 : vector<8x32xf32>
    %cst_216 = arith.constant dense<0.000000e+00> : vector<8x16xf32>
    %717 = tpu.matmul %716, %594, %cst_216 {dimension_numbers = #tpu.dot_dimension_numbers<[1], [1], [0], [0], [0, 0, 1, 0], [], []>} : vector<8x32xf32>, vector<16x32xf32>, vector<8x16xf32> -> vector<8x16xf32>
    %cst_217 = arith.constant 0.353553385 : f32
    %718 = vector.broadcast %cst_217 : f32 to vector<8x16xf32>
    %719 = arith.mulf %717, %718 : vector<8x16xf32>
    %cst_218 = arith.constant dense<0xFF800000> : vector<8xf32>
    %720 = vector.multi_reduction <maximumf>, %719, %cst_218 [1] : vector<8x16xf32> to vector<8xf32>
    %721 = vector.shape_cast %720 : vector<8xf32> to vector<8x1xf32>
    %722 = vector.broadcast %721 : vector<8x1xf32> to vector<8x16xf32>
    %723 = arith.subf %719, %722 : vector<8x16xf32>
    %724 = math.exp %723 : vector<8x16xf32>
    %cst_219 = arith.constant 0.000000e+00 : f32
    %725 = vector.broadcast %cst_219 : f32 to vector<8x16xf32>
    %726 = vector.broadcast %41 : vector<1x16xf32> to vector<8x16xf32>
    %727 = arith.mulf %724, %726 : vector<8x16xf32>
    %cst_220 = arith.constant dense<0.000000e+00> : vector<8xf32>
    %728 = vector.multi_reduction <add>, %727, %cst_220 [1] : vector<8x16xf32> to vector<8xf32>
    %729 = vector.shape_cast %728 : vector<8xf32> to vector<8x1xf32>
    %cst_221 = arith.constant 0.000000e+00 : f32
    %730 = vector.broadcast %cst_221 : f32 to vector<8x1xf32>
    %731 = arith.cmpf ogt, %729, %730 : vector<8x1xf32>
    %cst_222 = arith.constant 1.000000e+00 : f32
    %732 = vector.broadcast %cst_222 : f32 to vector<8x1xf32>
    %733 = arith.select %731, %729, %732 : vector<8x1xi1>, vector<8x1xf32>
    %734 = tpu.reciprocal %733 {approx = true} : vector<8x1xf32> -> vector<8x1xf32>
    %735 = vector.extract_strided_slice %583 {offsets = [0, 0], sizes = [1, 1], strides = [1, 1]} : vector<1x4xf32> to vector<1x1xf32>
    %736 = vector.extract %735[0, 0] : f32 from vector<1x1xf32>
    %cst_223 = arith.constant 0.000000e+00 : f32
    %737 = vector.broadcast %cst_223 : f32 to vector<8x1xf32>
    %738 = arith.cmpf ogt, %729, %737 : vector<8x1xf32>
    %739 = vector.broadcast %734 : vector<8x1xf32> to vector<8x16xf32>
    %740 = arith.mulf %727, %739 : vector<8x16xf32>
    %cst_224 = arith.constant 6.250000e-02 : f32
    %741 = vector.shape_cast %738 : vector<8x1xi1> to vector<8x1xi1>
    %742 = vector.broadcast %741 : vector<8x1xi1> to vector<8x16xi1>
    %743 = vector.broadcast %cst_224 : f32 to vector<8x16xf32>
    %744 = arith.select %742, %740, %743 : vector<8x16xi1>, vector<8x16xf32>
    %745 = vector.broadcast %736 : f32 to vector<8x16xf32>
    %746 = arith.mulf %745, %744 : vector<8x16xf32>
    %747 = arith.addf %725, %746 : vector<8x16xf32>
    %748 = vector.broadcast %47 : vector<1x16xf32> to vector<8x16xf32>
    %749 = arith.mulf %724, %748 : vector<8x16xf32>
    %cst_225 = arith.constant dense<0.000000e+00> : vector<8xf32>
    %750 = vector.multi_reduction <add>, %749, %cst_225 [1] : vector<8x16xf32> to vector<8xf32>
    %751 = vector.shape_cast %750 : vector<8xf32> to vector<8x1xf32>
    %cst_226 = arith.constant 0.000000e+00 : f32
    %752 = vector.broadcast %cst_226 : f32 to vector<8x1xf32>
    %753 = arith.cmpf ogt, %751, %752 : vector<8x1xf32>
    %cst_227 = arith.constant 1.000000e+00 : f32
    %754 = vector.broadcast %cst_227 : f32 to vector<8x1xf32>
    %755 = arith.select %753, %751, %754 : vector<8x1xi1>, vector<8x1xf32>
    %756 = tpu.reciprocal %755 {approx = true} : vector<8x1xf32> -> vector<8x1xf32>
    %757 = vector.extract_strided_slice %583 {offsets = [0, 1], sizes = [1, 1], strides = [1, 1]} : vector<1x4xf32> to vector<1x1xf32>
    %758 = vector.extract %757[0, 0] : f32 from vector<1x1xf32>
    %cst_228 = arith.constant 0.000000e+00 : f32
    %759 = vector.broadcast %cst_228 : f32 to vector<8x1xf32>
    %760 = arith.cmpf ogt, %751, %759 : vector<8x1xf32>
    %761 = vector.broadcast %756 : vector<8x1xf32> to vector<8x16xf32>
    %762 = arith.mulf %749, %761 : vector<8x16xf32>
    %cst_229 = arith.constant 6.250000e-02 : f32
    %763 = vector.shape_cast %760 : vector<8x1xi1> to vector<8x1xi1>
    %764 = vector.broadcast %763 : vector<8x1xi1> to vector<8x16xi1>
    %765 = vector.broadcast %cst_229 : f32 to vector<8x16xf32>
    %766 = arith.select %764, %762, %765 : vector<8x16xi1>, vector<8x16xf32>
    %767 = vector.broadcast %758 : f32 to vector<8x16xf32>
    %768 = arith.mulf %767, %766 : vector<8x16xf32>
    %769 = arith.addf %747, %768 : vector<8x16xf32>
    %770 = vector.broadcast %53 : vector<1x16xf32> to vector<8x16xf32>
    %771 = arith.mulf %724, %770 : vector<8x16xf32>
    %cst_230 = arith.constant dense<0.000000e+00> : vector<8xf32>
    %772 = vector.multi_reduction <add>, %771, %cst_230 [1] : vector<8x16xf32> to vector<8xf32>
    %773 = vector.shape_cast %772 : vector<8xf32> to vector<8x1xf32>
    %cst_231 = arith.constant 0.000000e+00 : f32
    %774 = vector.broadcast %cst_231 : f32 to vector<8x1xf32>
    %775 = arith.cmpf ogt, %773, %774 : vector<8x1xf32>
    %cst_232 = arith.constant 1.000000e+00 : f32
    %776 = vector.broadcast %cst_232 : f32 to vector<8x1xf32>
    %777 = arith.select %775, %773, %776 : vector<8x1xi1>, vector<8x1xf32>
    %778 = tpu.reciprocal %777 {approx = true} : vector<8x1xf32> -> vector<8x1xf32>
    %779 = vector.extract_strided_slice %583 {offsets = [0, 2], sizes = [1, 1], strides = [1, 1]} : vector<1x4xf32> to vector<1x1xf32>
    %780 = vector.extract %779[0, 0] : f32 from vector<1x1xf32>
    %cst_233 = arith.constant 0.000000e+00 : f32
    %781 = vector.broadcast %cst_233 : f32 to vector<8x1xf32>
    %782 = arith.cmpf ogt, %773, %781 : vector<8x1xf32>
    %783 = vector.broadcast %778 : vector<8x1xf32> to vector<8x16xf32>
    %784 = arith.mulf %771, %783 : vector<8x16xf32>
    %cst_234 = arith.constant 6.250000e-02 : f32
    %785 = vector.shape_cast %782 : vector<8x1xi1> to vector<8x1xi1>
    %786 = vector.broadcast %785 : vector<8x1xi1> to vector<8x16xi1>
    %787 = vector.broadcast %cst_234 : f32 to vector<8x16xf32>
    %788 = arith.select %786, %784, %787 : vector<8x16xi1>, vector<8x16xf32>
    %789 = vector.broadcast %780 : f32 to vector<8x16xf32>
    %790 = arith.mulf %789, %788 : vector<8x16xf32>
    %791 = arith.addf %769, %790 : vector<8x16xf32>
    %792 = vector.broadcast %59 : vector<1x16xf32> to vector<8x16xf32>
    %793 = arith.mulf %724, %792 : vector<8x16xf32>
    %cst_235 = arith.constant dense<0.000000e+00> : vector<8xf32>
    %794 = vector.multi_reduction <add>, %793, %cst_235 [1] : vector<8x16xf32> to vector<8xf32>
    %795 = vector.shape_cast %794 : vector<8xf32> to vector<8x1xf32>
    %cst_236 = arith.constant 0.000000e+00 : f32
    %796 = vector.broadcast %cst_236 : f32 to vector<8x1xf32>
    %797 = arith.cmpf ogt, %795, %796 : vector<8x1xf32>
    %cst_237 = arith.constant 1.000000e+00 : f32
    %798 = vector.broadcast %cst_237 : f32 to vector<8x1xf32>
    %799 = arith.select %797, %795, %798 : vector<8x1xi1>, vector<8x1xf32>
    %800 = tpu.reciprocal %799 {approx = true} : vector<8x1xf32> -> vector<8x1xf32>
    %801 = vector.extract_strided_slice %583 {offsets = [0, 3], sizes = [1, 1], strides = [1, 1]} : vector<1x4xf32> to vector<1x1xf32>
    %802 = vector.extract %801[0, 0] : f32 from vector<1x1xf32>
    %cst_238 = arith.constant 0.000000e+00 : f32
    %803 = vector.broadcast %cst_238 : f32 to vector<8x1xf32>
    %804 = arith.cmpf ogt, %795, %803 : vector<8x1xf32>
    %805 = vector.broadcast %800 : vector<8x1xf32> to vector<8x16xf32>
    %806 = arith.mulf %793, %805 : vector<8x16xf32>
    %cst_239 = arith.constant 6.250000e-02 : f32
    %807 = vector.shape_cast %804 : vector<8x1xi1> to vector<8x1xi1>
    %808 = vector.broadcast %807 : vector<8x1xi1> to vector<8x16xi1>
    %809 = vector.broadcast %cst_239 : f32 to vector<8x16xf32>
    %810 = arith.select %808, %806, %809 : vector<8x16xi1>, vector<8x16xf32>
    %811 = vector.broadcast %802 : f32 to vector<8x16xf32>
    %812 = arith.mulf %811, %810 : vector<8x16xf32>
    %813 = arith.addf %791, %812 : vector<8x16xf32>
    %814 = vector.broadcast %714 : vector<1x32xf32> to vector<16x32xf32>
    %815 = arith.mulf %595, %814 : vector<16x32xf32>
    %cst_240 = arith.constant dense<0.000000e+00> : vector<8x32xf32>
    %816 = tpu.matmul %813, %815, %cst_240 {dimension_numbers = #tpu.dot_dimension_numbers<[1], [0], [0], [1], [0, 0, 1, 1], [], []>} : vector<8x16xf32>, vector<16x32xf32>, vector<8x32xf32> -> vector<8x32xf32>
    %817 = arith.addf %707, %816 : vector<8x32xf32>
    %c16_i32_241 = arith.constant 16 : i32
    %818 = vector.broadcast %c16_i32_241 : i32 to vector<1x32xi32>
    %819 = arith.cmpi sge, %596, %818 : vector<1x32xi32>
    %c24_i32_242 = arith.constant 24 : i32
    %820 = vector.broadcast %c24_i32_242 : i32 to vector<1x32xi32>
    %821 = arith.cmpi slt, %596, %820 : vector<1x32xi32>
    %822 = arith.andi %819, %821 : vector<1x32xi1>
    %823 = arith.extui %822 : vector<1x32xi1> to vector<1x32xi32>
    %824 = arith.sitofp %823 : vector<1x32xi32> to vector<1x32xf32>
    %825 = vector.broadcast %824 : vector<1x32xf32> to vector<8x32xf32>
    %826 = arith.mulf %588, %825 : vector<8x32xf32>
    %cst_243 = arith.constant dense<0.000000e+00> : vector<8x16xf32>
    %827 = tpu.matmul %826, %594, %cst_243 {dimension_numbers = #tpu.dot_dimension_numbers<[1], [1], [0], [0], [0, 0, 1, 0], [], []>} : vector<8x32xf32>, vector<16x32xf32>, vector<8x16xf32> -> vector<8x16xf32>
    %cst_244 = arith.constant 0.353553385 : f32
    %828 = vector.broadcast %cst_244 : f32 to vector<8x16xf32>
    %829 = arith.mulf %827, %828 : vector<8x16xf32>
    %cst_245 = arith.constant dense<0xFF800000> : vector<8xf32>
    %830 = vector.multi_reduction <maximumf>, %829, %cst_245 [1] : vector<8x16xf32> to vector<8xf32>
    %831 = vector.shape_cast %830 : vector<8xf32> to vector<8x1xf32>
    %832 = vector.broadcast %831 : vector<8x1xf32> to vector<8x16xf32>
    %833 = arith.subf %829, %832 : vector<8x16xf32>
    %834 = math.exp %833 : vector<8x16xf32>
    %cst_246 = arith.constant 0.000000e+00 : f32
    %835 = vector.broadcast %cst_246 : f32 to vector<8x16xf32>
    %836 = vector.broadcast %41 : vector<1x16xf32> to vector<8x16xf32>
    %837 = arith.mulf %834, %836 : vector<8x16xf32>
    %cst_247 = arith.constant dense<0.000000e+00> : vector<8xf32>
    %838 = vector.multi_reduction <add>, %837, %cst_247 [1] : vector<8x16xf32> to vector<8xf32>
    %839 = vector.shape_cast %838 : vector<8xf32> to vector<8x1xf32>
    %cst_248 = arith.constant 0.000000e+00 : f32
    %840 = vector.broadcast %cst_248 : f32 to vector<8x1xf32>
    %841 = arith.cmpf ogt, %839, %840 : vector<8x1xf32>
    %cst_249 = arith.constant 1.000000e+00 : f32
    %842 = vector.broadcast %cst_249 : f32 to vector<8x1xf32>
    %843 = arith.select %841, %839, %842 : vector<8x1xi1>, vector<8x1xf32>
    %844 = tpu.reciprocal %843 {approx = true} : vector<8x1xf32> -> vector<8x1xf32>
    %845 = vector.extract_strided_slice %583 {offsets = [0, 0], sizes = [1, 1], strides = [1, 1]} : vector<1x4xf32> to vector<1x1xf32>
    %846 = vector.extract %845[0, 0] : f32 from vector<1x1xf32>
    %cst_250 = arith.constant 0.000000e+00 : f32
    %847 = vector.broadcast %cst_250 : f32 to vector<8x1xf32>
    %848 = arith.cmpf ogt, %839, %847 : vector<8x1xf32>
    %849 = vector.broadcast %844 : vector<8x1xf32> to vector<8x16xf32>
    %850 = arith.mulf %837, %849 : vector<8x16xf32>
    %cst_251 = arith.constant 6.250000e-02 : f32
    %851 = vector.shape_cast %848 : vector<8x1xi1> to vector<8x1xi1>
    %852 = vector.broadcast %851 : vector<8x1xi1> to vector<8x16xi1>
    %853 = vector.broadcast %cst_251 : f32 to vector<8x16xf32>
    %854 = arith.select %852, %850, %853 : vector<8x16xi1>, vector<8x16xf32>
    %855 = vector.broadcast %846 : f32 to vector<8x16xf32>
    %856 = arith.mulf %855, %854 : vector<8x16xf32>
    %857 = arith.addf %835, %856 : vector<8x16xf32>
    %858 = vector.broadcast %47 : vector<1x16xf32> to vector<8x16xf32>
    %859 = arith.mulf %834, %858 : vector<8x16xf32>
    %cst_252 = arith.constant dense<0.000000e+00> : vector<8xf32>
    %860 = vector.multi_reduction <add>, %859, %cst_252 [1] : vector<8x16xf32> to vector<8xf32>
    %861 = vector.shape_cast %860 : vector<8xf32> to vector<8x1xf32>
    %cst_253 = arith.constant 0.000000e+00 : f32
    %862 = vector.broadcast %cst_253 : f32 to vector<8x1xf32>
    %863 = arith.cmpf ogt, %861, %862 : vector<8x1xf32>
    %cst_254 = arith.constant 1.000000e+00 : f32
    %864 = vector.broadcast %cst_254 : f32 to vector<8x1xf32>
    %865 = arith.select %863, %861, %864 : vector<8x1xi1>, vector<8x1xf32>
    %866 = tpu.reciprocal %865 {approx = true} : vector<8x1xf32> -> vector<8x1xf32>
    %867 = vector.extract_strided_slice %583 {offsets = [0, 1], sizes = [1, 1], strides = [1, 1]} : vector<1x4xf32> to vector<1x1xf32>
    %868 = vector.extract %867[0, 0] : f32 from vector<1x1xf32>
    %cst_255 = arith.constant 0.000000e+00 : f32
    %869 = vector.broadcast %cst_255 : f32 to vector<8x1xf32>
    %870 = arith.cmpf ogt, %861, %869 : vector<8x1xf32>
    %871 = vector.broadcast %866 : vector<8x1xf32> to vector<8x16xf32>
    %872 = arith.mulf %859, %871 : vector<8x16xf32>
    %cst_256 = arith.constant 6.250000e-02 : f32
    %873 = vector.shape_cast %870 : vector<8x1xi1> to vector<8x1xi1>
    %874 = vector.broadcast %873 : vector<8x1xi1> to vector<8x16xi1>
    %875 = vector.broadcast %cst_256 : f32 to vector<8x16xf32>
    %876 = arith.select %874, %872, %875 : vector<8x16xi1>, vector<8x16xf32>
    %877 = vector.broadcast %868 : f32 to vector<8x16xf32>
    %878 = arith.mulf %877, %876 : vector<8x16xf32>
    %879 = arith.addf %857, %878 : vector<8x16xf32>
    %880 = vector.broadcast %53 : vector<1x16xf32> to vector<8x16xf32>
    %881 = arith.mulf %834, %880 : vector<8x16xf32>
    %cst_257 = arith.constant dense<0.000000e+00> : vector<8xf32>
    %882 = vector.multi_reduction <add>, %881, %cst_257 [1] : vector<8x16xf32> to vector<8xf32>
    %883 = vector.shape_cast %882 : vector<8xf32> to vector<8x1xf32>
    %cst_258 = arith.constant 0.000000e+00 : f32
    %884 = vector.broadcast %cst_258 : f32 to vector<8x1xf32>
    %885 = arith.cmpf ogt, %883, %884 : vector<8x1xf32>
    %cst_259 = arith.constant 1.000000e+00 : f32
    %886 = vector.broadcast %cst_259 : f32 to vector<8x1xf32>
    %887 = arith.select %885, %883, %886 : vector<8x1xi1>, vector<8x1xf32>
    %888 = tpu.reciprocal %887 {approx = true} : vector<8x1xf32> -> vector<8x1xf32>
    %889 = vector.extract_strided_slice %583 {offsets = [0, 2], sizes = [1, 1], strides = [1, 1]} : vector<1x4xf32> to vector<1x1xf32>
    %890 = vector.extract %889[0, 0] : f32 from vector<1x1xf32>
    %cst_260 = arith.constant 0.000000e+00 : f32
    %891 = vector.broadcast %cst_260 : f32 to vector<8x1xf32>
    %892 = arith.cmpf ogt, %883, %891 : vector<8x1xf32>
    %893 = vector.broadcast %888 : vector<8x1xf32> to vector<8x16xf32>
    %894 = arith.mulf %881, %893 : vector<8x16xf32>
    %cst_261 = arith.constant 6.250000e-02 : f32
    %895 = vector.shape_cast %892 : vector<8x1xi1> to vector<8x1xi1>
    %896 = vector.broadcast %895 : vector<8x1xi1> to vector<8x16xi1>
    %897 = vector.broadcast %cst_261 : f32 to vector<8x16xf32>
    %898 = arith.select %896, %894, %897 : vector<8x16xi1>, vector<8x16xf32>
    %899 = vector.broadcast %890 : f32 to vector<8x16xf32>
    %900 = arith.mulf %899, %898 : vector<8x16xf32>
    %901 = arith.addf %879, %900 : vector<8x16xf32>
    %902 = vector.broadcast %59 : vector<1x16xf32> to vector<8x16xf32>
    %903 = arith.mulf %834, %902 : vector<8x16xf32>
    %cst_262 = arith.constant dense<0.000000e+00> : vector<8xf32>
    %904 = vector.multi_reduction <add>, %903, %cst_262 [1] : vector<8x16xf32> to vector<8xf32>
    %905 = vector.shape_cast %904 : vector<8xf32> to vector<8x1xf32>
    %cst_263 = arith.constant 0.000000e+00 : f32
    %906 = vector.broadcast %cst_263 : f32 to vector<8x1xf32>
    %907 = arith.cmpf ogt, %905, %906 : vector<8x1xf32>
    %cst_264 = arith.constant 1.000000e+00 : f32
    %908 = vector.broadcast %cst_264 : f32 to vector<8x1xf32>
    %909 = arith.select %907, %905, %908 : vector<8x1xi1>, vector<8x1xf32>
    %910 = tpu.reciprocal %909 {approx = true} : vector<8x1xf32> -> vector<8x1xf32>
    %911 = vector.extract_strided_slice %583 {offsets = [0, 3], sizes = [1, 1], strides = [1, 1]} : vector<1x4xf32> to vector<1x1xf32>
    %912 = vector.extract %911[0, 0] : f32 from vector<1x1xf32>
    %cst_265 = arith.constant 0.000000e+00 : f32
    %913 = vector.broadcast %cst_265 : f32 to vector<8x1xf32>
    %914 = arith.cmpf ogt, %905, %913 : vector<8x1xf32>
    %915 = vector.broadcast %910 : vector<8x1xf32> to vector<8x16xf32>
    %916 = arith.mulf %903, %915 : vector<8x16xf32>
    %cst_266 = arith.constant 6.250000e-02 : f32
    %917 = vector.shape_cast %914 : vector<8x1xi1> to vector<8x1xi1>
    %918 = vector.broadcast %917 : vector<8x1xi1> to vector<8x16xi1>
    %919 = vector.broadcast %cst_266 : f32 to vector<8x16xf32>
    %920 = arith.select %918, %916, %919 : vector<8x16xi1>, vector<8x16xf32>
    %921 = vector.broadcast %912 : f32 to vector<8x16xf32>
    %922 = arith.mulf %921, %920 : vector<8x16xf32>
    %923 = arith.addf %901, %922 : vector<8x16xf32>
    %924 = vector.broadcast %824 : vector<1x32xf32> to vector<16x32xf32>
    %925 = arith.mulf %595, %924 : vector<16x32xf32>
    %cst_267 = arith.constant dense<0.000000e+00> : vector<8x32xf32>
    %926 = tpu.matmul %923, %925, %cst_267 {dimension_numbers = #tpu.dot_dimension_numbers<[1], [0], [0], [1], [0, 0, 1, 1], [], []>} : vector<8x16xf32>, vector<16x32xf32>, vector<8x32xf32> -> vector<8x32xf32>
    %927 = arith.addf %817, %926 : vector<8x32xf32>
    %c24_i32_268 = arith.constant 24 : i32
    %928 = vector.broadcast %c24_i32_268 : i32 to vector<1x32xi32>
    %929 = arith.cmpi sge, %596, %928 : vector<1x32xi32>
    %c32_i32_269 = arith.constant 32 : i32
    %930 = vector.broadcast %c32_i32_269 : i32 to vector<1x32xi32>
    %931 = arith.cmpi slt, %596, %930 : vector<1x32xi32>
    %932 = arith.andi %929, %931 : vector<1x32xi1>
    %933 = arith.extui %932 : vector<1x32xi1> to vector<1x32xi32>
    %934 = arith.sitofp %933 : vector<1x32xi32> to vector<1x32xf32>
    %935 = vector.broadcast %934 : vector<1x32xf32> to vector<8x32xf32>
    %936 = arith.mulf %588, %935 : vector<8x32xf32>
    %cst_270 = arith.constant dense<0.000000e+00> : vector<8x16xf32>
    %937 = tpu.matmul %936, %594, %cst_270 {dimension_numbers = #tpu.dot_dimension_numbers<[1], [1], [0], [0], [0, 0, 1, 0], [], []>} : vector<8x32xf32>, vector<16x32xf32>, vector<8x16xf32> -> vector<8x16xf32>
    %cst_271 = arith.constant 0.353553385 : f32
    %938 = vector.broadcast %cst_271 : f32 to vector<8x16xf32>
    %939 = arith.mulf %937, %938 : vector<8x16xf32>
    %cst_272 = arith.constant dense<0xFF800000> : vector<8xf32>
    %940 = vector.multi_reduction <maximumf>, %939, %cst_272 [1] : vector<8x16xf32> to vector<8xf32>
    %941 = vector.shape_cast %940 : vector<8xf32> to vector<8x1xf32>
    %942 = vector.broadcast %941 : vector<8x1xf32> to vector<8x16xf32>
    %943 = arith.subf %939, %942 : vector<8x16xf32>
    %944 = math.exp %943 : vector<8x16xf32>
    %cst_273 = arith.constant 0.000000e+00 : f32
    %945 = vector.broadcast %cst_273 : f32 to vector<8x16xf32>
    %946 = vector.broadcast %41 : vector<1x16xf32> to vector<8x16xf32>
    %947 = arith.mulf %944, %946 : vector<8x16xf32>
    %cst_274 = arith.constant dense<0.000000e+00> : vector<8xf32>
    %948 = vector.multi_reduction <add>, %947, %cst_274 [1] : vector<8x16xf32> to vector<8xf32>
    %949 = vector.shape_cast %948 : vector<8xf32> to vector<8x1xf32>
    %cst_275 = arith.constant 0.000000e+00 : f32
    %950 = vector.broadcast %cst_275 : f32 to vector<8x1xf32>
    %951 = arith.cmpf ogt, %949, %950 : vector<8x1xf32>
    %cst_276 = arith.constant 1.000000e+00 : f32
    %952 = vector.broadcast %cst_276 : f32 to vector<8x1xf32>
    %953 = arith.select %951, %949, %952 : vector<8x1xi1>, vector<8x1xf32>
    %954 = tpu.reciprocal %953 {approx = true} : vector<8x1xf32> -> vector<8x1xf32>
    %955 = vector.extract_strided_slice %583 {offsets = [0, 0], sizes = [1, 1], strides = [1, 1]} : vector<1x4xf32> to vector<1x1xf32>
    %956 = vector.extract %955[0, 0] : f32 from vector<1x1xf32>
    %cst_277 = arith.constant 0.000000e+00 : f32
    %957 = vector.broadcast %cst_277 : f32 to vector<8x1xf32>
    %958 = arith.cmpf ogt, %949, %957 : vector<8x1xf32>
    %959 = vector.broadcast %954 : vector<8x1xf32> to vector<8x16xf32>
    %960 = arith.mulf %947, %959 : vector<8x16xf32>
    %cst_278 = arith.constant 6.250000e-02 : f32
    %961 = vector.shape_cast %958 : vector<8x1xi1> to vector<8x1xi1>
    %962 = vector.broadcast %961 : vector<8x1xi1> to vector<8x16xi1>
    %963 = vector.broadcast %cst_278 : f32 to vector<8x16xf32>
    %964 = arith.select %962, %960, %963 : vector<8x16xi1>, vector<8x16xf32>
    %965 = vector.broadcast %956 : f32 to vector<8x16xf32>
    %966 = arith.mulf %965, %964 : vector<8x16xf32>
    %967 = arith.addf %945, %966 : vector<8x16xf32>
    %968 = vector.broadcast %47 : vector<1x16xf32> to vector<8x16xf32>
    %969 = arith.mulf %944, %968 : vector<8x16xf32>
    %cst_279 = arith.constant dense<0.000000e+00> : vector<8xf32>
    %970 = vector.multi_reduction <add>, %969, %cst_279 [1] : vector<8x16xf32> to vector<8xf32>
    %971 = vector.shape_cast %970 : vector<8xf32> to vector<8x1xf32>
    %cst_280 = arith.constant 0.000000e+00 : f32
    %972 = vector.broadcast %cst_280 : f32 to vector<8x1xf32>
    %973 = arith.cmpf ogt, %971, %972 : vector<8x1xf32>
    %cst_281 = arith.constant 1.000000e+00 : f32
    %974 = vector.broadcast %cst_281 : f32 to vector<8x1xf32>
    %975 = arith.select %973, %971, %974 : vector<8x1xi1>, vector<8x1xf32>
    %976 = tpu.reciprocal %975 {approx = true} : vector<8x1xf32> -> vector<8x1xf32>
    %977 = vector.extract_strided_slice %583 {offsets = [0, 1], sizes = [1, 1], strides = [1, 1]} : vector<1x4xf32> to vector<1x1xf32>
    %978 = vector.extract %977[0, 0] : f32 from vector<1x1xf32>
    %cst_282 = arith.constant 0.000000e+00 : f32
    %979 = vector.broadcast %cst_282 : f32 to vector<8x1xf32>
    %980 = arith.cmpf ogt, %971, %979 : vector<8x1xf32>
    %981 = vector.broadcast %976 : vector<8x1xf32> to vector<8x16xf32>
    %982 = arith.mulf %969, %981 : vector<8x16xf32>
    %cst_283 = arith.constant 6.250000e-02 : f32
    %983 = vector.shape_cast %980 : vector<8x1xi1> to vector<8x1xi1>
    %984 = vector.broadcast %983 : vector<8x1xi1> to vector<8x16xi1>
    %985 = vector.broadcast %cst_283 : f32 to vector<8x16xf32>
    %986 = arith.select %984, %982, %985 : vector<8x16xi1>, vector<8x16xf32>
    %987 = vector.broadcast %978 : f32 to vector<8x16xf32>
    %988 = arith.mulf %987, %986 : vector<8x16xf32>
    %989 = arith.addf %967, %988 : vector<8x16xf32>
    %990 = vector.broadcast %53 : vector<1x16xf32> to vector<8x16xf32>
    %991 = arith.mulf %944, %990 : vector<8x16xf32>
    %cst_284 = arith.constant dense<0.000000e+00> : vector<8xf32>
    %992 = vector.multi_reduction <add>, %991, %cst_284 [1] : vector<8x16xf32> to vector<8xf32>
    %993 = vector.shape_cast %992 : vector<8xf32> to vector<8x1xf32>
    %cst_285 = arith.constant 0.000000e+00 : f32
    %994 = vector.broadcast %cst_285 : f32 to vector<8x1xf32>
    %995 = arith.cmpf ogt, %993, %994 : vector<8x1xf32>
    %cst_286 = arith.constant 1.000000e+00 : f32
    %996 = vector.broadcast %cst_286 : f32 to vector<8x1xf32>
    %997 = arith.select %995, %993, %996 : vector<8x1xi1>, vector<8x1xf32>
    %998 = tpu.reciprocal %997 {approx = true} : vector<8x1xf32> -> vector<8x1xf32>
    %999 = vector.extract_strided_slice %583 {offsets = [0, 2], sizes = [1, 1], strides = [1, 1]} : vector<1x4xf32> to vector<1x1xf32>
    %1000 = vector.extract %999[0, 0] : f32 from vector<1x1xf32>
    %cst_287 = arith.constant 0.000000e+00 : f32
    %1001 = vector.broadcast %cst_287 : f32 to vector<8x1xf32>
    %1002 = arith.cmpf ogt, %993, %1001 : vector<8x1xf32>
    %1003 = vector.broadcast %998 : vector<8x1xf32> to vector<8x16xf32>
    %1004 = arith.mulf %991, %1003 : vector<8x16xf32>
    %cst_288 = arith.constant 6.250000e-02 : f32
    %1005 = vector.shape_cast %1002 : vector<8x1xi1> to vector<8x1xi1>
    %1006 = vector.broadcast %1005 : vector<8x1xi1> to vector<8x16xi1>
    %1007 = vector.broadcast %cst_288 : f32 to vector<8x16xf32>
    %1008 = arith.select %1006, %1004, %1007 : vector<8x16xi1>, vector<8x16xf32>
    %1009 = vector.broadcast %1000 : f32 to vector<8x16xf32>
    %1010 = arith.mulf %1009, %1008 : vector<8x16xf32>
    %1011 = arith.addf %989, %1010 : vector<8x16xf32>
    %1012 = vector.broadcast %59 : vector<1x16xf32> to vector<8x16xf32>
    %1013 = arith.mulf %944, %1012 : vector<8x16xf32>
    %cst_289 = arith.constant dense<0.000000e+00> : vector<8xf32>
    %1014 = vector.multi_reduction <add>, %1013, %cst_289 [1] : vector<8x16xf32> to vector<8xf32>
    %1015 = vector.shape_cast %1014 : vector<8xf32> to vector<8x1xf32>
    %cst_290 = arith.constant 0.000000e+00 : f32
    %1016 = vector.broadcast %cst_290 : f32 to vector<8x1xf32>
    %1017 = arith.cmpf ogt, %1015, %1016 : vector<8x1xf32>
    %cst_291 = arith.constant 1.000000e+00 : f32
    %1018 = vector.broadcast %cst_291 : f32 to vector<8x1xf32>
    %1019 = arith.select %1017, %1015, %1018 : vector<8x1xi1>, vector<8x1xf32>
    %1020 = tpu.reciprocal %1019 {approx = true} : vector<8x1xf32> -> vector<8x1xf32>
    %1021 = vector.extract_strided_slice %583 {offsets = [0, 3], sizes = [1, 1], strides = [1, 1]} : vector<1x4xf32> to vector<1x1xf32>
    %1022 = vector.extract %1021[0, 0] : f32 from vector<1x1xf32>
    %cst_292 = arith.constant 0.000000e+00 : f32
    %1023 = vector.broadcast %cst_292 : f32 to vector<8x1xf32>
    %1024 = arith.cmpf ogt, %1015, %1023 : vector<8x1xf32>
    %1025 = vector.broadcast %1020 : vector<8x1xf32> to vector<8x16xf32>
    %1026 = arith.mulf %1013, %1025 : vector<8x16xf32>
    %cst_293 = arith.constant 6.250000e-02 : f32
    %1027 = vector.shape_cast %1024 : vector<8x1xi1> to vector<8x1xi1>
    %1028 = vector.broadcast %1027 : vector<8x1xi1> to vector<8x16xi1>
    %1029 = vector.broadcast %cst_293 : f32 to vector<8x16xf32>
    %1030 = arith.select %1028, %1026, %1029 : vector<8x16xi1>, vector<8x16xf32>
    %1031 = vector.broadcast %1022 : f32 to vector<8x16xf32>
    %1032 = arith.mulf %1031, %1030 : vector<8x16xf32>
    %1033 = arith.addf %1011, %1032 : vector<8x16xf32>
    %1034 = vector.broadcast %934 : vector<1x32xf32> to vector<16x32xf32>
    %1035 = arith.mulf %595, %1034 : vector<16x32xf32>
    %cst_294 = arith.constant dense<0.000000e+00> : vector<8x32xf32>
    %1036 = tpu.matmul %1033, %1035, %cst_294 {dimension_numbers = #tpu.dot_dimension_numbers<[1], [0], [0], [1], [0, 0, 1, 1], [], []>} : vector<8x16xf32>, vector<16x32xf32>, vector<8x32xf32> -> vector<8x32xf32>
    %1037 = arith.addf %927, %1036 : vector<8x32xf32>
    %c0_295 = arith.constant 0 : index
    %c0_296 = arith.constant 0 : index
    %1038 = vector.load %arg20[%c0_295, %c0_296] : memref<32x32xf32, #tpu.memory_space<vmem>>, vector<32x32xf32>
    %cst_297 = arith.constant dense<0.000000e+00> : vector<8x32xf32>
    %1039 = tpu.matmul %1037, %1038, %cst_297 {dimension_numbers = #tpu.dot_dimension_numbers<[1], [0], [0], [1], [0, 0, 1, 1], [], []>} : vector<8x32xf32>, vector<32x32xf32>, vector<8x32xf32> -> vector<8x32xf32>
    %1040 = arith.addf %3, %1039 : vector<8x32xf32>
    %c0_298 = arith.constant 0 : index
    %c0_299 = arith.constant 0 : index
    %1041 = vector.load %arg21[%c0_298, %c0_299] : memref<1x32xf32, #tpu.memory_space<vmem>>, vector<1x32xf32>
    %1042 = vector.broadcast %1041 : vector<1x32xf32> to vector<8x32xf32>
    %1043 = arith.addf %1040, %1042 : vector<8x32xf32>
    %1044 = vector.extract_strided_slice %10 {offsets = [1, 0], sizes = [1, 32], strides = [1, 1]} : vector<4x32xf32> to vector<1x32xf32>
    %1045 = vector.extract_strided_slice %11 {offsets = [1, 0], sizes = [1, 32], strides = [1, 1]} : vector<4x32xf32> to vector<1x32xf32>
    %cst_300 = arith.constant dense<0.000000e+00> : vector<8xf32>
    %1046 = vector.multi_reduction <add>, %1043, %cst_300 [1] : vector<8x32xf32> to vector<8xf32>
    %1047 = vector.shape_cast %1046 : vector<8xf32> to vector<8x1xf32>
    %cst_301 = arith.constant 3.200000e+01 : f32
    %1048 = vector.broadcast %cst_301 : f32 to vector<8x1xf32>
    %1049 = arith.divf %1047, %1048 : vector<8x1xf32>
    %1050 = vector.broadcast %1049 : vector<8x1xf32> to vector<8x32xf32>
    %1051 = arith.subf %1043, %1050 : vector<8x32xf32>
    %1052 = arith.mulf %1051, %1051 : vector<8x32xf32>
    %cst_302 = arith.constant dense<0.000000e+00> : vector<8xf32>
    %1053 = vector.multi_reduction <add>, %1052, %cst_302 [1] : vector<8x32xf32> to vector<8xf32>
    %1054 = vector.shape_cast %1053 : vector<8xf32> to vector<8x1xf32>
    %cst_303 = arith.constant 0.0322580636 : f32
    %1055 = vector.broadcast %cst_303 : f32 to vector<8x1xf32>
    %1056 = arith.mulf %1054, %1055 : vector<8x1xf32>
    %1057 = math.sqrt %1056 : vector<8x1xf32>
    %cst_304 = arith.constant 9.99999997E-7 : f32
    %1058 = vector.broadcast %cst_304 : f32 to vector<8x1xf32>
    %1059 = arith.addf %1057, %1058 : vector<8x1xf32>
    %1060 = vector.broadcast %1059 : vector<8x1xf32> to vector<8x32xf32>
    %1061 = arith.divf %1051, %1060 : vector<8x32xf32>
    %1062 = vector.broadcast %1044 : vector<1x32xf32> to vector<8x32xf32>
    %1063 = arith.mulf %1062, %1061 : vector<8x32xf32>
    %1064 = vector.broadcast %1045 : vector<1x32xf32> to vector<8x32xf32>
    %1065 = arith.addf %1063, %1064 : vector<8x32xf32>
    %1066 = tpu.concatenate %562, %1065 in 0 : vector<16x32xf32>, vector<8x32xf32> -> vector<24x32xf32>
    %1067 = tpu.concatenate %5, %7 in 1 : vector<1x16xf32>, vector<1x8xf32> -> vector<1x24xf32>
    %cst_305 = arith.constant 5.000000e-01 : f32
    %1068 = vector.broadcast %cst_305 : f32 to vector<1x24xf32>
    %1069 = arith.cmpf ole, %1067, %1068 : vector<1x24xf32>
    %1070 = arith.extui %1069 : vector<1x24xi1> to vector<1x24xi32>
    %1071 = arith.sitofp %1070 : vector<1x24xi32> to vector<1x24xf32>
    %c0_306 = arith.constant 0 : index
    %c0_307 = arith.constant 0 : index
    %1072 = vector.load %arg25[%c0_306, %c0_307] : memref<32x96xf32, #tpu.memory_space<vmem>>, vector<32x96xf32>
    %cst_308 = arith.constant dense<0.000000e+00> : vector<24x96xf32>
    %1073 = tpu.matmul %1066, %1072, %cst_308 {dimension_numbers = #tpu.dot_dimension_numbers<[1], [0], [0], [1], [0, 0, 1, 1], [], []>} : vector<24x32xf32>, vector<32x96xf32>, vector<24x96xf32> -> vector<24x96xf32>
    %c0_309 = arith.constant 0 : index
    %c0_310 = arith.constant 0 : index
    %1074 = vector.load %arg26[%c0_309, %c0_310] : memref<1x96xf32, #tpu.memory_space<vmem>>, vector<1x96xf32>
    %1075 = vector.broadcast %1074 : vector<1x96xf32> to vector<24x96xf32>
    %1076 = arith.addf %1073, %1075 : vector<24x96xf32>
    %cst_311 = arith.constant 1.000000e+00 : f32
    %1077 = vector.broadcast %cst_311 : f32 to vector<1x1xf32>
    %1078 = vector.extract_strided_slice %1076 {offsets = [0, 0], sizes = [24, 32], strides = [1, 1]} : vector<24x96xf32> to vector<24x32xf32>
    %1079 = vector.extract_strided_slice %1076 {offsets = [0, 32], sizes = [24, 32], strides = [1, 1]} : vector<24x96xf32> to vector<24x32xf32>
    %1080 = vector.extract_strided_slice %1076 {offsets = [0, 64], sizes = [24, 32], strides = [1, 1]} : vector<24x96xf32> to vector<24x32xf32>
    %1081 = tpu.iota {dimensions = array<i32: 1>} : vector<1x32xi32>
    %cst_312 = arith.constant 0.000000e+00 : f32
    %1082 = vector.broadcast %cst_312 : f32 to vector<24x32xf32>
    %c0_i32_313 = arith.constant 0 : i32
    %1083 = vector.broadcast %c0_i32_313 : i32 to vector<1x32xi32>
    %1084 = arith.cmpi sge, %1081, %1083 : vector<1x32xi32>
    %c8_i32_314 = arith.constant 8 : i32
    %1085 = vector.broadcast %c8_i32_314 : i32 to vector<1x32xi32>
    %1086 = arith.cmpi slt, %1081, %1085 : vector<1x32xi32>
    %1087 = arith.andi %1084, %1086 : vector<1x32xi1>
    %1088 = arith.extui %1087 : vector<1x32xi1> to vector<1x32xi32>
    %1089 = arith.sitofp %1088 : vector<1x32xi32> to vector<1x32xf32>
    %1090 = vector.broadcast %1089 : vector<1x32xf32> to vector<24x32xf32>
    %1091 = arith.mulf %1078, %1090 : vector<24x32xf32>
    %cst_315 = arith.constant dense<0.000000e+00> : vector<24x24xf32>
    %1092 = tpu.matmul %1091, %1079, %cst_315 {dimension_numbers = #tpu.dot_dimension_numbers<[1], [1], [0], [0], [0, 0, 1, 0], [], []>} : vector<24x32xf32>, vector<24x32xf32>, vector<24x24xf32> -> vector<24x24xf32>
    %cst_316 = arith.constant 0.353553385 : f32
    %1093 = vector.broadcast %cst_316 : f32 to vector<24x24xf32>
    %1094 = arith.mulf %1092, %1093 : vector<24x24xf32>
    %cst_317 = arith.constant dense<0xFF800000> : vector<24xf32>
    %1095 = vector.multi_reduction <maximumf>, %1094, %cst_317 [1] : vector<24x24xf32> to vector<24xf32>
    %1096 = vector.shape_cast %1095 : vector<24xf32> to vector<24x1xf32>
    %1097 = vector.broadcast %1096 : vector<24x1xf32> to vector<24x24xf32>
    %1098 = arith.subf %1094, %1097 : vector<24x24xf32>
    %1099 = math.exp %1098 : vector<24x24xf32>
    %cst_318 = arith.constant 0.000000e+00 : f32
    %1100 = vector.broadcast %cst_318 : f32 to vector<24x24xf32>
    %1101 = vector.broadcast %1071 : vector<1x24xf32> to vector<24x24xf32>
    %1102 = arith.mulf %1099, %1101 : vector<24x24xf32>
    %cst_319 = arith.constant dense<0.000000e+00> : vector<24xf32>
    %1103 = vector.multi_reduction <add>, %1102, %cst_319 [1] : vector<24x24xf32> to vector<24xf32>
    %1104 = vector.shape_cast %1103 : vector<24xf32> to vector<24x1xf32>
    %cst_320 = arith.constant 0.000000e+00 : f32
    %1105 = vector.broadcast %cst_320 : f32 to vector<24x1xf32>
    %1106 = arith.cmpf ogt, %1104, %1105 : vector<24x1xf32>
    %cst_321 = arith.constant 1.000000e+00 : f32
    %1107 = vector.broadcast %cst_321 : f32 to vector<24x1xf32>
    %1108 = arith.select %1106, %1104, %1107 : vector<24x1xi1>, vector<24x1xf32>
    %1109 = tpu.reciprocal %1108 {approx = true} : vector<24x1xf32> -> vector<24x1xf32>
    %1110 = vector.extract %1077[0, 0] : f32 from vector<1x1xf32>
    %cst_322 = arith.constant 0.000000e+00 : f32
    %1111 = vector.broadcast %cst_322 : f32 to vector<24x1xf32>
    %1112 = arith.cmpf ogt, %1104, %1111 : vector<24x1xf32>
    %1113 = vector.broadcast %1109 : vector<24x1xf32> to vector<24x24xf32>
    %1114 = arith.mulf %1102, %1113 : vector<24x24xf32>
    %cst_323 = arith.constant 0.0416666679 : f32
    %1115 = vector.shape_cast %1112 : vector<24x1xi1> to vector<24x1xi1>
    %1116 = vector.broadcast %1115 : vector<24x1xi1> to vector<24x24xi1>
    %1117 = vector.broadcast %cst_323 : f32 to vector<24x24xf32>
    %1118 = arith.select %1116, %1114, %1117 : vector<24x24xi1>, vector<24x24xf32>
    %1119 = vector.broadcast %1110 : f32 to vector<24x24xf32>
    %1120 = arith.mulf %1119, %1118 : vector<24x24xf32>
    %1121 = arith.addf %1100, %1120 : vector<24x24xf32>
    %1122 = vector.broadcast %1089 : vector<1x32xf32> to vector<24x32xf32>
    %1123 = arith.mulf %1080, %1122 : vector<24x32xf32>
    %cst_324 = arith.constant dense<0.000000e+00> : vector<24x32xf32>
    %1124 = tpu.matmul %1121, %1123, %cst_324 {dimension_numbers = #tpu.dot_dimension_numbers<[1], [0], [0], [1], [0, 0, 1, 1], [], []>} : vector<24x24xf32>, vector<24x32xf32>, vector<24x32xf32> -> vector<24x32xf32>
    %1125 = arith.addf %1082, %1124 : vector<24x32xf32>
    %c8_i32_325 = arith.constant 8 : i32
    %1126 = vector.broadcast %c8_i32_325 : i32 to vector<1x32xi32>
    %1127 = arith.cmpi sge, %1081, %1126 : vector<1x32xi32>
    %c16_i32_326 = arith.constant 16 : i32
    %1128 = vector.broadcast %c16_i32_326 : i32 to vector<1x32xi32>
    %1129 = arith.cmpi slt, %1081, %1128 : vector<1x32xi32>
    %1130 = arith.andi %1127, %1129 : vector<1x32xi1>
    %1131 = arith.extui %1130 : vector<1x32xi1> to vector<1x32xi32>
    %1132 = arith.sitofp %1131 : vector<1x32xi32> to vector<1x32xf32>
    %1133 = vector.broadcast %1132 : vector<1x32xf32> to vector<24x32xf32>
    %1134 = arith.mulf %1078, %1133 : vector<24x32xf32>
    %cst_327 = arith.constant dense<0.000000e+00> : vector<24x24xf32>
    %1135 = tpu.matmul %1134, %1079, %cst_327 {dimension_numbers = #tpu.dot_dimension_numbers<[1], [1], [0], [0], [0, 0, 1, 0], [], []>} : vector<24x32xf32>, vector<24x32xf32>, vector<24x24xf32> -> vector<24x24xf32>
    %cst_328 = arith.constant 0.353553385 : f32
    %1136 = vector.broadcast %cst_328 : f32 to vector<24x24xf32>
    %1137 = arith.mulf %1135, %1136 : vector<24x24xf32>
    %cst_329 = arith.constant dense<0xFF800000> : vector<24xf32>
    %1138 = vector.multi_reduction <maximumf>, %1137, %cst_329 [1] : vector<24x24xf32> to vector<24xf32>
    %1139 = vector.shape_cast %1138 : vector<24xf32> to vector<24x1xf32>
    %1140 = vector.broadcast %1139 : vector<24x1xf32> to vector<24x24xf32>
    %1141 = arith.subf %1137, %1140 : vector<24x24xf32>
    %1142 = math.exp %1141 : vector<24x24xf32>
    %cst_330 = arith.constant 0.000000e+00 : f32
    %1143 = vector.broadcast %cst_330 : f32 to vector<24x24xf32>
    %1144 = vector.broadcast %1071 : vector<1x24xf32> to vector<24x24xf32>
    %1145 = arith.mulf %1142, %1144 : vector<24x24xf32>
    %cst_331 = arith.constant dense<0.000000e+00> : vector<24xf32>
    %1146 = vector.multi_reduction <add>, %1145, %cst_331 [1] : vector<24x24xf32> to vector<24xf32>
    %1147 = vector.shape_cast %1146 : vector<24xf32> to vector<24x1xf32>
    %cst_332 = arith.constant 0.000000e+00 : f32
    %1148 = vector.broadcast %cst_332 : f32 to vector<24x1xf32>
    %1149 = arith.cmpf ogt, %1147, %1148 : vector<24x1xf32>
    %cst_333 = arith.constant 1.000000e+00 : f32
    %1150 = vector.broadcast %cst_333 : f32 to vector<24x1xf32>
    %1151 = arith.select %1149, %1147, %1150 : vector<24x1xi1>, vector<24x1xf32>
    %1152 = tpu.reciprocal %1151 {approx = true} : vector<24x1xf32> -> vector<24x1xf32>
    %1153 = vector.extract %1077[0, 0] : f32 from vector<1x1xf32>
    %cst_334 = arith.constant 0.000000e+00 : f32
    %1154 = vector.broadcast %cst_334 : f32 to vector<24x1xf32>
    %1155 = arith.cmpf ogt, %1147, %1154 : vector<24x1xf32>
    %1156 = vector.broadcast %1152 : vector<24x1xf32> to vector<24x24xf32>
    %1157 = arith.mulf %1145, %1156 : vector<24x24xf32>
    %cst_335 = arith.constant 0.0416666679 : f32
    %1158 = vector.shape_cast %1155 : vector<24x1xi1> to vector<24x1xi1>
    %1159 = vector.broadcast %1158 : vector<24x1xi1> to vector<24x24xi1>
    %1160 = vector.broadcast %cst_335 : f32 to vector<24x24xf32>
    %1161 = arith.select %1159, %1157, %1160 : vector<24x24xi1>, vector<24x24xf32>
    %1162 = vector.broadcast %1153 : f32 to vector<24x24xf32>
    %1163 = arith.mulf %1162, %1161 : vector<24x24xf32>
    %1164 = arith.addf %1143, %1163 : vector<24x24xf32>
    %1165 = vector.broadcast %1132 : vector<1x32xf32> to vector<24x32xf32>
    %1166 = arith.mulf %1080, %1165 : vector<24x32xf32>
    %cst_336 = arith.constant dense<0.000000e+00> : vector<24x32xf32>
    %1167 = tpu.matmul %1164, %1166, %cst_336 {dimension_numbers = #tpu.dot_dimension_numbers<[1], [0], [0], [1], [0, 0, 1, 1], [], []>} : vector<24x24xf32>, vector<24x32xf32>, vector<24x32xf32> -> vector<24x32xf32>
    %1168 = arith.addf %1125, %1167 : vector<24x32xf32>
    %c16_i32_337 = arith.constant 16 : i32
    %1169 = vector.broadcast %c16_i32_337 : i32 to vector<1x32xi32>
    %1170 = arith.cmpi sge, %1081, %1169 : vector<1x32xi32>
    %c24_i32_338 = arith.constant 24 : i32
    %1171 = vector.broadcast %c24_i32_338 : i32 to vector<1x32xi32>
    %1172 = arith.cmpi slt, %1081, %1171 : vector<1x32xi32>
    %1173 = arith.andi %1170, %1172 : vector<1x32xi1>
    %1174 = arith.extui %1173 : vector<1x32xi1> to vector<1x32xi32>
    %1175 = arith.sitofp %1174 : vector<1x32xi32> to vector<1x32xf32>
    %1176 = vector.broadcast %1175 : vector<1x32xf32> to vector<24x32xf32>
    %1177 = arith.mulf %1078, %1176 : vector<24x32xf32>
    %cst_339 = arith.constant dense<0.000000e+00> : vector<24x24xf32>
    %1178 = tpu.matmul %1177, %1079, %cst_339 {dimension_numbers = #tpu.dot_dimension_numbers<[1], [1], [0], [0], [0, 0, 1, 0], [], []>} : vector<24x32xf32>, vector<24x32xf32>, vector<24x24xf32> -> vector<24x24xf32>
    %cst_340 = arith.constant 0.353553385 : f32
    %1179 = vector.broadcast %cst_340 : f32 to vector<24x24xf32>
    %1180 = arith.mulf %1178, %1179 : vector<24x24xf32>
    %cst_341 = arith.constant dense<0xFF800000> : vector<24xf32>
    %1181 = vector.multi_reduction <maximumf>, %1180, %cst_341 [1] : vector<24x24xf32> to vector<24xf32>
    %1182 = vector.shape_cast %1181 : vector<24xf32> to vector<24x1xf32>
    %1183 = vector.broadcast %1182 : vector<24x1xf32> to vector<24x24xf32>
    %1184 = arith.subf %1180, %1183 : vector<24x24xf32>
    %1185 = math.exp %1184 : vector<24x24xf32>
    %cst_342 = arith.constant 0.000000e+00 : f32
    %1186 = vector.broadcast %cst_342 : f32 to vector<24x24xf32>
    %1187 = vector.broadcast %1071 : vector<1x24xf32> to vector<24x24xf32>
    %1188 = arith.mulf %1185, %1187 : vector<24x24xf32>
    %cst_343 = arith.constant dense<0.000000e+00> : vector<24xf32>
    %1189 = vector.multi_reduction <add>, %1188, %cst_343 [1] : vector<24x24xf32> to vector<24xf32>
    %1190 = vector.shape_cast %1189 : vector<24xf32> to vector<24x1xf32>
    %cst_344 = arith.constant 0.000000e+00 : f32
    %1191 = vector.broadcast %cst_344 : f32 to vector<24x1xf32>
    %1192 = arith.cmpf ogt, %1190, %1191 : vector<24x1xf32>
    %cst_345 = arith.constant 1.000000e+00 : f32
    %1193 = vector.broadcast %cst_345 : f32 to vector<24x1xf32>
    %1194 = arith.select %1192, %1190, %1193 : vector<24x1xi1>, vector<24x1xf32>
    %1195 = tpu.reciprocal %1194 {approx = true} : vector<24x1xf32> -> vector<24x1xf32>
    %1196 = vector.extract %1077[0, 0] : f32 from vector<1x1xf32>
    %cst_346 = arith.constant 0.000000e+00 : f32
    %1197 = vector.broadcast %cst_346 : f32 to vector<24x1xf32>
    %1198 = arith.cmpf ogt, %1190, %1197 : vector<24x1xf32>
    %1199 = vector.broadcast %1195 : vector<24x1xf32> to vector<24x24xf32>
    %1200 = arith.mulf %1188, %1199 : vector<24x24xf32>
    %cst_347 = arith.constant 0.0416666679 : f32
    %1201 = vector.shape_cast %1198 : vector<24x1xi1> to vector<24x1xi1>
    %1202 = vector.broadcast %1201 : vector<24x1xi1> to vector<24x24xi1>
    %1203 = vector.broadcast %cst_347 : f32 to vector<24x24xf32>
    %1204 = arith.select %1202, %1200, %1203 : vector<24x24xi1>, vector<24x24xf32>
    %1205 = vector.broadcast %1196 : f32 to vector<24x24xf32>
    %1206 = arith.mulf %1205, %1204 : vector<24x24xf32>
    %1207 = arith.addf %1186, %1206 : vector<24x24xf32>
    %1208 = vector.broadcast %1175 : vector<1x32xf32> to vector<24x32xf32>
    %1209 = arith.mulf %1080, %1208 : vector<24x32xf32>
    %cst_348 = arith.constant dense<0.000000e+00> : vector<24x32xf32>
    %1210 = tpu.matmul %1207, %1209, %cst_348 {dimension_numbers = #tpu.dot_dimension_numbers<[1], [0], [0], [1], [0, 0, 1, 1], [], []>} : vector<24x24xf32>, vector<24x32xf32>, vector<24x32xf32> -> vector<24x32xf32>
    %1211 = arith.addf %1168, %1210 : vector<24x32xf32>
    %c24_i32_349 = arith.constant 24 : i32
    %1212 = vector.broadcast %c24_i32_349 : i32 to vector<1x32xi32>
    %1213 = arith.cmpi sge, %1081, %1212 : vector<1x32xi32>
    %c32_i32_350 = arith.constant 32 : i32
    %1214 = vector.broadcast %c32_i32_350 : i32 to vector<1x32xi32>
    %1215 = arith.cmpi slt, %1081, %1214 : vector<1x32xi32>
    %1216 = arith.andi %1213, %1215 : vector<1x32xi1>
    %1217 = arith.extui %1216 : vector<1x32xi1> to vector<1x32xi32>
    %1218 = arith.sitofp %1217 : vector<1x32xi32> to vector<1x32xf32>
    %1219 = vector.broadcast %1218 : vector<1x32xf32> to vector<24x32xf32>
    %1220 = arith.mulf %1078, %1219 : vector<24x32xf32>
    %cst_351 = arith.constant dense<0.000000e+00> : vector<24x24xf32>
    %1221 = tpu.matmul %1220, %1079, %cst_351 {dimension_numbers = #tpu.dot_dimension_numbers<[1], [1], [0], [0], [0, 0, 1, 0], [], []>} : vector<24x32xf32>, vector<24x32xf32>, vector<24x24xf32> -> vector<24x24xf32>
    %cst_352 = arith.constant 0.353553385 : f32
    %1222 = vector.broadcast %cst_352 : f32 to vector<24x24xf32>
    %1223 = arith.mulf %1221, %1222 : vector<24x24xf32>
    %cst_353 = arith.constant dense<0xFF800000> : vector<24xf32>
    %1224 = vector.multi_reduction <maximumf>, %1223, %cst_353 [1] : vector<24x24xf32> to vector<24xf32>
    %1225 = vector.shape_cast %1224 : vector<24xf32> to vector<24x1xf32>
    %1226 = vector.broadcast %1225 : vector<24x1xf32> to vector<24x24xf32>
    %1227 = arith.subf %1223, %1226 : vector<24x24xf32>
    %1228 = math.exp %1227 : vector<24x24xf32>
    %cst_354 = arith.constant 0.000000e+00 : f32
    %1229 = vector.broadcast %cst_354 : f32 to vector<24x24xf32>
    %1230 = vector.broadcast %1071 : vector<1x24xf32> to vector<24x24xf32>
    %1231 = arith.mulf %1228, %1230 : vector<24x24xf32>
    %cst_355 = arith.constant dense<0.000000e+00> : vector<24xf32>
    %1232 = vector.multi_reduction <add>, %1231, %cst_355 [1] : vector<24x24xf32> to vector<24xf32>
    %1233 = vector.shape_cast %1232 : vector<24xf32> to vector<24x1xf32>
    %cst_356 = arith.constant 0.000000e+00 : f32
    %1234 = vector.broadcast %cst_356 : f32 to vector<24x1xf32>
    %1235 = arith.cmpf ogt, %1233, %1234 : vector<24x1xf32>
    %cst_357 = arith.constant 1.000000e+00 : f32
    %1236 = vector.broadcast %cst_357 : f32 to vector<24x1xf32>
    %1237 = arith.select %1235, %1233, %1236 : vector<24x1xi1>, vector<24x1xf32>
    %1238 = tpu.reciprocal %1237 {approx = true} : vector<24x1xf32> -> vector<24x1xf32>
    %1239 = vector.extract %1077[0, 0] : f32 from vector<1x1xf32>
    %cst_358 = arith.constant 0.000000e+00 : f32
    %1240 = vector.broadcast %cst_358 : f32 to vector<24x1xf32>
    %1241 = arith.cmpf ogt, %1233, %1240 : vector<24x1xf32>
    %1242 = vector.broadcast %1238 : vector<24x1xf32> to vector<24x24xf32>
    %1243 = arith.mulf %1231, %1242 : vector<24x24xf32>
    %cst_359 = arith.constant 0.0416666679 : f32
    %1244 = vector.shape_cast %1241 : vector<24x1xi1> to vector<24x1xi1>
    %1245 = vector.broadcast %1244 : vector<24x1xi1> to vector<24x24xi1>
    %1246 = vector.broadcast %cst_359 : f32 to vector<24x24xf32>
    %1247 = arith.select %1245, %1243, %1246 : vector<24x24xi1>, vector<24x24xf32>
    %1248 = vector.broadcast %1239 : f32 to vector<24x24xf32>
    %1249 = arith.mulf %1248, %1247 : vector<24x24xf32>
    %1250 = arith.addf %1229, %1249 : vector<24x24xf32>
    %1251 = vector.broadcast %1218 : vector<1x32xf32> to vector<24x32xf32>
    %1252 = arith.mulf %1080, %1251 : vector<24x32xf32>
    %cst_360 = arith.constant dense<0.000000e+00> : vector<24x32xf32>
    %1253 = tpu.matmul %1250, %1252, %cst_360 {dimension_numbers = #tpu.dot_dimension_numbers<[1], [0], [0], [1], [0, 0, 1, 1], [], []>} : vector<24x24xf32>, vector<24x32xf32>, vector<24x32xf32> -> vector<24x32xf32>
    %1254 = arith.addf %1211, %1253 : vector<24x32xf32>
    %c0_361 = arith.constant 0 : index
    %c0_362 = arith.constant 0 : index
    %1255 = vector.load %arg27[%c0_361, %c0_362] : memref<32x32xf32, #tpu.memory_space<vmem>>, vector<32x32xf32>
    %cst_363 = arith.constant dense<0.000000e+00> : vector<24x32xf32>
    %1256 = tpu.matmul %1254, %1255, %cst_363 {dimension_numbers = #tpu.dot_dimension_numbers<[1], [0], [0], [1], [0, 0, 1, 1], [], []>} : vector<24x32xf32>, vector<32x32xf32>, vector<24x32xf32> -> vector<24x32xf32>
    %1257 = arith.addf %1066, %1256 : vector<24x32xf32>
    %c0_364 = arith.constant 0 : index
    %c0_365 = arith.constant 0 : index
    %1258 = vector.load %arg28[%c0_364, %c0_365] : memref<1x32xf32, #tpu.memory_space<vmem>>, vector<1x32xf32>
    %1259 = vector.broadcast %1258 : vector<1x32xf32> to vector<24x32xf32>
    %1260 = arith.addf %1257, %1259 : vector<24x32xf32>
    %1261 = vector.extract_strided_slice %10 {offsets = [2, 0], sizes = [1, 32], strides = [1, 1]} : vector<4x32xf32> to vector<1x32xf32>
    %1262 = vector.extract_strided_slice %11 {offsets = [2, 0], sizes = [1, 32], strides = [1, 1]} : vector<4x32xf32> to vector<1x32xf32>
    %cst_366 = arith.constant dense<0.000000e+00> : vector<24xf32>
    %1263 = vector.multi_reduction <add>, %1260, %cst_366 [1] : vector<24x32xf32> to vector<24xf32>
    %1264 = vector.shape_cast %1263 : vector<24xf32> to vector<24x1xf32>
    %cst_367 = arith.constant 3.200000e+01 : f32
    %1265 = vector.broadcast %cst_367 : f32 to vector<24x1xf32>
    %1266 = arith.divf %1264, %1265 : vector<24x1xf32>
    %1267 = vector.broadcast %1266 : vector<24x1xf32> to vector<24x32xf32>
    %1268 = arith.subf %1260, %1267 : vector<24x32xf32>
    %1269 = arith.mulf %1268, %1268 : vector<24x32xf32>
    %cst_368 = arith.constant dense<0.000000e+00> : vector<24xf32>
    %1270 = vector.multi_reduction <add>, %1269, %cst_368 [1] : vector<24x32xf32> to vector<24xf32>
    %1271 = vector.shape_cast %1270 : vector<24xf32> to vector<24x1xf32>
    %cst_369 = arith.constant 0.0322580636 : f32
    %1272 = vector.broadcast %cst_369 : f32 to vector<24x1xf32>
    %1273 = arith.mulf %1271, %1272 : vector<24x1xf32>
    %1274 = math.sqrt %1273 : vector<24x1xf32>
    %cst_370 = arith.constant 9.99999997E-7 : f32
    %1275 = vector.broadcast %cst_370 : f32 to vector<24x1xf32>
    %1276 = arith.addf %1274, %1275 : vector<24x1xf32>
    %1277 = vector.broadcast %1276 : vector<24x1xf32> to vector<24x32xf32>
    %1278 = arith.divf %1268, %1277 : vector<24x32xf32>
    %1279 = vector.broadcast %1261 : vector<1x32xf32> to vector<24x32xf32>
    %1280 = arith.mulf %1279, %1278 : vector<24x32xf32>
    %1281 = vector.broadcast %1262 : vector<1x32xf32> to vector<24x32xf32>
    %1282 = arith.addf %1280, %1281 : vector<24x32xf32>
    %c0_371 = arith.constant 0 : index
    %c0_372 = arith.constant 0 : index
    %1283 = vector.load %arg29[%c0_371, %c0_372] : memref<32x64xf32, #tpu.memory_space<vmem>>, vector<32x64xf32>
    %cst_373 = arith.constant dense<0.000000e+00> : vector<24x64xf32>
    %1284 = tpu.matmul %1282, %1283, %cst_373 {dimension_numbers = #tpu.dot_dimension_numbers<[1], [0], [0], [1], [0, 0, 1, 1], [], []>} : vector<24x32xf32>, vector<32x64xf32>, vector<24x64xf32> -> vector<24x64xf32>
    %c0_374 = arith.constant 0 : index
    %c0_375 = arith.constant 0 : index
    %1285 = vector.load %arg30[%c0_374, %c0_375] : memref<1x64xf32, #tpu.memory_space<vmem>>, vector<1x64xf32>
    %1286 = vector.broadcast %1285 : vector<1x64xf32> to vector<24x64xf32>
    %1287 = arith.addf %1284, %1286 : vector<24x64xf32>
    %cst_376 = arith.constant 0.000000e+00 : f32
    %1288 = vector.broadcast %cst_376 : f32 to vector<24x64xf32>
    %1289 = arith.maximumf %1287, %1288 : vector<24x64xf32>
    %c0_377 = arith.constant 0 : index
    %c0_378 = arith.constant 0 : index
    %1290 = vector.load %arg31[%c0_377, %c0_378] : memref<64x32xf32, #tpu.memory_space<vmem>>, vector<64x32xf32>
    %cst_379 = arith.constant dense<0.000000e+00> : vector<24x32xf32>
    %1291 = tpu.matmul %1289, %1290, %cst_379 {dimension_numbers = #tpu.dot_dimension_numbers<[1], [0], [0], [1], [0, 0, 1, 1], [], []>} : vector<24x64xf32>, vector<64x32xf32>, vector<24x32xf32> -> vector<24x32xf32>
    %1292 = arith.addf %1282, %1291 : vector<24x32xf32>
    %c0_380 = arith.constant 0 : index
    %c0_381 = arith.constant 0 : index
    %1293 = vector.load %arg32[%c0_380, %c0_381] : memref<1x32xf32, #tpu.memory_space<vmem>>, vector<1x32xf32>
    %1294 = vector.broadcast %1293 : vector<1x32xf32> to vector<24x32xf32>
    %1295 = arith.addf %1292, %1294 : vector<24x32xf32>
    %1296 = vector.extract_strided_slice %10 {offsets = [3, 0], sizes = [1, 32], strides = [1, 1]} : vector<4x32xf32> to vector<1x32xf32>
    %1297 = vector.extract_strided_slice %11 {offsets = [3, 0], sizes = [1, 32], strides = [1, 1]} : vector<4x32xf32> to vector<1x32xf32>
    %cst_382 = arith.constant dense<0.000000e+00> : vector<24xf32>
    %1298 = vector.multi_reduction <add>, %1295, %cst_382 [1] : vector<24x32xf32> to vector<24xf32>
    %1299 = vector.shape_cast %1298 : vector<24xf32> to vector<24x1xf32>
    %cst_383 = arith.constant 3.200000e+01 : f32
    %1300 = vector.broadcast %cst_383 : f32 to vector<24x1xf32>
    %1301 = arith.divf %1299, %1300 : vector<24x1xf32>
    %1302 = vector.broadcast %1301 : vector<24x1xf32> to vector<24x32xf32>
    %1303 = arith.subf %1295, %1302 : vector<24x32xf32>
    %1304 = arith.mulf %1303, %1303 : vector<24x32xf32>
    %cst_384 = arith.constant dense<0.000000e+00> : vector<24xf32>
    %1305 = vector.multi_reduction <add>, %1304, %cst_384 [1] : vector<24x32xf32> to vector<24xf32>
    %1306 = vector.shape_cast %1305 : vector<24xf32> to vector<24x1xf32>
    %cst_385 = arith.constant 0.0322580636 : f32
    %1307 = vector.broadcast %cst_385 : f32 to vector<24x1xf32>
    %1308 = arith.mulf %1306, %1307 : vector<24x1xf32>
    %1309 = math.sqrt %1308 : vector<24x1xf32>
    %cst_386 = arith.constant 9.99999997E-7 : f32
    %1310 = vector.broadcast %cst_386 : f32 to vector<24x1xf32>
    %1311 = arith.addf %1309, %1310 : vector<24x1xf32>
    %1312 = vector.broadcast %1311 : vector<24x1xf32> to vector<24x32xf32>
    %1313 = arith.divf %1303, %1312 : vector<24x32xf32>
    %1314 = vector.broadcast %1296 : vector<1x32xf32> to vector<24x32xf32>
    %1315 = arith.mulf %1314, %1313 : vector<24x32xf32>
    %1316 = vector.broadcast %1297 : vector<1x32xf32> to vector<24x32xf32>
    %1317 = arith.addf %1315, %1316 : vector<24x32xf32>
    %1318 = vector.extract_strided_slice %1317 {offsets = [0, 0], sizes = [16, 32], strides = [1, 1]} : vector<24x32xf32> to vector<16x32xf32>
    %c0_387 = arith.constant 0 : index
    %c0_388 = arith.constant 0 : index
    %c0_389 = arith.constant 0 : index
    %1319 = vector.load %arg35[%c0_387, %c0_388, %c0_389] : memref<1x16x32xf32, #tpu.memory_space<vmem>>, vector<1x16x32xf32>
    %1320 = vector.shape_cast %1319 : vector<1x16x32xf32> to vector<16x32xf32>
    %1321 = vector.shape_cast %1318 : vector<16x32xf32> to vector<1x16x32xf32>
    tpu.vector_store %arg35[%c0_387, %c0_388, %c0_389], %1321 {strides = array<i32>} : memref<1x16x32xf32, #tpu.memory_space<vmem>>, vector<1x16x32xf32>,
    %1322 = vector.extract_strided_slice %1317 {offsets = [16, 0], sizes = [8, 32], strides = [1, 1]} : vector<24x32xf32> to vector<8x32xf32>
    %c0_390 = arith.constant 0 : index
    %c0_391 = arith.constant 0 : index
    %c0_392 = arith.constant 0 : index
    %1323 = vector.load %arg36[%c0_390, %c0_391, %c0_392] : memref<1x8x32xf32, #tpu.memory_space<vmem>>, vector<1x8x32xf32>
    %1324 = vector.shape_cast %1323 : vector<1x8x32xf32> to vector<8x32xf32>
    %1325 = vector.shape_cast %1322 : vector<8x32xf32> to vector<1x8x32xf32>
    tpu.vector_store %arg36[%c0_390, %c0_391, %c0_392], %1325 {strides = array<i32>} : memref<1x8x32xf32, #tpu.memory_space<vmem>>, vector<1x8x32xf32>,
    return
  }
  func.func @transform_0(%arg0: i32) -> (i32, i32, i32) {
    %c0_i32 = arith.constant 0 : i32
    %c0_i32_0 = arith.constant 0 : i32
    %c0_i32_1 = arith.constant 0 : i32
    return %arg0, %c0_i32, %c0_i32_0 : i32, i32, i32
  }
  func.func @transform_1(%arg0: i32) -> (i32, i32, i32) {
    %c0_i32 = arith.constant 0 : i32
    %c0_i32_0 = arith.constant 0 : i32
    %c0_i32_1 = arith.constant 0 : i32
    return %arg0, %c0_i32, %c0_i32_0 : i32, i32, i32
  }
  func.func @transform_2(%arg0: i32) -> (i32, i32, i32) {
    %c0_i32 = arith.constant 0 : i32
    %c0_i32_0 = arith.constant 0 : i32
    %c0_i32_1 = arith.constant 0 : i32
    return %arg0, %c0_i32, %c0_i32_0 : i32, i32, i32
  }
  func.func @transform_3(%arg0: i32) -> (i32, i32, i32) {
    %c0_i32 = arith.constant 0 : i32
    %c0_i32_0 = arith.constant 0 : i32
    %c0_i32_1 = arith.constant 0 : i32
    return %arg0, %c0_i32, %c0_i32_0 : i32, i32, i32
  }
  func.func @transform_4(%arg0: i32) -> (i32, i32) {
    %c0_i32 = arith.constant 0 : i32
    %c0_i32_0 = arith.constant 0 : i32
    %c0_i32_1 = arith.constant 0 : i32
    return %c0_i32, %c0_i32_0 : i32, i32
  }
  func.func @transform_5(%arg0: i32) -> (i32, i32) {
    %c0_i32 = arith.constant 0 : i32
    %c0_i32_0 = arith.constant 0 : i32
    %c0_i32_1 = arith.constant 0 : i32
    return %c0_i32, %c0_i32_0 : i32, i32
  }
  func.func @transform_6(%arg0: i32) -> (i32, i32) {
    %c0_i32 = arith.constant 0 : i32
    %c0_i32_0 = arith.constant 0 : i32
    %c0_i32_1 = arith.constant 0 : i32
    return %c0_i32, %c0_i32_0 : i32, i32
  }
  func.func @transform_7(%arg0: i32) -> (i32, i32) {
    %c0_i32 = arith.constant 0 : i32
    %c0_i32_0 = arith.constant 0 : i32
    %c0_i32_1 = arith.constant 0 : i32
    return %c0_i32, %c0_i32_0 : i32, i32
  }
  func.func @transform_8(%arg0: i32) -> (i32, i32) {
    %c0_i32 = arith.constant 0 : i32
    %c0_i32_0 = arith.constant 0 : i32
    %c0_i32_1 = arith.constant 0 : i32
    return %c0_i32, %c0_i32_0 : i32, i32
  }
  func.func @transform_9(%arg0: i32) -> (i32, i32) {
    %c0_i32 = arith.constant 0 : i32
    %c0_i32_0 = arith.constant 0 : i32
    %c0_i32_1 = arith.constant 0 : i32
    return %c0_i32, %c0_i32_0 : i32, i32
  }
  func.func @transform_10(%arg0: i32) -> (i32, i32) {
    %c0_i32 = arith.constant 0 : i32
    %c0_i32_0 = arith.constant 0 : i32
    %c0_i32_1 = arith.constant 0 : i32
    return %c0_i32, %c0_i32_0 : i32, i32
  }
  func.func @transform_11(%arg0: i32) -> (i32, i32) {
    %c0_i32 = arith.constant 0 : i32
    %c0_i32_0 = arith.constant 0 : i32
    %c0_i32_1 = arith.constant 0 : i32
    return %c0_i32, %c0_i32_0 : i32, i32
  }
  func.func @transform_12(%arg0: i32) -> (i32, i32) {
    %c0_i32 = arith.constant 0 : i32
    %c0_i32_0 = arith.constant 0 : i32
    %c0_i32_1 = arith.constant 0 : i32
    return %c0_i32, %c0_i32_0 : i32, i32
  }
  func.func @transform_13(%arg0: i32) -> (i32, i32) {
    %c0_i32 = arith.constant 0 : i32
    %c0_i32_0 = arith.constant 0 : i32
    %c0_i32_1 = arith.constant 0 : i32
    return %c0_i32, %c0_i32_0 : i32, i32
  }
  func.func @transform_14(%arg0: i32) -> (i32, i32) {
    %c0_i32 = arith.constant 0 : i32
    %c0_i32_0 = arith.constant 0 : i32
    %c0_i32_1 = arith.constant 0 : i32
    return %c0_i32, %c0_i32_0 : i32, i32
  }
  func.func @transform_15(%arg0: i32) -> (i32, i32) {
    %c0_i32 = arith.constant 0 : i32
    %c0_i32_0 = arith.constant 0 : i32
    %c0_i32_1 = arith.constant 0 : i32
    return %c0_i32, %c0_i32_0 : i32, i32
  }
  func.func @transform_16(%arg0: i32) -> (i32, i32) {
    %c0_i32 = arith.constant 0 : i32
    %c0_i32_0 = arith.constant 0 : i32
    %c0_i32_1 = arith.constant 0 : i32
    return %c0_i32, %c0_i32_0 : i32, i32
  }
  func.func @transform_17(%arg0: i32) -> (i32, i32) {
    %c0_i32 = arith.constant 0 : i32
    %c0_i32_0 = arith.constant 0 : i32
    %c0_i32_1 = arith.constant 0 : i32
    return %c0_i32, %c0_i32_0 : i32, i32
  }
  func.func @transform_18(%arg0: i32) -> (i32, i32) {
    %c0_i32 = arith.constant 0 : i32
    %c0_i32_0 = arith.constant 0 : i32
    %c0_i32_1 = arith.constant 0 : i32
    return %c0_i32, %c0_i32_0 : i32, i32
  }
  func.func @transform_19(%arg0: i32) -> (i32, i32) {
    %c0_i32 = arith.constant 0 : i32
    %c0_i32_0 = arith.constant 0 : i32
    %c0_i32_1 = arith.constant 0 : i32
    return %c0_i32, %c0_i32_0 : i32, i32
  }
  func.func @transform_20(%arg0: i32) -> (i32, i32) {
    %c0_i32 = arith.constant 0 : i32
    %c0_i32_0 = arith.constant 0 : i32
    %c0_i32_1 = arith.constant 0 : i32
    return %c0_i32, %c0_i32_0 : i32, i32
  }
  func.func @transform_21(%arg0: i32) -> (i32, i32) {
    %c0_i32 = arith.constant 0 : i32
    %c0_i32_0 = arith.constant 0 : i32
    %c0_i32_1 = arith.constant 0 : i32
    return %c0_i32, %c0_i32_0 : i32, i32
  }
  func.func @transform_22(%arg0: i32) -> (i32, i32) {
    %c0_i32 = arith.constant 0 : i32
    %c0_i32_0 = arith.constant 0 : i32
    %c0_i32_1 = arith.constant 0 : i32
    return %c0_i32, %c0_i32_0 : i32, i32
  }
  func.func @transform_23(%arg0: i32) -> (i32, i32) {
    %c0_i32 = arith.constant 0 : i32
    %c0_i32_0 = arith.constant 0 : i32
    %c0_i32_1 = arith.constant 0 : i32
    return %c0_i32, %c0_i32_0 : i32, i32
  }
  func.func @transform_24(%arg0: i32) -> (i32, i32) {
    %c0_i32 = arith.constant 0 : i32
    %c0_i32_0 = arith.constant 0 : i32
    %c0_i32_1 = arith.constant 0 : i32
    return %c0_i32, %c0_i32_0 : i32, i32
  }
  func.func @transform_25(%arg0: i32) -> (i32, i32) {
    %c0_i32 = arith.constant 0 : i32
    %c0_i32_0 = arith.constant 0 : i32
    %c0_i32_1 = arith.constant 0 : i32
    return %c0_i32, %c0_i32_0 : i32, i32
  }
  func.func @transform_26(%arg0: i32) -> (i32, i32) {
    %c0_i32 = arith.constant 0 : i32
    %c0_i32_0 = arith.constant 0 : i32
    %c0_i32_1 = arith.constant 0 : i32
    return %c0_i32, %c0_i32_0 : i32, i32
  }
  func.func @transform_27(%arg0: i32) -> (i32, i32) {
    %c0_i32 = arith.constant 0 : i32
    %c0_i32_0 = arith.constant 0 : i32
    %c0_i32_1 = arith.constant 0 : i32
    return %c0_i32, %c0_i32_0 : i32, i32
  }
  func.func @transform_28(%arg0: i32) -> (i32, i32) {
    %c0_i32 = arith.constant 0 : i32
    %c0_i32_0 = arith.constant 0 : i32
    %c0_i32_1 = arith.constant 0 : i32
    return %c0_i32, %c0_i32_0 : i32, i32
  }
  func.func @transform_29(%arg0: i32) -> (i32, i32) {
    %c0_i32 = arith.constant 0 : i32
    %c0_i32_0 = arith.constant 0 : i32
    %c0_i32_1 = arith.constant 0 : i32
    return %c0_i32, %c0_i32_0 : i32, i32
  }
  func.func @transform_30(%arg0: i32) -> (i32, i32) {
    %c0_i32 = arith.constant 0 : i32
    %c0_i32_0 = arith.constant 0 : i32
    %c0_i32_1 = arith.constant 0 : i32
    return %c0_i32, %c0_i32_0 : i32, i32
  }
  func.func @transform_31(%arg0: i32) -> (i32, i32) {
    %c0_i32 = arith.constant 0 : i32
    %c0_i32_0 = arith.constant 0 : i32
    %c0_i32_1 = arith.constant 0 : i32
    return %c0_i32, %c0_i32_0 : i32, i32
  }
  func.func @transform_32(%arg0: i32) -> (i32, i32) {
    %c0_i32 = arith.constant 0 : i32
    %c0_i32_0 = arith.constant 0 : i32
    %c0_i32_1 = arith.constant 0 : i32
    return %c0_i32, %c0_i32_0 : i32, i32
  }
  func.func @transform_33(%arg0: i32) -> (i32, i32) {
    %c0_i32 = arith.constant 0 : i32
    %c0_i32_0 = arith.constant 0 : i32
    %c0_i32_1 = arith.constant 0 : i32
    return %c0_i32, %c0_i32_0 : i32, i32
  }
  func.func @transform_34(%arg0: i32) -> (i32, i32, i32) {
    %c0_i32 = arith.constant 0 : i32
    %c0_i32_0 = arith.constant 0 : i32
    %c0_i32_1 = arith.constant 0 : i32
    return %arg0, %c0_i32, %c0_i32_0 : i32, i32, i32
  }
  func.func @transform_35(%arg0: i32) -> (i32, i32, i32) {
    %c0_i32 = arith.constant 0 : i32
    %c0_i32_0 = arith.constant 0 : i32
    %c0_i32_1 = arith.constant 0 : i32
    return %arg0, %c0_i32, %c0_i32_0 : i32, i32, i32
  }
}

</mosaic_0001>

<llo_original>
// kernel: bi_block_apply.1
$region0: #{bi_block_apply.1}
  #allocation0 [shape = 'u32[]', space=smem, size = 0x4, offset = 0x4, fixed_abs, tag = 'smem constant byte address 0x4 - core index']
  #allocation1 [shape = 'u32[144,128]{1,0:T(1,128)}', space=vmem, size = 0x12000, scoped, tag = 'internal scratch']
  %s0 = inlined_call_operand.smem [shape: u32[36], index: -1, kind: input, shape index: {}]
  %s1 = sld [smem:[%s0]]
  %s2 = scalar_lea.smem %s0, 1
  %s3 = sld [smem:[%s2]]
  %s4 = scalar_lea.smem %s0, 2
  %s5 = sld [smem:[%s4]]
  %s6 = scalar_lea.smem %s0, 3
  %s7 = sld [smem:[%s6]]
  %s8 = scalar_lea.smem %s0, 4
  %s9 = sld [smem:[%s8]]
  %s10 = scalar_lea.smem %s0, 5
  %s11 = sld [smem:[%s10]]
  %s12 = scalar_lea.smem %s0, 6
  %s13 = sld [smem:[%s12]]
  %s14 = scalar_lea.smem %s0, 7
  %s15 = sld [smem:[%s14]]
  %s16 = scalar_lea.smem %s0, 8
  %s17 = sld [smem:[%s16]]
  %s18 = scalar_lea.smem %s0, 9
  %s19 = sld [smem:[%s18]]
  %s20 = scalar_lea.smem %s0, 10
  %s21 = sld [smem:[%s20]]
  %s22 = scalar_lea.smem %s0, 11
  %s23 = sld [smem:[%s22]]
  %s24 = scalar_lea.smem %s0, 12
  %s25 = sld [smem:[%s24]]
  %s26 = scalar_lea.smem %s0, 13
  %s27 = sld [smem:[%s26]]
  %s28 = scalar_lea.smem %s0, 14
  %s29 = sld [smem:[%s28]]
  %s30 = scalar_lea.smem %s0, 15
  %s31 = sld [smem:[%s30]]
  %s32 = scalar_lea.smem %s0, 16
  %s33 = sld [smem:[%s32]]
  %s34 = scalar_lea.smem %s0, 17
  %s35 = sld [smem:[%s34]]
  %s36 = scalar_lea.smem %s0, 18
  %s37 = sld [smem:[%s36]]
  %s38 = scalar_lea.smem %s0, 19
  %s39 = sld [smem:[%s38]]
  %s40 = scalar_lea.smem %s0, 20
  %s41 = sld [smem:[%s40]]
  %s42 = scalar_lea.smem %s0, 21
  %s43 = sld [smem:[%s42]]
  %s44 = scalar_lea.smem %s0, 22
  %s45 = sld [smem:[%s44]]
  %s46 = scalar_lea.smem %s0, 23
  %s47 = sld [smem:[%s46]]
  %s48 = scalar_lea.smem %s0, 24
  %s49 = sld [smem:[%s48]]
  %s50 = scalar_lea.smem %s0, 25
  %s51 = sld [smem:[%s50]]
  %s52 = scalar_lea.smem %s0, 26
  %s53 = sld [smem:[%s52]]
  %s54 = scalar_lea.smem %s0, 27
  %s55 = sld [smem:[%s54]]
  %s56 = scalar_lea.smem %s0, 28
  %s57 = sld [smem:[%s56]]
  %s58 = scalar_lea.smem %s0, 29
  %s59 = sld [smem:[%s58]]
  %s60 = scalar_lea.smem %s0, 30
  %s61 = sld [smem:[%s60]]
  %s62 = scalar_lea.smem %s0, 31
  %s63 = sld [smem:[%s62]]
  %s64 = scalar_lea.smem %s0, 32
  %s65 = sld [smem:[%s64]]
  %s66 = scalar_lea.smem %s0, 33
  %s67 = sld [smem:[%s66]]
  %s68 = scalar_lea.smem %s0, 34
  %s69 = sld [smem:[%s68]]
  %s70 = scalar_lea.smem %s0, 35
  %s71 = sld [smem:[%s70]]
  %72 = xla_tuple %s69, %s71
  %s73 = sld [smem:[#allocation0]]
  $region177: #{bi_block_apply.1} parent=0
    _
  %s75 = ssub.s32 1, %s73
  %s76 = scalar_select 0, %s75, %s73
  $region1: #{bi_block_apply.1} parent=0
    #allocation2 [shape = 'u8[16384]{0}', space=vmem, size = 0x4000, scoped, tag = 'output window, operand 0']
    #allocation3 [shape = 's32[2]{0}', space=sflag, size = 0x8, scoped, tag = 'scoped memory for bi_block_apply.1']
    #allocation4 [shape = 'u8[8192]{0}', space=vmem, size = 0x2000, scoped, tag = 'output window, operand 1']
    #allocation5 [shape = 's32[2]{0}', space=sflag, size = 0x8, scoped, tag = 'scoped memory for bi_block_apply.1']
    %77 = vsyncpa [#allocation3], 0
    %s78 = scalar_lea.sflag [#allocation3], 1
    %79 = vsyncpa %s78, 0
    %80 = vsyncpa [#allocation5], 0
    %s81 = scalar_lea.sflag [#allocation5], 1
    %82 = vsyncpa %s81, 0
    loop: start=0, step=1, limit=4
    $region2: #{bi_block_apply.1} parent=1 // loop_pre_header
      _
    $region3: #{bi_block_apply.1} parent=1 // loop_header
      %s84 = sphi 0, %s88
      %p85 = scmp.ge.s32.totalorder %s84, 4
      %s94 = sphi 0, %s96
      %s97 = sphi 0, %s94
      %s98 = sphi 0, %s97
      %s114 = sphi 0, %s98
      %s120 = sphi 0, %s122
      %s123 = sphi 0, %s120
      %s124 = sphi 0, %s123
      %s140 = sphi 0, %s124
      %s146 = sphi 0, %s148
      %s149 = sphi 0, %s146
      %s150 = sphi 0, %s149
      %s166 = sphi 0, %s150
      %s172 = sphi 0, %s174
      %s175 = sphi 0, %s172
      %s176 = sphi 0, %s175
      %s192 = sphi 0, %s176
      %s196 = sphi 0, %s196
      %s198 = sphi 0, %s196
      %s199 = sphi 0, %s198
      %s213 = sphi 0, %s199
      %s217 = sphi 0, %s217
      %s219 = sphi 0, %s217
      %s220 = sphi 0, %s219
      %s234 = sphi 0, %s220
      %s238 = sphi 0, %s238
      %s240 = sphi 0, %s238
      %s241 = sphi 0, %s240
      %s255 = sphi 0, %s241
      %s259 = sphi 0, %s259
      %s261 = sphi 0, %s259
      %s262 = sphi 0, %s261
      %s276 = sphi 0, %s262
      %s280 = sphi 0, %s280
      %s282 = sphi 0, %s280
      %s283 = sphi 0, %s282
      %s297 = sphi 0, %s283
      %s301 = sphi 0, %s301
      %s303 = sphi 0, %s301
      %s304 = sphi 0, %s303
      %s318 = sphi 0, %s304
      %s322 = sphi 0, %s322
      %s324 = sphi 0, %s322
      %s325 = sphi 0, %s324
      %s339 = sphi 0, %s325
      %s343 = sphi 0, %s343
      %s345 = sphi 0, %s343
      %s346 = sphi 0, %s345
      %s360 = sphi 0, %s346
      %s364 = sphi 0, %s364
      %s366 = sphi 0, %s364
      %s367 = sphi 0, %s366
      %s381 = sphi 0, %s367
      %s385 = sphi 0, %s385
      %s387 = sphi 0, %s385
      %s388 = sphi 0, %s387
      %s402 = sphi 0, %s388
      %s406 = sphi 0, %s406
      %s408 = sphi 0, %s406
      %s409 = sphi 0, %s408
      %s423 = sphi 0, %s409
      %s427 = sphi 0, %s427
      %s429 = sphi 0, %s427
      %s430 = sphi 0, %s429
      %s444 = sphi 0, %s430
      %s448 = sphi 0, %s448
      %s450 = sphi 0, %s448
      %s451 = sphi 0, %s450
      %s465 = sphi 0, %s451
      %s469 = sphi 0, %s469
      %s471 = sphi 0, %s469
      %s472 = sphi 0, %s471
      %s486 = sphi 0, %s472
      %s490 = sphi 0, %s490
      %s492 = sphi 0, %s490
      %s493 = sphi 0, %s492
      %s507 = sphi 0, %s493
      %s511 = sphi 0, %s511
      %s513 = sphi 0, %s511
      %s514 = sphi 0, %s513
      %s528 = sphi 0, %s514
      %s532 = sphi 0, %s532
      %s534 = sphi 0, %s532
      %s535 = sphi 0, %s534
      %s549 = sphi 0, %s535
      %s553 = sphi 0, %s553
      %s555 = sphi 0, %s553
      %s556 = sphi 0, %s555
      %s570 = sphi 0, %s556
      %s574 = sphi 0, %s574
      %s576 = sphi 0, %s574
      %s577 = sphi 0, %s576
      %s591 = sphi 0, %s577
      %s595 = sphi 0, %s595
      %s597 = sphi 0, %s595
      %s598 = sphi 0, %s597
      %s612 = sphi 0, %s598
      %s616 = sphi 0, %s616
      %s618 = sphi 0, %s616
      %s619 = sphi 0, %s618
      %s633 = sphi 0, %s619
      %s637 = sphi 0, %s637
      %s639 = sphi 0, %s637
      %s640 = sphi 0, %s639
      %s654 = sphi 0, %s640
      %s658 = sphi 0, %s658
      %s660 = sphi 0, %s658
      %s661 = sphi 0, %s660
      %s675 = sphi 0, %s661
      %s679 = sphi 0, %s679
      %s681 = sphi 0, %s679
      %s682 = sphi 0, %s681
      %s696 = sphi 0, %s682
      %s700 = sphi 0, %s700
      %s702 = sphi 0, %s700
      %s703 = sphi 0, %s702
      %s717 = sphi 0, %s703
      %s721 = sphi 0, %s721
      %s723 = sphi 0, %s721
      %s724 = sphi 0, %s723
      %s738 = sphi 0, %s724
      %s742 = sphi 0, %s742
      %s744 = sphi 0, %s742
      %s745 = sphi 0, %s744
      %s759 = sphi 0, %s745
      %s763 = sphi 0, %s763
      %s765 = sphi 0, %s763
      %s766 = sphi 0, %s765
      %s780 = sphi 0, %s766
      %s784 = sphi 0, %s784
      %s786 = sphi 0, %s784
      %s787 = sphi 0, %s786
      %s801 = sphi 0, %s787
      %s805 = sphi 0, %s805
      %s807 = sphi 0, %s805
      %s808 = sphi 0, %s807
      %s822 = sphi 0, %s808
      %s828 = sphi 0, %s830
      %s831 = sphi 0, %s828
      %s832 = sphi 0, %s831
      %s848 = sphi 0, %s832
      %s854 = sphi 0, %s856
      %s857 = sphi 0, %s854
      %s858 = sphi 0, %s857
      %s874 = sphi 0, %s858
    $region4: #{bi_block_apply.1} parent=1 // loop_header_branch
      %87 = sbr.rel (%p85) target = $region8
    $region5: #{bi_block_apply.1} parent=1 // loop_body
      %s89 = ssub.s32 %s84, 1
      %s90 = ssub.s32 %s84, 2
      %s91 = sadd.s32 %s84, 1
      %s92 = ssub.s32 %s84, %s91
      %p93 = scmp.eq.s32.totalorder %s92, 0
      %s95 = sadd.s32 %s94, 1
      %s96 = scalar_select %p93, %s94, %s95
      %p99 = pneg %p93
      %p100 = scmp.eq.s32.totalorder %s84, 1
      %p101 = por %p99, %p100
      %p102 = scmp.ne.s32.totalorder %s94, %s97
      %p103 = scmp.eq.s32.totalorder %s84, 0
      %p104 = por %p102, %p103
      %p105 = scmp.ne.s32.totalorder %s94, %s97
      %p106 = scmp.eq.s32.totalorder %s89, 1
      %p107 = por %p105, %p106
      %p108 = scmp.ne.s32.totalorder %s97, %s98
      %p109 = scmp.eq.s32.totalorder %s89, 0
      %p110 = por %p108, %p109
      %p111 = scmp.ne.s32.totalorder %s97, %s98
      %p112 = scmp.eq.s32.totalorder %s90, 1
      %p113 = por %p111, %p112
      %p115 = scmp.ne.s32.totalorder %s98, %s114
      %p116 = scmp.eq.s32.totalorder %s90, 0
      %p117 = por %p115, %p116
      %s118 = ssub.s32 %s84, %s91
      %p119 = scmp.eq.s32.totalorder %s118, 0
      %s121 = sadd.s32 %s120, 1
      %s122 = scalar_select %p119, %s120, %s121
      %p125 = pneg %p119
      %p126 = scmp.eq.s32.totalorder %s84, 1
      %p127 = por %p125, %p126
      %p128 = scmp.ne.s32.totalorder %s120, %s123
      %p129 = scmp.eq.s32.totalorder %s84, 0
      %p130 = por %p128, %p129
      %p131 = scmp.ne.s32.totalorder %s120, %s123
      %p132 = scmp.eq.s32.totalorder %s89, 1
      %p133 = por %p131, %p132
      %p134 = scmp.ne.s32.totalorder %s123, %s124
      %p135 = scmp.eq.s32.totalorder %s89, 0
      %p136 = por %p134, %p135
      %p137 = scmp.ne.s32.totalorder %s123, %s124
      %p138 = scmp.eq.s32.totalorder %s90, 1
      %p139 = por %p137, %p138
      %p141 = scmp.ne.s32.totalorder %s124, %s140
      %p142 = scmp.eq.s32.totalorder %s90, 0
      %p143 = por %p141, %p142
      %s144 = ssub.s32 %s84, %s91
      %p145 = scmp.eq.s32.totalorder %s144, 0
      %s147 = sadd.s32 %s146, 1
      %s148 = scalar_select %p145, %s146, %s147
      %p151 = pneg %p145
      %p152 = scmp.eq.s32.totalorder %s84, 1
      %p153 = por %p151, %p152
      %p154 = scmp.ne.s32.totalorder %s146, %s149
      %p155 = scmp.eq.s32.totalorder %s84, 0
      %p156 = por %p154, %p155
      %p157 = scmp.ne.s32.totalorder %s146, %s149
      %p158 = scmp.eq.s32.totalorder %s89, 1
      %p159 = por %p157, %p158
      %p160 = scmp.ne.s32.totalorder %s149, %s150
      %p161 = scmp.eq.s32.totalorder %s89, 0
      %p162 = por %p160, %p161
      %p163 = scmp.ne.s32.totalorder %s149, %s150
      %p164 = scmp.eq.s32.totalorder %s90, 1
      %p165 = por %p163, %p164
      %p167 = scmp.ne.s32.totalorder %s150, %s166
      %p168 = scmp.eq.s32.totalorder %s90, 0
      %p169 = por %p167, %p168
      %s170 = ssub.s32 %s84, %s91
      %p171 = scmp.eq.s32.totalorder %s170, 0
      %s173 = sadd.s32 %s172, 1
      %s174 = scalar_select %p171, %s172, %s173
      %p177 = pneg %p171
      %p178 = scmp.eq.s32.totalorder %s84, 1
      %p179 = por %p177, %p178
      %p180 = scmp.ne.s32.totalorder %s172, %s175
      %p181 = scmp.eq.s32.totalorder %s84, 0
      %p182 = por %p180, %p181
      %p183 = scmp.ne.s32.totalorder %s172, %s175
      %p184 = scmp.eq.s32.totalorder %s89, 1
      %p185 = por %p183, %p184
      %p186 = scmp.ne.s32.totalorder %s175, %s176
      %p187 = scmp.eq.s32.totalorder %s89, 0
      %p188 = por %p186, %p187
      %p189 = scmp.ne.s32.totalorder %s175, %s176
      %p190 = scmp.eq.s32.totalorder %s90, 1
      %p191 = por %p189, %p190
      %p193 = scmp.ne.s32.totalorder %s176, %s192
      %p194 = scmp.eq.s32.totalorder %s90, 0
      %p195 = por %p193, %p194
      %s197 = sadd.s32 %s196, 1
      %p200 = scmp.eq.s32.totalorder %s84, 1
      %p201 = scmp.ne.s32.totalorder %s196, %s198
      %p202 = scmp.eq.s32.totalorder %s84, 0
      %p203 = por %p201, %p202
      %p204 = scmp.ne.s32.totalorder %s196, %s198
      %p205 = scmp.eq.s32.totalorder %s89, 1
      %p206 = por %p204, %p205
      %p207 = scmp.ne.s32.totalorder %s198, %s199
      %p208 = scmp.eq.s32.totalorder %s89, 0
      %p209 = por %p207, %p208
      %p210 = scmp.ne.s32.totalorder %s198, %s199
      %p211 = scmp.eq.s32.totalorder %s90, 1
      %p212 = por %p210, %p211
      %p214 = scmp.ne.s32.totalorder %s199, %s213
      %p215 = scmp.eq.s32.totalorder %s90, 0
      %p216 = por %p214, %p215
      %s218 = sadd.s32 %s217, 1
      %p221 = scmp.eq.s32.totalorder %s84, 1
      %p222 = scmp.ne.s32.totalorder %s217, %s219
      %p223 = scmp.eq.s32.totalorder %s84, 0
      %p224 = por %p222, %p223
      %p225 = scmp.ne.s32.totalorder %s217, %s219
      %p226 = scmp.eq.s32.totalorder %s89, 1
      %p227 = por %p225, %p226
      %p228 = scmp.ne.s32.totalorder %s219, %s220
      %p229 = scmp.eq.s32.totalorder %s89, 0
      %p230 = por %p228, %p229
      %p231 = scmp.ne.s32.totalorder %s219, %s220
      %p232 = scmp.eq.s32.totalorder %s90, 1
      %p233 = por %p231, %p232
      %p235 = scmp.ne.s32.totalorder %s220, %s234
      %p236 = scmp.eq.s32.totalorder %s90, 0
      %p237 = por %p235, %p236
      %s239 = sadd.s32 %s238, 1
      %p242 = scmp.eq.s32.totalorder %s84, 1
      %p243 = scmp.ne.s32.totalorder %s238, %s240
      %p244 = scmp.eq.s32.totalorder %s84, 0
      %p245 = por %p243, %p244
      %p246 = scmp.ne.s32.totalorder %s238, %s240
      %p247 = scmp.eq.s32.totalorder %s89, 1
      %p248 = por %p246, %p247
      %p249 = scmp.ne.s32.totalorder %s240, %s241
      %p250 = scmp.eq.s32.totalorder %s89, 0
      %p251 = por %p249, %p250
      %p252 = scmp.ne.s32.totalorder %s240, %s241
      %p253 = scmp.eq.s32.totalorder %s90, 1
      %p254 = por %p252, %p253
      %p256 = scmp.ne.s32.totalorder %s241, %s255
      %p257 = scmp.eq.s32.totalorder %s90, 0
      %p258 = por %p256, %p257
      %s260 = sadd.s32 %s259, 1
      %p263 = scmp.eq.s32.totalorder %s84, 1
      %p264 = scmp.ne.s32.totalorder %s259, %s261
      %p265 = scmp.eq.s32.totalorder %s84, 0
      %p266 = por %p264, %p265
      %p267 = scmp.ne.s32.totalorder %s259, %s261
      %p268 = scmp.eq.s32.totalorder %s89, 1
      %p269 = por %p267, %p268
      %p270 = scmp.ne.s32.totalorder %s261, %s262
      %p271 = scmp.eq.s32.totalorder %s89, 0
      %p272 = por %p270, %p271
      %p273 = scmp.ne.s32.totalorder %s261, %s262
      %p274 = scmp.eq.s32.totalorder %s90, 1
      %p275 = por %p273, %p274
      %p277 = scmp.ne.s32.totalorder %s262, %s276
      %p278 = scmp.eq.s32.totalorder %s90, 0
      %p279 = por %p277, %p278
      %s281 = sadd.s32 %s280, 1
      %p284 = scmp.eq.s32.totalorder %s84, 1
      %p285 = scmp.ne.s32.totalorder %s280, %s282
      %p286 = scmp.eq.s32.totalorder %s84, 0
      %p287 = por %p285, %p286
      %p288 = scmp.ne.s32.totalorder %s280, %s282
      %p289 = scmp.eq.s32.totalorder %s89, 1
      %p290 = por %p288, %p289
      %p291 = scmp.ne.s32.totalorder %s282, %s283
      %p292 = scmp.eq.s32.totalorder %s89, 0
      %p293 = por %p291, %p292
      %p294 = scmp.ne.s32.totalorder %s282, %s283
      %p295 = scmp.eq.s32.totalorder %s90, 1
      %p296 = por %p294, %p295
      %p298 = scmp.ne.s32.totalorder %s283, %s297
      %p299 = scmp.eq.s32.totalorder %s90, 0
      %p300 = por %p298, %p299
      %s302 = sadd.s32 %s301, 1
      %p305 = scmp.eq.s32.totalorder %s84, 1
      %p306 = scmp.ne.s32.totalorder %s301, %s303
      %p307 = scmp.eq.s32.totalorder %s84, 0
      %p308 = por %p306, %p307
      %p309 = scmp.ne.s32.totalorder %s301, %s303
      %p310 = scmp.eq.s32.totalorder %s89, 1
      %p311 = por %p309, %p310
      %p312 = scmp.ne.s32.totalorder %s303, %s304
      %p313 = scmp.eq.s32.totalorder %s89, 0
      %p314 = por %p312, %p313
      %p315 = scmp.ne.s32.totalorder %s303, %s304
      %p316 = scmp.eq.s32.totalorder %s90, 1
      %p317 = por %p315, %p316
      %p319 = scmp.ne.s32.totalorder %s304, %s318
      %p320 = scmp.eq.s32.totalorder %s90, 0
      %p321 = por %p319, %p320
      %s323 = sadd.s32 %s322, 1
      %p326 = scmp.eq.s32.totalorder %s84, 1
      %p327 = scmp.ne.s32.totalorder %s322, %s324
      %p328 = scmp.eq.s32.totalorder %s84, 0
      %p329 = por %p327, %p328
      %p330 = scmp.ne.s32.totalorder %s322, %s324
      %p331 = scmp.eq.s32.totalorder %s89, 1
      %p332 = por %p330, %p331
      %p333 = scmp.ne.s32.totalorder %s324, %s325
      %p334 = scmp.eq.s32.totalorder %s89, 0
      %p335 = por %p333, %p334
      %p336 = scmp.ne.s32.totalorder %s324, %s325
      %p337 = scmp.eq.s32.totalorder %s90, 1
      %p338 = por %p336, %p337
      %p340 = scmp.ne.s32.totalorder %s325, %s339
      %p341 = scmp.eq.s32.totalorder %s90, 0
      %p342 = por %p340, %p341
      %s344 = sadd.s32 %s343, 1
      %p347 = scmp.eq.s32.totalorder %s84, 1
      %p348 = scmp.ne.s32.totalorder %s343, %s345
      %p349 = scmp.eq.s32.totalorder %s84, 0
      %p350 = por %p348, %p349
      %p351 = scmp.ne.s32.totalorder %s343, %s345
      %p352 = scmp.eq.s32.totalorder %s89, 1
      %p353 = por %p351, %p352
      %p354 = scmp.ne.s32.totalorder %s345, %s346
      %p355 = scmp.eq.s32.totalorder %s89, 0
      %p356 = por %p354, %p355
      %p357 = scmp.ne.s32.totalorder %s345, %s346
      %p358 = scmp.eq.s32.totalorder %s90, 1
      %p359 = por %p357, %p358
      %p361 = scmp.ne.s32.totalorder %s346, %s360
      %p362 = scmp.eq.s32.totalorder %s90, 0
      %p363 = por %p361, %p362
      %s365 = sadd.s32 %s364, 1
      %p368 = scmp.eq.s32.totalorder %s84, 1
      %p369 = scmp.ne.s32.totalorder %s364, %s366
      %p370 = scmp.eq.s32.totalorder %s84, 0
      %p371 = por %p369, %p370
      %p372 = scmp.ne.s32.totalorder %s364, %s366
      %p373 = scmp.eq.s32.totalorder %s89, 1
      %p374 = por %p372, %p373
      %p375 = scmp.ne.s32.totalorder %s366, %s367
      %p376 = scmp.eq.s32.totalorder %s89, 0
      %p377 = por %p375, %p376
      %p378 = scmp.ne.s32.totalorder %s366, %s367
      %p379 = scmp.eq.s32.totalorder %s90, 1
      %p380 = por %p378, %p379
      %p382 = scmp.ne.s32.totalorder %s367, %s381
      %p383 = scmp.eq.s32.totalorder %s90, 0
      %p384 = por %p382, %p383
      %s386 = sadd.s32 %s385, 1
      %p389 = scmp.eq.s32.totalorder %s84, 1
      %p390 = scmp.ne.s32.totalorder %s385, %s387
      %p391 = scmp.eq.s32.totalorder %s84, 0
      %p392 = por %p390, %p391
      %p393 = scmp.ne.s32.totalorder %s385, %s387
      %p394 = scmp.eq.s32.totalorder %s89, 1
      %p395 = por %p393, %p394
      %p396 = scmp.ne.s32.totalorder %s387, %s388
      %p397 = scmp.eq.s32.totalorder %s89, 0
      %p398 = por %p396, %p397
      %p399 = scmp.ne.s32.totalorder %s387, %s388
      %p400 = scmp.eq.s32.totalorder %s90, 1
      %p401 = por %p399, %p400
      %p403 = scmp.ne.s32.totalorder %s388, %s402
      %p404 = scmp.eq.s32.totalorder %s90, 0
      %p405 = por %p403, %p404
      %s407 = sadd.s32 %s406, 1
      %p410 = scmp.eq.s32.totalorder %s84, 1
      %p411 = scmp.ne.s32.totalorder %s406, %s408
      %p412 = scmp.eq.s32.totalorder %s84, 0
      %p413 = por %p411, %p412
      %p414 = scmp.ne.s32.totalorder %s406, %s408
      %p415 = scmp.eq.s32.totalorder %s89, 1
      %p416 = por %p414, %p415
      %p417 = scmp.ne.s32.totalorder %s408, %s409
      %p418 = scmp.eq.s32.totalorder %s89, 0
      %p419 = por %p417, %p418
      %p420 = scmp.ne.s32.totalorder %s408, %s409
      %p421 = scmp.eq.s32.totalorder %s90, 1
      %p422 = por %p420, %p421
      %p424 = scmp.ne.s32.totalorder %s409, %s423
      %p425 = scmp.eq.s32.totalorder %s90, 0
      %p426 = por %p424, %p425
      %s428 = sadd.s32 %s427, 1
      %p431 = scmp.eq.s32.totalorder %s84, 1
      %p432 = scmp.ne.s32.totalorder %s427, %s429
      %p433 = scmp.eq.s32.totalorder %s84, 0
      %p434 = por %p432, %p433
      %p435 = scmp.ne.s32.totalorder %s427, %s429
      %p436 = scmp.eq.s32.totalorder %s89, 1
      %p437 = por %p435, %p436
      %p438 = scmp.ne.s32.totalorder %s429, %s430
      %p439 = scmp.eq.s32.totalorder %s89, 0
      %p440 = por %p438, %p439
      %p441 = scmp.ne.s32.totalorder %s429, %s430
      %p442 = scmp.eq.s32.totalorder %s90, 1
      %p443 = por %p441, %p442
      %p445 = scmp.ne.s32.totalorder %s430, %s444
      %p446 = scmp.eq.s32.totalorder %s90, 0
      %p447 = por %p445, %p446
      %s449 = sadd.s32 %s448, 1
      %p452 = scmp.eq.s32.totalorder %s84, 1
      %p453 = scmp.ne.s32.totalorder %s448, %s450
      %p454 = scmp.eq.s32.totalorder %s84, 0
      %p455 = por %p453, %p454
      %p456 = scmp.ne.s32.totalorder %s448, %s450
      %p457 = scmp.eq.s32.totalorder %s89, 1
      %p458 = por %p456, %p457
      %p459 = scmp.ne.s32.totalorder %s450, %s451
      %p460 = scmp.eq.s32.totalorder %s89, 0
      %p461 = por %p459, %p460
      %p462 = scmp.ne.s32.totalorder %s450, %s451
      %p463 = scmp.eq.s32.totalorder %s90, 1
      %p464 = por %p462, %p463
      %p466 = scmp.ne.s32.totalorder %s451, %s465
      %p467 = scmp.eq.s32.totalorder %s90, 0
      %p468 = por %p466, %p467
      %s470 = sadd.s32 %s469, 1
      %p473 = scmp.eq.s32.totalorder %s84, 1
      %p474 = scmp.ne.s32.totalorder %s469, %s471
      %p475 = scmp.eq.s32.totalorder %s84, 0
      %p476 = por %p474, %p475
      %p477 = scmp.ne.s32.totalorder %s469, %s471
      %p478 = scmp.eq.s32.totalorder %s89, 1
      %p479 = por %p477, %p478
      %p480 = scmp.ne.s32.totalorder %s471, %s472
      %p481 = scmp.eq.s32.totalorder %s89, 0
      %p482 = por %p480, %p481
      %p483 = scmp.ne.s32.totalorder %s471, %s472
      %p484 = scmp.eq.s32.totalorder %s90, 1
      %p485 = por %p483, %p484
      %p487 = scmp.ne.s32.totalorder %s472, %s486
      %p488 = scmp.eq.s32.totalorder %s90, 0
      %p489 = por %p487, %p488
      %s491 = sadd.s32 %s490, 1
      %p494 = scmp.eq.s32.totalorder %s84, 1
      %p495 = scmp.ne.s32.totalorder %s490, %s492
      %p496 = scmp.eq.s32.totalorder %s84, 0
      %p497 = por %p495, %p496
      %p498 = scmp.ne.s32.totalorder %s490, %s492
      %p499 = scmp.eq.s32.totalorder %s89, 1
      %p500 = por %p498, %p499
      %p501 = scmp.ne.s32.totalorder %s492, %s493
      %p502 = scmp.eq.s32.totalorder %s89, 0
      %p503 = por %p501, %p502
      %p504 = scmp.ne.s32.totalorder %s492, %s493
      %p505 = scmp.eq.s32.totalorder %s90, 1
      %p506 = por %p504, %p505
      %p508 = scmp.ne.s32.totalorder %s493, %s507
      %p509 = scmp.eq.s32.totalorder %s90, 0
      %p510 = por %p508, %p509
      %s512 = sadd.s32 %s511, 1
      %p515 = scmp.eq.s32.totalorder %s84, 1
      %p516 = scmp.ne.s32.totalorder %s511, %s513
      %p517 = scmp.eq.s32.totalorder %s84, 0
      %p518 = por %p516, %p517
      %p519 = scmp.ne.s32.totalorder %s511, %s513
      %p520 = scmp.eq.s32.totalorder %s89, 1
      %p521 = por %p519, %p520
      %p522 = scmp.ne.s32.totalorder %s513, %s514
      %p523 = scmp.eq.s32.totalorder %s89, 0
      %p524 = por %p522, %p523
      %p525 = scmp.ne.s32.totalorder %s513, %s514
      %p526 = scmp.eq.s32.totalorder %s90, 1
      %p527 = por %p525, %p526
      %p529 = scmp.ne.s32.totalorder %s514, %s528
      %p530 = scmp.eq.s32.totalorder %s90, 0
      %p531 = por %p529, %p530
      %s533 = sadd.s32 %s532, 1
      %p536 = scmp.eq.s32.totalorder %s84, 1
      %p537 = scmp.ne.s32.totalorder %s532, %s534
      %p538 = scmp.eq.s32.totalorder %s84, 0
      %p539 = por %p537, %p538
      %p540 = scmp.ne.s32.totalorder %s532, %s534
      %p541 = scmp.eq.s32.totalorder %s89, 1
      %p542 = por %p540, %p541
      %p543 = scmp.ne.s32.totalorder %s534, %s535
      %p544 = scmp.eq.s32.totalorder %s89, 0
      %p545 = por %p543, %p544
      %p546 = scmp.ne.s32.totalorder %s534, %s535
      %p547 = scmp.eq.s32.totalorder %s90, 1
      %p548 = por %p546, %p547
      %p550 = scmp.ne.s32.totalorder %s535, %s549
      %p551 = scmp.eq.s32.totalorder %s90, 0
      %p552 = por %p550, %p551
      %s554 = sadd.s32 %s553, 1
      %p557 = scmp.eq.s32.totalorder %s84, 1
      %p558 = scmp.ne.s32.totalorder %s553, %s555
      %p559 = scmp.eq.s32.totalorder %s84, 0
      %p560 = por %p558, %p559
      %p561 = scmp.ne.s32.totalorder %s553, %s555
      %p562 = scmp.eq.s32.totalorder %s89, 1
      %p563 = por %p561, %p562
      %p564 = scmp.ne.s32.totalorder %s555, %s556
      %p565 = scmp.eq.s32.totalorder %s89, 0
      %p566 = por %p564, %p565
      %p567 = scmp.ne.s32.totalorder %s555, %s556
      %p568 = scmp.eq.s32.totalorder %s90, 1
      %p569 = por %p567, %p568
      %p571 = scmp.ne.s32.totalorder %s556, %s570
      %p572 = scmp.eq.s32.totalorder %s90, 0
      %p573 = por %p571, %p572
      %s575 = sadd.s32 %s574, 1
      %p578 = scmp.eq.s32.totalorder %s84, 1
      %p579 = scmp.ne.s32.totalorder %s574, %s576
      %p580 = scmp.eq.s32.totalorder %s84, 0
      %p581 = por %p579, %p580
      %p582 = scmp.ne.s32.totalorder %s574, %s576
      %p583 = scmp.eq.s32.totalorder %s89, 1
      %p584 = por %p582, %p583
      %p585 = scmp.ne.s32.totalorder %s576, %s577
      %p586 = scmp.eq.s32.totalorder %s89, 0
      %p587 = por %p585, %p586
      %p588 = scmp.ne.s32.totalorder %s576, %s577
      %p589 = scmp.eq.s32.totalorder %s90, 1
      %p590 = por %p588, %p589
      %p592 = scmp.ne.s32.totalorder %s577, %s591
      %p593 = scmp.eq.s32.totalorder %s90, 0
      %p594 = por %p592, %p593
      %s596 = sadd.s32 %s595, 1
      %p599 = scmp.eq.s32.totalorder %s84, 1
      %p600 = scmp.ne.s32.totalorder %s595, %s597
      %p601 = scmp.eq.s32.totalorder %s84, 0
      %p602 = por %p600, %p601
      %p603 = scmp.ne.s32.totalorder %s595, %s597
      %p604 = scmp.eq.s32.totalorder %s89, 1
      %p605 = por %p603, %p604
      %p606 = scmp.ne.s32.totalorder %s597, %s598
      %p607 = scmp.eq.s32.totalorder %s89, 0
      %p608 = por %p606, %p607
      %p609 = scmp.ne.s32.totalorder %s597, %s598
      %p610 = scmp.eq.s32.totalorder %s90, 1
      %p611 = por %p609, %p610
      %p613 = scmp.ne.s32.totalorder %s598, %s612
      %p614 = scmp.eq.s32.totalorder %s90, 0
      %p615 = por %p613, %p614
      %s617 = sadd.s32 %s616, 1
      %p620 = scmp.eq.s32.totalorder %s84, 1
      %p621 = scmp.ne.s32.totalorder %s616, %s618
      %p622 = scmp.eq.s32.totalorder %s84, 0
      %p623 = por %p621, %p622
      %p624 = scmp.ne.s32.totalorder %s616, %s618
      %p625 = scmp.eq.s32.totalorder %s89, 1
      %p626 = por %p624, %p625
      %p627 = scmp.ne.s32.totalorder %s618, %s619
      %p628 = scmp.eq.s32.totalorder %s89, 0
      %p629 = por %p627, %p628
      %p630 = scmp.ne.s32.totalorder %s618, %s619
      %p631 = scmp.eq.s32.totalorder %s90, 1
      %p632 = por %p630, %p631
      %p634 = scmp.ne.s32.totalorder %s619, %s633
      %p635 = scmp.eq.s32.totalorder %s90, 0
      %p636 = por %p634, %p635
      %s638 = sadd.s32 %s637, 1
      %p641 = scmp.eq.s32.totalorder %s84, 1
      %p642 = scmp.ne.s32.totalorder %s637, %s639
      %p643 = scmp.eq.s32.totalorder %s84, 0
      %p644 = por %p642, %p643
      %p645 = scmp.ne.s32.totalorder %s637, %s639
      %p646 = scmp.eq.s32.totalorder %s89, 1
      %p647 = por %p645, %p646
      %p648 = scmp.ne.s32.totalorder %s639, %s640
      %p649 = scmp.eq.s32.totalorder %s89, 0
      %p650 = por %p648, %p649
      %p651 = scmp.ne.s32.totalorder %s639, %s640
      %p652 = scmp.eq.s32.totalorder %s90, 1
      %p653 = por %p651, %p652
      %p655 = scmp.ne.s32.totalorder %s640, %s654
      %p656 = scmp.eq.s32.totalorder %s90, 0
      %p657 = por %p655, %p656
      %s659 = sadd.s32 %s658, 1
      %p662 = scmp.eq.s32.totalorder %s84, 1
      %p663 = scmp.ne.s32.totalorder %s658, %s660
      %p664 = scmp.eq.s32.totalorder %s84, 0
      %p665 = por %p663, %p664
      %p666 = scmp.ne.s32.totalorder %s658, %s660
      %p667 = scmp.eq.s32.totalorder %s89, 1
      %p668 = por %p666, %p667
      %p669 = scmp.ne.s32.totalorder %s660, %s661
      %p670 = scmp.eq.s32.totalorder %s89, 0
      %p671 = por %p669, %p670
      %p672 = scmp.ne.s32.totalorder %s660, %s661
      %p673 = scmp.eq.s32.totalorder %s90, 1
      %p674 = por %p672, %p673
      %p676 = scmp.ne.s32.totalorder %s661, %s675
      %p677 = scmp.eq.s32.totalorder %s90, 0
      %p678 = por %p676, %p677
      %s680 = sadd.s32 %s679, 1
      %p683 = scmp.eq.s32.totalorder %s84, 1
      %p684 = scmp.ne.s32.totalorder %s679, %s681
      %p685 = scmp.eq.s32.totalorder %s84, 0
      %p686 = por %p684, %p685
      %p687 = scmp.ne.s32.totalorder %s679, %s681
      %p688 = scmp.eq.s32.totalorder %s89, 1
      %p689 = por %p687, %p688
      %p690 = scmp.ne.s32.totalorder %s681, %s682
      %p691 = scmp.eq.s32.totalorder %s89, 0
      %p692 = por %p690, %p691
      %p693 = scmp.ne.s32.totalorder %s681, %s682
      %p694 = scmp.eq.s32.totalorder %s90, 1
      %p695 = por %p693, %p694
      %p697 = scmp.ne.s32.totalorder %s682, %s696
      %p698 = scmp.eq.s32.totalorder %s90, 0
      %p699 = por %p697, %p698
      %s701 = sadd.s32 %s700, 1
      %p704 = scmp.eq.s32.totalorder %s84, 1
      %p705 = scmp.ne.s32.totalorder %s700, %s702
      %p706 = scmp.eq.s32.totalorder %s84, 0
      %p707 = por %p705, %p706
      %p708 = scmp.ne.s32.totalorder %s700, %s702
      %p709 = scmp.eq.s32.totalorder %s89, 1
      %p710 = por %p708, %p709
      %p711 = scmp.ne.s32.totalorder %s702, %s703
      %p712 = scmp.eq.s32.totalorder %s89, 0
      %p713 = por %p711, %p712
      %p714 = scmp.ne.s32.totalorder %s702, %s703
      %p715 = scmp.eq.s32.totalorder %s90, 1
      %p716 = por %p714, %p715
      %p718 = scmp.ne.s32.totalorder %s703, %s717
      %p719 = scmp.eq.s32.totalorder %s90, 0
      %p720 = por %p718, %p719
      %s722 = sadd.s32 %s721, 1
      %p725 = scmp.eq.s32.totalorder %s84, 1
      %p726 = scmp.ne.s32.totalorder %s721, %s723
      %p727 = scmp.eq.s32.totalorder %s84, 0
      %p728 = por %p726, %p727
      %p729 = scmp.ne.s32.totalorder %s721, %s723
      %p730 = scmp.eq.s32.totalorder %s89, 1
      %p731 = por %p729, %p730
      %p732 = scmp.ne.s32.totalorder %s723, %s724
      %p733 = scmp.eq.s32.totalorder %s89, 0
      %p734 = por %p732, %p733
      %p735 = scmp.ne.s32.totalorder %s723, %s724
      %p736 = scmp.eq.s32.totalorder %s90, 1
      %p737 = por %p735, %p736
      %p739 = scmp.ne.s32.totalorder %s724, %s738
      %p740 = scmp.eq.s32.totalorder %s90, 0
      %p741 = por %p739, %p740
      %s743 = sadd.s32 %s742, 1
      %p746 = scmp.eq.s32.totalorder %s84, 1
      %p747 = scmp.ne.s32.totalorder %s742, %s744
      %p748 = scmp.eq.s32.totalorder %s84, 0
      %p749 = por %p747, %p748
      %p750 = scmp.ne.s32.totalorder %s742, %s744
      %p751 = scmp.eq.s32.totalorder %s89, 1
      %p752 = por %p750, %p751
      %p753 = scmp.ne.s32.totalorder %s744, %s745
      %p754 = scmp.eq.s32.totalorder %s89, 0
      %p755 = por %p753, %p754
      %p756 = scmp.ne.s32.totalorder %s744, %s745
      %p757 = scmp.eq.s32.totalorder %s90, 1
      %p758 = por %p756, %p757
      %p760 = scmp.ne.s32.totalorder %s745, %s759
      %p761 = scmp.eq.s32.totalorder %s90, 0
      %p762 = por %p760, %p761
      %s764 = sadd.s32 %s763, 1
      %p767 = scmp.eq.s32.totalorder %s84, 1
      %p768 = scmp.ne.s32.totalorder %s763, %s765
      %p769 = scmp.eq.s32.totalorder %s84, 0
      %p770 = por %p768, %p769
      %p771 = scmp.ne.s32.totalorder %s763, %s765
      %p772 = scmp.eq.s32.totalorder %s89, 1
      %p773 = por %p771, %p772
      %p774 = scmp.ne.s32.totalorder %s765, %s766
      %p775 = scmp.eq.s32.totalorder %s89, 0
      %p776 = por %p774, %p775
      %p777 = scmp.ne.s32.totalorder %s765, %s766
      %p778 = scmp.eq.s32.totalorder %s90, 1
      %p779 = por %p777, %p778
      %p781 = scmp.ne.s32.totalorder %s766, %s780
      %p782 = scmp.eq.s32.totalorder %s90, 0
      %p783 = por %p781, %p782
      %s785 = sadd.s32 %s784, 1
      %p788 = scmp.eq.s32.totalorder %s84, 1
      %p789 = scmp.ne.s32.totalorder %s784, %s786
      %p790 = scmp.eq.s32.totalorder %s84, 0
      %p791 = por %p789, %p790
      %p792 = scmp.ne.s32.totalorder %s784, %s786
      %p793 = scmp.eq.s32.totalorder %s89, 1
      %p794 = por %p792, %p793
      %p795 = scmp.ne.s32.totalorder %s786, %s787
      %p796 = scmp.eq.s32.totalorder %s89, 0
      %p797 = por %p795, %p796
      %p798 = scmp.ne.s32.totalorder %s786, %s787
      %p799 = scmp.eq.s32.totalorder %s90, 1
      %p800 = por %p798, %p799
      %p802 = scmp.ne.s32.totalorder %s787, %s801
      %p803 = scmp.eq.s32.totalorder %s90, 0
      %p804 = por %p802, %p803
      %s806 = sadd.s32 %s805, 1
      %p809 = scmp.eq.s32.totalorder %s84, 1
      %p810 = scmp.ne.s32.totalorder %s805, %s807
      %p811 = scmp.eq.s32.totalorder %s84, 0
      %p812 = por %p810, %p811
      %p813 = scmp.ne.s32.totalorder %s805, %s807
      %p814 = scmp.eq.s32.totalorder %s89, 1
      %p815 = por %p813, %p814
      %p816 = scmp.ne.s32.totalorder %s807, %s808
      %p817 = scmp.eq.s32.totalorder %s89, 0
      %p818 = por %p816, %p817
      %p819 = scmp.ne.s32.totalorder %s807, %s808
      %p820 = scmp.eq.s32.totalorder %s90, 1
      %p821 = por %p819, %p820
      %p823 = scmp.ne.s32.totalorder %s808, %s822
      %p824 = scmp.eq.s32.totalorder %s90, 0
      %p825 = por %p823, %p824
      %s826 = ssub.s32 %s84, %s91
      %p827 = scmp.eq.s32.totalorder %s826, 0
      %s829 = sadd.s32 %s828, 1
      %s830 = scalar_select %p827, %s828, %s829
      %p833 = pneg %p827
      %p834 = scmp.eq.s32.totalorder %s84, 1
      %p835 = por %p833, %p834
      %p836 = scmp.ne.s32.totalorder %s828, %s831
      %p837 = scmp.eq.s32.totalorder %s84, 0
      %p838 = por %p836, %p837
      %p839 = scmp.ne.s32.totalorder %s828, %s831
      %p840 = scmp.eq.s32.totalorder %s89, 1
      %p841 = por %p839, %p840
      %p842 = scmp.ne.s32.totalorder %s831, %s832
      %p843 = scmp.eq.s32.totalorder %s89, 0
      %p844 = por %p842, %p843
      %p845 = scmp.ne.s32.totalorder %s831, %s832
      %p846 = scmp.eq.s32.totalorder %s90, 1
      %p847 = por %p845, %p846
      %p849 = scmp.ne.s32.totalorder %s832, %s848
      %p850 = scmp.eq.s32.totalorder %s90, 0
      %p851 = por %p849, %p850
      %s852 = ssub.s32 %s84, %s91
      %p853 = scmp.eq.s32.totalorder %s852, 0
      %s855 = sadd.s32 %s854, 1
      %s856 = scalar_select %p853, %s854, %s855
      %p859 = pneg %p853
      %p860 = scmp.eq.s32.totalorder %s84, 1
      %p861 = por %p859, %p860
      %p862 = scmp.ne.s32.totalorder %s854, %s857
      %p863 = scmp.eq.s32.totalorder %s84, 0
      %p864 = por %p862, %p863
      %p865 = scmp.ne.s32.totalorder %s854, %s857
      %p866 = scmp.eq.s32.totalorder %s89, 1
      %p867 = por %p865, %p866
      %p868 = scmp.ne.s32.totalorder %s857, %s858
      %p869 = scmp.eq.s32.totalorder %s89, 0
      %p870 = por %p868, %p869
      %p871 = scmp.ne.s32.totalorder %s857, %s858
      %p872 = scmp.eq.s32.totalorder %s90, 1
      %p873 = por %p871, %p872
      %p875 = scmp.ne.s32.totalorder %s858, %s874
      %p876 = scmp.eq.s32.totalorder %s90, 0
      %p877 = por %p875, %p876
      %p878 = scmp.le.s32.totalorder 1, %s84
      %p879 = scmp.lt.s32.totalorder %s84, 3
      %p880 = pnand %p878, %p879
      %p881 = pneg %p880
      // Predicated region
      $region9: #{bi_block_apply.1} parent=5 // pred_check
        _
      $region10: #{bi_block_apply.1} parent=5 // pred_check_branch
        %883 = sbr.rel (%p880) target = $region12
      $region11: #{bi_block_apply.1} parent=5 // pred_region
        %s884 = ssub.s32 %s84, 1
        // Predicated region
        $region13: #{bi_block_apply.1} parent=11 // pred_check
          %p885 = pneg %p209
        $region14: #{bi_block_apply.1} parent=11 // pred_check_branch
          %887 = sbr.rel (%p885) target = $region16
        $region15: #{bi_block_apply.1} parent=11 // pred_region
          _
        $region16: #{bi_block_apply.1} parent=11 // pred_fallthru
          _
        // Predicated region
        $region17: #{bi_block_apply.1} parent=11 // pred_check
          %p888 = pneg %p230
        $region18: #{bi_block_apply.1} parent=11 // pred_check_branch
          %890 = sbr.rel (%p888) target = $region20
        $region19: #{bi_block_apply.1} parent=11 // pred_region
          _
        $region20: #{bi_block_apply.1} parent=11 // pred_fallthru
          _
        // Predicated region
        $region21: #{bi_block_apply.1} parent=11 // pred_check
          %p891 = pneg %p251
        $region22: #{bi_block_apply.1} parent=11 // pred_check_branch
          %893 = sbr.rel (%p891) target = $region24
        $region23: #{bi_block_apply.1} parent=11 // pred_region
          _
        $region24: #{bi_block_apply.1} parent=11 // pred_fallthru
          _
        // Predicated region
        $region25: #{bi_block_apply.1} parent=11 // pred_check
          %p894 = pneg %p272
        $region26: #{bi_block_apply.1} parent=11 // pred_check_branch
          %896 = sbr.rel (%p894) target = $region28
        $region27: #{bi_block_apply.1} parent=11 // pred_region
          _
        $region28: #{bi_block_apply.1} parent=11 // pred_fallthru
          _
        // Predicated region
        $region29: #{bi_block_apply.1} parent=11 // pred_check
          %p897 = pneg %p293
        $region30: #{bi_block_apply.1} parent=11 // pred_check_branch
          %899 = sbr.rel (%p897) target = $region32
        $region31: #{bi_block_apply.1} parent=11 // pred_region
          _
        $region32: #{bi_block_apply.1} parent=11 // pred_fallthru
          _
        // Predicated region
        $region33: #{bi_block_apply.1} parent=11 // pred_check
          %p900 = pneg %p314
        $region34: #{bi_block_apply.1} parent=11 // pred_check_branch
          %902 = sbr.rel (%p900) target = $region36
        $region35: #{bi_block_apply.1} parent=11 // pred_region
          _
        $region36: #{bi_block_apply.1} parent=11 // pred_fallthru
          _
        // Predicated region
        $region37: #{bi_block_apply.1} parent=11 // pred_check
          %p903 = pneg %p335
        $region38: #{bi_block_apply.1} parent=11 // pred_check_branch
          %905 = sbr.rel (%p903) target = $region40
        $region39: #{bi_block_apply.1} parent=11 // pred_region
          _
        $region40: #{bi_block_apply.1} parent=11 // pred_fallthru
          _
        // Predicated region
        $region41: #{bi_block_apply.1} parent=11 // pred_check
          %p906 = pneg %p356
        $region42: #{bi_block_apply.1} parent=11 // pred_check_branch
          %908 = sbr.rel (%p906) target = $region44
        $region43: #{bi_block_apply.1} parent=11 // pred_region
          _
        $region44: #{bi_block_apply.1} parent=11 // pred_fallthru
          _
        // Predicated region
        $region45: #{bi_block_apply.1} parent=11 // pred_check
          %p909 = pneg %p377
        $region46: #{bi_block_apply.1} parent=11 // pred_check_branch
          %911 = sbr.rel (%p909) target = $region48
        $region47: #{bi_block_apply.1} parent=11 // pred_region
          _
        $region48: #{bi_block_apply.1} parent=11 // pred_fallthru
          _
        // Predicated region
        $region49: #{bi_block_apply.1} parent=11 // pred_check
          %p912 = pneg %p398
        $region50: #{bi_block_apply.1} parent=11 // pred_check_branch
          %914 = sbr.rel (%p912) target = $region52
        $region51: #{bi_block_apply.1} parent=11 // pred_region
          _
        $region52: #{bi_block_apply.1} parent=11 // pred_fallthru
          _
        // Predicated region
        $region53: #{bi_block_apply.1} parent=11 // pred_check
          %p915 = pneg %p419
        $region54: #{bi_block_apply.1} parent=11 // pred_check_branch
          %917 = sbr.rel (%p915) target = $region56
        $region55: #{bi_block_apply.1} parent=11 // pred_region
          _
        $region56: #{bi_block_apply.1} parent=11 // pred_fallthru
          _
        // Predicated region
        $region57: #{bi_block_apply.1} parent=11 // pred_check
          %p918 = pneg %p440
        $region58: #{bi_block_apply.1} parent=11 // pred_check_branch
          %920 = sbr.rel (%p918) target = $region60
        $region59: #{bi_block_apply.1} parent=11 // pred_region
          _
        $region60: #{bi_block_apply.1} parent=11 // pred_fallthru
          _
        // Predicated region
        $region61: #{bi_block_apply.1} parent=11 // pred_check
          %p921 = pneg %p461
        $region62: #{bi_block_apply.1} parent=11 // pred_check_branch
          %923 = sbr.rel (%p921) target = $region64
        $region63: #{bi_block_apply.1} parent=11 // pred_region
          _
        $region64: #{bi_block_apply.1} parent=11 // pred_fallthru
          _
        // Predicated region
        $region65: #{bi_block_apply.1} parent=11 // pred_check
          %p924 = pneg %p482
        $region66: #{bi_block_apply.1} parent=11 // pred_check_branch
          %926 = sbr.rel (%p924) target = $region68
        $region67: #{bi_block_apply.1} parent=11 // pred_region
          _
        $region68: #{bi_block_apply.1} parent=11 // pred_fallthru
          _
        // Predicated region
        $region69: #{bi_block_apply.1} parent=11 // pred_check
          %p927 = pneg %p503
        $region70: #{bi_block_apply.1} parent=11 // pred_check_branch
          %929 = sbr.rel (%p927) target = $region72
        $region71: #{bi_block_apply.1} parent=11 // pred_region
          _
        $region72: #{bi_block_apply.1} parent=11 // pred_fallthru
          _
        // Predicated region
        $region73: #{bi_block_apply.1} parent=11 // pred_check
          %p930 = pneg %p524
        $region74: #{bi_block_apply.1} parent=11 // pred_check_branch
          %932 = sbr.rel (%p930) target = $region76
        $region75: #{bi_block_apply.1} parent=11 // pred_region
          _
        $region76: #{bi_block_apply.1} parent=11 // pred_fallthru
          _
        // Predicated region
        $region77: #{bi_block_apply.1} parent=11 // pred_check
          %p933 = pneg %p545
        $region78: #{bi_block_apply.1} parent=11 // pred_check_branch
          %935 = sbr.rel (%p933) target = $region80
        $region79: #{bi_block_apply.1} parent=11 // pred_region
          _
        $region80: #{bi_block_apply.1} parent=11 // pred_fallthru
          _
        // Predicated region
        $region81: #{bi_block_apply.1} parent=11 // pred_check
          %p936 = pneg %p566
        $region82: #{bi_block_apply.1} parent=11 // pred_check_branch
          %938 = sbr.rel (%p936) target = $region84
        $region83: #{bi_block_apply.1} parent=11 // pred_region
          _
        $region84: #{bi_block_apply.1} parent=11 // pred_fallthru
          _
        // Predicated region
        $region85: #{bi_block_apply.1} parent=11 // pred_check
          %p939 = pneg %p587
        $region86: #{bi_block_apply.1} parent=11 // pred_check_branch
          %941 = sbr.rel (%p939) target = $region88
        $region87: #{bi_block_apply.1} parent=11 // pred_region
          _
        $region88: #{bi_block_apply.1} parent=11 // pred_fallthru
          _
        // Predicated region
        $region89: #{bi_block_apply.1} parent=11 // pred_check
          %p942 = pneg %p608
        $region90: #{bi_block_apply.1} parent=11 // pred_check_branch
          %944 = sbr.rel (%p942) target = $region92
        $region91: #{bi_block_apply.1} parent=11 // pred_region
          _
        $region92: #{bi_block_apply.1} parent=11 // pred_fallthru
          _
        // Predicated region
        $region93: #{bi_block_apply.1} parent=11 // pred_check
          %p945 = pneg %p629
        $region94: #{bi_block_apply.1} parent=11 // pred_check_branch
          %947 = sbr.rel (%p945) target = $region96
        $region95: #{bi_block_apply.1} parent=11 // pred_region
          _
        $region96: #{bi_block_apply.1} parent=11 // pred_fallthru
          _
        // Predicated region
        $region97: #{bi_block_apply.1} parent=11 // pred_check
          %p948 = pneg %p650
        $region98: #{bi_block_apply.1} parent=11 // pred_check_branch
          %950 = sbr.rel (%p948) target = $region100
        $region99: #{bi_block_apply.1} parent=11 // pred_region
          _
        $region100: #{bi_block_apply.1} parent=11 // pred_fallthru
          _
        // Predicated region
        $region101: #{bi_block_apply.1} parent=11 // pred_check
          %p951 = pneg %p671
        $region102: #{bi_block_apply.1} parent=11 // pred_check_branch
          %953 = sbr.rel (%p951) target = $region104
        $region103: #{bi_block_apply.1} parent=11 // pred_region
          _
        $region104: #{bi_block_apply.1} parent=11 // pred_fallthru
          _
        // Predicated region
        $region105: #{bi_block_apply.1} parent=11 // pred_check
          %p954 = pneg %p692
        $region106: #{bi_block_apply.1} parent=11 // pred_check_branch
          %956 = sbr.rel (%p954) target = $region108
        $region107: #{bi_block_apply.1} parent=11 // pred_region
          _
        $region108: #{bi_block_apply.1} parent=11 // pred_fallthru
          _
        // Predicated region
        $region109: #{bi_block_apply.1} parent=11 // pred_check
          %p957 = pneg %p713
        $region110: #{bi_block_apply.1} parent=11 // pred_check_branch
          %959 = sbr.rel (%p957) target = $region112
        $region111: #{bi_block_apply.1} parent=11 // pred_region
          _
        $region112: #{bi_block_apply.1} parent=11 // pred_fallthru
          _
        // Predicated region
        $region113: #{bi_block_apply.1} parent=11 // pred_check
          %p960 = pneg %p734
        $region114: #{bi_block_apply.1} parent=11 // pred_check_branch
          %962 = sbr.rel (%p960) target = $region116
        $region115: #{bi_block_apply.1} parent=11 // pred_region
          _
        $region116: #{bi_block_apply.1} parent=11 // pred_fallthru
          _
        // Predicated region
        $region117: #{bi_block_apply.1} parent=11 // pred_check
          %p963 = pneg %p755
        $region118: #{bi_block_apply.1} parent=11 // pred_check_branch
          %965 = sbr.rel (%p963) target = $region120
        $region119: #{bi_block_apply.1} parent=11 // pred_region
          _
        $region120: #{bi_block_apply.1} parent=11 // pred_fallthru
          _
        // Predicated region
        $region121: #{bi_block_apply.1} parent=11 // pred_check
          %p966 = pneg %p776
        $region122: #{bi_block_apply.1} parent=11 // pred_check_branch
          %968 = sbr.rel (%p966) target = $region124
        $region123: #{bi_block_apply.1} parent=11 // pred_region
          _
        $region124: #{bi_block_apply.1} parent=11 // pred_fallthru
          _
        // Predicated region
        $region125: #{bi_block_apply.1} parent=11 // pred_check
          %p969 = pneg %p797
        $region126: #{bi_block_apply.1} parent=11 // pred_check_branch
          %971 = sbr.rel (%p969) target = $region128
        $region127: #{bi_block_apply.1} parent=11 // pred_region
          _
        $region128: #{bi_block_apply.1} parent=11 // pred_fallthru
          _
        // Predicated region
        $region129: #{bi_block_apply.1} parent=11 // pred_check
          %p972 = pneg %p818
        $region130: #{bi_block_apply.1} parent=11 // pred_check_branch
          %974 = sbr.rel (%p972) target = $region132
        $region131: #{bi_block_apply.1} parent=11 // pred_region
          _
        $region132: #{bi_block_apply.1} parent=11 // pred_fallthru
          _
      $region12: #{bi_block_apply.1} parent=5 // pred_fallthru
        _
      %p975 = scmp.lt.s32.totalorder %s84, 2
      // Predicated region
      $region133: #{bi_block_apply.1} parent=5 // pred_check
        %p976 = pneg %p975
      $region134: #{bi_block_apply.1} parent=5 // pred_check_branch
        %978 = sbr.rel (%p976) target = $region136
      $region135: #{bi_block_apply.1} parent=5 // pred_region
        // Predicated region
        $region137: #{bi_block_apply.1} parent=135 // pred_check
          %p979 = pneg %p104
        $region138: #{bi_block_apply.1} parent=135 // pred_check_branch
          %981 = sbr.rel (%p979) target = $region140
        $region139: #{bi_block_apply.1} parent=135 // pred_region
          %p982 = scmp.lt.s32.totalorder %s84, 1
          %s983 = scalar_select %p982, %s84, 1
          %s984 = smul.addr %s983, 2
          %s985 = smul.addr %s984, 8
          %s986 = scalar_lea.vmem %s1, %s985
        $region140: #{bi_block_apply.1} parent=135 // pred_fallthru
          _
        // Predicated region
        $region141: #{bi_block_apply.1} parent=135 // pred_check
          %p987 = pneg %p130
        $region142: #{bi_block_apply.1} parent=135 // pred_check_branch
          %989 = sbr.rel (%p987) target = $region144
        $region143: #{bi_block_apply.1} parent=135 // pred_region
          %p990 = scmp.lt.s32.totalorder %s84, 1
          %s991 = scalar_select %p990, %s84, 1
          %s992 = smul.addr %s991, 8
          %s993 = scalar_lea.vmem %s3, %s992
        $region144: #{bi_block_apply.1} parent=135 // pred_fallthru
          _
        // Predicated region
        $region145: #{bi_block_apply.1} parent=135 // pred_check
          %p994 = pneg %p156
        $region146: #{bi_block_apply.1} parent=135 // pred_check_branch
          %996 = sbr.rel (%p994) target = $region148
        $region147: #{bi_block_apply.1} parent=135 // pred_region
          %p997 = scmp.lt.s32.totalorder %s84, 1
          %s998 = scalar_select %p997, %s84, 1
          %s999 = scalar_lea.vmem %s5, %s998
        $region148: #{bi_block_apply.1} parent=135 // pred_fallthru
          _
        // Predicated region
        $region149: #{bi_block_apply.1} parent=135 // pred_check
          %p1000 = pneg %p182
        $region150: #{bi_block_apply.1} parent=135 // pred_check_branch
          %1002 = sbr.rel (%p1000) target = $region152
        $region151: #{bi_block_apply.1} parent=135 // pred_region
          %p1003 = scmp.lt.s32.totalorder %s84, 1
          %s1004 = scalar_select %p1003, %s84, 1
          %s1005 = scalar_lea.vmem %s7, %s1004
        $region152: #{bi_block_apply.1} parent=135 // pred_fallthru
          _
      $region136: #{bi_block_apply.1} parent=5 // pred_fallthru
        _
      %p1006 = scmp.le.s32.totalorder 1, %s84
      %p1007 = scmp.lt.s32.totalorder %s84, 3
      %p1008 = pnand %p1006, %p1007
      %p1009 = pneg %p1008
      // Predicated region
      $region153: #{bi_block_apply.1} parent=5 // pred_check
        _
      $region154: #{bi_block_apply.1} parent=5 // pred_check_branch
        %1011 = sbr.rel (%p1008) target = $region156
      $region155: #{bi_block_apply.1} parent=5 // pred_region
        %s1012 = ssub.s32 %s84, 1
        %p1013 = scmp.lt.s32.totalorder %s89, 1
        %s1014 = scalar_select %p1013, %s89, 1
        %s1015 = smul.addr %s1014, 2
        %s1016 = smul.addr %s1015, 8
        %s1017 = scalar_lea.vmem %s1, %s1016
        %p1018 = pneg %p110
        %p1019 = pneg %p107
        %p1020 = scmp.lt.s32.totalorder %s89, 1
        %s1021 = scalar_select %p1020, %s89, 1
        %s1022 = smul.addr %s1021, 8
        %s1023 = scalar_lea.vmem %s3, %s1022
        %p1024 = pneg %p136
        %p1025 = pneg %p133
        %p1026 = scmp.lt.s32.totalorder %s89, 1
        %s1027 = scalar_select %p1026, %s89, 1
        %s1028 = scalar_lea.vmem %s5, %s1027
        %p1029 = pneg %p162
        %p1030 = pneg %p159
        %p1031 = scmp.lt.s32.totalorder %s89, 1
        %s1032 = scalar_select %p1031, %s89, 1
        %s1033 = scalar_lea.vmem %s7, %s1032
        %p1034 = pneg %p188
        %p1035 = pneg %p185
        %p1036 = pneg %p209
        %p1037 = pneg %p206
        %p1038 = pneg %p230
        %p1039 = pneg %p227
        %p1040 = pneg %p251
        %p1041 = pneg %p248
        %p1042 = pneg %p272
        %p1043 = pneg %p269
        %p1044 = pneg %p293
        %p1045 = pneg %p290
        %p1046 = pneg %p314
        %p1047 = pneg %p311
        %p1048 = pneg %p335
        %p1049 = pneg %p332
        %p1050 = pneg %p356
        %p1051 = pneg %p353
        %p1052 = pneg %p377
        %p1053 = pneg %p374
        %p1054 = pneg %p398
        %p1055 = pneg %p395
        %p1056 = pneg %p419
        %p1057 = pneg %p416
        %p1058 = pneg %p440
        %p1059 = pneg %p437
        %p1060 = pneg %p461
        %p1061 = pneg %p458
        %p1062 = pneg %p482
        %p1063 = pneg %p479
        %p1064 = pneg %p503
        %p1065 = pneg %p500
        %p1066 = pneg %p524
        %p1067 = pneg %p521
        %p1068 = pneg %p545
        %p1069 = pneg %p542
        %p1070 = pneg %p566
        %p1071 = pneg %p563
        %p1072 = pneg %p587
        %p1073 = pneg %p584
        %p1074 = pneg %p608
        %p1075 = pneg %p605
        %p1076 = pneg %p629
        %p1077 = pneg %p626
        %p1078 = pneg %p650
        %p1079 = pneg %p647
        %p1080 = pneg %p671
        %p1081 = pneg %p668
        %p1082 = pneg %p692
        %p1083 = pneg %p689
        %p1084 = pneg %p713
        %p1085 = pneg %p710
        %p1086 = pneg %p734
        %p1087 = pneg %p731
        %p1088 = pneg %p755
        %p1089 = pneg %p752
        %p1090 = pneg %p776
        %p1091 = pneg %p773
        %p1092 = pneg %p797
        %p1093 = pneg %p794
        %p1094 = pneg %p818
        %p1095 = pneg %p815
        %p1096 = pneg %p844
        %p1097 = pneg %p841
        %s1098 = sand.u32 %s831, 1
        %s1099 = scalar_lea.sflag [#allocation3], %s1098
        %s1100 = sand.u32 %s831, 1
        %s1101 = smul.addr %s1100, 16
        %s1102 = scalar_lea.vmem [#allocation2], %s1101
        %p1103 = pneg %p870
        %p1104 = pneg %p867
        %s1105 = sand.u32 %s857, 1
        %s1106 = scalar_lea.sflag [#allocation5], %s1105
        %s1107 = sand.u32 %s857, 1
        %s1108 = smul.addr %s1107, 8
        %s1109 = scalar_lea.vmem [#allocation4], %s1108
        %p1110 = scmp.lt.s32.totalorder %s89, 1
        %s1111 = scalar_select %p1110, %s89, 1
        %s1112 = smul.addr %s1111, 2
        %s1113 = smul.addr %s1112, 8
        %s1114 = scalar_lea.vmem %s1, %s1113
        %p1115 = scmp.lt.s32.totalorder %s89, 1
        %s1116 = scalar_select %p1115, %s89, 1
        %s1117 = smul.addr %s1116, 8
        %s1118 = scalar_lea.vmem %s3, %s1117
        %p1119 = scmp.lt.s32.totalorder %s89, 1
        %s1120 = scalar_select %p1119, %s89, 1
        %s1121 = scalar_lea.vmem %s5, %s1120
        %p1122 = scmp.lt.s32.totalorder %s89, 1
        %s1123 = scalar_select %p1122, %s89, 1
        %s1124 = scalar_lea.vmem %s7, %s1123
        %v1125 = vld [vmem:[%s1114] sm:$0xff]
        %v1126 = vld [vmem:[%s1114 + $0x8] sm:$0xff]
        %v1127 = vld [vmem:[%s1118] sm:$0xff]
        %v1128 = vld [vmem:[%s1121] sm:$0x1]
        %v1129 = vld [vmem:[%s1124] sm:$0x1]
        %v1130 = vld [vmem:[%s9] sm:$0xf]
        %v1131 = vld [vmem:[%s11] sm:$0xf]
        %v1132 = vld [vmem:[%s65] sm:$0xf]
        %v1133 = vld [vmem:[%s67] sm:$0xf]
        %v1134 = vmax.f32 %v1130, %v1129
        %vm1135 = vcmp.le.f32.partialorder %v1134, 0.5
        %v1136 = vsel %vm1135, 1, 0
        %v1137 = vcvt.s32.f32 %v1136
        %v1139 = vlaneseq
        %v1140 = vshrl.u32 %v1139, 7
        %v1141 = vsub.s32 0, %v1140
        %v1142 = vrot.slane %v1129, %v1141
        %v1144 = vmax.f32 %v1130, %v1142
        %vm1145 = vcmp.le.f32.partialorder %v1144, 0.5
        %v1146 = vsel %vm1145, 1, 0
        %v1147 = vcvt.s32.f32 %v1146
        %v1148 = vmax.f32 %v1131, %v1128
        %vm1149 = vcmp.le.f32.partialorder %v1148, 0.5
        %v1150 = vsel %vm1149, 1, 0
        %v1151 = vcvt.s32.f32 %v1150
        %v1153 = vlaneseq
        %v1154 = vshrl.u32 %v1153, 7
        %v1155 = vsub.s32 0, %v1154
        %v1156 = vrot.slane %v1128, %v1155
        %v1158 = vmax.f32 %v1131, %v1156
        %vm1159 = vcmp.le.f32.partialorder %v1158, 0.5
        %v1160 = vsel %vm1159, 1, 0
        %v1161 = vcvt.s32.f32 %v1160
        %v1162 = vld [vmem:[%s25] sm:$0xff]
        %v1163 = vld [vmem:[%s25 + $0x8] sm:$0xff]
        %v1164 = vld [vmem:[%s25 + $0x10] sm:$0xff]
        %v1165 = vld [vmem:[%s25 + $0x18] sm:$0xff]
        %v1166 = vld [vmem:[%s27] sm:$0xff]
        %v1167 = vld [vmem:[%s27 + $0x8] sm:$0xff]
        %v1168 = vld [vmem:[%s29] sm:$0x1]
        %vm1169 = vcmask 261120
        %v1170 = vsel %vm1169, %v1127, 0.0
        %v1171 = vrot.slane %v1170, 4
        %v1172 = vadd.f32 %v1170, %v1171
        %v1173 = vrot.slane %v1172, 2
        %v1174 = vadd.f32 %v1172, %v1173
        %v1175 = vrot.slane %v1174, 1
        %v1176 = vadd.f32 %v1174, %v1175
        %v1177 = vrcp.pop 8.0
        %v1178 = vmul.f32 %v1176, %v1177
        %v1180 = vsel %vm1169, %v1178, 0
        %1182 = vmatprep.subr.mxu0 0.0
        %1183 = vmatpush1.msra.mxu0 %v1162
        %1184 = vmatprep.subr.mxu0 0.0
        %1185 = vmatpush1.msra.mxu0 %v1163
        %1186 = vmatprep.subr.mxu0 0.0
        %1187 = vmatpush1.msra.mxu0 %v1164
        %1188 = vmatprep.subr.mxu0 0.0
        %1189 = vmatpush1.msra.mxu0 %v1165
        %1190 = vmatprep.subr.mxu0 0.0
        %1191 = vmatpush1.msra.mxu0 0.0
        %1192 = vmatprep.subr.mxu0 0.0
        %1193 = vmatpush1.msra.mxu0 0.0
        %1194 = vmatprep.subr.mxu0 0.0
        %1195 = vmatpush1.msra.mxu0 0.0
        %1196 = vmatprep.subr.mxu0 0.0
        %1197 = vmatpush1.msra.mxu0 0.0
        %1198 = vmatprep.subr.mxu0 0.0
        %1199 = vmatpush1.msra.mxu0 0.0
        %1200 = vmatprep.subr.mxu0 0.0
        %1201 = vmatpush1.msra.mxu0 0.0
        %1202 = vmatprep.subr.mxu0 0.0
        %1203 = vmatpush1.msra.mxu0 0.0
        %1204 = vmatprep.subr.mxu0 0.0
        %1205 = vmatpush1.msra.mxu0 0.0
        %1206 = vmatprep.subr.mxu0 0.0
        %1207 = vmatpush1.msra.mxu0 0.0
        %1208 = vmatprep.subr.mxu0 0.0
        %1209 = vmatpush1.msra.mxu0 0.0
        %1210 = vmatprep.subr.mxu0 0.0
        %1211 = vmatpush1.msra.mxu0 0.0
        %1212 = vmatprep.subr.mxu0 0.0
        %1213 = vmatpush1.msra.mxu0 0.0
        %1214 = vmatprep.subr.mxu0 0.0
        %1215 = vmatpush1.msra.mxu0 0.0
        %1216 = vmatprep.subr.mxu0 0.0
        %1217 = vmatpush1.msra.mxu0 0.0
        %1218 = vmatprep.subr.mxu0 0.0
        %1219 = vmatpush1.msra.mxu0 0.0
        %1220 = vmatprep.subr.mxu0 0.0
        %1221 = vmatpush1.msra.mxu0 0.0
        %1222 = vmatprep.subr.mxu0 0.0
        %1223 = vmatpush1.msra.mxu0 0.0
        %1224 = vmatprep.subr.mxu0 0.0
        %1225 = vmatpush1.msra.mxu0 0.0
        %1226 = vmatprep.subr.mxu0 0.0
        %1227 = vmatpush1.msra.mxu0 0.0
        %1228 = vmatprep.subr.mxu0 0.0
        %1229 = vmatpush1.msra.mxu0 0.0
        %1230 = vmatprep.subr.mxu0 0.0
        %1231 = vmatpush1.msra.mxu0 0.0
        %1232 = vmatprep.subr.mxu0 0.0
        %1233 = vmatpush1.msra.mxu0 0.0
        %1234 = vmatprep.subr.mxu0 0.0
        %1235 = vmatpush1.msra.mxu0 0.0
        %1236 = vmatprep.subr.mxu0 0.0
        %1237 = vmatpush1.msra.mxu0 0.0
        %1238 = vmatprep.subr.mxu0 0.0
        %1239 = vmatpush1.msra.mxu0 0.0
        %1240 = vmatprep.subr.mxu0 0.0
        %1241 = vmatpush1.msra.mxu0 0.0
        %1242 = vmatprep.subr.mxu0 0.0
        %1243 = vmatpush1.msra.mxu0 0.0
        %1244 = vmatprep.subr.mxu0 0.0
        %1245 = vmatpush1.msra.mxu0 0.0
        %1246 = vmatprep.mubr.f32.mxu0 0.0
        %1247 = vmatmul.mubr.f32.gmra.mrb[0].mxu0 %v1180
        %v1248 = vpop.f32.mrb[0].mxu0
        %v1249 = vadd.f32 0.0, %v1248
        %v1250 = vpop.f32.mrb[0].mxu0
        %1251 = vdwg.mxu0
        %v1252 = vmax.f32 %v1249, 0.0
        %vm1253 = vcmask 130048
        %v1255 = vsel %vm1253, %v1252, 0
        %1257 = vmatprep.subr.mxu0 0.0
        %1258 = vmatpush1.msra.mxu0 %v1166
        %1259 = vmatprep.subr.mxu0 0.0
        %1260 = vmatpush1.msra.mxu0 %v1167
        %1261 = vmatprep.subr.mxu0 0.0
        %1262 = vmatpush1.msra.mxu0 0.0
        %1263 = vmatprep.subr.mxu0 0.0
        %1264 = vmatpush1.msra.mxu0 0.0
        %1265 = vmatprep.subr.mxu0 0.0
        %1266 = vmatpush1.msra.mxu0 0.0
        %1267 = vmatprep.subr.mxu0 0.0
        %1268 = vmatpush1.msra.mxu0 0.0
        %1269 = vmatprep.subr.mxu0 0.0
        %1270 = vmatpush1.msra.mxu0 0.0
        %1271 = vmatprep.subr.mxu0 0.0
        %1272 = vmatpush1.msra.mxu0 0.0
        %1273 = vmatprep.subr.mxu0 0.0
        %1274 = vmatpush1.msra.mxu0 0.0
        %1275 = vmatprep.subr.mxu0 0.0
        %1276 = vmatpush1.msra.mxu0 0.0
        %1277 = vmatprep.subr.mxu0 0.0
        %1278 = vmatpush1.msra.mxu0 0.0
        %1279 = vmatprep.subr.mxu0 0.0
        %1280 = vmatpush1.msra.mxu0 0.0
        %1281 = vmatprep.subr.mxu0 0.0
        %1282 = vmatpush1.msra.mxu0 0.0
        %1283 = vmatprep.subr.mxu0 0.0
        %1284 = vmatpush1.msra.mxu0 0.0
        %1285 = vmatprep.subr.mxu0 0.0
        %1286 = vmatpush1.msra.mxu0 0.0
        %1287 = vmatprep.subr.mxu0 0.0
        %1288 = vmatpush1.msra.mxu0 0.0
        %1289 = vmatprep.subr.mxu0 0.0
        %1290 = vmatpush1.msra.mxu0 0.0
        %1291 = vmatprep.subr.mxu0 0.0
        %1292 = vmatpush1.msra.mxu0 0.0
        %1293 = vmatprep.subr.mxu0 0.0
        %1294 = vmatpush1.msra.mxu0 0.0
        %1295 = vmatprep.subr.mxu0 0.0
        %1296 = vmatpush1.msra.mxu0 0.0
        %1297 = vmatprep.subr.mxu0 0.0
        %1298 = vmatpush1.msra.mxu0 0.0
        %1299 = vmatprep.subr.mxu0 0.0
        %1300 = vmatpush1.msra.mxu0 0.0
        %1301 = vmatprep.subr.mxu0 0.0
        %1302 = vmatpush1.msra.mxu0 0.0
        %1303 = vmatprep.subr.mxu0 0.0
        %1304 = vmatpush1.msra.mxu0 0.0
        %1305 = vmatprep.subr.mxu0 0.0
        %1306 = vmatpush1.msra.mxu0 0.0
        %1307 = vmatprep.subr.mxu0 0.0
        %1308 = vmatpush1.msra.mxu0 0.0
        %1309 = vmatprep.subr.mxu0 0.0
        %1310 = vmatpush1.msra.mxu0 0.0
        %1311 = vmatprep.subr.mxu0 0.0
        %1312 = vmatpush1.msra.mxu0 0.0
        %1313 = vmatprep.subr.mxu0 0.0
        %1314 = vmatpush1.msra.mxu0 0.0
        %1315 = vmatprep.subr.mxu0 0.0
        %1316 = vmatpush1.msra.mxu0 0.0
        %1317 = vmatprep.subr.mxu0 0.0
        %1318 = vmatpush1.msra.mxu0 0.0
        %1319 = vmatprep.subr.mxu0 0.0
        %1320 = vmatpush1.msra.mxu0 0.0
        %1321 = vmatprep.mubr.f32.mxu0 0.0
        %1322 = vmatmul.mubr.f32.gmra.mrb[0].mxu0 %v1255
        %v1323 = vpop.f32.mrb[0].mxu0
        %v1324 = vadd.f32 %v1168, %v1323
        %v1325 = vpop.f32.mrb[0].mxu0
        %1326 = vdwg.mxu0
        %vm1327 = vcmask 24576
        %v1328 = vsel %vm1327, %v1324, -inf
        %1329 = vmax.xlane.f32.xlu0 %v1328
        %v1330 = vpop.xlane.xlu0 %1329
        %v1331 = vsub.f32 %v1324, %v1330
        %v1332 = vmul.f32 %v1331, 1.442695
        %v1333 = vpow.pop %v1332
        %v1334 = vsel %vm1327, %v1333, 0.0
        %1335 = vadd.xlane.f32.xlu0 %v1334
        %v1336 = vpop.xlane.xlu0 %1335
        %v1337 = vrcp.pop %v1336
        %v1338 = vmul.f32 %v1333, %v1337
        %v1339 = vld [vmem:[%s13] sm:$0xff]
        %v1340 = vld [vmem:[%s13 + $0x8] sm:$0xff]
        %v1341 = vld [vmem:[%s13 + $0x10] sm:$0xff]
        %v1342 = vld [vmem:[%s13 + $0x18] sm:$0xff]
        %v1343 = vld [vmem:[%s15] sm:$0x1]
        %v1345 = vlaneseq
        %v1346 = vshrl.u32 %v1345, 7
        %v1347 = vsub.s32 0, %v1346
        %v1348 = vrot.slane %v1343, %v1347
        %v1351 = vsel %vm1169, %v1125, 0
        %v1354 = vsel %vm1169, %v1126, 0
        %1356 = vmatprep.subr.mxu0 0.0
        %1357 = vmatpush1.msra.mxu0 %v1339
        %1358 = vmatprep.subr.mxu0 0.0
        %1359 = vmatpush1.msra.mxu0 %v1340
        %1360 = vmatprep.subr.mxu0 0.0
        %1361 = vmatpush1.msra.mxu0 %v1341
        %1362 = vmatprep.subr.mxu0 0.0
        %1363 = vmatpush1.msra.mxu0 %v1342
        %1364 = vmatprep.subr.mxu0 0.0
        %1365 = vmatpush1.msra.mxu0 0.0
        %1366 = vmatprep.subr.mxu0 0.0
        %1367 = vmatpush1.msra.mxu0 0.0
        %1368 = vmatprep.subr.mxu0 0.0
        %1369 = vmatpush1.msra.mxu0 0.0
        %1370 = vmatprep.subr.mxu0 0.0
        %1371 = vmatpush1.msra.mxu0 0.0
        %1372 = vmatprep.subr.mxu0 0.0
        %1373 = vmatpush1.msra.mxu0 0.0
        %1374 = vmatprep.subr.mxu0 0.0
        %1375 = vmatpush1.msra.mxu0 0.0
        %1376 = vmatprep.subr.mxu0 0.0
        %1377 = vmatpush1.msra.mxu0 0.0
        %1378 = vmatprep.subr.mxu0 0.0
        %1379 = vmatpush1.msra.mxu0 0.0
        %1380 = vmatprep.subr.mxu0 0.0
        %1381 = vmatpush1.msra.mxu0 0.0
        %1382 = vmatprep.subr.mxu0 0.0
        %1383 = vmatpush1.msra.mxu0 0.0
        %1384 = vmatprep.subr.mxu0 0.0
        %1385 = vmatpush1.msra.mxu0 0.0
        %1386 = vmatprep.subr.mxu0 0.0
        %1387 = vmatpush1.msra.mxu0 0.0
        %1388 = vmatprep.subr.mxu0 0.0
        %1389 = vmatpush1.msra.mxu0 0.0
        %1390 = vmatprep.subr.mxu0 0.0
        %1391 = vmatpush1.msra.mxu0 0.0
        %1392 = vmatprep.subr.mxu0 0.0
        %1393 = vmatpush1.msra.mxu0 0.0
        %1394 = vmatprep.subr.mxu0 0.0
        %1395 = vmatpush1.msra.mxu0 0.0
        %1396 = vmatprep.subr.mxu0 0.0
        %1397 = vmatpush1.msra.mxu0 0.0
        %1398 = vmatprep.subr.mxu0 0.0
        %1399 = vmatpush1.msra.mxu0 0.0
        %1400 = vmatprep.subr.mxu0 0.0
        %1401 = vmatpush1.msra.mxu0 0.0
        %1402 = vmatprep.subr.mxu0 0.0
        %1403 = vmatpush1.msra.mxu0 0.0
        %1404 = vmatprep.subr.mxu0 0.0
        %1405 = vmatpush1.msra.mxu0 0.0
        %1406 = vmatprep.subr.mxu0 0.0
        %1407 = vmatpush1.msra.mxu0 0.0
        %1408 = vmatprep.subr.mxu0 0.0
        %1409 = vmatpush1.msra.mxu0 0.0
        %1410 = vmatprep.subr.mxu0 0.0
        %1411 = vmatpush1.msra.mxu0 0.0
        %1412 = vmatprep.subr.mxu0 0.0
        %1413 = vmatpush1.msra.mxu0 0.0
        %1414 = vmatprep.subr.mxu0 0.0
        %1415 = vmatpush1.msra.mxu0 0.0
        %1416 = vmatprep.subr.mxu0 0.0
        %1417 = vmatpush1.msra.mxu0 0.0
        %1418 = vmatprep.subr.mxu0 0.0
        %1419 = vmatpush1.msra.mxu0 0.0
        %1420 = vmatprep.mubr.f32.mxu0 0.0
        %1421 = vmatmul.mubr.f32.gmra.mrb[0].mxu0 %v1351
        %v1422 = vpop.f32.mrb[0].mxu0
        %v1423 = vadd.f32 %v1348, %v1422
        %v1424 = vpop.f32.mrb[0].mxu0
        %1425 = vmatprep.mubr.f32.mxu0 0.0
        %1426 = vmatmul.mubr.f32.gmra.mrb[0].mxu0 %v1354
        %v1427 = vpop.f32.mrb[0].mxu0
        %v1428 = vadd.f32 %v1348, %v1427
        %v1429 = vpop.f32.mrb[0].mxu0
        %1430 = vdwg.mxu0
        %v1431 = vld [vmem:[%s17] sm:$0xff]
        %v1432 = vld [vmem:[%s17 + $0x8] sm:$0xff]
        %v1433 = vld [vmem:[%s17 + $0x10] sm:$0xff]
        %v1434 = vld [vmem:[%s17 + $0x18] sm:$0xff]
        %v1435 = vld [vmem:[%s19] sm:$0x1]
        %v1437 = vlaneseq
        %v1438 = vshrl.u32 %v1437, 7
        %v1439 = vsub.s32 0, %v1438
        %v1440 = vrot.slane %v1435, %v1439
        %v1443 = vsel %vm1169, %v1127, 0
        %1445 = vmatprep.subr.mxu0 0.0
        %1446 = vmatpush1.msra.mxu0 %v1431
        %1447 = vmatprep.subr.mxu0 0.0
        %1448 = vmatpush1.msra.mxu0 %v1432
        %1449 = vmatprep.subr.mxu0 0.0
        %1450 = vmatpush1.msra.mxu0 %v1433
        %1451 = vmatprep.subr.mxu0 0.0
        %1452 = vmatpush1.msra.mxu0 %v1434
        %1453 = vmatprep.subr.mxu0 0.0
        %1454 = vmatpush1.msra.mxu0 0.0
        %1455 = vmatprep.subr.mxu0 0.0
        %1456 = vmatpush1.msra.mxu0 0.0
        %1457 = vmatprep.subr.mxu0 0.0
        %1458 = vmatpush1.msra.mxu0 0.0
        %1459 = vmatprep.subr.mxu0 0.0
        %1460 = vmatpush1.msra.mxu0 0.0
        %1461 = vmatprep.subr.mxu0 0.0
        %1462 = vmatpush1.msra.mxu0 0.0
        %1463 = vmatprep.subr.mxu0 0.0
        %1464 = vmatpush1.msra.mxu0 0.0
        %1465 = vmatprep.subr.mxu0 0.0
        %1466 = vmatpush1.msra.mxu0 0.0
        %1467 = vmatprep.subr.mxu0 0.0
        %1468 = vmatpush1.msra.mxu0 0.0
        %1469 = vmatprep.subr.mxu0 0.0
        %1470 = vmatpush1.msra.mxu0 0.0
        %1471 = vmatprep.subr.mxu0 0.0
        %1472 = vmatpush1.msra.mxu0 0.0
        %1473 = vmatprep.subr.mxu0 0.0
        %1474 = vmatpush1.msra.mxu0 0.0
        %1475 = vmatprep.subr.mxu0 0.0
        %1476 = vmatpush1.msra.mxu0 0.0
        %1477 = vmatprep.subr.mxu0 0.0
        %1478 = vmatpush1.msra.mxu0 0.0
        %1479 = vmatprep.subr.mxu0 0.0
        %1480 = vmatpush1.msra.mxu0 0.0
        %1481 = vmatprep.subr.mxu0 0.0
        %1482 = vmatpush1.msra.mxu0 0.0
        %1483 = vmatprep.subr.mxu0 0.0
        %1484 = vmatpush1.msra.mxu0 0.0
        %1485 = vmatprep.subr.mxu0 0.0
        %1486 = vmatpush1.msra.mxu0 0.0
        %1487 = vmatprep.subr.mxu0 0.0
        %1488 = vmatpush1.msra.mxu0 0.0
        %1489 = vmatprep.subr.mxu0 0.0
        %1490 = vmatpush1.msra.mxu0 0.0
        %1491 = vmatprep.subr.mxu0 0.0
        %1492 = vmatpush1.msra.mxu0 0.0
        %1493 = vmatprep.subr.mxu0 0.0
        %1494 = vmatpush1.msra.mxu0 0.0
        %1495 = vmatprep.subr.mxu0 0.0
        %1496 = vmatpush1.msra.mxu0 0.0
        %1497 = vmatprep.subr.mxu0 0.0
        %1498 = vmatpush1.msra.mxu0 0.0
        %1499 = vmatprep.subr.mxu0 0.0
        %1500 = vmatpush1.msra.mxu0 0.0
        %1501 = vmatprep.subr.mxu0 0.0
        %1502 = vmatpush1.msra.mxu0 0.0
        %1503 = vmatprep.subr.mxu0 0.0
        %1504 = vmatpush1.msra.mxu0 0.0
        %1505 = vmatprep.subr.mxu0 0.0
        %1506 = vmatpush1.msra.mxu0 0.0
        %1507 = vmatprep.subr.mxu0 0.0
        %1508 = vmatpush1.msra.mxu0 0.0
        %1509 = vmatprep.mubr.f32.mxu0 0.0
        %1510 = vmatmul.mubr.f32.gmra.mrb[0].mxu0 %v1443
        %v1511 = vpop.f32.mrb[0].mxu0
        %v1512 = vadd.f32 %v1440, %v1511
        %v1513 = vpop.f32.mrb[0].mxu0
        %1514 = vdwg.mxu0
        %v1515 = vlaneseq
        %v1516 = vand.u32 %v1515, 127
        %vm1517 = vcmp.ge.s32.totalorder %v1516, 0
        %vm1518 = vcmp.lt.s32.totalorder %v1516, 8
        %vm1519 = vmand %vm1517, %vm1518
        %v1520 = vsel %vm1519, 1, 0
        %v1521 = vcvt.s32.f32 %v1520
        %v1522 = vmul.f32 %v1423, %v1521
        %v1523 = vmul.f32 %v1428, %v1521
        %v1525 = vsel %vm1169, %v1522, 0
        %v1528 = vsel %vm1169, %v1523, 0
        %v1531 = vsel %vm1169, %v1512, 0
        %1533 = vmatprep.subr.mxu0 0.0
        %1534 = vmatpush1.xpose.msra.mxu0 %v1531
        %1535 = vmatprep.subr.mxu0 0.0
        %1536 = vmatpush1.xpose.msra.mxu0 0.0
        %1537 = vmatprep.subr.mxu0 0.0
        %1538 = vmatpush1.xpose.msra.mxu0 0.0
        %1539 = vmatprep.subr.mxu0 0.0
        %1540 = vmatpush1.xpose.msra.mxu0 0.0
        %1541 = vmatprep.subr.mxu0 0.0
        %1542 = vmatpush1.xpose.msra.mxu0 0.0
        %1543 = vmatprep.subr.mxu0 0.0
        %1544 = vmatpush1.xpose.msra.mxu0 0.0
        %1545 = vmatprep.subr.mxu0 0.0
        %1546 = vmatpush1.xpose.msra.mxu0 0.0
        %1547 = vmatprep.subr.mxu0 0.0
        %1548 = vmatpush1.xpose.msra.mxu0 0.0
        %1549 = vmatprep.subr.mxu0 0.0
        %1550 = vmatpush1.xpose.msra.mxu0 0.0
        %1551 = vmatprep.subr.mxu0 0.0
        %1552 = vmatpush1.xpose.msra.mxu0 0.0
        %1553 = vmatprep.subr.mxu0 0.0
        %1554 = vmatpush1.xpose.msra.mxu0 0.0
        %1555 = vmatprep.subr.mxu0 0.0
        %1556 = vmatpush1.xpose.msra.mxu0 0.0
        %1557 = vmatprep.subr.mxu0 0.0
        %1558 = vmatpush1.xpose.msra.mxu0 0.0
        %1559 = vmatprep.subr.mxu0 0.0
        %1560 = vmatpush1.xpose.msra.mxu0 0.0
        %1561 = vmatprep.subr.mxu0 0.0
        %1562 = vmatpush1.xpose.msra.mxu0 0.0
        %1563 = vmatprep.subr.mxu0 0.0
        %1564 = vmatpush1.xpose.msra.mxu0 0.0
        %1565 = vmatprep.subr.mxu0 0.0
        %1566 = vmatpush1.xpose.msra.mxu0 0.0
        %1567 = vmatprep.subr.mxu0 0.0
        %1568 = vmatpush1.xpose.msra.mxu0 0.0
        %1569 = vmatprep.subr.mxu0 0.0
        %1570 = vmatpush1.xpose.msra.mxu0 0.0
        %1571 = vmatprep.subr.mxu0 0.0
        %1572 = vmatpush1.xpose.msra.mxu0 0.0
        %1573 = vmatprep.subr.mxu0 0.0
        %1574 = vmatpush1.xpose.msra.mxu0 0.0
        %1575 = vmatprep.subr.mxu0 0.0
        %1576 = vmatpush1.xpose.msra.mxu0 0.0
        %1577 = vmatprep.subr.mxu0 0.0
        %1578 = vmatpush1.xpose.msra.mxu0 0.0
        %1579 = vmatprep.subr.mxu0 0.0
        %1580 = vmatpush1.xpose.msra.mxu0 0.0
        %1581 = vmatprep.subr.mxu0 0.0
        %1582 = vmatpush1.xpose.msra.mxu0 0.0
        %1583 = vmatprep.subr.mxu0 0.0
        %1584 = vmatpush1.xpose.msra.mxu0 0.0
        %1585 = vmatprep.subr.mxu0 0.0
        %1586 = vmatpush1.xpose.msra.mxu0 0.0
        %1587 = vmatprep.subr.mxu0 0.0
        %1588 = vmatpush1.xpose.msra.mxu0 0.0
        %1589 = vmatprep.subr.mxu0 0.0
        %1590 = vmatpush1.xpose.msra.mxu0 0.0
        %1591 = vmatprep.subr.mxu0 0.0
        %1592 = vmatpush1.xpose.msra.mxu0 0.0
        %1593 = vmatprep.subr.mxu0 0.0
        %1594 = vmatpush1.xpose.msra.mxu0 0.0
        %1595 = vmatprep.subr.mxu0 0.0
        %1596 = vmatpush1.xpose.msra.mxu0 0.0
        %1597 = vmatprep.mubr.f32.mxu0 0.0
        %1598 = vmatmul.mubr.f32.gmra.mrb[0].mxu0 %v1525
        %v1599 = vpop.f32.mrb[0].mxu0
        %v1600 = vadd.f32 0.0, %v1599
        %v1601 = vpop.f32.mrb[0].mxu0
        %1602 = vmatprep.mubr.f32.mxu0 0.0
        %1603 = vmatmul.mubr.f32.gmra.mrb[0].mxu0 %v1528
        %v1604 = vpop.f32.mrb[0].mxu0
        %v1605 = vadd.f32 0.0, %v1604
        %v1606 = vpop.f32.mrb[0].mxu0
        %1607 = vdwg.mxu0
        %v1608 = vmul.f32 %v1600, 0.35355338
        %v1609 = vmul.f32 %v1605, 0.35355338
        %vm1610 = vcmask 64512
        %v1611 = vsel %vm1610, %v1608, -inf
        %1612 = vmax.xlane.f32.xlu0 %v1611
        %v1613 = vpop.xlane.xlu0 %1612
        %v1614 = vsel %vm1610, %v1609, -inf
        %1615 = vmax.xlane.f32.xlu0 %v1614
        %v1616 = vpop.xlane.xlu0 %1615
        %v1617 = vsub.f32 %v1608, %v1613
        %v1618 = vsub.f32 %v1609, %v1616
        %v1619 = vmul.f32 %v1617, 1.442695
        %v1620 = vpow.pop %v1619
        %v1621 = vmul.f32 %v1618, 1.442695
        %v1622 = vpow.pop %v1621
        %v1623 = vlaneseq
        %v1624 = vshrl.u32 %v1623, 7
        %v1625 = vsub.s32 0, %v1624
        %v1626 = vrot.slane %v1137, %v1625
        %v1627 = vmul.f32 %v1620, %v1626
        %v1628 = vmul.f32 %v1622, %v1626
        %v1629 = vsel %vm1610, %v1627, 0.0
        %1630 = vadd.xlane.f32.xlu0 %v1629
        %v1631 = vpop.xlane.xlu0 %1630
        %v1632 = vsel %vm1610, %v1628, 0.0
        %1633 = vadd.xlane.f32.xlu0 %v1632
        %v1634 = vpop.xlane.xlu0 %1633
        %vm1635 = vcmp.gt.f32.partialorder %v1631, 0.0
        %vm1636 = vcmp.gt.f32.partialorder %v1634, 0.0
        %v1637 = vsel %vm1635, %v1631, 1.0
        %v1638 = vsel %vm1636, %v1634, 1.0
        %v1639 = vrcp.pop %v1637
        %v1640 = vrcp.pop %v1638
        %s1641 = vtos %v1338
        %v1642 = vmul.f32 %v1627, %v1639
        %v1643 = vmul.f32 %v1628, %v1640
        %v1644 = vsel %vm1635, 1, 0
        %v1645 = vsel %vm1636, 1, 0
        %vm1646 = vcmp.eq.s32.totalorder %v1644, 1
        %vm1647 = vcmp.eq.s32.totalorder %v1645, 1
        %v1648 = vsel %vm1646, %v1642, 0.125
        %v1649 = vsel %vm1647, %v1643, 0.125
        %v1650 = vstv %s1641
        %v1651 = vmul.f32 %v1650, %v1648
        %v1652 = vmul.f32 %v1650, %v1649
        %v1653 = vadd.f32 %v1651, 0.0
        %v1654 = vadd.f32 %v1652, 0.0
        %v1655 = vlaneseq
        %v1656 = vshrl.u32 %v1655, 7
        %v1657 = vsub.s32 1, %v1656
        %v1658 = vrot.slane %v1147, %v1657
        %v1659 = vmul.f32 %v1620, %v1658
        %v1660 = vmul.f32 %v1622, %v1658
        %v1661 = vsel %vm1610, %v1659, 0.0
        %1662 = vadd.xlane.f32.xlu0 %v1661
        %v1663 = vpop.xlane.xlu0 %1662
        %v1664 = vsel %vm1610, %v1660, 0.0
        %1665 = vadd.xlane.f32.xlu0 %v1664
        %v1666 = vpop.xlane.xlu0 %1665
        %vm1667 = vcmp.gt.f32.partialorder %v1663, 0.0
        %vm1668 = vcmp.gt.f32.partialorder %v1666, 0.0
        %v1669 = vsel %vm1667, %v1663, 1.0
        %v1670 = vsel %vm1668, %v1666, 1.0
        %v1671 = vrcp.pop %v1669
        %v1672 = vrcp.pop %v1670
        %1673 = vrot.lane.b32.xlu0 %v1338, 127
        %v1674 = vpop.permute.xlu0 %1673
        %s1675 = vtos %v1674
        %v1676 = vmul.f32 %v1659, %v1671
        %v1677 = vmul.f32 %v1660, %v1672
        %v1678 = vsel %vm1667, 1, 0
        %v1679 = vsel %vm1668, 1, 0
        %vm1680 = vcmp.eq.s32.totalorder %v1678, 1
        %vm1681 = vcmp.eq.s32.totalorder %v1679, 1
        %v1682 = vsel %vm1680, %v1676, 0.125
        %v1683 = vsel %vm1681, %v1677, 0.125
        %v1684 = vstv %s1675
        %v1685 = vmul.f32 %v1684, %v1682
        %v1686 = vmul.f32 %v1684, %v1683
        %v1687 = vadd.f32 %v1653, %v1685
        %v1688 = vadd.f32 %v1654, %v1686
        %v1689 = vlaneseq
        %v1690 = vshrl.u32 %v1689, 7
        %v1691 = vsub.s32 2, %v1690
        %v1692 = vrot.slane %v1147, %v1691
        %v1693 = vmul.f32 %v1620, %v1692
        %v1694 = vmul.f32 %v1622, %v1692
        %v1695 = vsel %vm1610, %v1693, 0.0
        %1696 = vadd.xlane.f32.xlu0 %v1695
        %v1697 = vpop.xlane.xlu0 %1696
        %v1698 = vsel %vm1610, %v1694, 0.0
        %1699 = vadd.xlane.f32.xlu0 %v1698
        %v1700 = vpop.xlane.xlu0 %1699
        %vm1701 = vcmp.gt.f32.partialorder %v1697, 0.0
        %vm1702 = vcmp.gt.f32.partialorder %v1700, 0.0
        %v1703 = vsel %vm1701, %v1697, 1.0
        %v1704 = vsel %vm1702, %v1700, 1.0
        %v1705 = vrcp.pop %v1703
        %v1706 = vrcp.pop %v1704
        %1707 = vrot.lane.b32.xlu0 %v1338, 126
        %v1708 = vpop.permute.xlu0 %1707
        %s1709 = vtos %v1708
        %v1710 = vmul.f32 %v1693, %v1705
        %v1711 = vmul.f32 %v1694, %v1706
        %v1712 = vsel %vm1701, 1, 0
        %v1713 = vsel %vm1702, 1, 0
        %vm1714 = vcmp.eq.s32.totalorder %v1712, 1
        %vm1715 = vcmp.eq.s32.totalorder %v1713, 1
        %v1716 = vsel %vm1714, %v1710, 0.125
        %v1717 = vsel %vm1715, %v1711, 0.125
        %v1718 = vstv %s1709
        %v1719 = vmul.f32 %v1718, %v1716
        %v1720 = vmul.f32 %v1718, %v1717
        %v1721 = vadd.f32 %v1687, %v1719
        %v1722 = vadd.f32 %v1688, %v1720
        %v1723 = vlaneseq
        %v1724 = vshrl.u32 %v1723, 7
        %v1725 = vsub.s32 3, %v1724
        %v1726 = vrot.slane %v1147, %v1725
        %v1727 = vmul.f32 %v1620, %v1726
        %v1728 = vmul.f32 %v1622, %v1726
        %v1729 = vsel %vm1610, %v1727, 0.0
        %1730 = vadd.xlane.f32.xlu0 %v1729
        %v1731 = vpop.xlane.xlu0 %1730
        %v1732 = vsel %vm1610, %v1728, 0.0
        %1733 = vadd.xlane.f32.xlu0 %v1732
        %v1734 = vpop.xlane.xlu0 %1733
        %vm1735 = vcmp.gt.f32.partialorder %v1731, 0.0
        %vm1736 = vcmp.gt.f32.partialorder %v1734, 0.0
        %v1737 = vsel %vm1735, %v1731, 1.0
        %v1738 = vsel %vm1736, %v1734, 1.0
        %v1739 = vrcp.pop %v1737
        %v1740 = vrcp.pop %v1738
        %1741 = vrot.lane.b32.xlu0 %v1338, 125
        %v1742 = vpop.permute.xlu0 %1741
        %s1743 = vtos %v1742
        %v1744 = vmul.f32 %v1727, %v1739
        %v1745 = vmul.f32 %v1728, %v1740
        %v1746 = vsel %vm1735, 1, 0
        %v1747 = vsel %vm1736, 1, 0
        %vm1748 = vcmp.eq.s32.totalorder %v1746, 1
        %vm1749 = vcmp.eq.s32.totalorder %v1747, 1
        %v1750 = vsel %vm1748, %v1744, 0.125
        %v1751 = vsel %vm1749, %v1745, 0.125
        %v1752 = vstv %s1743
        %v1753 = vmul.f32 %v1752, %v1750
        %v1754 = vmul.f32 %v1752, %v1751
        %v1755 = vadd.f32 %v1721, %v1753
        %v1756 = vadd.f32 %v1722, %v1754
        %1758 = vrot.lane.b32.xlu0 %v1521, 32
        %v1759 = vpop.permute.xlu0 %1758
        %v1761 = vmul.f32 %v1512, %v1759
        %vm1762 = vcmp.ge.s32.totalorder %v1516, 8
        %vm1763 = vcmp.lt.s32.totalorder %v1516, 16
        %vm1764 = vmand %vm1762, %vm1763
        %v1765 = vsel %vm1764, 1, 0
        %v1766 = vcvt.s32.f32 %v1765
        %v1767 = vmul.f32 %v1423, %v1766
        %v1768 = vmul.f32 %v1428, %v1766
        %v1770 = vsel %vm1169, %v1767, 0
        %v1773 = vsel %vm1169, %v1768, 0
        %1775 = vmatprep.subr.mxu0 0.0
        %1776 = vmatpush1.xpose.msra.mxu0 %v1531
        %1777 = vmatprep.subr.mxu0 0.0
        %1778 = vmatpush1.xpose.msra.mxu0 0.0
        %1779 = vmatprep.subr.mxu0 0.0
        %1780 = vmatpush1.xpose.msra.mxu0 0.0
        %1781 = vmatprep.subr.mxu0 0.0
        %1782 = vmatpush1.xpose.msra.mxu0 0.0
        %1783 = vmatprep.subr.mxu0 0.0
        %1784 = vmatpush1.xpose.msra.mxu0 0.0
        %1785 = vmatprep.subr.mxu0 0.0
        %1786 = vmatpush1.xpose.msra.mxu0 0.0
        %1787 = vmatprep.subr.mxu0 0.0
        %1788 = vmatpush1.xpose.msra.mxu0 0.0
        %1789 = vmatprep.subr.mxu0 0.0
        %1790 = vmatpush1.xpose.msra.mxu0 0.0
        %1791 = vmatprep.subr.mxu0 0.0
        %1792 = vmatpush1.xpose.msra.mxu0 0.0
        %1793 = vmatprep.subr.mxu0 0.0
        %1794 = vmatpush1.xpose.msra.mxu0 0.0
        %1795 = vmatprep.subr.mxu0 0.0
        %1796 = vmatpush1.xpose.msra.mxu0 0.0
        %1797 = vmatprep.subr.mxu0 0.0
        %1798 = vmatpush1.xpose.msra.mxu0 0.0
        %1799 = vmatprep.subr.mxu0 0.0
        %1800 = vmatpush1.xpose.msra.mxu0 0.0
        %1801 = vmatprep.subr.mxu0 0.0
        %1802 = vmatpush1.xpose.msra.mxu0 0.0
        %1803 = vmatprep.subr.mxu0 0.0
        %1804 = vmatpush1.xpose.msra.mxu0 0.0
        %1805 = vmatprep.subr.mxu0 0.0
        %1806 = vmatpush1.xpose.msra.mxu0 0.0
        %1807 = vmatprep.subr.mxu0 0.0
        %1808 = vmatpush1.xpose.msra.mxu0 0.0
        %1809 = vmatprep.subr.mxu0 0.0
        %1810 = vmatpush1.xpose.msra.mxu0 0.0
        %1811 = vmatprep.subr.mxu0 0.0
        %1812 = vmatpush1.xpose.msra.mxu0 0.0
        %1813 = vmatprep.subr.mxu0 0.0
        %1814 = vmatpush1.xpose.msra.mxu0 0.0
        %1815 = vmatprep.subr.mxu0 0.0
        %1816 = vmatpush1.xpose.msra.mxu0 0.0
        %1817 = vmatprep.subr.mxu0 0.0
        %1818 = vmatpush1.xpose.msra.mxu0 0.0
        %1819 = vmatprep.subr.mxu0 0.0
        %1820 = vmatpush1.xpose.msra.mxu0 0.0
        %1821 = vmatprep.subr.mxu0 0.0
        %1822 = vmatpush1.xpose.msra.mxu0 0.0
        %1823 = vmatprep.subr.mxu0 0.0
        %1824 = vmatpush1.xpose.msra.mxu0 0.0
        %1825 = vmatprep.subr.mxu0 0.0
        %1826 = vmatpush1.xpose.msra.mxu0 0.0
        %1827 = vmatprep.subr.mxu0 0.0
        %1828 = vmatpush1.xpose.msra.mxu0 0.0
        %1829 = vmatprep.subr.mxu0 0.0
        %1830 = vmatpush1.xpose.msra.mxu0 0.0
        %1831 = vmatprep.subr.mxu0 0.0
        %1832 = vmatpush1.xpose.msra.mxu0 0.0
        %1833 = vmatprep.subr.mxu0 0.0
        %1834 = vmatpush1.xpose.msra.mxu0 0.0
        %1835 = vmatprep.subr.mxu0 0.0
        %1836 = vmatpush1.xpose.msra.mxu0 0.0
        %1837 = vmatprep.subr.mxu0 0.0
        %1838 = vmatpush1.xpose.msra.mxu0 0.0
        %1839 = vmatprep.mubr.f32.mxu0 0.0
        %1840 = vmatmul.mubr.f32.gmra.mrb[0].mxu0 %v1770
        %v1841 = vpop.f32.mrb[0].mxu0
        %v1842 = vadd.f32 0.0, %v1841
        %v1843 = vpop.f32.mrb[0].mxu0
        %1844 = vmatprep.mubr.f32.mxu0 0.0
        %1845 = vmatmul.mubr.f32.gmra.mrb[0].mxu0 %v1773
        %v1846 = vpop.f32.mrb[0].mxu0
        %v1847 = vadd.f32 0.0, %v1846
        %v1848 = vpop.f32.mrb[0].mxu0
        %1849 = vdwg.mxu0
        %v1850 = vmul.f32 %v1842, 0.35355338
        %v1851 = vmul.f32 %v1847, 0.35355338
        %v1852 = vsel %vm1610, %v1850, -inf
        %1853 = vmax.xlane.f32.xlu0 %v1852
        %v1854 = vpop.xlane.xlu0 %1853
        %v1855 = vsel %vm1610, %v1851, -inf
        %1856 = vmax.xlane.f32.xlu0 %v1855
        %v1857 = vpop.xlane.xlu0 %1856
        %v1858 = vsub.f32 %v1850, %v1854
        %v1859 = vsub.f32 %v1851, %v1857
        %v1860 = vmul.f32 %v1858, 1.442695
        %v1861 = vpow.pop %v1860
        %v1862 = vmul.f32 %v1859, 1.442695
        %v1863 = vpow.pop %v1862
        %v1864 = vmul.f32 %v1861, %v1626
        %v1865 = vmul.f32 %v1863, %v1626
        %v1866 = vsel %vm1610, %v1864, 0.0
        %1867 = vadd.xlane.f32.xlu0 %v1866
        %v1868 = vpop.xlane.xlu0 %1867
        %v1869 = vsel %vm1610, %v1865, 0.0
        %1870 = vadd.xlane.f32.xlu0 %v1869
        %v1871 = vpop.xlane.xlu0 %1870
        %vm1872 = vcmp.gt.f32.partialorder %v1868, 0.0
        %vm1873 = vcmp.gt.f32.partialorder %v1871, 0.0
        %v1874 = vsel %vm1872, %v1868, 1.0
        %v1875 = vsel %vm1873, %v1871, 1.0
        %v1876 = vrcp.pop %v1874
        %v1877 = vrcp.pop %v1875
        %v1878 = vmul.f32 %v1864, %v1876
        %v1879 = vmul.f32 %v1865, %v1877
        %v1880 = vsel %vm1872, 1, 0
        %v1881 = vsel %vm1873, 1, 0
        %vm1882 = vcmp.eq.s32.totalorder %v1880, 1
        %vm1883 = vcmp.eq.s32.totalorder %v1881, 1
        %v1884 = vsel %vm1882, %v1878, 0.125
        %v1885 = vsel %vm1883, %v1879, 0.125
        %v1886 = vmul.f32 %v1650, %v1884
        %v1887 = vmul.f32 %v1650, %v1885
        %v1888 = vadd.f32 %v1886, 0.0
        %v1889 = vadd.f32 %v1887, 0.0
        %v1890 = vmul.f32 %v1861, %v1658
        %v1891 = vmul.f32 %v1863, %v1658
        %v1892 = vsel %vm1610, %v1890, 0.0
        %1893 = vadd.xlane.f32.xlu0 %v1892
        %v1894 = vpop.xlane.xlu0 %1893
        %v1895 = vsel %vm1610, %v1891, 0.0
        %1896 = vadd.xlane.f32.xlu0 %v1895
        %v1897 = vpop.xlane.xlu0 %1896
        %vm1898 = vcmp.gt.f32.partialorder %v1894, 0.0
        %vm1899 = vcmp.gt.f32.partialorder %v1897, 0.0
        %v1900 = vsel %vm1898, %v1894, 1.0
        %v1901 = vsel %vm1899, %v1897, 1.0
        %v1902 = vrcp.pop %v1900
        %v1903 = vrcp.pop %v1901
        %v1904 = vmul.f32 %v1890, %v1902
        %v1905 = vmul.f32 %v1891, %v1903
        %v1906 = vsel %vm1898, 1, 0
        %v1907 = vsel %vm1899, 1, 0
        %vm1908 = vcmp.eq.s32.totalorder %v1906, 1
        %vm1909 = vcmp.eq.s32.totalorder %v1907, 1
        %v1910 = vsel %vm1908, %v1904, 0.125
        %v1911 = vsel %vm1909, %v1905, 0.125
        %v1912 = vmul.f32 %v1684, %v1910
        %v1913 = vmul.f32 %v1684, %v1911
        %v1914 = vadd.f32 %v1888, %v1912
        %v1915 = vadd.f32 %v1889, %v1913
        %v1916 = vmul.f32 %v1861, %v1692
        %v1917 = vmul.f32 %v1863, %v1692
        %v1918 = vsel %vm1610, %v1916, 0.0
        %1919 = vadd.xlane.f32.xlu0 %v1918
        %v1920 = vpop.xlane.xlu0 %1919
        %v1921 = vsel %vm1610, %v1917, 0.0
        %1922 = vadd.xlane.f32.xlu0 %v1921
        %v1923 = vpop.xlane.xlu0 %1922
        %vm1924 = vcmp.gt.f32.partialorder %v1920, 0.0
        %vm1925 = vcmp.gt.f32.partialorder %v1923, 0.0
        %v1926 = vsel %vm1924, %v1920, 1.0
        %v1927 = vsel %vm1925, %v1923, 1.0
        %v1928 = vrcp.pop %v1926
        %v1929 = vrcp.pop %v1927
        %v1930 = vmul.f32 %v1916, %v1928
        %v1931 = vmul.f32 %v1917, %v1929
        %v1932 = vsel %vm1924, 1, 0
        %v1933 = vsel %vm1925, 1, 0
        %vm1934 = vcmp.eq.s32.totalorder %v1932, 1
        %vm1935 = vcmp.eq.s32.totalorder %v1933, 1
        %v1936 = vsel %vm1934, %v1930, 0.125
        %v1937 = vsel %vm1935, %v1931, 0.125
        %v1938 = vmul.f32 %v1718, %v1936
        %v1939 = vmul.f32 %v1718, %v1937
        %v1940 = vadd.f32 %v1914, %v1938
        %v1941 = vadd.f32 %v1915, %v1939
        %v1942 = vmul.f32 %v1861, %v1726
        %v1943 = vmul.f32 %v1863, %v1726
        %v1944 = vsel %vm1610, %v1942, 0.0
        %1945 = vadd.xlane.f32.xlu0 %v1944
        %v1946 = vpop.xlane.xlu0 %1945
        %v1947 = vsel %vm1610, %v1943, 0.0
        %1948 = vadd.xlane.f32.xlu0 %v1947
        %v1949 = vpop.xlane.xlu0 %1948
        %vm1950 = vcmp.gt.f32.partialorder %v1946, 0.0
        %vm1951 = vcmp.gt.f32.partialorder %v1949, 0.0
        %v1952 = vsel %vm1950, %v1946, 1.0
        %v1953 = vsel %vm1951, %v1949, 1.0
        %v1954 = vrcp.pop %v1952
        %v1955 = vrcp.pop %v1953
        %v1956 = vmul.f32 %v1942, %v1954
        %v1957 = vmul.f32 %v1943, %v1955
        %v1958 = vsel %vm1950, 1, 0
        %v1959 = vsel %vm1951, 1, 0
        %vm1960 = vcmp.eq.s32.totalorder %v1958, 1
        %vm1961 = vcmp.eq.s32.totalorder %v1959, 1
        %v1962 = vsel %vm1960, %v1956, 0.125
        %v1963 = vsel %vm1961, %v1957, 0.125
        %v1964 = vmul.f32 %v1752, %v1962
        %v1965 = vmul.f32 %v1752, %v1963
        %v1966 = vadd.f32 %v1940, %v1964
        %v1967 = vadd.f32 %v1941, %v1965
        %1969 = vrot.lane.b32.xlu0 %v1766, 32
        %v1970 = vpop.permute.xlu0 %1969
        %v1972 = vmul.f32 %v1512, %v1970
        %1974 = vrot.lane.b32.xlu0 %v1972, 96
        %v1975 = vpop.permute.xlu0 %1974
        %v1978 = vsel %vm1610, %v1966, 0
        %v1981 = vsel %vm1610, %v1967, 0
        %1983 = vmatprep.subr.mxu0 0.0
        %1984 = vmatpush1.msra.mxu0 %v1975
        %1985 = vmatprep.subr.mxu0 0.0
        %1986 = vmatpush1.msra.mxu0 0.0
        %1987 = vmatprep.subr.mxu0 0.0
        %1988 = vmatpush1.msra.mxu0 0.0
        %1989 = vmatprep.subr.mxu0 0.0
        %1990 = vmatpush1.msra.mxu0 0.0
        %1991 = vmatprep.subr.mxu0 0.0
        %1992 = vmatpush1.msra.mxu0 0.0
        %1993 = vmatprep.subr.mxu0 0.0
        %1994 = vmatpush1.msra.mxu0 0.0
        %1995 = vmatprep.subr.mxu0 0.0
        %1996 = vmatpush1.msra.mxu0 0.0
        %1997 = vmatprep.subr.mxu0 0.0
        %1998 = vmatpush1.msra.mxu0 0.0
        %1999 = vmatprep.subr.mxu0 0.0
        %2000 = vmatpush1.msra.mxu0 0.0
        %2001 = vmatprep.subr.mxu0 0.0
        %2002 = vmatpush1.msra.mxu0 0.0
        %2003 = vmatprep.subr.mxu0 0.0
        %2004 = vmatpush1.msra.mxu0 0.0
        %2005 = vmatprep.subr.mxu0 0.0
        %2006 = vmatpush1.msra.mxu0 0.0
        %2007 = vmatprep.subr.mxu0 0.0
        %2008 = vmatpush1.msra.mxu0 0.0
        %2009 = vmatprep.subr.mxu0 0.0
        %2010 = vmatpush1.msra.mxu0 0.0
        %2011 = vmatprep.subr.mxu0 0.0
        %2012 = vmatpush1.msra.mxu0 0.0
        %2013 = vmatprep.subr.mxu0 0.0
        %2014 = vmatpush1.msra.mxu0 0.0
        %2015 = vmatprep.subr.mxu0 0.0
        %2016 = vmatpush1.msra.mxu0 0.0
        %2017 = vmatprep.subr.mxu0 0.0
        %2018 = vmatpush1.msra.mxu0 0.0
        %2019 = vmatprep.subr.mxu0 0.0
        %2020 = vmatpush1.msra.mxu0 0.0
        %2021 = vmatprep.subr.mxu0 0.0
        %2022 = vmatpush1.msra.mxu0 0.0
        %2023 = vmatprep.subr.mxu0 0.0
        %2024 = vmatpush1.msra.mxu0 0.0
        %2025 = vmatprep.subr.mxu0 0.0
        %2026 = vmatpush1.msra.mxu0 0.0
        %2027 = vmatprep.subr.mxu0 0.0
        %2028 = vmatpush1.msra.mxu0 0.0
        %2029 = vmatprep.subr.mxu0 0.0
        %2030 = vmatpush1.msra.mxu0 0.0
        %2031 = vmatprep.subr.mxu0 0.0
        %2032 = vmatpush1.msra.mxu0 0.0
        %2033 = vmatprep.subr.mxu0 0.0
        %2034 = vmatpush1.msra.mxu0 0.0
        %2035 = vmatprep.subr.mxu0 0.0
        %2036 = vmatpush1.msra.mxu0 0.0
        %2037 = vmatprep.subr.mxu0 0.0
        %2038 = vmatpush1.msra.mxu0 0.0
        %2039 = vmatprep.subr.mxu0 0.0
        %2040 = vmatpush1.msra.mxu0 0.0
        %2041 = vmatprep.subr.mxu0 0.0
        %2042 = vmatpush1.msra.mxu0 0.0
        %2043 = vmatprep.subr.mxu0 0.0
        %2044 = vmatpush1.msra.mxu0 0.0
        %2045 = vmatprep.subr.mxu0 0.0
        %2046 = vmatpush1.msra.mxu0 0.0
        %2047 = vmatprep.mubr.f32.mxu0 0.0
        %2048 = vmatmul.mubr.f32.gmra.mrb[0].mxu0 %v1978
        %v2049 = vpop.f32.mrb[0].mxu0
        %v2050 = vadd.f32 0.0, %v2049
        %v2051 = vpop.f32.mrb[0].mxu0
        %2052 = vmatprep.mubr.f32.mxu0 0.0
        %2053 = vmatmul.mubr.f32.gmra.mrb[0].mxu0 %v1981
        %v2054 = vpop.f32.mrb[0].mxu0
        %v2055 = vadd.f32 0.0, %v2054
        %v2056 = vpop.f32.mrb[0].mxu0
        %2057 = vdwg.mxu0
        %2059 = vrot.lane.b32.xlu0 %v1761, 96
        %v2060 = vpop.permute.xlu0 %2059
        %v2063 = vsel %vm1610, %v1755, 0
        %v2066 = vsel %vm1610, %v1756, 0
        %2068 = vmatprep.subr.mxu0 0.0
        %2069 = vmatpush1.msra.mxu0 %v2060
        %2070 = vmatprep.subr.mxu0 0.0
        %2071 = vmatpush1.msra.mxu0 0.0
        %2072 = vmatprep.subr.mxu0 0.0
        %2073 = vmatpush1.msra.mxu0 0.0
        %2074 = vmatprep.subr.mxu0 0.0
        %2075 = vmatpush1.msra.mxu0 0.0
        %2076 = vmatprep.subr.mxu0 0.0
        %2077 = vmatpush1.msra.mxu0 0.0
        %2078 = vmatprep.subr.mxu0 0.0
        %2079 = vmatpush1.msra.mxu0 0.0
        %2080 = vmatprep.subr.mxu0 0.0
        %2081 = vmatpush1.msra.mxu0 0.0
        %2082 = vmatprep.subr.mxu0 0.0
        %2083 = vmatpush1.msra.mxu0 0.0
        %2084 = vmatprep.subr.mxu0 0.0
        %2085 = vmatpush1.msra.mxu0 0.0
        %2086 = vmatprep.subr.mxu0 0.0
        %2087 = vmatpush1.msra.mxu0 0.0
        %2088 = vmatprep.subr.mxu0 0.0
        %2089 = vmatpush1.msra.mxu0 0.0
        %2090 = vmatprep.subr.mxu0 0.0
        %2091 = vmatpush1.msra.mxu0 0.0
        %2092 = vmatprep.subr.mxu0 0.0
        %2093 = vmatpush1.msra.mxu0 0.0
        %2094 = vmatprep.subr.mxu0 0.0
        %2095 = vmatpush1.msra.mxu0 0.0
        %2096 = vmatprep.subr.mxu0 0.0
        %2097 = vmatpush1.msra.mxu0 0.0
        %2098 = vmatprep.subr.mxu0 0.0
        %2099 = vmatpush1.msra.mxu0 0.0
        %2100 = vmatprep.subr.mxu0 0.0
        %2101 = vmatpush1.msra.mxu0 0.0
        %2102 = vmatprep.subr.mxu0 0.0
        %2103 = vmatpush1.msra.mxu0 0.0
        %2104 = vmatprep.subr.mxu0 0.0
        %2105 = vmatpush1.msra.mxu0 0.0
        %2106 = vmatprep.subr.mxu0 0.0
        %2107 = vmatpush1.msra.mxu0 0.0
        %2108 = vmatprep.subr.mxu0 0.0
        %2109 = vmatpush1.msra.mxu0 0.0
        %2110 = vmatprep.subr.mxu0 0.0
        %2111 = vmatpush1.msra.mxu0 0.0
        %2112 = vmatprep.subr.mxu0 0.0
        %2113 = vmatpush1.msra.mxu0 0.0
        %2114 = vmatprep.subr.mxu0 0.0
        %2115 = vmatpush1.msra.mxu0 0.0
        %2116 = vmatprep.subr.mxu0 0.0
        %2117 = vmatpush1.msra.mxu0 0.0
        %2118 = vmatprep.subr.mxu0 0.0
        %2119 = vmatpush1.msra.mxu0 0.0
        %2120 = vmatprep.subr.mxu0 0.0
        %2121 = vmatpush1.msra.mxu0 0.0
        %2122 = vmatprep.subr.mxu0 0.0
        %2123 = vmatpush1.msra.mxu0 0.0
        %2124 = vmatprep.subr.mxu0 0.0
        %2125 = vmatpush1.msra.mxu0 0.0
        %2126 = vmatprep.subr.mxu0 0.0
        %2127 = vmatpush1.msra.mxu0 0.0
        %2128 = vmatprep.subr.mxu0 0.0
        %2129 = vmatpush1.msra.mxu0 0.0
        %2130 = vmatprep.subr.mxu0 0.0
        %2131 = vmatpush1.msra.mxu0 0.0
        %2132 = vmatprep.mubr.f32.mxu0 0.0
        %2133 = vmatmul.mubr.f32.gmra.mrb[0].mxu0 %v2063
        %v2134 = vpop.f32.mrb[0].mxu0
        %v2135 = vadd.f32 %v2050, %v2134
        %v2136 = vpop.f32.mrb[0].mxu0
        %2137 = vmatprep.mubr.f32.mxu0 0.0
        %2138 = vmatmul.mubr.f32.gmra.mrb[0].mxu0 %v2066
        %v2139 = vpop.f32.mrb[0].mxu0
        %v2140 = vadd.f32 %v2055, %v2139
        %v2141 = vpop.f32.mrb[0].mxu0
        %2142 = vdwg.mxu0
        %vm2143 = vcmp.ge.s32.totalorder %v1516, 16
        %vm2144 = vcmp.lt.s32.totalorder %v1516, 24
        %vm2145 = vmand %vm2143, %vm2144
        %v2146 = vsel %vm2145, 1, 0
        %v2147 = vcvt.s32.f32 %v2146
        %v2148 = vmul.f32 %v1423, %v2147
        %v2149 = vmul.f32 %v1428, %v2147
        %v2151 = vsel %vm1169, %v2148, 0
        %v2154 = vsel %vm1169, %v2149, 0
        %2156 = vmatprep.subr.mxu0 0.0
        %2157 = vmatpush1.xpose.msra.mxu0 %v1531
        %2158 = vmatprep.subr.mxu0 0.0
        %2159 = vmatpush1.xpose.msra.mxu0 0.0
        %2160 = vmatprep.subr.mxu0 0.0
        %2161 = vmatpush1.xpose.msra.mxu0 0.0
        %2162 = vmatprep.subr.mxu0 0.0
        %2163 = vmatpush1.xpose.msra.mxu0 0.0
        %2164 = vmatprep.subr.mxu0 0.0
        %2165 = vmatpush1.xpose.msra.mxu0 0.0
        %2166 = vmatprep.subr.mxu0 0.0
        %2167 = vmatpush1.xpose.msra.mxu0 0.0
        %2168 = vmatprep.subr.mxu0 0.0
        %2169 = vmatpush1.xpose.msra.mxu0 0.0
        %2170 = vmatprep.subr.mxu0 0.0
        %2171 = vmatpush1.xpose.msra.mxu0 0.0
        %2172 = vmatprep.subr.mxu0 0.0
        %2173 = vmatpush1.xpose.msra.mxu0 0.0
        %2174 = vmatprep.subr.mxu0 0.0
        %2175 = vmatpush1.xpose.msra.mxu0 0.0
        %2176 = vmatprep.subr.mxu0 0.0
        %2177 = vmatpush1.xpose.msra.mxu0 0.0
        %2178 = vmatprep.subr.mxu0 0.0
        %2179 = vmatpush1.xpose.msra.mxu0 0.0
        %2180 = vmatprep.subr.mxu0 0.0
        %2181 = vmatpush1.xpose.msra.mxu0 0.0
        %2182 = vmatprep.subr.mxu0 0.0
        %2183 = vmatpush1.xpose.msra.mxu0 0.0
        %2184 = vmatprep.subr.mxu0 0.0
        %2185 = vmatpush1.xpose.msra.mxu0 0.0
        %2186 = vmatprep.subr.mxu0 0.0
        %2187 = vmatpush1.xpose.msra.mxu0 0.0
        %2188 = vmatprep.subr.mxu0 0.0
        %2189 = vmatpush1.xpose.msra.mxu0 0.0
        %2190 = vmatprep.subr.mxu0 0.0
        %2191 = vmatpush1.xpose.msra.mxu0 0.0
        %2192 = vmatprep.subr.mxu0 0.0
        %2193 = vmatpush1.xpose.msra.mxu0 0.0
        %2194 = vmatprep.subr.mxu0 0.0
        %2195 = vmatpush1.xpose.msra.mxu0 0.0
        %2196 = vmatprep.subr.mxu0 0.0
        %2197 = vmatpush1.xpose.msra.mxu0 0.0
        %2198 = vmatprep.subr.mxu0 0.0
        %2199 = vmatpush1.xpose.msra.mxu0 0.0
        %2200 = vmatprep.subr.mxu0 0.0
        %2201 = vmatpush1.xpose.msra.mxu0 0.0
        %2202 = vmatprep.subr.mxu0 0.0
        %2203 = vmatpush1.xpose.msra.mxu0 0.0
        %2204 = vmatprep.subr.mxu0 0.0
        %2205 = vmatpush1.xpose.msra.mxu0 0.0
        %2206 = vmatprep.subr.mxu0 0.0
        %2207 = vmatpush1.xpose.msra.mxu0 0.0
        %2208 = vmatprep.subr.mxu0 0.0
        %2209 = vmatpush1.xpose.msra.mxu0 0.0
        %2210 = vmatprep.subr.mxu0 0.0
        %2211 = vmatpush1.xpose.msra.mxu0 0.0
        %2212 = vmatprep.subr.mxu0 0.0
        %2213 = vmatpush1.xpose.msra.mxu0 0.0
        %2214 = vmatprep.subr.mxu0 0.0
        %2215 = vmatpush1.xpose.msra.mxu0 0.0
        %2216 = vmatprep.subr.mxu0 0.0
        %2217 = vmatpush1.xpose.msra.mxu0 0.0
        %2218 = vmatprep.subr.mxu0 0.0
        %2219 = vmatpush1.xpose.msra.mxu0 0.0
        %2220 = vmatprep.mubr.f32.mxu0 0.0
        %2221 = vmatmul.mubr.f32.gmra.mrb[0].mxu0 %v2151
        %v2222 = vpop.f32.mrb[0].mxu0
        %v2223 = vadd.f32 0.0, %v2222
        %v2224 = vpop.f32.mrb[0].mxu0
        %2225 = vmatprep.mubr.f32.mxu0 0.0
        %2226 = vmatmul.mubr.f32.gmra.mrb[0].mxu0 %v2154
        %v2227 = vpop.f32.mrb[0].mxu0
        %v2228 = vadd.f32 0.0, %v2227
        %v2229 = vpop.f32.mrb[0].mxu0
        %2230 = vdwg.mxu0
        %v2231 = vmul.f32 %v2223, 0.35355338
        %v2232 = vmul.f32 %v2228, 0.35355338
        %v2233 = vsel %vm1610, %v2231, -inf
        %2234 = vmax.xlane.f32.xlu0 %v2233
        %v2235 = vpop.xlane.xlu0 %2234
        %v2236 = vsel %vm1610, %v2232, -inf
        %2237 = vmax.xlane.f32.xlu0 %v2236
        %v2238 = vpop.xlane.xlu0 %2237
        %v2239 = vsub.f32 %v2231, %v2235
        %v2240 = vsub.f32 %v2232, %v2238
        %v2241 = vmul.f32 %v2239, 1.442695
        %v2242 = vpow.pop %v2241
        %v2243 = vmul.f32 %v2240, 1.442695
        %v2244 = vpow.pop %v2243
        %v2245 = vmul.f32 %v2242, %v1626
        %v2246 = vmul.f32 %v2244, %v1626
        %v2247 = vsel %vm1610, %v2245, 0.0
        %2248 = vadd.xlane.f32.xlu0 %v2247
        %v2249 = vpop.xlane.xlu0 %2248
        %v2250 = vsel %vm1610, %v2246, 0.0
        %2251 = vadd.xlane.f32.xlu0 %v2250
        %v2252 = vpop.xlane.xlu0 %2251
        %vm2253 = vcmp.gt.f32.partialorder %v2249, 0.0
        %vm2254 = vcmp.gt.f32.partialorder %v2252, 0.0
        %v2255 = vsel %vm2253, %v2249, 1.0
        %v2256 = vsel %vm2254, %v2252, 1.0
        %v2257 = vrcp.pop %v2255
        %v2258 = vrcp.pop %v2256
        %v2259 = vmul.f32 %v2245, %v2257
        %v2260 = vmul.f32 %v2246, %v2258
        %v2261 = vsel %vm2253, 1, 0
        %v2262 = vsel %vm2254, 1, 0
        %vm2263 = vcmp.eq.s32.totalorder %v2261, 1
        %vm2264 = vcmp.eq.s32.totalorder %v2262, 1
        %v2265 = vsel %vm2263, %v2259, 0.125
        %v2266 = vsel %vm2264, %v2260, 0.125
        %v2267 = vmul.f32 %v1650, %v2265
        %v2268 = vmul.f32 %v1650, %v2266
        %v2269 = vadd.f32 %v2267, 0.0
        %v2270 = vadd.f32 %v2268, 0.0
        %v2271 = vmul.f32 %v2242, %v1658
        %v2272 = vmul.f32 %v2244, %v1658
        %v2273 = vsel %vm1610, %v2271, 0.0
        %2274 = vadd.xlane.f32.xlu0 %v2273
        %v2275 = vpop.xlane.xlu0 %2274
        %v2276 = vsel %vm1610, %v2272, 0.0
        %2277 = vadd.xlane.f32.xlu0 %v2276
        %v2278 = vpop.xlane.xlu0 %2277
        %vm2279 = vcmp.gt.f32.partialorder %v2275, 0.0
        %vm2280 = vcmp.gt.f32.partialorder %v2278, 0.0
        %v2281 = vsel %vm2279, %v2275, 1.0
        %v2282 = vsel %vm2280, %v2278, 1.0
        %v2283 = vrcp.pop %v2281
        %v2284 = vrcp.pop %v2282
        %v2285 = vmul.f32 %v2271, %v2283
        %v2286 = vmul.f32 %v2272, %v2284
        %v2287 = vsel %vm2279, 1, 0
        %v2288 = vsel %vm2280, 1, 0
        %vm2289 = vcmp.eq.s32.totalorder %v2287, 1
        %vm2290 = vcmp.eq.s32.totalorder %v2288, 1
        %v2291 = vsel %vm2289, %v2285, 0.125
        %v2292 = vsel %vm2290, %v2286, 0.125
        %v2293 = vmul.f32 %v1684, %v2291
        %v2294 = vmul.f32 %v1684, %v2292
        %v2295 = vadd.f32 %v2269, %v2293
        %v2296 = vadd.f32 %v2270, %v2294
        %v2297 = vmul.f32 %v2242, %v1692
        %v2298 = vmul.f32 %v2244, %v1692
        %v2299 = vsel %vm1610, %v2297, 0.0
        %2300 = vadd.xlane.f32.xlu0 %v2299
        %v2301 = vpop.xlane.xlu0 %2300
        %v2302 = vsel %vm1610, %v2298, 0.0
        %2303 = vadd.xlane.f32.xlu0 %v2302
        %v2304 = vpop.xlane.xlu0 %2303
        %vm2305 = vcmp.gt.f32.partialorder %v2301, 0.0
        %vm2306 = vcmp.gt.f32.partialorder %v2304, 0.0
        %v2307 = vsel %vm2305, %v2301, 1.0
        %v2308 = vsel %vm2306, %v2304, 1.0
        %v2309 = vrcp.pop %v2307
        %v2310 = vrcp.pop %v2308
        %v2311 = vmul.f32 %v2297, %v2309
        %v2312 = vmul.f32 %v2298, %v2310
        %v2313 = vsel %vm2305, 1, 0
        %v2314 = vsel %vm2306, 1, 0
        %vm2315 = vcmp.eq.s32.totalorder %v2313, 1
        %vm2316 = vcmp.eq.s32.totalorder %v2314, 1
        %v2317 = vsel %vm2315, %v2311, 0.125
        %v2318 = vsel %vm2316, %v2312, 0.125
        %v2319 = vmul.f32 %v1718, %v2317
        %v2320 = vmul.f32 %v1718, %v2318
        %v2321 = vadd.f32 %v2295, %v2319
        %v2322 = vadd.f32 %v2296, %v2320
        %v2323 = vmul.f32 %v2242, %v1726
        %v2324 = vmul.f32 %v2244, %v1726
        %v2325 = vsel %vm1610, %v2323, 0.0
        %2326 = vadd.xlane.f32.xlu0 %v2325
        %v2327 = vpop.xlane.xlu0 %2326
        %v2328 = vsel %vm1610, %v2324, 0.0
        %2329 = vadd.xlane.f32.xlu0 %v2328
        %v2330 = vpop.xlane.xlu0 %2329
        %vm2331 = vcmp.gt.f32.partialorder %v2327, 0.0
        %vm2332 = vcmp.gt.f32.partialorder %v2330, 0.0
        %v2333 = vsel %vm2331, %v2327, 1.0
        %v2334 = vsel %vm2332, %v2330, 1.0
        %v2335 = vrcp.pop %v2333
        %v2336 = vrcp.pop %v2334
        %v2337 = vmul.f32 %v2323, %v2335
        %v2338 = vmul.f32 %v2324, %v2336
        %v2339 = vsel %vm2331, 1, 0
        %v2340 = vsel %vm2332, 1, 0
        %vm2341 = vcmp.eq.s32.totalorder %v2339, 1
        %vm2342 = vcmp.eq.s32.totalorder %v2340, 1
        %v2343 = vsel %vm2341, %v2337, 0.125
        %v2344 = vsel %vm2342, %v2338, 0.125
        %v2345 = vmul.f32 %v1752, %v2343
        %v2346 = vmul.f32 %v1752, %v2344
        %v2347 = vadd.f32 %v2321, %v2345
        %v2348 = vadd.f32 %v2322, %v2346
        %2350 = vrot.lane.b32.xlu0 %v2147, 32
        %v2351 = vpop.permute.xlu0 %2350
        %v2353 = vmul.f32 %v1512, %v2351
        %2355 = vrot.lane.b32.xlu0 %v2353, 96
        %v2356 = vpop.permute.xlu0 %2355
        %v2359 = vsel %vm1610, %v2347, 0
        %v2362 = vsel %vm1610, %v2348, 0
        %2364 = vmatprep.subr.mxu0 0.0
        %2365 = vmatpush1.msra.mxu0 %v2356
        %2366 = vmatprep.subr.mxu0 0.0
        %2367 = vmatpush1.msra.mxu0 0.0
        %2368 = vmatprep.subr.mxu0 0.0
        %2369 = vmatpush1.msra.mxu0 0.0
        %2370 = vmatprep.subr.mxu0 0.0
        %2371 = vmatpush1.msra.mxu0 0.0
        %2372 = vmatprep.subr.mxu0 0.0
        %2373 = vmatpush1.msra.mxu0 0.0
        %2374 = vmatprep.subr.mxu0 0.0
        %2375 = vmatpush1.msra.mxu0 0.0
        %2376 = vmatprep.subr.mxu0 0.0
        %2377 = vmatpush1.msra.mxu0 0.0
        %2378 = vmatprep.subr.mxu0 0.0
        %2379 = vmatpush1.msra.mxu0 0.0
        %2380 = vmatprep.subr.mxu0 0.0
        %2381 = vmatpush1.msra.mxu0 0.0
        %2382 = vmatprep.subr.mxu0 0.0
        %2383 = vmatpush1.msra.mxu0 0.0
        %2384 = vmatprep.subr.mxu0 0.0
        %2385 = vmatpush1.msra.mxu0 0.0
        %2386 = vmatprep.subr.mxu0 0.0
        %2387 = vmatpush1.msra.mxu0 0.0
        %2388 = vmatprep.subr.mxu0 0.0
        %2389 = vmatpush1.msra.mxu0 0.0
        %2390 = vmatprep.subr.mxu0 0.0
        %2391 = vmatpush1.msra.mxu0 0.0
        %2392 = vmatprep.subr.mxu0 0.0
        %2393 = vmatpush1.msra.mxu0 0.0
        %2394 = vmatprep.subr.mxu0 0.0
        %2395 = vmatpush1.msra.mxu0 0.0
        %2396 = vmatprep.subr.mxu0 0.0
        %2397 = vmatpush1.msra.mxu0 0.0
        %2398 = vmatprep.subr.mxu0 0.0
        %2399 = vmatpush1.msra.mxu0 0.0
        %2400 = vmatprep.subr.mxu0 0.0
        %2401 = vmatpush1.msra.mxu0 0.0
        %2402 = vmatprep.subr.mxu0 0.0
        %2403 = vmatpush1.msra.mxu0 0.0
        %2404 = vmatprep.subr.mxu0 0.0
        %2405 = vmatpush1.msra.mxu0 0.0
        %2406 = vmatprep.subr.mxu0 0.0
        %2407 = vmatpush1.msra.mxu0 0.0
        %2408 = vmatprep.subr.mxu0 0.0
        %2409 = vmatpush1.msra.mxu0 0.0
        %2410 = vmatprep.subr.mxu0 0.0
        %2411 = vmatpush1.msra.mxu0 0.0
        %2412 = vmatprep.subr.mxu0 0.0
        %2413 = vmatpush1.msra.mxu0 0.0
        %2414 = vmatprep.subr.mxu0 0.0
        %2415 = vmatpush1.msra.mxu0 0.0
        %2416 = vmatprep.subr.mxu0 0.0
        %2417 = vmatpush1.msra.mxu0 0.0
        %2418 = vmatprep.subr.mxu0 0.0
        %2419 = vmatpush1.msra.mxu0 0.0
        %2420 = vmatprep.subr.mxu0 0.0
        %2421 = vmatpush1.msra.mxu0 0.0
        %2422 = vmatprep.subr.mxu0 0.0
        %2423 = vmatpush1.msra.mxu0 0.0
        %2424 = vmatprep.subr.mxu0 0.0
        %2425 = vmatpush1.msra.mxu0 0.0
        %2426 = vmatprep.subr.mxu0 0.0
        %2427 = vmatpush1.msra.mxu0 0.0
        %2428 = vmatprep.mubr.f32.mxu0 0.0
        %2429 = vmatmul.mubr.f32.gmra.mrb[0].mxu0 %v2359
        %v2430 = vpop.f32.mrb[0].mxu0
        %v2431 = vadd.f32 0.0, %v2430
        %v2432 = vpop.f32.mrb[0].mxu0
        %2433 = vmatprep.mubr.f32.mxu0 0.0
        %2434 = vmatmul.mubr.f32.gmra.mrb[0].mxu0 %v2362
        %v2435 = vpop.f32.mrb[0].mxu0
        %v2436 = vadd.f32 0.0, %v2435
        %v2437 = vpop.f32.mrb[0].mxu0
        %2438 = vdwg.mxu0
        %v2439 = vadd.f32 %v2135, %v2431
        %v2440 = vadd.f32 %v2140, %v2436
        %vm2441 = vcmp.ge.s32.totalorder %v1516, 24
        %vm2442 = vcmp.lt.s32.totalorder %v1516, 32
        %vm2443 = vmand %vm2441, %vm2442
        %v2444 = vsel %vm2443, 1, 0
        %v2445 = vcvt.s32.f32 %v2444
        %v2446 = vmul.f32 %v1423, %v2445
        %v2447 = vmul.f32 %v1428, %v2445
        %v2449 = vsel %vm1169, %v2446, 0
        %v2452 = vsel %vm1169, %v2447, 0
        %2454 = vmatprep.subr.mxu0 0.0
        %2455 = vmatpush1.xpose.msra.mxu0 %v1531
        %2456 = vmatprep.subr.mxu0 0.0
        %2457 = vmatpush1.xpose.msra.mxu0 0.0
        %2458 = vmatprep.subr.mxu0 0.0
        %2459 = vmatpush1.xpose.msra.mxu0 0.0
        %2460 = vmatprep.subr.mxu0 0.0
        %2461 = vmatpush1.xpose.msra.mxu0 0.0
        %2462 = vmatprep.subr.mxu0 0.0
        %2463 = vmatpush1.xpose.msra.mxu0 0.0
        %2464 = vmatprep.subr.mxu0 0.0
        %2465 = vmatpush1.xpose.msra.mxu0 0.0
        %2466 = vmatprep.subr.mxu0 0.0
        %2467 = vmatpush1.xpose.msra.mxu0 0.0
        %2468 = vmatprep.subr.mxu0 0.0
        %2469 = vmatpush1.xpose.msra.mxu0 0.0
        %2470 = vmatprep.subr.mxu0 0.0
        %2471 = vmatpush1.xpose.msra.mxu0 0.0
        %2472 = vmatprep.subr.mxu0 0.0
        %2473 = vmatpush1.xpose.msra.mxu0 0.0
        %2474 = vmatprep.subr.mxu0 0.0
        %2475 = vmatpush1.xpose.msra.mxu0 0.0
        %2476 = vmatprep.subr.mxu0 0.0
        %2477 = vmatpush1.xpose.msra.mxu0 0.0
        %2478 = vmatprep.subr.mxu0 0.0
        %2479 = vmatpush1.xpose.msra.mxu0 0.0
        %2480 = vmatprep.subr.mxu0 0.0
        %2481 = vmatpush1.xpose.msra.mxu0 0.0
        %2482 = vmatprep.subr.mxu0 0.0
        %2483 = vmatpush1.xpose.msra.mxu0 0.0
        %2484 = vmatprep.subr.mxu0 0.0
        %2485 = vmatpush1.xpose.msra.mxu0 0.0
        %2486 = vmatprep.subr.mxu0 0.0
        %2487 = vmatpush1.xpose.msra.mxu0 0.0
        %2488 = vmatprep.subr.mxu0 0.0
        %2489 = vmatpush1.xpose.msra.mxu0 0.0
        %2490 = vmatprep.subr.mxu0 0.0
        %2491 = vmatpush1.xpose.msra.mxu0 0.0
        %2492 = vmatprep.subr.mxu0 0.0
        %2493 = vmatpush1.xpose.msra.mxu0 0.0
        %2494 = vmatprep.subr.mxu0 0.0
        %2495 = vmatpush1.xpose.msra.mxu0 0.0
        %2496 = vmatprep.subr.mxu0 0.0
        %2497 = vmatpush1.xpose.msra.mxu0 0.0
        %2498 = vmatprep.subr.mxu0 0.0
        %2499 = vmatpush1.xpose.msra.mxu0 0.0
        %2500 = vmatprep.subr.mxu0 0.0
        %2501 = vmatpush1.xpose.msra.mxu0 0.0
        %2502 = vmatprep.subr.mxu0 0.0
        %2503 = vmatpush1.xpose.msra.mxu0 0.0
        %2504 = vmatprep.subr.mxu0 0.0
        %2505 = vmatpush1.xpose.msra.mxu0 0.0
        %2506 = vmatprep.subr.mxu0 0.0
        %2507 = vmatpush1.xpose.msra.mxu0 0.0
        %2508 = vmatprep.subr.mxu0 0.0
        %2509 = vmatpush1.xpose.msra.mxu0 0.0
        %2510 = vmatprep.subr.mxu0 0.0
        %2511 = vmatpush1.xpose.msra.mxu0 0.0
        %2512 = vmatprep.subr.mxu0 0.0
        %2513 = vmatpush1.xpose.msra.mxu0 0.0
        %2514 = vmatprep.subr.mxu0 0.0
        %2515 = vmatpush1.xpose.msra.mxu0 0.0
        %2516 = vmatprep.subr.mxu0 0.0
        %2517 = vmatpush1.xpose.msra.mxu0 0.0
        %2518 = vmatprep.mubr.f32.mxu0 0.0
        %2519 = vmatmul.mubr.f32.gmra.mrb[0].mxu0 %v2449
        %v2520 = vpop.f32.mrb[0].mxu0
        %v2521 = vadd.f32 0.0, %v2520
        %v2522 = vpop.f32.mrb[0].mxu0
        %2523 = vmatprep.mubr.f32.mxu0 0.0
        %2524 = vmatmul.mubr.f32.gmra.mrb[0].mxu0 %v2452
        %v2525 = vpop.f32.mrb[0].mxu0
        %v2526 = vadd.f32 0.0, %v2525
        %v2527 = vpop.f32.mrb[0].mxu0
        %2528 = vdwg.mxu0
        %v2529 = vmul.f32 %v2521, 0.35355338
        %v2530 = vmul.f32 %v2526, 0.35355338
        %v2531 = vsel %vm1610, %v2529, -inf
        %2532 = vmax.xlane.f32.xlu0 %v2531
        %v2533 = vpop.xlane.xlu0 %2532
        %v2534 = vsel %vm1610, %v2530, -inf
        %2535 = vmax.xlane.f32.xlu0 %v2534
        %v2536 = vpop.xlane.xlu0 %2535
        %v2537 = vsub.f32 %v2529, %v2533
        %v2538 = vsub.f32 %v2530, %v2536
        %v2539 = vmul.f32 %v2537, 1.442695
        %v2540 = vpow.pop %v2539
        %v2541 = vmul.f32 %v2538, 1.442695
        %v2542 = vpow.pop %v2541
        %v2543 = vmul.f32 %v2540, %v1626
        %v2544 = vmul.f32 %v2542, %v1626
        %v2545 = vsel %vm1610, %v2543, 0.0
        %2546 = vadd.xlane.f32.xlu0 %v2545
        %v2547 = vpop.xlane.xlu0 %2546
        %v2548 = vsel %vm1610, %v2544, 0.0
        %2549 = vadd.xlane.f32.xlu0 %v2548
        %v2550 = vpop.xlane.xlu0 %2549
        %vm2551 = vcmp.gt.f32.partialorder %v2547, 0.0
        %vm2552 = vcmp.gt.f32.partialorder %v2550, 0.0
        %v2553 = vsel %vm2551, %v2547, 1.0
        %v2554 = vsel %vm2552, %v2550, 1.0
        %v2555 = vrcp.pop %v2553
        %v2556 = vrcp.pop %v2554
        %v2557 = vmul.f32 %v2543, %v2555
        %v2558 = vmul.f32 %v2544, %v2556
        %v2559 = vsel %vm2551, 1, 0
        %v2560 = vsel %vm2552, 1, 0
        %vm2561 = vcmp.eq.s32.totalorder %v2559, 1
        %vm2562 = vcmp.eq.s32.totalorder %v2560, 1
        %v2563 = vsel %vm2561, %v2557, 0.125
        %v2564 = vsel %vm2562, %v2558, 0.125
        %v2565 = vmul.f32 %v1650, %v2563
        %v2566 = vmul.f32 %v1650, %v2564
        %v2567 = vadd.f32 %v2565, 0.0
        %v2568 = vadd.f32 %v2566, 0.0
        %v2569 = vmul.f32 %v2540, %v1658
        %v2570 = vmul.f32 %v2542, %v1658
        %v2571 = vsel %vm1610, %v2569, 0.0
        %2572 = vadd.xlane.f32.xlu0 %v2571
        %v2573 = vpop.xlane.xlu0 %2572
        %v2574 = vsel %vm1610, %v2570, 0.0
        %2575 = vadd.xlane.f32.xlu0 %v2574
        %v2576 = vpop.xlane.xlu0 %2575
        %vm2577 = vcmp.gt.f32.partialorder %v2573, 0.0
        %vm2578 = vcmp.gt.f32.partialorder %v2576, 0.0
        %v2579 = vsel %vm2577, %v2573, 1.0
        %v2580 = vsel %vm2578, %v2576, 1.0
        %v2581 = vrcp.pop %v2579
        %v2582 = vrcp.pop %v2580
        %v2583 = vmul.f32 %v2569, %v2581
        %v2584 = vmul.f32 %v2570, %v2582
        %v2585 = vsel %vm2577, 1, 0
        %v2586 = vsel %vm2578, 1, 0
        %vm2587 = vcmp.eq.s32.totalorder %v2585, 1
        %vm2588 = vcmp.eq.s32.totalorder %v2586, 1
        %v2589 = vsel %vm2587, %v2583, 0.125
        %v2590 = vsel %vm2588, %v2584, 0.125
        %v2591 = vmul.f32 %v1684, %v2589
        %v2592 = vmul.f32 %v1684, %v2590
        %v2593 = vadd.f32 %v2567, %v2591
        %v2594 = vadd.f32 %v2568, %v2592
        %v2595 = vmul.f32 %v2540, %v1692
        %v2596 = vmul.f32 %v2542, %v1692
        %v2597 = vsel %vm1610, %v2595, 0.0
        %2598 = vadd.xlane.f32.xlu0 %v2597
        %v2599 = vpop.xlane.xlu0 %2598
        %v2600 = vsel %vm1610, %v2596, 0.0
        %2601 = vadd.xlane.f32.xlu0 %v2600
        %v2602 = vpop.xlane.xlu0 %2601
        %vm2603 = vcmp.gt.f32.partialorder %v2599, 0.0
        %vm2604 = vcmp.gt.f32.partialorder %v2602, 0.0
        %v2605 = vsel %vm2603, %v2599, 1.0
        %v2606 = vsel %vm2604, %v2602, 1.0
        %v2607 = vrcp.pop %v2605
        %v2608 = vrcp.pop %v2606
        %v2609 = vmul.f32 %v2595, %v2607
        %v2610 = vmul.f32 %v2596, %v2608
        %v2611 = vsel %vm2603, 1, 0
        %v2612 = vsel %vm2604, 1, 0
        %vm2613 = vcmp.eq.s32.totalorder %v2611, 1
        %vm2614 = vcmp.eq.s32.totalorder %v2612, 1
        %v2615 = vsel %vm2613, %v2609, 0.125
        %v2616 = vsel %vm2614, %v2610, 0.125
        %v2617 = vmul.f32 %v1718, %v2615
        %v2618 = vmul.f32 %v1718, %v2616
        %v2619 = vadd.f32 %v2593, %v2617
        %v2620 = vadd.f32 %v2594, %v2618
        %v2621 = vmul.f32 %v2540, %v1726
        %v2622 = vmul.f32 %v2542, %v1726
        %v2623 = vsel %vm1610, %v2621, 0.0
        %2624 = vadd.xlane.f32.xlu0 %v2623
        %v2625 = vpop.xlane.xlu0 %2624
        %v2626 = vsel %vm1610, %v2622, 0.0
        %2627 = vadd.xlane.f32.xlu0 %v2626
        %v2628 = vpop.xlane.xlu0 %2627
        %vm2629 = vcmp.gt.f32.partialorder %v2625, 0.0
        %vm2630 = vcmp.gt.f32.partialorder %v2628, 0.0
        %v2631 = vsel %vm2629, %v2625, 1.0
        %v2632 = vsel %vm2630, %v2628, 1.0
        %v2633 = vrcp.pop %v2631
        %v2634 = vrcp.pop %v2632
        %v2635 = vmul.f32 %v2621, %v2633
        %v2636 = vmul.f32 %v2622, %v2634
        %v2637 = vsel %vm2629, 1, 0
        %v2638 = vsel %vm2630, 1, 0
        %vm2639 = vcmp.eq.s32.totalorder %v2637, 1
        %vm2640 = vcmp.eq.s32.totalorder %v2638, 1
        %v2641 = vsel %vm2639, %v2635, 0.125
        %v2642 = vsel %vm2640, %v2636, 0.125
        %v2643 = vmul.f32 %v1752, %v2641
        %v2644 = vmul.f32 %v1752, %v2642
        %v2645 = vadd.f32 %v2619, %v2643
        %v2646 = vadd.f32 %v2620, %v2644
        %2648 = vrot.lane.b32.xlu0 %v2445, 32
        %v2649 = vpop.permute.xlu0 %2648
        %v2651 = vmul.f32 %v1512, %v2649
        %2653 = vrot.lane.b32.xlu0 %v2651, 96
        %v2654 = vpop.permute.xlu0 %2653
        %v2657 = vsel %vm1610, %v2645, 0
        %v2660 = vsel %vm1610, %v2646, 0
        %2662 = vmatprep.subr.mxu0 0.0
        %2663 = vmatpush1.msra.mxu0 %v2654
        %2664 = vmatprep.subr.mxu0 0.0
        %2665 = vmatpush1.msra.mxu0 0.0
        %2666 = vmatprep.subr.mxu0 0.0
        %2667 = vmatpush1.msra.mxu0 0.0
        %2668 = vmatprep.subr.mxu0 0.0
        %2669 = vmatpush1.msra.mxu0 0.0
        %2670 = vmatprep.subr.mxu0 0.0
        %2671 = vmatpush1.msra.mxu0 0.0
        %2672 = vmatprep.subr.mxu0 0.0
        %2673 = vmatpush1.msra.mxu0 0.0
        %2674 = vmatprep.subr.mxu0 0.0
        %2675 = vmatpush1.msra.mxu0 0.0
        %2676 = vmatprep.subr.mxu0 0.0
        %2677 = vmatpush1.msra.mxu0 0.0
        %2678 = vmatprep.subr.mxu0 0.0
        %2679 = vmatpush1.msra.mxu0 0.0
        %2680 = vmatprep.subr.mxu0 0.0
        %2681 = vmatpush1.msra.mxu0 0.0
        %2682 = vmatprep.subr.mxu0 0.0
        %2683 = vmatpush1.msra.mxu0 0.0
        %2684 = vmatprep.subr.mxu0 0.0
        %2685 = vmatpush1.msra.mxu0 0.0
        %2686 = vmatprep.subr.mxu0 0.0
        %2687 = vmatpush1.msra.mxu0 0.0
        %2688 = vmatprep.subr.mxu0 0.0
        %2689 = vmatpush1.msra.mxu0 0.0
        %2690 = vmatprep.subr.mxu0 0.0
        %2691 = vmatpush1.msra.mxu0 0.0
        %2692 = vmatprep.subr.mxu0 0.0
        %2693 = vmatpush1.msra.mxu0 0.0
        %2694 = vmatprep.subr.mxu0 0.0
        %2695 = vmatpush1.msra.mxu0 0.0
        %2696 = vmatprep.subr.mxu0 0.0
        %2697 = vmatpush1.msra.mxu0 0.0
        %2698 = vmatprep.subr.mxu0 0.0
        %2699 = vmatpush1.msra.mxu0 0.0
        %2700 = vmatprep.subr.mxu0 0.0
        %2701 = vmatpush1.msra.mxu0 0.0
        %2702 = vmatprep.subr.mxu0 0.0
        %2703 = vmatpush1.msra.mxu0 0.0
        %2704 = vmatprep.subr.mxu0 0.0
        %2705 = vmatpush1.msra.mxu0 0.0
        %2706 = vmatprep.subr.mxu0 0.0
        %2707 = vmatpush1.msra.mxu0 0.0
        %2708 = vmatprep.subr.mxu0 0.0
        %2709 = vmatpush1.msra.mxu0 0.0
        %2710 = vmatprep.subr.mxu0 0.0
        %2711 = vmatpush1.msra.mxu0 0.0
        %2712 = vmatprep.subr.mxu0 0.0
        %2713 = vmatpush1.msra.mxu0 0.0
        %2714 = vmatprep.subr.mxu0 0.0
        %2715 = vmatpush1.msra.mxu0 0.0
        %2716 = vmatprep.subr.mxu0 0.0
        %2717 = vmatpush1.msra.mxu0 0.0
        %2718 = vmatprep.subr.mxu0 0.0
        %2719 = vmatpush1.msra.mxu0 0.0
        %2720 = vmatprep.subr.mxu0 0.0
        %2721 = vmatpush1.msra.mxu0 0.0
        %2722 = vmatprep.subr.mxu0 0.0
        %2723 = vmatpush1.msra.mxu0 0.0
        %2724 = vmatprep.subr.mxu0 0.0
        %2725 = vmatpush1.msra.mxu0 0.0
        %2726 = vmatprep.mubr.f32.mxu0 0.0
        %2727 = vmatmul.mubr.f32.gmra.mrb[0].mxu0 %v2657
        %v2728 = vpop.f32.mrb[0].mxu0
        %v2729 = vadd.f32 0.0, %v2728
        %v2730 = vpop.f32.mrb[0].mxu0
        %2731 = vmatprep.mubr.f32.mxu0 0.0
        %2732 = vmatmul.mubr.f32.gmra.mrb[0].mxu0 %v2660
        %v2733 = vpop.f32.mrb[0].mxu0
        %v2734 = vadd.f32 0.0, %v2733
        %v2735 = vpop.f32.mrb[0].mxu0
        %2736 = vdwg.mxu0
        %v2737 = vadd.f32 %v2439, %v2729
        %v2738 = vadd.f32 %v2440, %v2734
        %v2739 = vld [vmem:[%s21] sm:$0xff]
        %v2740 = vld [vmem:[%s21 + $0x8] sm:$0xff]
        %v2741 = vld [vmem:[%s21 + $0x10] sm:$0xff]
        %v2742 = vld [vmem:[%s21 + $0x18] sm:$0xff]
        %v2744 = vsel %vm1169, %v2737, 0
        %v2747 = vsel %vm1169, %v2738, 0
        %2749 = vmatprep.subr.mxu0 0.0
        %2750 = vmatpush1.msra.mxu0 %v2739
        %2751 = vmatprep.subr.mxu0 0.0
        %2752 = vmatpush1.msra.mxu0 %v2740
        %2753 = vmatprep.subr.mxu0 0.0
        %2754 = vmatpush1.msra.mxu0 %v2741
        %2755 = vmatprep.subr.mxu0 0.0
        %2756 = vmatpush1.msra.mxu0 %v2742
        %2757 = vmatprep.subr.mxu0 0.0
        %2758 = vmatpush1.msra.mxu0 0.0
        %2759 = vmatprep.subr.mxu0 0.0
        %2760 = vmatpush1.msra.mxu0 0.0
        %2761 = vmatprep.subr.mxu0 0.0
        %2762 = vmatpush1.msra.mxu0 0.0
        %2763 = vmatprep.subr.mxu0 0.0
        %2764 = vmatpush1.msra.mxu0 0.0
        %2765 = vmatprep.subr.mxu0 0.0
        %2766 = vmatpush1.msra.mxu0 0.0
        %2767 = vmatprep.subr.mxu0 0.0
        %2768 = vmatpush1.msra.mxu0 0.0
        %2769 = vmatprep.subr.mxu0 0.0
        %2770 = vmatpush1.msra.mxu0 0.0
        %2771 = vmatprep.subr.mxu0 0.0
        %2772 = vmatpush1.msra.mxu0 0.0
        %2773 = vmatprep.subr.mxu0 0.0
        %2774 = vmatpush1.msra.mxu0 0.0
        %2775 = vmatprep.subr.mxu0 0.0
        %2776 = vmatpush1.msra.mxu0 0.0
        %2777 = vmatprep.subr.mxu0 0.0
        %2778 = vmatpush1.msra.mxu0 0.0
        %2779 = vmatprep.subr.mxu0 0.0
        %2780 = vmatpush1.msra.mxu0 0.0
        %2781 = vmatprep.subr.mxu0 0.0
        %2782 = vmatpush1.msra.mxu0 0.0
        %2783 = vmatprep.subr.mxu0 0.0
        %2784 = vmatpush1.msra.mxu0 0.0
        %2785 = vmatprep.subr.mxu0 0.0
        %2786 = vmatpush1.msra.mxu0 0.0
        %2787 = vmatprep.subr.mxu0 0.0
        %2788 = vmatpush1.msra.mxu0 0.0
        %2789 = vmatprep.subr.mxu0 0.0
        %2790 = vmatpush1.msra.mxu0 0.0
        %2791 = vmatprep.subr.mxu0 0.0
        %2792 = vmatpush1.msra.mxu0 0.0
        %2793 = vmatprep.subr.mxu0 0.0
        %2794 = vmatpush1.msra.mxu0 0.0
        %2795 = vmatprep.subr.mxu0 0.0
        %2796 = vmatpush1.msra.mxu0 0.0
        %2797 = vmatprep.subr.mxu0 0.0
        %2798 = vmatpush1.msra.mxu0 0.0
        %2799 = vmatprep.subr.mxu0 0.0
        %2800 = vmatpush1.msra.mxu0 0.0
        %2801 = vmatprep.subr.mxu0 0.0
        %2802 = vmatpush1.msra.mxu0 0.0
        %2803 = vmatprep.subr.mxu0 0.0
        %2804 = vmatpush1.msra.mxu0 0.0
        %2805 = vmatprep.subr.mxu0 0.0
        %2806 = vmatpush1.msra.mxu0 0.0
        %2807 = vmatprep.subr.mxu0 0.0
        %2808 = vmatpush1.msra.mxu0 0.0
        %2809 = vmatprep.subr.mxu0 0.0
        %2810 = vmatpush1.msra.mxu0 0.0
        %2811 = vmatprep.subr.mxu0 0.0
        %2812 = vmatpush1.msra.mxu0 0.0
        %2813 = vmatprep.mubr.f32.mxu0 0.0
        %2814 = vmatmul.mubr.f32.gmra.mrb[0].mxu0 %v2744
        %v2815 = vpop.f32.mrb[0].mxu0
        %v2816 = vadd.f32 0.0, %v2815
        %v2817 = vpop.f32.mrb[0].mxu0
        %2818 = vmatprep.mubr.f32.mxu0 0.0
        %2819 = vmatmul.mubr.f32.gmra.mrb[0].mxu0 %v2747
        %v2820 = vpop.f32.mrb[0].mxu0
        %v2821 = vadd.f32 0.0, %v2820
        %v2822 = vpop.f32.mrb[0].mxu0
        %2823 = vdwg.mxu0
        %v2824 = vadd.f32 %v1125, %v2816
        %v2825 = vadd.f32 %v1126, %v2821
        %v2826 = vld [vmem:[%s23] sm:$0x1]
        %v2828 = vlaneseq
        %v2829 = vshrl.u32 %v2828, 7
        %v2830 = vsub.s32 0, %v2829
        %v2831 = vrot.slane %v2826, %v2830
        %v2833 = vadd.f32 %v2824, %v2831
        %v2834 = vadd.f32 %v2825, %v2831
        %v2835 = vsel %vm1169, %v2833, 0.0
        %2836 = vadd.xlane.f32.xlu0 %v2835
        %v2837 = vpop.xlane.xlu0 %2836
        %v2838 = vsel %vm1169, %v2834, 0.0
        %2839 = vadd.xlane.f32.xlu0 %v2838
        %v2840 = vpop.xlane.xlu0 %2839
        %v2841 = vrcp.pop 32.0
        %v2842 = vmul.f32 %v2837, %v2841
        %v2843 = vmul.f32 %v2840, %v2841
        %v2844 = vsub.f32 %v2833, %v2842
        %v2845 = vsub.f32 %v2834, %v2843
        %v2846 = vmul.f32 %v2844, %v2844
        %v2847 = vmul.f32 %v2845, %v2845
        %v2848 = vsel %vm1169, %v2846, 0.0
        %2849 = vadd.xlane.f32.xlu0 %v2848
        %v2850 = vpop.xlane.xlu0 %2849
        %v2851 = vsel %vm1169, %v2847, 0.0
        %2852 = vadd.xlane.f32.xlu0 %v2851
        %v2853 = vpop.xlane.xlu0 %2852
        %v2854 = vmul.f32 %v2850, 0.032258064
        %v2855 = vmul.f32 %v2853, 0.032258064
        %v2856 = vrsqrt.pop %v2854
        %v2857 = vmul.f32 %v2854, %v2856
        %vm2858 = vcmp.eq.f32.partialorder %v2854, inf
        %v2859 = vsel %vm2858, %v2854, %v2857
        %vm2860 = vcmp.eq.f32.partialorder %v2854, 0.0
        %v2861 = vand.u32 %v2854, 2147483648
        %v2862 = vsel %vm2860, %v2861, %v2859
        %v2863 = vrsqrt.pop %v2855
        %v2864 = vmul.f32 %v2855, %v2863
        %vm2865 = vcmp.eq.f32.partialorder %v2855, inf
        %v2866 = vsel %vm2865, %v2855, %v2864
        %vm2867 = vcmp.eq.f32.partialorder %v2855, 0.0
        %v2868 = vand.u32 %v2855, 2147483648
        %v2869 = vsel %vm2867, %v2868, %v2866
        %v2870 = vadd.f32 %v2862, 1e-06
        %v2871 = vadd.f32 %v2869, 1e-06
        %v2872 = vrcp.pop %v2870
        %v2873 = vmul.f32 %v2844, %v2872
        %v2874 = vrcp.pop %v2871
        %v2875 = vmul.f32 %v2845, %v2874
        %v2876 = vlaneseq
        %v2877 = vshrl.u32 %v2876, 7
        %v2878 = vsub.s32 0, %v2877
        %v2879 = vrot.slane %v1132, %v2878
        %v2880 = vmul.f32 %v2879, %v2873
        %v2881 = vmul.f32 %v2879, %v2875
        %v2882 = vlaneseq
        %v2883 = vshrl.u32 %v2882, 7
        %v2884 = vsub.s32 0, %v2883
        %v2885 = vrot.slane %v1133, %v2884
        %v2886 = vadd.f32 %v2880, %v2885
        %v2887 = vadd.f32 %v2881, %v2885
        %v2888 = vld [vmem:[%s43] sm:$0xff]
        %v2889 = vld [vmem:[%s43 + $0x8] sm:$0xff]
        %v2890 = vld [vmem:[%s43 + $0x10] sm:$0xff]
        %v2891 = vld [vmem:[%s43 + $0x18] sm:$0xff]
        %v2892 = vld [vmem:[%s45] sm:$0xff]
        %v2893 = vld [vmem:[%s45 + $0x8] sm:$0xff]
        %v2894 = vld [vmem:[%s47] sm:$0x1]
        %v2895 = vsel %vm1169, %v2886, 0.0
        %v2896 = vsel %vm1169, %v2887, 0.0
        %v2897 = vadd.f32 %v2895, %v2896
        %v2898 = vrot.slane %v2897, 4
        %v2899 = vadd.f32 %v2897, %v2898
        %v2900 = vrot.slane %v2899, 2
        %v2901 = vadd.f32 %v2899, %v2900
        %v2902 = vrot.slane %v2901, 1
        %v2903 = vadd.f32 %v2901, %v2902
        %v2904 = vrcp.pop 16.0
        %v2905 = vmul.f32 %v2903, %v2904
        %v2907 = vsel %vm1169, %v2905, 0
        %2909 = vmatprep.subr.mxu0 0.0
        %2910 = vmatpush1.msra.mxu0 %v2888
        %2911 = vmatprep.subr.mxu0 0.0
        %2912 = vmatpush1.msra.mxu0 %v2889
        %2913 = vmatprep.subr.mxu0 0.0
        %2914 = vmatpush1.msra.mxu0 %v2890
        %2915 = vmatprep.subr.mxu0 0.0
        %2916 = vmatpush1.msra.mxu0 %v2891
        %2917 = vmatprep.subr.mxu0 0.0
        %2918 = vmatpush1.msra.mxu0 0.0
        %2919 = vmatprep.subr.mxu0 0.0
        %2920 = vmatpush1.msra.mxu0 0.0
        %2921 = vmatprep.subr.mxu0 0.0
        %2922 = vmatpush1.msra.mxu0 0.0
        %2923 = vmatprep.subr.mxu0 0.0
        %2924 = vmatpush1.msra.mxu0 0.0
        %2925 = vmatprep.subr.mxu0 0.0
        %2926 = vmatpush1.msra.mxu0 0.0
        %2927 = vmatprep.subr.mxu0 0.0
        %2928 = vmatpush1.msra.mxu0 0.0
        %2929 = vmatprep.subr.mxu0 0.0
        %2930 = vmatpush1.msra.mxu0 0.0
        %2931 = vmatprep.subr.mxu0 0.0
        %2932 = vmatpush1.msra.mxu0 0.0
        %2933 = vmatprep.subr.mxu0 0.0
        %2934 = vmatpush1.msra.mxu0 0.0
        %2935 = vmatprep.subr.mxu0 0.0
        %2936 = vmatpush1.msra.mxu0 0.0
        %2937 = vmatprep.subr.mxu0 0.0
        %2938 = vmatpush1.msra.mxu0 0.0
        %2939 = vmatprep.subr.mxu0 0.0
        %2940 = vmatpush1.msra.mxu0 0.0
        %2941 = vmatprep.subr.mxu0 0.0
        %2942 = vmatpush1.msra.mxu0 0.0
        %2943 = vmatprep.subr.mxu0 0.0
        %2944 = vmatpush1.msra.mxu0 0.0
        %2945 = vmatprep.subr.mxu0 0.0
        %2946 = vmatpush1.msra.mxu0 0.0
        %2947 = vmatprep.subr.mxu0 0.0
        %2948 = vmatpush1.msra.mxu0 0.0
        %2949 = vmatprep.subr.mxu0 0.0
        %2950 = vmatpush1.msra.mxu0 0.0
        %2951 = vmatprep.subr.mxu0 0.0
        %2952 = vmatpush1.msra.mxu0 0.0
        %2953 = vmatprep.subr.mxu0 0.0
        %2954 = vmatpush1.msra.mxu0 0.0
        %2955 = vmatprep.subr.mxu0 0.0
        %2956 = vmatpush1.msra.mxu0 0.0
        %2957 = vmatprep.subr.mxu0 0.0
        %2958 = vmatpush1.msra.mxu0 0.0
        %2959 = vmatprep.subr.mxu0 0.0
        %2960 = vmatpush1.msra.mxu0 0.0
        %2961 = vmatprep.subr.mxu0 0.0
        %2962 = vmatpush1.msra.mxu0 0.0
        %2963 = vmatprep.subr.mxu0 0.0
        %2964 = vmatpush1.msra.mxu0 0.0
        %2965 = vmatprep.subr.mxu0 0.0
        %2966 = vmatpush1.msra.mxu0 0.0
        %2967 = vmatprep.subr.mxu0 0.0
        %2968 = vmatpush1.msra.mxu0 0.0
        %2969 = vmatprep.subr.mxu0 0.0
        %2970 = vmatpush1.msra.mxu0 0.0
        %2971 = vmatprep.subr.mxu0 0.0
        %2972 = vmatpush1.msra.mxu0 0.0
        %2973 = vmatprep.mubr.f32.mxu0 0.0
        %2974 = vmatmul.mubr.f32.gmra.mrb[0].mxu0 %v2907
        %v2975 = vpop.f32.mrb[0].mxu0
        %v2976 = vadd.f32 0.0, %v2975
        %v2977 = vpop.f32.mrb[0].mxu0
        %2978 = vdwg.mxu0
        %v2979 = vmax.f32 %v2976, 0.0
        %v2981 = vsel %vm1253, %v2979, 0
        %2983 = vmatprep.subr.mxu0 0.0
        %2984 = vmatpush1.msra.mxu0 %v2892
        %2985 = vmatprep.subr.mxu0 0.0
        %2986 = vmatpush1.msra.mxu0 %v2893
        %2987 = vmatprep.subr.mxu0 0.0
        %2988 = vmatpush1.msra.mxu0 0.0
        %2989 = vmatprep.subr.mxu0 0.0
        %2990 = vmatpush1.msra.mxu0 0.0
        %2991 = vmatprep.subr.mxu0 0.0
        %2992 = vmatpush1.msra.mxu0 0.0
        %2993 = vmatprep.subr.mxu0 0.0
        %2994 = vmatpush1.msra.mxu0 0.0
        %2995 = vmatprep.subr.mxu0 0.0
        %2996 = vmatpush1.msra.mxu0 0.0
        %2997 = vmatprep.subr.mxu0 0.0
        %2998 = vmatpush1.msra.mxu0 0.0
        %2999 = vmatprep.subr.mxu0 0.0
        %3000 = vmatpush1.msra.mxu0 0.0
        %3001 = vmatprep.subr.mxu0 0.0
        %3002 = vmatpush1.msra.mxu0 0.0
        %3003 = vmatprep.subr.mxu0 0.0
        %3004 = vmatpush1.msra.mxu0 0.0
        %3005 = vmatprep.subr.mxu0 0.0
        %3006 = vmatpush1.msra.mxu0 0.0
        %3007 = vmatprep.subr.mxu0 0.0
        %3008 = vmatpush1.msra.mxu0 0.0
        %3009 = vmatprep.subr.mxu0 0.0
        %3010 = vmatpush1.msra.mxu0 0.0
        %3011 = vmatprep.subr.mxu0 0.0
        %3012 = vmatpush1.msra.mxu0 0.0
        %3013 = vmatprep.subr.mxu0 0.0
        %3014 = vmatpush1.msra.mxu0 0.0
        %3015 = vmatprep.subr.mxu0 0.0
        %3016 = vmatpush1.msra.mxu0 0.0
        %3017 = vmatprep.subr.mxu0 0.0
        %3018 = vmatpush1.msra.mxu0 0.0
        %3019 = vmatprep.subr.mxu0 0.0
        %3020 = vmatpush1.msra.mxu0 0.0
        %3021 = vmatprep.subr.mxu0 0.0
        %3022 = vmatpush1.msra.mxu0 0.0
        %3023 = vmatprep.subr.mxu0 0.0
        %3024 = vmatpush1.msra.mxu0 0.0
        %3025 = vmatprep.subr.mxu0 0.0
        %3026 = vmatpush1.msra.mxu0 0.0
        %3027 = vmatprep.subr.mxu0 0.0
        %3028 = vmatpush1.msra.mxu0 0.0
        %3029 = vmatprep.subr.mxu0 0.0
        %3030 = vmatpush1.msra.mxu0 0.0
        %3031 = vmatprep.subr.mxu0 0.0
        %3032 = vmatpush1.msra.mxu0 0.0
        %3033 = vmatprep.subr.mxu0 0.0
        %3034 = vmatpush1.msra.mxu0 0.0
        %3035 = vmatprep.subr.mxu0 0.0
        %3036 = vmatpush1.msra.mxu0 0.0
        %3037 = vmatprep.subr.mxu0 0.0
        %3038 = vmatpush1.msra.mxu0 0.0
        %3039 = vmatprep.subr.mxu0 0.0
        %3040 = vmatpush1.msra.mxu0 0.0
        %3041 = vmatprep.subr.mxu0 0.0
        %3042 = vmatpush1.msra.mxu0 0.0
        %3043 = vmatprep.subr.mxu0 0.0
        %3044 = vmatpush1.msra.mxu0 0.0
        %3045 = vmatprep.subr.mxu0 0.0
        %3046 = vmatpush1.msra.mxu0 0.0
        %3047 = vmatprep.mubr.f32.mxu0 0.0
        %3048 = vmatmul.mubr.f32.gmra.mrb[0].mxu0 %v2981
        %v3049 = vpop.f32.mrb[0].mxu0
        %v3050 = vadd.f32 %v2894, %v3049
        %v3051 = vpop.f32.mrb[0].mxu0
        %3052 = vdwg.mxu0
        %v3053 = vsel %vm1327, %v3050, -inf
        %3054 = vmax.xlane.f32.xlu0 %v3053
        %v3055 = vpop.xlane.xlu0 %3054
        %v3056 = vsub.f32 %v3050, %v3055
        %v3057 = vmul.f32 %v3056, 1.442695
        %v3058 = vpow.pop %v3057
        %v3059 = vsel %vm1327, %v3058, 0.0
        %3060 = vadd.xlane.f32.xlu0 %v3059
        %v3061 = vpop.xlane.xlu0 %3060
        %v3062 = vrcp.pop %v3061
        %v3063 = vmul.f32 %v3058, %v3062
        %v3064 = vld [vmem:[%s31] sm:$0xff]
        %v3065 = vld [vmem:[%s31 + $0x8] sm:$0xff]
        %v3066 = vld [vmem:[%s31 + $0x10] sm:$0xff]
        %v3067 = vld [vmem:[%s31 + $0x18] sm:$0xff]
        %v3068 = vld [vmem:[%s33] sm:$0x1]
        %v3070 = vlaneseq
        %v3071 = vshrl.u32 %v3070, 7
        %v3072 = vsub.s32 0, %v3071
        %v3073 = vrot.slane %v3068, %v3072
        %3075 = vmatprep.subr.mxu0 0.0
        %3076 = vmatpush1.msra.mxu0 %v3064
        %3077 = vmatprep.subr.mxu0 0.0
        %3078 = vmatpush1.msra.mxu0 %v3065
        %3079 = vmatprep.subr.mxu0 0.0
        %3080 = vmatpush1.msra.mxu0 %v3066
        %3081 = vmatprep.subr.mxu0 0.0
        %3082 = vmatpush1.msra.mxu0 %v3067
        %3083 = vmatprep.subr.mxu0 0.0
        %3084 = vmatpush1.msra.mxu0 0.0
        %3085 = vmatprep.subr.mxu0 0.0
        %3086 = vmatpush1.msra.mxu0 0.0
        %3087 = vmatprep.subr.mxu0 0.0
        %3088 = vmatpush1.msra.mxu0 0.0
        %3089 = vmatprep.subr.mxu0 0.0
        %3090 = vmatpush1.msra.mxu0 0.0
        %3091 = vmatprep.subr.mxu0 0.0
        %3092 = vmatpush1.msra.mxu0 0.0
        %3093 = vmatprep.subr.mxu0 0.0
        %3094 = vmatpush1.msra.mxu0 0.0
        %3095 = vmatprep.subr.mxu0 0.0
        %3096 = vmatpush1.msra.mxu0 0.0
        %3097 = vmatprep.subr.mxu0 0.0
        %3098 = vmatpush1.msra.mxu0 0.0
        %3099 = vmatprep.subr.mxu0 0.0
        %3100 = vmatpush1.msra.mxu0 0.0
        %3101 = vmatprep.subr.mxu0 0.0
        %3102 = vmatpush1.msra.mxu0 0.0
        %3103 = vmatprep.subr.mxu0 0.0
        %3104 = vmatpush1.msra.mxu0 0.0
        %3105 = vmatprep.subr.mxu0 0.0
        %3106 = vmatpush1.msra.mxu0 0.0
        %3107 = vmatprep.subr.mxu0 0.0
        %3108 = vmatpush1.msra.mxu0 0.0
        %3109 = vmatprep.subr.mxu0 0.0
        %3110 = vmatpush1.msra.mxu0 0.0
        %3111 = vmatprep.subr.mxu0 0.0
        %3112 = vmatpush1.msra.mxu0 0.0
        %3113 = vmatprep.subr.mxu0 0.0
        %3114 = vmatpush1.msra.mxu0 0.0
        %3115 = vmatprep.subr.mxu0 0.0
        %3116 = vmatpush1.msra.mxu0 0.0
        %3117 = vmatprep.subr.mxu0 0.0
        %3118 = vmatpush1.msra.mxu0 0.0
        %3119 = vmatprep.subr.mxu0 0.0
        %3120 = vmatpush1.msra.mxu0 0.0
        %3121 = vmatprep.subr.mxu0 0.0
        %3122 = vmatpush1.msra.mxu0 0.0
        %3123 = vmatprep.subr.mxu0 0.0
        %3124 = vmatpush1.msra.mxu0 0.0
        %3125 = vmatprep.subr.mxu0 0.0
        %3126 = vmatpush1.msra.mxu0 0.0
        %3127 = vmatprep.subr.mxu0 0.0
        %3128 = vmatpush1.msra.mxu0 0.0
        %3129 = vmatprep.subr.mxu0 0.0
        %3130 = vmatpush1.msra.mxu0 0.0
        %3131 = vmatprep.subr.mxu0 0.0
        %3132 = vmatpush1.msra.mxu0 0.0
        %3133 = vmatprep.subr.mxu0 0.0
        %3134 = vmatpush1.msra.mxu0 0.0
        %3135 = vmatprep.subr.mxu0 0.0
        %3136 = vmatpush1.msra.mxu0 0.0
        %3137 = vmatprep.subr.mxu0 0.0
        %3138 = vmatpush1.msra.mxu0 0.0
        %3139 = vmatprep.mubr.f32.mxu0 0.0
        %3140 = vmatmul.mubr.f32.gmra.mrb[0].mxu0 %v1443
        %v3141 = vpop.f32.mrb[0].mxu0
        %v3142 = vadd.f32 %v3073, %v3141
        %v3143 = vpop.f32.mrb[0].mxu0
        %3144 = vdwg.mxu0
        %v3145 = vld [vmem:[%s35] sm:$0xff]
        %v3146 = vld [vmem:[%s35 + $0x8] sm:$0xff]
        %v3147 = vld [vmem:[%s35 + $0x10] sm:$0xff]
        %v3148 = vld [vmem:[%s35 + $0x18] sm:$0xff]
        %v3149 = vld [vmem:[%s37] sm:$0x1]
        %v3151 = vlaneseq
        %v3152 = vshrl.u32 %v3151, 7
        %v3153 = vsub.s32 0, %v3152
        %v3154 = vrot.slane %v3149, %v3153
        %v3157 = vsel %vm1169, %v2886, 0
        %v3160 = vsel %vm1169, %v2887, 0
        %3162 = vmatprep.subr.mxu0 0.0
        %3163 = vmatpush1.msra.mxu0 %v3145
        %3164 = vmatprep.subr.mxu0 0.0
        %3165 = vmatpush1.msra.mxu0 %v3146
        %3166 = vmatprep.subr.mxu0 0.0
        %3167 = vmatpush1.msra.mxu0 %v3147
        %3168 = vmatprep.subr.mxu0 0.0
        %3169 = vmatpush1.msra.mxu0 %v3148
        %3170 = vmatprep.subr.mxu0 0.0
        %3171 = vmatpush1.msra.mxu0 0.0
        %3172 = vmatprep.subr.mxu0 0.0
        %3173 = vmatpush1.msra.mxu0 0.0
        %3174 = vmatprep.subr.mxu0 0.0
        %3175 = vmatpush1.msra.mxu0 0.0
        %3176 = vmatprep.subr.mxu0 0.0
        %3177 = vmatpush1.msra.mxu0 0.0
        %3178 = vmatprep.subr.mxu0 0.0
        %3179 = vmatpush1.msra.mxu0 0.0
        %3180 = vmatprep.subr.mxu0 0.0
        %3181 = vmatpush1.msra.mxu0 0.0
        %3182 = vmatprep.subr.mxu0 0.0
        %3183 = vmatpush1.msra.mxu0 0.0
        %3184 = vmatprep.subr.mxu0 0.0
        %3185 = vmatpush1.msra.mxu0 0.0
        %3186 = vmatprep.subr.mxu0 0.0
        %3187 = vmatpush1.msra.mxu0 0.0
        %3188 = vmatprep.subr.mxu0 0.0
        %3189 = vmatpush1.msra.mxu0 0.0
        %3190 = vmatprep.subr.mxu0 0.0
        %3191 = vmatpush1.msra.mxu0 0.0
        %3192 = vmatprep.subr.mxu0 0.0
        %3193 = vmatpush1.msra.mxu0 0.0
        %3194 = vmatprep.subr.mxu0 0.0
        %3195 = vmatpush1.msra.mxu0 0.0
        %3196 = vmatprep.subr.mxu0 0.0
        %3197 = vmatpush1.msra.mxu0 0.0
        %3198 = vmatprep.subr.mxu0 0.0
        %3199 = vmatpush1.msra.mxu0 0.0
        %3200 = vmatprep.subr.mxu0 0.0
        %3201 = vmatpush1.msra.mxu0 0.0
        %3202 = vmatprep.subr.mxu0 0.0
        %3203 = vmatpush1.msra.mxu0 0.0
        %3204 = vmatprep.subr.mxu0 0.0
        %3205 = vmatpush1.msra.mxu0 0.0
        %3206 = vmatprep.subr.mxu0 0.0
        %3207 = vmatpush1.msra.mxu0 0.0
        %3208 = vmatprep.subr.mxu0 0.0
        %3209 = vmatpush1.msra.mxu0 0.0
        %3210 = vmatprep.subr.mxu0 0.0
        %3211 = vmatpush1.msra.mxu0 0.0
        %3212 = vmatprep.subr.mxu0 0.0
        %3213 = vmatpush1.msra.mxu0 0.0
        %3214 = vmatprep.subr.mxu0 0.0
        %3215 = vmatpush1.msra.mxu0 0.0
        %3216 = vmatprep.subr.mxu0 0.0
        %3217 = vmatpush1.msra.mxu0 0.0
        %3218 = vmatprep.subr.mxu0 0.0
        %3219 = vmatpush1.msra.mxu0 0.0
        %3220 = vmatprep.subr.mxu0 0.0
        %3221 = vmatpush1.msra.mxu0 0.0
        %3222 = vmatprep.subr.mxu0 0.0
        %3223 = vmatpush1.msra.mxu0 0.0
        %3224 = vmatprep.subr.mxu0 0.0
        %3225 = vmatpush1.msra.mxu0 0.0
        %3226 = vmatprep.mubr.f32.mxu0 0.0
        %3227 = vmatmul.mubr.f32.gmra.mrb[0].mxu0 %v3157
        %v3228 = vpop.f32.mrb[0].mxu0
        %v3229 = vadd.f32 %v3154, %v3228
        %v3230 = vpop.f32.mrb[0].mxu0
        %3231 = vmatprep.mubr.f32.mxu0 0.0
        %3232 = vmatmul.mubr.f32.gmra.mrb[0].mxu0 %v3160
        %v3233 = vpop.f32.mrb[0].mxu0
        %v3234 = vadd.f32 %v3154, %v3233
        %v3235 = vpop.f32.mrb[0].mxu0
        %3236 = vdwg.mxu0
        %v3237 = vmul.f32 %v3142, %v1521
        %v3239 = vsel %vm1169, %v3237, 0
        %v3242 = vsel %vm1169, %v3229, 0
        %v3245 = vsel %vm1169, %v3234, 0
        %3247 = vmatprep.subr.mxu0 0.0
        %3248 = vmatpush1.xpose.msra.mxu0 %v3242
        %3249 = vmatprep.subr.mxu0 0.0
        %3250 = vmatpush1.xpose.msra.mxu0 %v3245
        %3251 = vmatprep.subr.mxu0 0.0
        %3252 = vmatpush1.xpose.msra.mxu0 0.0
        %3253 = vmatprep.subr.mxu0 0.0
        %3254 = vmatpush1.xpose.msra.mxu0 0.0
        %3255 = vmatprep.subr.mxu0 0.0
        %3256 = vmatpush1.xpose.msra.mxu0 0.0
        %3257 = vmatprep.subr.mxu0 0.0
        %3258 = vmatpush1.xpose.msra.mxu0 0.0
        %3259 = vmatprep.subr.mxu0 0.0
        %3260 = vmatpush1.xpose.msra.mxu0 0.0
        %3261 = vmatprep.subr.mxu0 0.0
        %3262 = vmatpush1.xpose.msra.mxu0 0.0
        %3263 = vmatprep.subr.mxu0 0.0
        %3264 = vmatpush1.xpose.msra.mxu0 0.0
        %3265 = vmatprep.subr.mxu0 0.0
        %3266 = vmatpush1.xpose.msra.mxu0 0.0
        %3267 = vmatprep.subr.mxu0 0.0
        %3268 = vmatpush1.xpose.msra.mxu0 0.0
        %3269 = vmatprep.subr.mxu0 0.0
        %3270 = vmatpush1.xpose.msra.mxu0 0.0
        %3271 = vmatprep.subr.mxu0 0.0
        %3272 = vmatpush1.xpose.msra.mxu0 0.0
        %3273 = vmatprep.subr.mxu0 0.0
        %3274 = vmatpush1.xpose.msra.mxu0 0.0
        %3275 = vmatprep.subr.mxu0 0.0
        %3276 = vmatpush1.xpose.msra.mxu0 0.0
        %3277 = vmatprep.subr.mxu0 0.0
        %3278 = vmatpush1.xpose.msra.mxu0 0.0
        %3279 = vmatprep.subr.mxu0 0.0
        %3280 = vmatpush1.xpose.msra.mxu0 0.0
        %3281 = vmatprep.subr.mxu0 0.0
        %3282 = vmatpush1.xpose.msra.mxu0 0.0
        %3283 = vmatprep.subr.mxu0 0.0
        %3284 = vmatpush1.xpose.msra.mxu0 0.0
        %3285 = vmatprep.subr.mxu0 0.0
        %3286 = vmatpush1.xpose.msra.mxu0 0.0
        %3287 = vmatprep.subr.mxu0 0.0
        %3288 = vmatpush1.xpose.msra.mxu0 0.0
        %3289 = vmatprep.subr.mxu0 0.0
        %3290 = vmatpush1.xpose.msra.mxu0 0.0
        %3291 = vmatprep.subr.mxu0 0.0
        %3292 = vmatpush1.xpose.msra.mxu0 0.0
        %3293 = vmatprep.subr.mxu0 0.0
        %3294 = vmatpush1.xpose.msra.mxu0 0.0
        %3295 = vmatprep.subr.mxu0 0.0
        %3296 = vmatpush1.xpose.msra.mxu0 0.0
        %3297 = vmatprep.subr.mxu0 0.0
        %3298 = vmatpush1.xpose.msra.mxu0 0.0
        %3299 = vmatprep.subr.mxu0 0.0
        %3300 = vmatpush1.xpose.msra.mxu0 0.0
        %3301 = vmatprep.subr.mxu0 0.0
        %3302 = vmatpush1.xpose.msra.mxu0 0.0
        %3303 = vmatprep.subr.mxu0 0.0
        %3304 = vmatpush1.xpose.msra.mxu0 0.0
        %3305 = vmatprep.subr.mxu0 0.0
        %3306 = vmatpush1.xpose.msra.mxu0 0.0
        %3307 = vmatprep.subr.mxu0 0.0
        %3308 = vmatpush1.xpose.msra.mxu0 0.0
        %3309 = vmatprep.subr.mxu0 0.0
        %3310 = vmatpush1.xpose.msra.mxu0 0.0
        %3311 = vmatprep.mubr.f32.mxu0 0.0
        %3312 = vmatmul.mubr.f32.gmra.mrb[0].mxu0 %v3239
        %v3313 = vpop.f32.mrb[0].mxu0
        %v3314 = vadd.f32 0.0, %v3313
        %v3315 = vpop.f32.mrb[0].mxu0
        %3316 = vdwg.mxu0
        %v3317 = vmul.f32 %v3314, 0.35355338
        %v3318 = vsel %vm1253, %v3317, -inf
        %3319 = vmax.xlane.f32.xlu0 %v3318
        %v3320 = vpop.xlane.xlu0 %3319
        %v3321 = vsub.f32 %v3317, %v3320
        %v3322 = vmul.f32 %v3321, 1.442695
        %v3323 = vpow.pop %v3322
        %v3324 = vlaneseq
        %v3325 = vshrl.u32 %v3324, 7
        %v3326 = vsub.s32 0, %v3325
        %v3327 = vrot.slane %v1151, %v3326
        %v3328 = vmul.f32 %v3323, %v3327
        %v3329 = vsel %vm1253, %v3328, 0.0
        %3330 = vadd.xlane.f32.xlu0 %v3329
        %v3331 = vpop.xlane.xlu0 %3330
        %vm3332 = vcmp.gt.f32.partialorder %v3331, 0.0
        %v3333 = vsel %vm3332, %v3331, 1.0
        %v3334 = vrcp.pop %v3333
        %s3335 = vtos %v3063
        %v3336 = vmul.f32 %v3328, %v3334
        %v3337 = vsel %vm3332, 1, 0
        %vm3338 = vcmp.eq.s32.totalorder %v3337, 1
        %v3339 = vsel %vm3338, %v3336, 0.0625
        %v3340 = vstv %s3335
        %v3341 = vmul.f32 %v3340, %v3339
        %v3342 = vadd.f32 %v3341, 0.0
        %v3343 = vlaneseq
        %v3344 = vshrl.u32 %v3343, 7
        %v3345 = vsub.s32 1, %v3344
        %v3346 = vrot.slane %v1161, %v3345
        %v3347 = vmul.f32 %v3323, %v3346
        %v3348 = vsel %vm1253, %v3347, 0.0
        %3349 = vadd.xlane.f32.xlu0 %v3348
        %v3350 = vpop.xlane.xlu0 %3349
        %vm3351 = vcmp.gt.f32.partialorder %v3350, 0.0
        %v3352 = vsel %vm3351, %v3350, 1.0
        %v3353 = vrcp.pop %v3352
        %3354 = vrot.lane.b32.xlu0 %v3063, 127
        %v3355 = vpop.permute.xlu0 %3354
        %s3356 = vtos %v3355
        %v3357 = vmul.f32 %v3347, %v3353
        %v3358 = vsel %vm3351, 1, 0
        %vm3359 = vcmp.eq.s32.totalorder %v3358, 1
        %v3360 = vsel %vm3359, %v3357, 0.0625
        %v3361 = vstv %s3356
        %v3362 = vmul.f32 %v3361, %v3360
        %v3363 = vadd.f32 %v3342, %v3362
        %v3364 = vlaneseq
        %v3365 = vshrl.u32 %v3364, 7
        %v3366 = vsub.s32 2, %v3365
        %v3367 = vrot.slane %v1161, %v3366
        %v3368 = vmul.f32 %v3323, %v3367
        %v3369 = vsel %vm1253, %v3368, 0.0
        %3370 = vadd.xlane.f32.xlu0 %v3369
        %v3371 = vpop.xlane.xlu0 %3370
        %vm3372 = vcmp.gt.f32.partialorder %v3371, 0.0
        %v3373 = vsel %vm3372, %v3371, 1.0
        %v3374 = vrcp.pop %v3373
        %3375 = vrot.lane.b32.xlu0 %v3063, 126
        %v3376 = vpop.permute.xlu0 %3375
        %s3377 = vtos %v3376
        %v3378 = vmul.f32 %v3368, %v3374
        %v3379 = vsel %vm3372, 1, 0
        %vm3380 = vcmp.eq.s32.totalorder %v3379, 1
        %v3381 = vsel %vm3380, %v3378, 0.0625
        %v3382 = vstv %s3377
        %v3383 = vmul.f32 %v3382, %v3381
        %v3384 = vadd.f32 %v3363, %v3383
        %v3385 = vlaneseq
        %v3386 = vshrl.u32 %v3385, 7
        %v3387 = vsub.s32 3, %v3386
        %v3388 = vrot.slane %v1161, %v3387
        %v3389 = vmul.f32 %v3323, %v3388
        %v3390 = vsel %vm1253, %v3389, 0.0
        %3391 = vadd.xlane.f32.xlu0 %v3390
        %v3392 = vpop.xlane.xlu0 %3391
        %vm3393 = vcmp.gt.f32.partialorder %v3392, 0.0
        %v3394 = vsel %vm3393, %v3392, 1.0
        %v3395 = vrcp.pop %v3394
        %3396 = vrot.lane.b32.xlu0 %v3063, 125
        %v3397 = vpop.permute.xlu0 %3396
        %s3398 = vtos %v3397
        %v3399 = vmul.f32 %v3389, %v3395
        %v3400 = vsel %vm3393, 1, 0
        %vm3401 = vcmp.eq.s32.totalorder %v3400, 1
        %v3402 = vsel %vm3401, %v3399, 0.0625
        %v3403 = vstv %s3398
        %v3404 = vmul.f32 %v3403, %v3402
        %v3405 = vadd.f32 %v3384, %v3404
        %v3406 = vmul.f32 %v3229, %v1759
        %v3407 = vmul.f32 %v3234, %v1759
        %v3408 = vmul.f32 %v3142, %v1766
        %v3410 = vsel %vm1169, %v3408, 0
        %3412 = vmatprep.subr.mxu0 0.0
        %3413 = vmatpush1.xpose.msra.mxu0 %v3242
        %3414 = vmatprep.subr.mxu0 0.0
        %3415 = vmatpush1.xpose.msra.mxu0 %v3245
        %3416 = vmatprep.subr.mxu0 0.0
        %3417 = vmatpush1.xpose.msra.mxu0 0.0
        %3418 = vmatprep.subr.mxu0 0.0
        %3419 = vmatpush1.xpose.msra.mxu0 0.0
        %3420 = vmatprep.subr.mxu0 0.0
        %3421 = vmatpush1.xpose.msra.mxu0 0.0
        %3422 = vmatprep.subr.mxu0 0.0
        %3423 = vmatpush1.xpose.msra.mxu0 0.0
        %3424 = vmatprep.subr.mxu0 0.0
        %3425 = vmatpush1.xpose.msra.mxu0 0.0
        %3426 = vmatprep.subr.mxu0 0.0
        %3427 = vmatpush1.xpose.msra.mxu0 0.0
        %3428 = vmatprep.subr.mxu0 0.0
        %3429 = vmatpush1.xpose.msra.mxu0 0.0
        %3430 = vmatprep.subr.mxu0 0.0
        %3431 = vmatpush1.xpose.msra.mxu0 0.0
        %3432 = vmatprep.subr.mxu0 0.0
        %3433 = vmatpush1.xpose.msra.mxu0 0.0
        %3434 = vmatprep.subr.mxu0 0.0
        %3435 = vmatpush1.xpose.msra.mxu0 0.0
        %3436 = vmatprep.subr.mxu0 0.0
        %3437 = vmatpush1.xpose.msra.mxu0 0.0
        %3438 = vmatprep.subr.mxu0 0.0
        %3439 = vmatpush1.xpose.msra.mxu0 0.0
        %3440 = vmatprep.subr.mxu0 0.0
        %3441 = vmatpush1.xpose.msra.mxu0 0.0
        %3442 = vmatprep.subr.mxu0 0.0
        %3443 = vmatpush1.xpose.msra.mxu0 0.0
        %3444 = vmatprep.subr.mxu0 0.0
        %3445 = vmatpush1.xpose.msra.mxu0 0.0
        %3446 = vmatprep.subr.mxu0 0.0
        %3447 = vmatpush1.xpose.msra.mxu0 0.0
        %3448 = vmatprep.subr.mxu0 0.0
        %3449 = vmatpush1.xpose.msra.mxu0 0.0
        %3450 = vmatprep.subr.mxu0 0.0
        %3451 = vmatpush1.xpose.msra.mxu0 0.0
        %3452 = vmatprep.subr.mxu0 0.0
        %3453 = vmatpush1.xpose.msra.mxu0 0.0
        %3454 = vmatprep.subr.mxu0 0.0
        %3455 = vmatpush1.xpose.msra.mxu0 0.0
        %3456 = vmatprep.subr.mxu0 0.0
        %3457 = vmatpush1.xpose.msra.mxu0 0.0
        %3458 = vmatprep.subr.mxu0 0.0
        %3459 = vmatpush1.xpose.msra.mxu0 0.0
        %3460 = vmatprep.subr.mxu0 0.0
        %3461 = vmatpush1.xpose.msra.mxu0 0.0
        %3462 = vmatprep.subr.mxu0 0.0
        %3463 = vmatpush1.xpose.msra.mxu0 0.0
        %3464 = vmatprep.subr.mxu0 0.0
        %3465 = vmatpush1.xpose.msra.mxu0 0.0
        %3466 = vmatprep.subr.mxu0 0.0
        %3467 = vmatpush1.xpose.msra.mxu0 0.0
        %3468 = vmatprep.subr.mxu0 0.0
        %3469 = vmatpush1.xpose.msra.mxu0 0.0
        %3470 = vmatprep.subr.mxu0 0.0
        %3471 = vmatpush1.xpose.msra.mxu0 0.0
        %3472 = vmatprep.subr.mxu0 0.0
        %3473 = vmatpush1.xpose.msra.mxu0 0.0
        %3474 = vmatprep.subr.mxu0 0.0
        %3475 = vmatpush1.xpose.msra.mxu0 0.0
        %3476 = vmatprep.mubr.f32.mxu0 0.0
        %3477 = vmatmul.mubr.f32.gmra.mrb[0].mxu0 %v3410
        %v3478 = vpop.f32.mrb[0].mxu0
        %v3479 = vadd.f32 0.0, %v3478
        %v3480 = vpop.f32.mrb[0].mxu0
        %3481 = vdwg.mxu0
        %v3482 = vmul.f32 %v3479, 0.35355338
        %v3483 = vsel %vm1253, %v3482, -inf
        %3484 = vmax.xlane.f32.xlu0 %v3483
        %v3485 = vpop.xlane.xlu0 %3484
        %v3486 = vsub.f32 %v3482, %v3485
        %v3487 = vmul.f32 %v3486, 1.442695
        %v3488 = vpow.pop %v3487
        %v3489 = vmul.f32 %v3488, %v3327
        %v3490 = vsel %vm1253, %v3489, 0.0
        %3491 = vadd.xlane.f32.xlu0 %v3490
        %v3492 = vpop.xlane.xlu0 %3491
        %vm3493 = vcmp.gt.f32.partialorder %v3492, 0.0
        %v3494 = vsel %vm3493, %v3492, 1.0
        %v3495 = vrcp.pop %v3494
        %v3496 = vmul.f32 %v3489, %v3495
        %v3497 = vsel %vm3493, 1, 0
        %vm3498 = vcmp.eq.s32.totalorder %v3497, 1
        %v3499 = vsel %vm3498, %v3496, 0.0625
        %v3500 = vmul.f32 %v3340, %v3499
        %v3501 = vadd.f32 %v3500, 0.0
        %v3502 = vmul.f32 %v3488, %v3346
        %v3503 = vsel %vm1253, %v3502, 0.0
        %3504 = vadd.xlane.f32.xlu0 %v3503
        %v3505 = vpop.xlane.xlu0 %3504
        %vm3506 = vcmp.gt.f32.partialorder %v3505, 0.0
        %v3507 = vsel %vm3506, %v3505, 1.0
        %v3508 = vrcp.pop %v3507
        %v3509 = vmul.f32 %v3502, %v3508
        %v3510 = vsel %vm3506, 1, 0
        %vm3511 = vcmp.eq.s32.totalorder %v3510, 1
        %v3512 = vsel %vm3511, %v3509, 0.0625
        %v3513 = vmul.f32 %v3361, %v3512
        %v3514 = vadd.f32 %v3501, %v3513
        %v3515 = vmul.f32 %v3488, %v3367
        %v3516 = vsel %vm1253, %v3515, 0.0
        %3517 = vadd.xlane.f32.xlu0 %v3516
        %v3518 = vpop.xlane.xlu0 %3517
        %vm3519 = vcmp.gt.f32.partialorder %v3518, 0.0
        %v3520 = vsel %vm3519, %v3518, 1.0
        %v3521 = vrcp.pop %v3520
        %v3522 = vmul.f32 %v3515, %v3521
        %v3523 = vsel %vm3519, 1, 0
        %vm3524 = vcmp.eq.s32.totalorder %v3523, 1
        %v3525 = vsel %vm3524, %v3522, 0.0625
        %v3526 = vmul.f32 %v3382, %v3525
        %v3527 = vadd.f32 %v3514, %v3526
        %v3528 = vmul.f32 %v3488, %v3388
        %v3529 = vsel %vm1253, %v3528, 0.0
        %3530 = vadd.xlane.f32.xlu0 %v3529
        %v3531 = vpop.xlane.xlu0 %3530
        %vm3532 = vcmp.gt.f32.partialorder %v3531, 0.0
        %v3533 = vsel %vm3532, %v3531, 1.0
        %v3534 = vrcp.pop %v3533
        %v3535 = vmul.f32 %v3528, %v3534
        %v3536 = vsel %vm3532, 1, 0
        %vm3537 = vcmp.eq.s32.totalorder %v3536, 1
        %v3538 = vsel %vm3537, %v3535, 0.0625
        %v3539 = vmul.f32 %v3403, %v3538
        %v3540 = vadd.f32 %v3527, %v3539
        %v3541 = vmul.f32 %v3229, %v1970
        %v3542 = vmul.f32 %v3234, %v1970
        %3545 = vrot.lane.b32.xlu0 %v3541, 96
        %v3546 = vpop.permute.xlu0 %3545
        %3547 = vrot.lane.b32.xlu0 %v3542, 96
        %v3548 = vpop.permute.xlu0 %3547
        %v3552 = vsel %vm1253, %v3540, 0
        %3554 = vmatprep.subr.mxu0 0.0
        %3555 = vmatpush1.msra.mxu0 %v3546
        %3556 = vmatprep.subr.mxu0 0.0
        %3557 = vmatpush1.msra.mxu0 %v3548
        %3558 = vmatprep.subr.mxu0 0.0
        %3559 = vmatpush1.msra.mxu0 0.0
        %3560 = vmatprep.subr.mxu0 0.0
        %3561 = vmatpush1.msra.mxu0 0.0
        %3562 = vmatprep.subr.mxu0 0.0
        %3563 = vmatpush1.msra.mxu0 0.0
        %3564 = vmatprep.subr.mxu0 0.0
        %3565 = vmatpush1.msra.mxu0 0.0
        %3566 = vmatprep.subr.mxu0 0.0
        %3567 = vmatpush1.msra.mxu0 0.0
        %3568 = vmatprep.subr.mxu0 0.0
        %3569 = vmatpush1.msra.mxu0 0.0
        %3570 = vmatprep.subr.mxu0 0.0
        %3571 = vmatpush1.msra.mxu0 0.0
        %3572 = vmatprep.subr.mxu0 0.0
        %3573 = vmatpush1.msra.mxu0 0.0
        %3574 = vmatprep.subr.mxu0 0.0
        %3575 = vmatpush1.msra.mxu0 0.0
        %3576 = vmatprep.subr.mxu0 0.0
        %3577 = vmatpush1.msra.mxu0 0.0
        %3578 = vmatprep.subr.mxu0 0.0
        %3579 = vmatpush1.msra.mxu0 0.0
        %3580 = vmatprep.subr.mxu0 0.0
        %3581 = vmatpush1.msra.mxu0 0.0
        %3582 = vmatprep.subr.mxu0 0.0
        %3583 = vmatpush1.msra.mxu0 0.0
        %3584 = vmatprep.subr.mxu0 0.0
        %3585 = vmatpush1.msra.mxu0 0.0
        %3586 = vmatprep.subr.mxu0 0.0
        %3587 = vmatpush1.msra.mxu0 0.0
        %3588 = vmatprep.subr.mxu0 0.0
        %3589 = vmatpush1.msra.mxu0 0.0
        %3590 = vmatprep.subr.mxu0 0.0
        %3591 = vmatpush1.msra.mxu0 0.0
        %3592 = vmatprep.subr.mxu0 0.0
        %3593 = vmatpush1.msra.mxu0 0.0
        %3594 = vmatprep.subr.mxu0 0.0
        %3595 = vmatpush1.msra.mxu0 0.0
        %3596 = vmatprep.subr.mxu0 0.0
        %3597 = vmatpush1.msra.mxu0 0.0
        %3598 = vmatprep.subr.mxu0 0.0
        %3599 = vmatpush1.msra.mxu0 0.0
        %3600 = vmatprep.subr.mxu0 0.0
        %3601 = vmatpush1.msra.mxu0 0.0
        %3602 = vmatprep.subr.mxu0 0.0
        %3603 = vmatpush1.msra.mxu0 0.0
        %3604 = vmatprep.subr.mxu0 0.0
        %3605 = vmatpush1.msra.mxu0 0.0
        %3606 = vmatprep.subr.mxu0 0.0
        %3607 = vmatpush1.msra.mxu0 0.0
        %3608 = vmatprep.subr.mxu0 0.0
        %3609 = vmatpush1.msra.mxu0 0.0
        %3610 = vmatprep.subr.mxu0 0.0
        %3611 = vmatpush1.msra.mxu0 0.0
        %3612 = vmatprep.subr.mxu0 0.0
        %3613 = vmatpush1.msra.mxu0 0.0
        %3614 = vmatprep.subr.mxu0 0.0
        %3615 = vmatpush1.msra.mxu0 0.0
        %3616 = vmatprep.subr.mxu0 0.0
        %3617 = vmatpush1.msra.mxu0 0.0
        %3618 = vmatprep.mubr.f32.mxu0 0.0
        %3619 = vmatmul.mubr.f32.gmra.mrb[0].mxu0 %v3552
        %v3620 = vpop.f32.mrb[0].mxu0
        %v3621 = vadd.f32 0.0, %v3620
        %v3622 = vpop.f32.mrb[0].mxu0
        %3623 = vdwg.mxu0
        %3626 = vrot.lane.b32.xlu0 %v3406, 96
        %v3627 = vpop.permute.xlu0 %3626
        %3628 = vrot.lane.b32.xlu0 %v3407, 96
        %v3629 = vpop.permute.xlu0 %3628
        %v3633 = vsel %vm1253, %v3405, 0
        %3635 = vmatprep.subr.mxu0 0.0
        %3636 = vmatpush1.msra.mxu0 %v3627
        %3637 = vmatprep.subr.mxu0 0.0
        %3638 = vmatpush1.msra.mxu0 %v3629
        %3639 = vmatprep.subr.mxu0 0.0
        %3640 = vmatpush1.msra.mxu0 0.0
        %3641 = vmatprep.subr.mxu0 0.0
        %3642 = vmatpush1.msra.mxu0 0.0
        %3643 = vmatprep.subr.mxu0 0.0
        %3644 = vmatpush1.msra.mxu0 0.0
        %3645 = vmatprep.subr.mxu0 0.0
        %3646 = vmatpush1.msra.mxu0 0.0
        %3647 = vmatprep.subr.mxu0 0.0
        %3648 = vmatpush1.msra.mxu0 0.0
        %3649 = vmatprep.subr.mxu0 0.0
        %3650 = vmatpush1.msra.mxu0 0.0
        %3651 = vmatprep.subr.mxu0 0.0
        %3652 = vmatpush1.msra.mxu0 0.0
        %3653 = vmatprep.subr.mxu0 0.0
        %3654 = vmatpush1.msra.mxu0 0.0
        %3655 = vmatprep.subr.mxu0 0.0
        %3656 = vmatpush1.msra.mxu0 0.0
        %3657 = vmatprep.subr.mxu0 0.0
        %3658 = vmatpush1.msra.mxu0 0.0
        %3659 = vmatprep.subr.mxu0 0.0
        %3660 = vmatpush1.msra.mxu0 0.0
        %3661 = vmatprep.subr.mxu0 0.0
        %3662 = vmatpush1.msra.mxu0 0.0
        %3663 = vmatprep.subr.mxu0 0.0
        %3664 = vmatpush1.msra.mxu0 0.0
        %3665 = vmatprep.subr.mxu0 0.0
        %3666 = vmatpush1.msra.mxu0 0.0
        %3667 = vmatprep.subr.mxu0 0.0
        %3668 = vmatpush1.msra.mxu0 0.0
        %3669 = vmatprep.subr.mxu0 0.0
        %3670 = vmatpush1.msra.mxu0 0.0
        %3671 = vmatprep.subr.mxu0 0.0
        %3672 = vmatpush1.msra.mxu0 0.0
        %3673 = vmatprep.subr.mxu0 0.0
        %3674 = vmatpush1.msra.mxu0 0.0
        %3675 = vmatprep.subr.mxu0 0.0
        %3676 = vmatpush1.msra.mxu0 0.0
        %3677 = vmatprep.subr.mxu0 0.0
        %3678 = vmatpush1.msra.mxu0 0.0
        %3679 = vmatprep.subr.mxu0 0.0
        %3680 = vmatpush1.msra.mxu0 0.0
        %3681 = vmatprep.subr.mxu0 0.0
        %3682 = vmatpush1.msra.mxu0 0.0
        %3683 = vmatprep.subr.mxu0 0.0
        %3684 = vmatpush1.msra.mxu0 0.0
        %3685 = vmatprep.subr.mxu0 0.0
        %3686 = vmatpush1.msra.mxu0 0.0
        %3687 = vmatprep.subr.mxu0 0.0
        %3688 = vmatpush1.msra.mxu0 0.0
        %3689 = vmatprep.subr.mxu0 0.0
        %3690 = vmatpush1.msra.mxu0 0.0
        %3691 = vmatprep.subr.mxu0 0.0
        %3692 = vmatpush1.msra.mxu0 0.0
        %3693 = vmatprep.subr.mxu0 0.0
        %3694 = vmatpush1.msra.mxu0 0.0
        %3695 = vmatprep.subr.mxu0 0.0
        %3696 = vmatpush1.msra.mxu0 0.0
        %3697 = vmatprep.subr.mxu0 0.0
        %3698 = vmatpush1.msra.mxu0 0.0
        %3699 = vmatprep.mubr.f32.mxu0 0.0
        %3700 = vmatmul.mubr.f32.gmra.mrb[0].mxu0 %v3633
        %v3701 = vpop.f32.mrb[0].mxu0
        %v3702 = vadd.f32 %v3621, %v3701
        %v3703 = vpop.f32.mrb[0].mxu0
        %3704 = vdwg.mxu0
        %v3705 = vmul.f32 %v3142, %v2147
        %v3707 = vsel %vm1169, %v3705, 0
        %3709 = vmatprep.subr.mxu0 0.0
        %3710 = vmatpush1.xpose.msra.mxu0 %v3242
        %3711 = vmatprep.subr.mxu0 0.0
        %3712 = vmatpush1.xpose.msra.mxu0 %v3245
        %3713 = vmatprep.subr.mxu0 0.0
        %3714 = vmatpush1.xpose.msra.mxu0 0.0
        %3715 = vmatprep.subr.mxu0 0.0
        %3716 = vmatpush1.xpose.msra.mxu0 0.0
        %3717 = vmatprep.subr.mxu0 0.0
        %3718 = vmatpush1.xpose.msra.mxu0 0.0
        %3719 = vmatprep.subr.mxu0 0.0
        %3720 = vmatpush1.xpose.msra.mxu0 0.0
        %3721 = vmatprep.subr.mxu0 0.0
        %3722 = vmatpush1.xpose.msra.mxu0 0.0
        %3723 = vmatprep.subr.mxu0 0.0
        %3724 = vmatpush1.xpose.msra.mxu0 0.0
        %3725 = vmatprep.subr.mxu0 0.0
        %3726 = vmatpush1.xpose.msra.mxu0 0.0
        %3727 = vmatprep.subr.mxu0 0.0
        %3728 = vmatpush1.xpose.msra.mxu0 0.0
        %3729 = vmatprep.subr.mxu0 0.0
        %3730 = vmatpush1.xpose.msra.mxu0 0.0
        %3731 = vmatprep.subr.mxu0 0.0
        %3732 = vmatpush1.xpose.msra.mxu0 0.0
        %3733 = vmatprep.subr.mxu0 0.0
        %3734 = vmatpush1.xpose.msra.mxu0 0.0
        %3735 = vmatprep.subr.mxu0 0.0
        %3736 = vmatpush1.xpose.msra.mxu0 0.0
        %3737 = vmatprep.subr.mxu0 0.0
        %3738 = vmatpush1.xpose.msra.mxu0 0.0
        %3739 = vmatprep.subr.mxu0 0.0
        %3740 = vmatpush1.xpose.msra.mxu0 0.0
        %3741 = vmatprep.subr.mxu0 0.0
        %3742 = vmatpush1.xpose.msra.mxu0 0.0
        %3743 = vmatprep.subr.mxu0 0.0
        %3744 = vmatpush1.xpose.msra.mxu0 0.0
        %3745 = vmatprep.subr.mxu0 0.0
        %3746 = vmatpush1.xpose.msra.mxu0 0.0
        %3747 = vmatprep.subr.mxu0 0.0
        %3748 = vmatpush1.xpose.msra.mxu0 0.0
        %3749 = vmatprep.subr.mxu0 0.0
        %3750 = vmatpush1.xpose.msra.mxu0 0.0
        %3751 = vmatprep.subr.mxu0 0.0
        %3752 = vmatpush1.xpose.msra.mxu0 0.0
        %3753 = vmatprep.subr.mxu0 0.0
        %3754 = vmatpush1.xpose.msra.mxu0 0.0
        %3755 = vmatprep.subr.mxu0 0.0
        %3756 = vmatpush1.xpose.msra.mxu0 0.0
        %3757 = vmatprep.subr.mxu0 0.0
        %3758 = vmatpush1.xpose.msra.mxu0 0.0
        %3759 = vmatprep.subr.mxu0 0.0
        %3760 = vmatpush1.xpose.msra.mxu0 0.0
        %3761 = vmatprep.subr.mxu0 0.0
        %3762 = vmatpush1.xpose.msra.mxu0 0.0
        %3763 = vmatprep.subr.mxu0 0.0
        %3764 = vmatpush1.xpose.msra.mxu0 0.0
        %3765 = vmatprep.subr.mxu0 0.0
        %3766 = vmatpush1.xpose.msra.mxu0 0.0
        %3767 = vmatprep.subr.mxu0 0.0
        %3768 = vmatpush1.xpose.msra.mxu0 0.0
        %3769 = vmatprep.subr.mxu0 0.0
        %3770 = vmatpush1.xpose.msra.mxu0 0.0
        %3771 = vmatprep.subr.mxu0 0.0
        %3772 = vmatpush1.xpose.msra.mxu0 0.0
        %3773 = vmatprep.mubr.f32.mxu0 0.0
        %3774 = vmatmul.mubr.f32.gmra.mrb[0].mxu0 %v3707
        %v3775 = vpop.f32.mrb[0].mxu0
        %v3776 = vadd.f32 0.0, %v3775
        %v3777 = vpop.f32.mrb[0].mxu0
        %3778 = vdwg.mxu0
        %v3779 = vmul.f32 %v3776, 0.35355338
        %v3780 = vsel %vm1253, %v3779, -inf
        %3781 = vmax.xlane.f32.xlu0 %v3780
        %v3782 = vpop.xlane.xlu0 %3781
        %v3783 = vsub.f32 %v3779, %v3782
        %v3784 = vmul.f32 %v3783, 1.442695
        %v3785 = vpow.pop %v3784
        %v3786 = vmul.f32 %v3785, %v3327
        %v3787 = vsel %vm1253, %v3786, 0.0
        %3788 = vadd.xlane.f32.xlu0 %v3787
        %v3789 = vpop.xlane.xlu0 %3788
        %vm3790 = vcmp.gt.f32.partialorder %v3789, 0.0
        %v3791 = vsel %vm3790, %v3789, 1.0
        %v3792 = vrcp.pop %v3791
        %v3793 = vmul.f32 %v3786, %v3792
        %v3794 = vsel %vm3790, 1, 0
        %vm3795 = vcmp.eq.s32.totalorder %v3794, 1
        %v3796 = vsel %vm3795, %v3793, 0.0625
        %v3797 = vmul.f32 %v3340, %v3796
        %v3798 = vadd.f32 %v3797, 0.0
        %v3799 = vmul.f32 %v3785, %v3346
        %v3800 = vsel %vm1253, %v3799, 0.0
        %3801 = vadd.xlane.f32.xlu0 %v3800
        %v3802 = vpop.xlane.xlu0 %3801
        %vm3803 = vcmp.gt.f32.partialorder %v3802, 0.0
        %v3804 = vsel %vm3803, %v3802, 1.0
        %v3805 = vrcp.pop %v3804
        %v3806 = vmul.f32 %v3799, %v3805
        %v3807 = vsel %vm3803, 1, 0
        %vm3808 = vcmp.eq.s32.totalorder %v3807, 1
        %v3809 = vsel %vm3808, %v3806, 0.0625
        %v3810 = vmul.f32 %v3361, %v3809
        %v3811 = vadd.f32 %v3798, %v3810
        %v3812 = vmul.f32 %v3785, %v3367
        %v3813 = vsel %vm1253, %v3812, 0.0
        %3814 = vadd.xlane.f32.xlu0 %v3813
        %v3815 = vpop.xlane.xlu0 %3814
        %vm3816 = vcmp.gt.f32.partialorder %v3815, 0.0
        %v3817 = vsel %vm3816, %v3815, 1.0
        %v3818 = vrcp.pop %v3817
        %v3819 = vmul.f32 %v3812, %v3818
        %v3820 = vsel %vm3816, 1, 0
        %vm3821 = vcmp.eq.s32.totalorder %v3820, 1
        %v3822 = vsel %vm3821, %v3819, 0.0625
        %v3823 = vmul.f32 %v3382, %v3822
        %v3824 = vadd.f32 %v3811, %v3823
        %v3825 = vmul.f32 %v3785, %v3388
        %v3826 = vsel %vm1253, %v3825, 0.0
        %3827 = vadd.xlane.f32.xlu0 %v3826
        %v3828 = vpop.xlane.xlu0 %3827
        %vm3829 = vcmp.gt.f32.partialorder %v3828, 0.0
        %v3830 = vsel %vm3829, %v3828, 1.0
        %v3831 = vrcp.pop %v3830
        %v3832 = vmul.f32 %v3825, %v3831
        %v3833 = vsel %vm3829, 1, 0
        %vm3834 = vcmp.eq.s32.totalorder %v3833, 1
        %v3835 = vsel %vm3834, %v3832, 0.0625
        %v3836 = vmul.f32 %v3403, %v3835
        %v3837 = vadd.f32 %v3824, %v3836
        %v3838 = vmul.f32 %v3229, %v2351
        %v3839 = vmul.f32 %v3234, %v2351
        %3842 = vrot.lane.b32.xlu0 %v3838, 96
        %v3843 = vpop.permute.xlu0 %3842
        %3844 = vrot.lane.b32.xlu0 %v3839, 96
        %v3845 = vpop.permute.xlu0 %3844
        %v3849 = vsel %vm1253, %v3837, 0
        %3851 = vmatprep.subr.mxu0 0.0
        %3852 = vmatpush1.msra.mxu0 %v3843
        %3853 = vmatprep.subr.mxu0 0.0
        %3854 = vmatpush1.msra.mxu0 %v3845
        %3855 = vmatprep.subr.mxu0 0.0
        %3856 = vmatpush1.msra.mxu0 0.0
        %3857 = vmatprep.subr.mxu0 0.0
        %3858 = vmatpush1.msra.mxu0 0.0
        %3859 = vmatprep.subr.mxu0 0.0
        %3860 = vmatpush1.msra.mxu0 0.0
        %3861 = vmatprep.subr.mxu0 0.0
        %3862 = vmatpush1.msra.mxu0 0.0
        %3863 = vmatprep.subr.mxu0 0.0
        %3864 = vmatpush1.msra.mxu0 0.0
        %3865 = vmatprep.subr.mxu0 0.0
        %3866 = vmatpush1.msra.mxu0 0.0
        %3867 = vmatprep.subr.mxu0 0.0
        %3868 = vmatpush1.msra.mxu0 0.0
        %3869 = vmatprep.subr.mxu0 0.0
        %3870 = vmatpush1.msra.mxu0 0.0
        %3871 = vmatprep.subr.mxu0 0.0
        %3872 = vmatpush1.msra.mxu0 0.0
        %3873 = vmatprep.subr.mxu0 0.0
        %3874 = vmatpush1.msra.mxu0 0.0
        %3875 = vmatprep.subr.mxu0 0.0
        %3876 = vmatpush1.msra.mxu0 0.0
        %3877 = vmatprep.subr.mxu0 0.0
        %3878 = vmatpush1.msra.mxu0 0.0
        %3879 = vmatprep.subr.mxu0 0.0
        %3880 = vmatpush1.msra.mxu0 0.0
        %3881 = vmatprep.subr.mxu0 0.0
        %3882 = vmatpush1.msra.mxu0 0.0
        %3883 = vmatprep.subr.mxu0 0.0
        %3884 = vmatpush1.msra.mxu0 0.0
        %3885 = vmatprep.subr.mxu0 0.0
        %3886 = vmatpush1.msra.mxu0 0.0
        %3887 = vmatprep.subr.mxu0 0.0
        %3888 = vmatpush1.msra.mxu0 0.0
        %3889 = vmatprep.subr.mxu0 0.0
        %3890 = vmatpush1.msra.mxu0 0.0
        %3891 = vmatprep.subr.mxu0 0.0
        %3892 = vmatpush1.msra.mxu0 0.0
        %3893 = vmatprep.subr.mxu0 0.0
        %3894 = vmatpush1.msra.mxu0 0.0
        %3895 = vmatprep.subr.mxu0 0.0
        %3896 = vmatpush1.msra.mxu0 0.0
        %3897 = vmatprep.subr.mxu0 0.0
        %3898 = vmatpush1.msra.mxu0 0.0
        %3899 = vmatprep.subr.mxu0 0.0
        %3900 = vmatpush1.msra.mxu0 0.0
        %3901 = vmatprep.subr.mxu0 0.0
        %3902 = vmatpush1.msra.mxu0 0.0
        %3903 = vmatprep.subr.mxu0 0.0
        %3904 = vmatpush1.msra.mxu0 0.0
        %3905 = vmatprep.subr.mxu0 0.0
        %3906 = vmatpush1.msra.mxu0 0.0
        %3907 = vmatprep.subr.mxu0 0.0
        %3908 = vmatpush1.msra.mxu0 0.0
        %3909 = vmatprep.subr.mxu0 0.0
        %3910 = vmatpush1.msra.mxu0 0.0
        %3911 = vmatprep.subr.mxu0 0.0
        %3912 = vmatpush1.msra.mxu0 0.0
        %3913 = vmatprep.subr.mxu0 0.0
        %3914 = vmatpush1.msra.mxu0 0.0
        %3915 = vmatprep.mubr.f32.mxu0 0.0
        %3916 = vmatmul.mubr.f32.gmra.mrb[0].mxu0 %v3849
        %v3917 = vpop.f32.mrb[0].mxu0
        %v3918 = vadd.f32 0.0, %v3917
        %v3919 = vpop.f32.mrb[0].mxu0
        %3920 = vdwg.mxu0
        %v3921 = vadd.f32 %v3702, %v3918
        %v3922 = vmul.f32 %v3142, %v2445
        %v3924 = vsel %vm1169, %v3922, 0
        %3926 = vmatprep.subr.mxu0 0.0
        %3927 = vmatpush1.xpose.msra.mxu0 %v3242
        %3928 = vmatprep.subr.mxu0 0.0
        %3929 = vmatpush1.xpose.msra.mxu0 %v3245
        %3930 = vmatprep.subr.mxu0 0.0
        %3931 = vmatpush1.xpose.msra.mxu0 0.0
        %3932 = vmatprep.subr.mxu0 0.0
        %3933 = vmatpush1.xpose.msra.mxu0 0.0
        %3934 = vmatprep.subr.mxu0 0.0
        %3935 = vmatpush1.xpose.msra.mxu0 0.0
        %3936 = vmatprep.subr.mxu0 0.0
        %3937 = vmatpush1.xpose.msra.mxu0 0.0
        %3938 = vmatprep.subr.mxu0 0.0
        %3939 = vmatpush1.xpose.msra.mxu0 0.0
        %3940 = vmatprep.subr.mxu0 0.0
        %3941 = vmatpush1.xpose.msra.mxu0 0.0
        %3942 = vmatprep.subr.mxu0 0.0
        %3943 = vmatpush1.xpose.msra.mxu0 0.0
        %3944 = vmatprep.subr.mxu0 0.0
        %3945 = vmatpush1.xpose.msra.mxu0 0.0
        %3946 = vmatprep.subr.mxu0 0.0
        %3947 = vmatpush1.xpose.msra.mxu0 0.0
        %3948 = vmatprep.subr.mxu0 0.0
        %3949 = vmatpush1.xpose.msra.mxu0 0.0
        %3950 = vmatprep.subr.mxu0 0.0
        %3951 = vmatpush1.xpose.msra.mxu0 0.0
        %3952 = vmatprep.subr.mxu0 0.0
        %3953 = vmatpush1.xpose.msra.mxu0 0.0
        %3954 = vmatprep.subr.mxu0 0.0
        %3955 = vmatpush1.xpose.msra.mxu0 0.0
        %3956 = vmatprep.subr.mxu0 0.0
        %3957 = vmatpush1.xpose.msra.mxu0 0.0
        %3958 = vmatprep.subr.mxu0 0.0
        %3959 = vmatpush1.xpose.msra.mxu0 0.0
        %3960 = vmatprep.subr.mxu0 0.0
        %3961 = vmatpush1.xpose.msra.mxu0 0.0
        %3962 = vmatprep.subr.mxu0 0.0
        %3963 = vmatpush1.xpose.msra.mxu0 0.0
        %3964 = vmatprep.subr.mxu0 0.0
        %3965 = vmatpush1.xpose.msra.mxu0 0.0
        %3966 = vmatprep.subr.mxu0 0.0
        %3967 = vmatpush1.xpose.msra.mxu0 0.0
        %3968 = vmatprep.subr.mxu0 0.0
        %3969 = vmatpush1.xpose.msra.mxu0 0.0
        %3970 = vmatprep.subr.mxu0 0.0
        %3971 = vmatpush1.xpose.msra.mxu0 0.0
        %3972 = vmatprep.subr.mxu0 0.0
        %3973 = vmatpush1.xpose.msra.mxu0 0.0
        %3974 = vmatprep.subr.mxu0 0.0
        %3975 = vmatpush1.xpose.msra.mxu0 0.0
        %3976 = vmatprep.subr.mxu0 0.0
        %3977 = vmatpush1.xpose.msra.mxu0 0.0
        %3978 = vmatprep.subr.mxu0 0.0
        %3979 = vmatpush1.xpose.msra.mxu0 0.0
        %3980 = vmatprep.subr.mxu0 0.0
        %3981 = vmatpush1.xpose.msra.mxu0 0.0
        %3982 = vmatprep.subr.mxu0 0.0
        %3983 = vmatpush1.xpose.msra.mxu0 0.0
        %3984 = vmatprep.subr.mxu0 0.0
        %3985 = vmatpush1.xpose.msra.mxu0 0.0
        %3986 = vmatprep.subr.mxu0 0.0
        %3987 = vmatpush1.xpose.msra.mxu0 0.0
        %3988 = vmatprep.subr.mxu0 0.0
        %3989 = vmatpush1.xpose.msra.mxu0 0.0
        %3990 = vmatprep.mubr.f32.mxu0 0.0
        %3991 = vmatmul.mubr.f32.gmra.mrb[0].mxu0 %v3924
        %v3992 = vpop.f32.mrb[0].mxu0
        %v3993 = vadd.f32 0.0, %v3992
        %v3994 = vpop.f32.mrb[0].mxu0
        %3995 = vdwg.mxu0
        %v3996 = vmul.f32 %v3993, 0.35355338
        %v3997 = vsel %vm1253, %v3996, -inf
        %3998 = vmax.xlane.f32.xlu0 %v3997
        %v3999 = vpop.xlane.xlu0 %3998
        %v4000 = vsub.f32 %v3996, %v3999
        %v4001 = vmul.f32 %v4000, 1.442695
        %v4002 = vpow.pop %v4001
        %v4003 = vmul.f32 %v4002, %v3327
        %v4004 = vsel %vm1253, %v4003, 0.0
        %4005 = vadd.xlane.f32.xlu0 %v4004
        %v4006 = vpop.xlane.xlu0 %4005
        %vm4007 = vcmp.gt.f32.partialorder %v4006, 0.0
        %v4008 = vsel %vm4007, %v4006, 1.0
        %v4009 = vrcp.pop %v4008
        %v4010 = vmul.f32 %v4003, %v4009
        %v4011 = vsel %vm4007, 1, 0
        %vm4012 = vcmp.eq.s32.totalorder %v4011, 1
        %v4013 = vsel %vm4012, %v4010, 0.0625
        %v4014 = vmul.f32 %v3340, %v4013
        %v4015 = vadd.f32 %v4014, 0.0
        %v4016 = vmul.f32 %v4002, %v3346
        %v4017 = vsel %vm1253, %v4016, 0.0
        %4018 = vadd.xlane.f32.xlu0 %v4017
        %v4019 = vpop.xlane.xlu0 %4018
        %vm4020 = vcmp.gt.f32.partialorder %v4019, 0.0
        %v4021 = vsel %vm4020, %v4019, 1.0
        %v4022 = vrcp.pop %v4021
        %v4023 = vmul.f32 %v4016, %v4022
        %v4024 = vsel %vm4020, 1, 0
        %vm4025 = vcmp.eq.s32.totalorder %v4024, 1
        %v4026 = vsel %vm4025, %v4023, 0.0625
        %v4027 = vmul.f32 %v3361, %v4026
        %v4028 = vadd.f32 %v4015, %v4027
        %v4029 = vmul.f32 %v4002, %v3367
        %v4030 = vsel %vm1253, %v4029, 0.0
        %4031 = vadd.xlane.f32.xlu0 %v4030
        %v4032 = vpop.xlane.xlu0 %4031
        %vm4033 = vcmp.gt.f32.partialorder %v4032, 0.0
        %v4034 = vsel %vm4033, %v4032, 1.0
        %v4035 = vrcp.pop %v4034
        %v4036 = vmul.f32 %v4029, %v4035
        %v4037 = vsel %vm4033, 1, 0
        %vm4038 = vcmp.eq.s32.totalorder %v4037, 1
        %v4039 = vsel %vm4038, %v4036, 0.0625
        %v4040 = vmul.f32 %v3382, %v4039
        %v4041 = vadd.f32 %v4028, %v4040
        %v4042 = vmul.f32 %v4002, %v3388
        %v4043 = vsel %vm1253, %v4042, 0.0
        %4044 = vadd.xlane.f32.xlu0 %v4043
        %v4045 = vpop.xlane.xlu0 %4044
        %vm4046 = vcmp.gt.f32.partialorder %v4045, 0.0
        %v4047 = vsel %vm4046, %v4045, 1.0
        %v4048 = vrcp.pop %v4047
        %v4049 = vmul.f32 %v4042, %v4048
        %v4050 = vsel %vm4046, 1, 0
        %vm4051 = vcmp.eq.s32.totalorder %v4050, 1
        %v4052 = vsel %vm4051, %v4049, 0.0625
        %v4053 = vmul.f32 %v3403, %v4052
        %v4054 = vadd.f32 %v4041, %v4053
        %v4055 = vmul.f32 %v3229, %v2649
        %v4056 = vmul.f32 %v3234, %v2649
        %4059 = vrot.lane.b32.xlu0 %v4055, 96
        %v4060 = vpop.permute.xlu0 %4059
        %4061 = vrot.lane.b32.xlu0 %v4056, 96
        %v4062 = vpop.permute.xlu0 %4061
        %v4066 = vsel %vm1253, %v4054, 0
        %4068 = vmatprep.subr.mxu0 0.0
        %4069 = vmatpush1.msra.mxu0 %v4060
        %4070 = vmatprep.subr.mxu0 0.0
        %4071 = vmatpush1.msra.mxu0 %v4062
        %4072 = vmatprep.subr.mxu0 0.0
        %4073 = vmatpush1.msra.mxu0 0.0
        %4074 = vmatprep.subr.mxu0 0.0
        %4075 = vmatpush1.msra.mxu0 0.0
        %4076 = vmatprep.subr.mxu0 0.0
        %4077 = vmatpush1.msra.mxu0 0.0
        %4078 = vmatprep.subr.mxu0 0.0
        %4079 = vmatpush1.msra.mxu0 0.0
        %4080 = vmatprep.subr.mxu0 0.0
        %4081 = vmatpush1.msra.mxu0 0.0
        %4082 = vmatprep.subr.mxu0 0.0
        %4083 = vmatpush1.msra.mxu0 0.0
        %4084 = vmatprep.subr.mxu0 0.0
        %4085 = vmatpush1.msra.mxu0 0.0
        %4086 = vmatprep.subr.mxu0 0.0
        %4087 = vmatpush1.msra.mxu0 0.0
        %4088 = vmatprep.subr.mxu0 0.0
        %4089 = vmatpush1.msra.mxu0 0.0
        %4090 = vmatprep.subr.mxu0 0.0
        %4091 = vmatpush1.msra.mxu0 0.0
        %4092 = vmatprep.subr.mxu0 0.0
        %4093 = vmatpush1.msra.mxu0 0.0
        %4094 = vmatprep.subr.mxu0 0.0
        %4095 = vmatpush1.msra.mxu0 0.0
        %4096 = vmatprep.subr.mxu0 0.0
        %4097 = vmatpush1.msra.mxu0 0.0
        %4098 = vmatprep.subr.mxu0 0.0
        %4099 = vmatpush1.msra.mxu0 0.0
        %4100 = vmatprep.subr.mxu0 0.0
        %4101 = vmatpush1.msra.mxu0 0.0
        %4102 = vmatprep.subr.mxu0 0.0
        %4103 = vmatpush1.msra.mxu0 0.0
        %4104 = vmatprep.subr.mxu0 0.0
        %4105 = vmatpush1.msra.mxu0 0.0
        %4106 = vmatprep.subr.mxu0 0.0
        %4107 = vmatpush1.msra.mxu0 0.0
        %4108 = vmatprep.subr.mxu0 0.0
        %4109 = vmatpush1.msra.mxu0 0.0
        %4110 = vmatprep.subr.mxu0 0.0
        %4111 = vmatpush1.msra.mxu0 0.0
        %4112 = vmatprep.subr.mxu0 0.0
        %4113 = vmatpush1.msra.mxu0 0.0
        %4114 = vmatprep.subr.mxu0 0.0
        %4115 = vmatpush1.msra.mxu0 0.0
        %4116 = vmatprep.subr.mxu0 0.0
        %4117 = vmatpush1.msra.mxu0 0.0
        %4118 = vmatprep.subr.mxu0 0.0
        %4119 = vmatpush1.msra.mxu0 0.0
        %4120 = vmatprep.subr.mxu0 0.0
        %4121 = vmatpush1.msra.mxu0 0.0
        %4122 = vmatprep.subr.mxu0 0.0
        %4123 = vmatpush1.msra.mxu0 0.0
        %4124 = vmatprep.subr.mxu0 0.0
        %4125 = vmatpush1.msra.mxu0 0.0
        %4126 = vmatprep.subr.mxu0 0.0
        %4127 = vmatpush1.msra.mxu0 0.0
        %4128 = vmatprep.subr.mxu0 0.0
        %4129 = vmatpush1.msra.mxu0 0.0
        %4130 = vmatprep.subr.mxu0 0.0
        %4131 = vmatpush1.msra.mxu0 0.0
        %4132 = vmatprep.mubr.f32.mxu0 0.0
        %4133 = vmatmul.mubr.f32.gmra.mrb[0].mxu0 %v4066
        %v4134 = vpop.f32.mrb[0].mxu0
        %v4135 = vadd.f32 0.0, %v4134
        %v4136 = vpop.f32.mrb[0].mxu0
        %4137 = vdwg.mxu0
        %v4138 = vadd.f32 %v3921, %v4135
        %v4139 = vld [vmem:[%s39] sm:$0xff]
        %v4140 = vld [vmem:[%s39 + $0x8] sm:$0xff]
        %v4141 = vld [vmem:[%s39 + $0x10] sm:$0xff]
        %v4142 = vld [vmem:[%s39 + $0x18] sm:$0xff]
        %v4144 = vsel %vm1169, %v4138, 0
        %4146 = vmatprep.subr.mxu0 0.0
        %4147 = vmatpush1.msra.mxu0 %v4139
        %4148 = vmatprep.subr.mxu0 0.0
        %4149 = vmatpush1.msra.mxu0 %v4140
        %4150 = vmatprep.subr.mxu0 0.0
        %4151 = vmatpush1.msra.mxu0 %v4141
        %4152 = vmatprep.subr.mxu0 0.0
        %4153 = vmatpush1.msra.mxu0 %v4142
        %4154 = vmatprep.subr.mxu0 0.0
        %4155 = vmatpush1.msra.mxu0 0.0
        %4156 = vmatprep.subr.mxu0 0.0
        %4157 = vmatpush1.msra.mxu0 0.0
        %4158 = vmatprep.subr.mxu0 0.0
        %4159 = vmatpush1.msra.mxu0 0.0
        %4160 = vmatprep.subr.mxu0 0.0
        %4161 = vmatpush1.msra.mxu0 0.0
        %4162 = vmatprep.subr.mxu0 0.0
        %4163 = vmatpush1.msra.mxu0 0.0
        %4164 = vmatprep.subr.mxu0 0.0
        %4165 = vmatpush1.msra.mxu0 0.0
        %4166 = vmatprep.subr.mxu0 0.0
        %4167 = vmatpush1.msra.mxu0 0.0
        %4168 = vmatprep.subr.mxu0 0.0
        %4169 = vmatpush1.msra.mxu0 0.0
        %4170 = vmatprep.subr.mxu0 0.0
        %4171 = vmatpush1.msra.mxu0 0.0
        %4172 = vmatprep.subr.mxu0 0.0
        %4173 = vmatpush1.msra.mxu0 0.0
        %4174 = vmatprep.subr.mxu0 0.0
        %4175 = vmatpush1.msra.mxu0 0.0
        %4176 = vmatprep.subr.mxu0 0.0
        %4177 = vmatpush1.msra.mxu0 0.0
        %4178 = vmatprep.subr.mxu0 0.0
        %4179 = vmatpush1.msra.mxu0 0.0
        %4180 = vmatprep.subr.mxu0 0.0
        %4181 = vmatpush1.msra.mxu0 0.0
        %4182 = vmatprep.subr.mxu0 0.0
        %4183 = vmatpush1.msra.mxu0 0.0
        %4184 = vmatprep.subr.mxu0 0.0
        %4185 = vmatpush1.msra.mxu0 0.0
        %4186 = vmatprep.subr.mxu0 0.0
        %4187 = vmatpush1.msra.mxu0 0.0
        %4188 = vmatprep.subr.mxu0 0.0
        %4189 = vmatpush1.msra.mxu0 0.0
        %4190 = vmatprep.subr.mxu0 0.0
        %4191 = vmatpush1.msra.mxu0 0.0
        %4192 = vmatprep.subr.mxu0 0.0
        %4193 = vmatpush1.msra.mxu0 0.0
        %4194 = vmatprep.subr.mxu0 0.0
        %4195 = vmatpush1.msra.mxu0 0.0
        %4196 = vmatprep.subr.mxu0 0.0
        %4197 = vmatpush1.msra.mxu0 0.0
        %4198 = vmatprep.subr.mxu0 0.0
        %4199 = vmatpush1.msra.mxu0 0.0
        %4200 = vmatprep.subr.mxu0 0.0
        %4201 = vmatpush1.msra.mxu0 0.0
        %4202 = vmatprep.subr.mxu0 0.0
        %4203 = vmatpush1.msra.mxu0 0.0
        %4204 = vmatprep.subr.mxu0 0.0
        %4205 = vmatpush1.msra.mxu0 0.0
        %4206 = vmatprep.subr.mxu0 0.0
        %4207 = vmatpush1.msra.mxu0 0.0
        %4208 = vmatprep.subr.mxu0 0.0
        %4209 = vmatpush1.msra.mxu0 0.0
        %4210 = vmatprep.mubr.f32.mxu0 0.0
        %4211 = vmatmul.mubr.f32.gmra.mrb[0].mxu0 %v4144
        %v4212 = vpop.f32.mrb[0].mxu0
        %v4213 = vadd.f32 0.0, %v4212
        %v4214 = vpop.f32.mrb[0].mxu0
        %4215 = vdwg.mxu0
        %v4216 = vadd.f32 %v1127, %v4213
        %v4217 = vld [vmem:[%s41] sm:$0x1]
        %v4219 = vlaneseq
        %v4220 = vshrl.u32 %v4219, 7
        %v4221 = vsub.s32 0, %v4220
        %v4222 = vrot.slane %v4217, %v4221
        %v4224 = vadd.f32 %v4216, %v4222
        %v4225 = vsel %vm1169, %v4224, 0.0
        %4226 = vadd.xlane.f32.xlu0 %v4225
        %v4227 = vpop.xlane.xlu0 %4226
        %v4228 = vmul.f32 %v4227, %v2841
        %v4229 = vsub.f32 %v4224, %v4228
        %v4230 = vmul.f32 %v4229, %v4229
        %v4231 = vsel %vm1169, %v4230, 0.0
        %4232 = vadd.xlane.f32.xlu0 %v4231
        %v4233 = vpop.xlane.xlu0 %4232
        %v4234 = vmul.f32 %v4233, 0.032258064
        %v4235 = vrsqrt.pop %v4234
        %v4236 = vmul.f32 %v4234, %v4235
        %vm4237 = vcmp.eq.f32.partialorder %v4234, inf
        %v4238 = vsel %vm4237, %v4234, %v4236
        %vm4239 = vcmp.eq.f32.partialorder %v4234, 0.0
        %v4240 = vand.u32 %v4234, 2147483648
        %v4241 = vsel %vm4239, %v4240, %v4238
        %v4242 = vadd.f32 %v4241, 1e-06
        %v4243 = vrcp.pop %v4242
        %v4244 = vmul.f32 %v4229, %v4243
        %v4245 = vlaneseq
        %v4246 = vshrl.u32 %v4245, 7
        %v4247 = vsub.s32 1, %v4246
        %v4248 = vrot.slane %v1132, %v4247
        %v4249 = vmul.f32 %v4248, %v4244
        %v4250 = vlaneseq
        %v4251 = vshrl.u32 %v4250, 7
        %v4252 = vsub.s32 1, %v4251
        %v4253 = vrot.slane %v1133, %v4252
        %v4254 = vadd.f32 %v4249, %v4253
        %4255 = vrot.lane.b32.xlu0 %v1142, 16
        %v4256 = vpop.permute.xlu0 %4255
        %v4258 = vsel %vm1253, %v1128, %v4256
        %vm4259 = vcmp.le.f32.partialorder %v4258, 0.5
        %v4260 = vsel %vm4259, 1, 0
        %v4261 = vcvt.s32.f32 %v4260
        %v4262 = vld [vmem:[%s49] sm:$0xff]
        %v4263 = vld [vmem:[%s49 + $0x8] sm:$0xff]
        %v4264 = vld [vmem:[%s49 + $0x10] sm:$0xff]
        %v4265 = vld [vmem:[%s49 + $0x18] sm:$0xff]
        %v4266 = vld [vmem:[%s51] sm:$0x1]
        %v4268 = vlaneseq
        %v4269 = vshrl.u32 %v4268, 7
        %v4270 = vsub.s32 0, %v4269
        %v4271 = vrot.slane %v4266, %v4270
        %v4274 = vsel %vm1169, %v4254, 0
        %4276 = vmatprep.subr.mxu0 0.0
        %4277 = vmatpush1.msra.mxu0 %v4262
        %4278 = vmatprep.subr.mxu0 0.0
        %4279 = vmatpush1.msra.mxu0 %v4263
        %4280 = vmatprep.subr.mxu0 0.0
        %4281 = vmatpush1.msra.mxu0 %v4264
        %4282 = vmatprep.subr.mxu0 0.0
        %4283 = vmatpush1.msra.mxu0 %v4265
        %4284 = vmatprep.subr.mxu0 0.0
        %4285 = vmatpush1.msra.mxu0 0.0
        %4286 = vmatprep.subr.mxu0 0.0
        %4287 = vmatpush1.msra.mxu0 0.0
        %4288 = vmatprep.subr.mxu0 0.0
        %4289 = vmatpush1.msra.mxu0 0.0
        %4290 = vmatprep.subr.mxu0 0.0
        %4291 = vmatpush1.msra.mxu0 0.0
        %4292 = vmatprep.subr.mxu0 0.0
        %4293 = vmatpush1.msra.mxu0 0.0
        %4294 = vmatprep.subr.mxu0 0.0
        %4295 = vmatpush1.msra.mxu0 0.0
        %4296 = vmatprep.subr.mxu0 0.0
        %4297 = vmatpush1.msra.mxu0 0.0
        %4298 = vmatprep.subr.mxu0 0.0
        %4299 = vmatpush1.msra.mxu0 0.0
        %4300 = vmatprep.subr.mxu0 0.0
        %4301 = vmatpush1.msra.mxu0 0.0
        %4302 = vmatprep.subr.mxu0 0.0
        %4303 = vmatpush1.msra.mxu0 0.0
        %4304 = vmatprep.subr.mxu0 0.0
        %4305 = vmatpush1.msra.mxu0 0.0
        %4306 = vmatprep.subr.mxu0 0.0
        %4307 = vmatpush1.msra.mxu0 0.0
        %4308 = vmatprep.subr.mxu0 0.0
        %4309 = vmatpush1.msra.mxu0 0.0
        %4310 = vmatprep.subr.mxu0 0.0
        %4311 = vmatpush1.msra.mxu0 0.0
        %4312 = vmatprep.subr.mxu0 0.0
        %4313 = vmatpush1.msra.mxu0 0.0
        %4314 = vmatprep.subr.mxu0 0.0
        %4315 = vmatpush1.msra.mxu0 0.0
        %4316 = vmatprep.subr.mxu0 0.0
        %4317 = vmatpush1.msra.mxu0 0.0
        %4318 = vmatprep.subr.mxu0 0.0
        %4319 = vmatpush1.msra.mxu0 0.0
        %4320 = vmatprep.subr.mxu0 0.0
        %4321 = vmatpush1.msra.mxu0 0.0
        %4322 = vmatprep.subr.mxu0 0.0
        %4323 = vmatpush1.msra.mxu0 0.0
        %4324 = vmatprep.subr.mxu0 0.0
        %4325 = vmatpush1.msra.mxu0 0.0
        %4326 = vmatprep.subr.mxu0 0.0
        %4327 = vmatpush1.msra.mxu0 0.0
        %4328 = vmatprep.subr.mxu0 0.0
        %4329 = vmatpush1.msra.mxu0 0.0
        %4330 = vmatprep.subr.mxu0 0.0
        %4331 = vmatpush1.msra.mxu0 0.0
        %4332 = vmatprep.subr.mxu0 0.0
        %4333 = vmatpush1.msra.mxu0 0.0
        %4334 = vmatprep.subr.mxu0 0.0
        %4335 = vmatpush1.msra.mxu0 0.0
        %4336 = vmatprep.subr.mxu0 0.0
        %4337 = vmatpush1.msra.mxu0 0.0
        %4338 = vmatprep.subr.mxu0 0.0
        %4339 = vmatpush1.msra.mxu0 0.0
        %4340 = vmatprep.mubr.f32.mxu0 0.0
        %4341 = vmatmul.mubr.f32.gmra.mrb[0].mxu0 %v3157
        %v4342 = vpop.f32.mrb[0].mxu0
        %v4343 = vadd.f32 %v4271, %v4342
        %v4344 = vpop.f32.mrb[0].mxu0
        %4345 = vmatprep.mubr.f32.mxu0 0.0
        %4346 = vmatmul.mubr.f32.gmra.mrb[0].mxu0 %v3160
        %v4347 = vpop.f32.mrb[0].mxu0
        %v4348 = vadd.f32 %v4271, %v4347
        %v4349 = vpop.f32.mrb[0].mxu0
        %4350 = vmatprep.mubr.f32.mxu0 0.0
        %4351 = vmatmul.mubr.f32.gmra.mrb[0].mxu0 %v4274
        %v4352 = vpop.f32.mrb[0].mxu0
        %v4353 = vadd.f32 %v4271, %v4352
        %v4354 = vpop.f32.mrb[0].mxu0
        %4355 = vdwg.mxu0
        %v4356 = vmul.f32 %v4343, %v1521
        %v4357 = vmul.f32 %v4348, %v1521
        %v4358 = vmul.f32 %v4353, %v1521
        %4362 = vrot.lane.b32.xlu0 %v4343, 96
        %v4363 = vpop.permute.xlu0 %4362
        %4364 = vrot.lane.b32.xlu0 %v4348, 96
        %v4365 = vpop.permute.xlu0 %4364
        %4366 = vrot.lane.b32.xlu0 %v4353, 96
        %v4367 = vpop.permute.xlu0 %4366
        %v4369 = vsel %vm1169, %v4356, 0
        %v4372 = vsel %vm1169, %v4357, 0
        %v4375 = vsel %vm1169, %v4358, 0
        %v4377 = vsel %vm1169, %v4363, 0
        %v4379 = vsel %vm1169, %v4365, 0
        %v4381 = vsel %vm1169, %v4367, 0
        %4383 = vmatprep.subr.mxu0 0.0
        %4384 = vmatpush1.xpose.msra.mxu0 %v4377
        %4385 = vmatprep.subr.mxu0 0.0
        %4386 = vmatpush1.xpose.msra.mxu0 %v4379
        %4387 = vmatprep.subr.mxu0 0.0
        %4388 = vmatpush1.xpose.msra.mxu0 %v4381
        %4389 = vmatprep.subr.mxu0 0.0
        %4390 = vmatpush1.xpose.msra.mxu0 0.0
        %4391 = vmatprep.subr.mxu0 0.0
        %4392 = vmatpush1.xpose.msra.mxu0 0.0
        %4393 = vmatprep.subr.mxu0 0.0
        %4394 = vmatpush1.xpose.msra.mxu0 0.0
        %4395 = vmatprep.subr.mxu0 0.0
        %4396 = vmatpush1.xpose.msra.mxu0 0.0
        %4397 = vmatprep.subr.mxu0 0.0
        %4398 = vmatpush1.xpose.msra.mxu0 0.0
        %4399 = vmatprep.subr.mxu0 0.0
        %4400 = vmatpush1.xpose.msra.mxu0 0.0
        %4401 = vmatprep.subr.mxu0 0.0
        %4402 = vmatpush1.xpose.msra.mxu0 0.0
        %4403 = vmatprep.subr.mxu0 0.0
        %4404 = vmatpush1.xpose.msra.mxu0 0.0
        %4405 = vmatprep.subr.mxu0 0.0
        %4406 = vmatpush1.xpose.msra.mxu0 0.0
        %4407 = vmatprep.subr.mxu0 0.0
        %4408 = vmatpush1.xpose.msra.mxu0 0.0
        %4409 = vmatprep.subr.mxu0 0.0
        %4410 = vmatpush1.xpose.msra.mxu0 0.0
        %4411 = vmatprep.subr.mxu0 0.0
        %4412 = vmatpush1.xpose.msra.mxu0 0.0
        %4413 = vmatprep.subr.mxu0 0.0
        %4414 = vmatpush1.xpose.msra.mxu0 0.0
        %4415 = vmatprep.subr.mxu0 0.0
        %4416 = vmatpush1.xpose.msra.mxu0 0.0
        %4417 = vmatprep.subr.mxu0 0.0
        %4418 = vmatpush1.xpose.msra.mxu0 0.0
        %4419 = vmatprep.subr.mxu0 0.0
        %4420 = vmatpush1.xpose.msra.mxu0 0.0
        %4421 = vmatprep.subr.mxu0 0.0
        %4422 = vmatpush1.xpose.msra.mxu0 0.0
        %4423 = vmatprep.subr.mxu0 0.0
        %4424 = vmatpush1.xpose.msra.mxu0 0.0
        %4425 = vmatprep.subr.mxu0 0.0
        %4426 = vmatpush1.xpose.msra.mxu0 0.0
        %4427 = vmatprep.subr.mxu0 0.0
        %4428 = vmatpush1.xpose.msra.mxu0 0.0
        %4429 = vmatprep.subr.mxu0 0.0
        %4430 = vmatpush1.xpose.msra.mxu0 0.0
        %4431 = vmatprep.subr.mxu0 0.0
        %4432 = vmatpush1.xpose.msra.mxu0 0.0
        %4433 = vmatprep.subr.mxu0 0.0
        %4434 = vmatpush1.xpose.msra.mxu0 0.0
        %4435 = vmatprep.subr.mxu0 0.0
        %4436 = vmatpush1.xpose.msra.mxu0 0.0
        %4437 = vmatprep.subr.mxu0 0.0
        %4438 = vmatpush1.xpose.msra.mxu0 0.0
        %4439 = vmatprep.subr.mxu0 0.0
        %4440 = vmatpush1.xpose.msra.mxu0 0.0
        %4441 = vmatprep.subr.mxu0 0.0
        %4442 = vmatpush1.xpose.msra.mxu0 0.0
        %4443 = vmatprep.subr.mxu0 0.0
        %4444 = vmatpush1.xpose.msra.mxu0 0.0
        %4445 = vmatprep.subr.mxu0 0.0
        %4446 = vmatpush1.xpose.msra.mxu0 0.0
        %4447 = vmatprep.mubr.f32.mxu0 0.0
        %4448 = vmatmul.mubr.f32.gmra.mrb[0].mxu0 %v4369
        %v4449 = vpop.f32.mrb[0].mxu0
        %v4450 = vadd.f32 0.0, %v4449
        %v4451 = vpop.f32.mrb[0].mxu0
        %4452 = vmatprep.mubr.f32.mxu0 0.0
        %4453 = vmatmul.mubr.f32.gmra.mrb[0].mxu0 %v4372
        %v4454 = vpop.f32.mrb[0].mxu0
        %v4455 = vadd.f32 0.0, %v4454
        %v4456 = vpop.f32.mrb[0].mxu0
        %4457 = vmatprep.mubr.f32.mxu0 0.0
        %4458 = vmatmul.mubr.f32.gmra.mrb[0].mxu0 %v4375
        %v4459 = vpop.f32.mrb[0].mxu0
        %v4460 = vadd.f32 0.0, %v4459
        %v4461 = vpop.f32.mrb[0].mxu0
        %4462 = vdwg.mxu0
        %v4463 = vmul.f32 %v4450, 0.35355338
        %v4464 = vmul.f32 %v4455, 0.35355338
        %v4465 = vmul.f32 %v4460, 0.35355338
        %vm4466 = vcmask 195584
        %v4467 = vsel %vm4466, %v4463, -inf
        %4468 = vmax.xlane.f32.xlu0 %v4467
        %v4469 = vpop.xlane.xlu0 %4468
        %v4470 = vsel %vm4466, %v4464, -inf
        %4471 = vmax.xlane.f32.xlu0 %v4470
        %v4472 = vpop.xlane.xlu0 %4471
        %v4473 = vsel %vm4466, %v4465, -inf
        %4474 = vmax.xlane.f32.xlu0 %v4473
        %v4475 = vpop.xlane.xlu0 %4474
        %v4476 = vsub.f32 %v4463, %v4469
        %v4477 = vsub.f32 %v4464, %v4472
        %v4478 = vsub.f32 %v4465, %v4475
        %v4479 = vmul.f32 %v4476, 1.442695
        %v4480 = vpow.pop %v4479
        %v4481 = vmul.f32 %v4477, 1.442695
        %v4482 = vpow.pop %v4481
        %v4483 = vmul.f32 %v4478, 1.442695
        %v4484 = vpow.pop %v4483
        %v4485 = vlaneseq
        %v4486 = vshrl.u32 %v4485, 7
        %v4487 = vsub.s32 0, %v4486
        %v4488 = vrot.slane %v4261, %v4487
        %v4489 = vmul.f32 %v4480, %v4488
        %v4490 = vmul.f32 %v4482, %v4488
        %v4491 = vmul.f32 %v4484, %v4488
        %v4492 = vsel %vm4466, %v4489, 0.0
        %4493 = vadd.xlane.f32.xlu0 %v4492
        %v4494 = vpop.xlane.xlu0 %4493
        %v4495 = vsel %vm4466, %v4490, 0.0
        %4496 = vadd.xlane.f32.xlu0 %v4495
        %v4497 = vpop.xlane.xlu0 %4496
        %v4498 = vsel %vm4466, %v4491, 0.0
        %4499 = vadd.xlane.f32.xlu0 %v4498
        %v4500 = vpop.xlane.xlu0 %4499
        %vm4501 = vcmp.gt.f32.partialorder %v4494, 0.0
        %vm4502 = vcmp.gt.f32.partialorder %v4497, 0.0
        %vm4503 = vcmp.gt.f32.partialorder %v4500, 0.0
        %v4504 = vsel %vm4501, %v4494, 1.0
        %v4505 = vsel %vm4502, %v4497, 1.0
        %v4506 = vsel %vm4503, %v4500, 1.0
        %v4507 = vrcp.pop %v4504
        %v4508 = vrcp.pop %v4505
        %v4509 = vrcp.pop %v4506
        %v4510 = vmul.f32 %v4489, %v4507
        %v4511 = vmul.f32 %v4490, %v4508
        %v4512 = vmul.f32 %v4491, %v4509
        %v4513 = vsel %vm4501, 1, 0
        %v4514 = vsel %vm4502, 1, 0
        %v4515 = vsel %vm4503, 1, 0
        %vm4516 = vcmp.eq.s32.totalorder %v4513, 1
        %vm4517 = vcmp.eq.s32.totalorder %v4514, 1
        %vm4518 = vcmp.eq.s32.totalorder %v4515, 1
        %v4519 = vsel %vm4516, %v4510, 0.041666668
        %v4520 = vsel %vm4517, %v4511, 0.041666668
        %v4521 = vsel %vm4518, %v4512, 0.041666668
        %v4522 = vadd.f32 %v4519, 0.0
        %v4523 = vadd.f32 %v4520, 0.0
        %v4524 = vadd.f32 %v4521, 0.0
        %4525 = vrot.lane.b32.xlu0 %v1521, 64
        %v4526 = vpop.permute.xlu0 %4525
        %v4528 = vmul.f32 %v4343, %v4526
        %v4529 = vmul.f32 %v4348, %v4526
        %v4530 = vmul.f32 %v4353, %v4526
        %v4531 = vmul.f32 %v4343, %v1766
        %v4532 = vmul.f32 %v4348, %v1766
        %v4533 = vmul.f32 %v4353, %v1766
        %v4535 = vsel %vm1169, %v4531, 0
        %v4538 = vsel %vm1169, %v4532, 0
        %v4541 = vsel %vm1169, %v4533, 0
        %4543 = vmatprep.subr.mxu0 0.0
        %4544 = vmatpush1.xpose.msra.mxu0 %v4377
        %4545 = vmatprep.subr.mxu0 0.0
        %4546 = vmatpush1.xpose.msra.mxu0 %v4379
        %4547 = vmatprep.subr.mxu0 0.0
        %4548 = vmatpush1.xpose.msra.mxu0 %v4381
        %4549 = vmatprep.subr.mxu0 0.0
        %4550 = vmatpush1.xpose.msra.mxu0 0.0
        %4551 = vmatprep.subr.mxu0 0.0
        %4552 = vmatpush1.xpose.msra.mxu0 0.0
        %4553 = vmatprep.subr.mxu0 0.0
        %4554 = vmatpush1.xpose.msra.mxu0 0.0
        %4555 = vmatprep.subr.mxu0 0.0
        %4556 = vmatpush1.xpose.msra.mxu0 0.0
        %4557 = vmatprep.subr.mxu0 0.0
        %4558 = vmatpush1.xpose.msra.mxu0 0.0
        %4559 = vmatprep.subr.mxu0 0.0
        %4560 = vmatpush1.xpose.msra.mxu0 0.0
        %4561 = vmatprep.subr.mxu0 0.0
        %4562 = vmatpush1.xpose.msra.mxu0 0.0
        %4563 = vmatprep.subr.mxu0 0.0
        %4564 = vmatpush1.xpose.msra.mxu0 0.0
        %4565 = vmatprep.subr.mxu0 0.0
        %4566 = vmatpush1.xpose.msra.mxu0 0.0
        %4567 = vmatprep.subr.mxu0 0.0
        %4568 = vmatpush1.xpose.msra.mxu0 0.0
        %4569 = vmatprep.subr.mxu0 0.0
        %4570 = vmatpush1.xpose.msra.mxu0 0.0
        %4571 = vmatprep.subr.mxu0 0.0
        %4572 = vmatpush1.xpose.msra.mxu0 0.0
        %4573 = vmatprep.subr.mxu0 0.0
        %4574 = vmatpush1.xpose.msra.mxu0 0.0
        %4575 = vmatprep.subr.mxu0 0.0
        %4576 = vmatpush1.xpose.msra.mxu0 0.0
        %4577 = vmatprep.subr.mxu0 0.0
        %4578 = vmatpush1.xpose.msra.mxu0 0.0
        %4579 = vmatprep.subr.mxu0 0.0
        %4580 = vmatpush1.xpose.msra.mxu0 0.0
        %4581 = vmatprep.subr.mxu0 0.0
        %4582 = vmatpush1.xpose.msra.mxu0 0.0
        %4583 = vmatprep.subr.mxu0 0.0
        %4584 = vmatpush1.xpose.msra.mxu0 0.0
        %4585 = vmatprep.subr.mxu0 0.0
        %4586 = vmatpush1.xpose.msra.mxu0 0.0
        %4587 = vmatprep.subr.mxu0 0.0
        %4588 = vmatpush1.xpose.msra.mxu0 0.0
        %4589 = vmatprep.subr.mxu0 0.0
        %4590 = vmatpush1.xpose.msra.mxu0 0.0
        %4591 = vmatprep.subr.mxu0 0.0
        %4592 = vmatpush1.xpose.msra.mxu0 0.0
        %4593 = vmatprep.subr.mxu0 0.0
        %4594 = vmatpush1.xpose.msra.mxu0 0.0
        %4595 = vmatprep.subr.mxu0 0.0
        %4596 = vmatpush1.xpose.msra.mxu0 0.0
        %4597 = vmatprep.subr.mxu0 0.0
        %4598 = vmatpush1.xpose.msra.mxu0 0.0
        %4599 = vmatprep.subr.mxu0 0.0
        %4600 = vmatpush1.xpose.msra.mxu0 0.0
        %4601 = vmatprep.subr.mxu0 0.0
        %4602 = vmatpush1.xpose.msra.mxu0 0.0
        %4603 = vmatprep.subr.mxu0 0.0
        %4604 = vmatpush1.xpose.msra.mxu0 0.0
        %4605 = vmatprep.subr.mxu0 0.0
        %4606 = vmatpush1.xpose.msra.mxu0 0.0
        %4607 = vmatprep.mubr.f32.mxu0 0.0
        %4608 = vmatmul.mubr.f32.gmra.mrb[0].mxu0 %v4535
        %v4609 = vpop.f32.mrb[0].mxu0
        %v4610 = vadd.f32 0.0, %v4609
        %v4611 = vpop.f32.mrb[0].mxu0
        %4612 = vmatprep.mubr.f32.mxu0 0.0
        %4613 = vmatmul.mubr.f32.gmra.mrb[0].mxu0 %v4538
        %v4614 = vpop.f32.mrb[0].mxu0
        %v4615 = vadd.f32 0.0, %v4614
        %v4616 = vpop.f32.mrb[0].mxu0
        %4617 = vmatprep.mubr.f32.mxu0 0.0
        %4618 = vmatmul.mubr.f32.gmra.mrb[0].mxu0 %v4541
        %v4619 = vpop.f32.mrb[0].mxu0
        %v4620 = vadd.f32 0.0, %v4619
        %v4621 = vpop.f32.mrb[0].mxu0
        %4622 = vdwg.mxu0
        %v4623 = vmul.f32 %v4610, 0.35355338
        %v4624 = vmul.f32 %v4615, 0.35355338
        %v4625 = vmul.f32 %v4620, 0.35355338
        %v4626 = vsel %vm4466, %v4623, -inf
        %4627 = vmax.xlane.f32.xlu0 %v4626
        %v4628 = vpop.xlane.xlu0 %4627
        %v4629 = vsel %vm4466, %v4624, -inf
        %4630 = vmax.xlane.f32.xlu0 %v4629
        %v4631 = vpop.xlane.xlu0 %4630
        %v4632 = vsel %vm4466, %v4625, -inf
        %4633 = vmax.xlane.f32.xlu0 %v4632
        %v4634 = vpop.xlane.xlu0 %4633
        %v4635 = vsub.f32 %v4623, %v4628
        %v4636 = vsub.f32 %v4624, %v4631
        %v4637 = vsub.f32 %v4625, %v4634
        %v4638 = vmul.f32 %v4635, 1.442695
        %v4639 = vpow.pop %v4638
        %v4640 = vmul.f32 %v4636, 1.442695
        %v4641 = vpow.pop %v4640
        %v4642 = vmul.f32 %v4637, 1.442695
        %v4643 = vpow.pop %v4642
        %v4644 = vmul.f32 %v4639, %v4488
        %v4645 = vmul.f32 %v4641, %v4488
        %v4646 = vmul.f32 %v4643, %v4488
        %v4647 = vsel %vm4466, %v4644, 0.0
        %4648 = vadd.xlane.f32.xlu0 %v4647
        %v4649 = vpop.xlane.xlu0 %4648
        %v4650 = vsel %vm4466, %v4645, 0.0
        %4651 = vadd.xlane.f32.xlu0 %v4650
        %v4652 = vpop.xlane.xlu0 %4651
        %v4653 = vsel %vm4466, %v4646, 0.0
        %4654 = vadd.xlane.f32.xlu0 %v4653
        %v4655 = vpop.xlane.xlu0 %4654
        %vm4656 = vcmp.gt.f32.partialorder %v4649, 0.0
        %vm4657 = vcmp.gt.f32.partialorder %v4652, 0.0
        %vm4658 = vcmp.gt.f32.partialorder %v4655, 0.0
        %v4659 = vsel %vm4656, %v4649, 1.0
        %v4660 = vsel %vm4657, %v4652, 1.0
        %v4661 = vsel %vm4658, %v4655, 1.0
        %v4662 = vrcp.pop %v4659
        %v4663 = vrcp.pop %v4660
        %v4664 = vrcp.pop %v4661
        %v4665 = vmul.f32 %v4644, %v4662
        %v4666 = vmul.f32 %v4645, %v4663
        %v4667 = vmul.f32 %v4646, %v4664
        %v4668 = vsel %vm4656, 1, 0
        %v4669 = vsel %vm4657, 1, 0
        %v4670 = vsel %vm4658, 1, 0
        %vm4671 = vcmp.eq.s32.totalorder %v4668, 1
        %vm4672 = vcmp.eq.s32.totalorder %v4669, 1
        %vm4673 = vcmp.eq.s32.totalorder %v4670, 1
        %v4674 = vsel %vm4671, %v4665, 0.041666668
        %v4675 = vsel %vm4672, %v4666, 0.041666668
        %v4676 = vsel %vm4673, %v4667, 0.041666668
        %v4677 = vadd.f32 %v4674, 0.0
        %v4678 = vadd.f32 %v4675, 0.0
        %v4679 = vadd.f32 %v4676, 0.0
        %4680 = vrot.lane.b32.xlu0 %v1766, 64
        %v4681 = vpop.permute.xlu0 %4680
        %v4683 = vmul.f32 %v4343, %v4681
        %v4684 = vmul.f32 %v4348, %v4681
        %v4685 = vmul.f32 %v4353, %v4681
        %4689 = vrot.lane.b32.xlu0 %v4683, 64
        %v4690 = vpop.permute.xlu0 %4689
        %4691 = vrot.lane.b32.xlu0 %v4684, 64
        %v4692 = vpop.permute.xlu0 %4691
        %4693 = vrot.lane.b32.xlu0 %v4685, 64
        %v4694 = vpop.permute.xlu0 %4693
        %v4699 = vsel %vm4466, %v4677, 0
        %v4702 = vsel %vm4466, %v4678, 0
        %v4705 = vsel %vm4466, %v4679, 0
        %4707 = vmatprep.subr.mxu0 0.0
        %4708 = vmatpush1.msra.mxu0 %v4690
        %4709 = vmatprep.subr.mxu0 0.0
        %4710 = vmatpush1.msra.mxu0 %v4692
        %4711 = vmatprep.subr.mxu0 0.0
        %4712 = vmatpush1.msra.mxu0 %v4694
        %4713 = vmatprep.subr.mxu0 0.0
        %4714 = vmatpush1.msra.mxu0 0.0
        %4715 = vmatprep.subr.mxu0 0.0
        %4716 = vmatpush1.msra.mxu0 0.0
        %4717 = vmatprep.subr.mxu0 0.0
        %4718 = vmatpush1.msra.mxu0 0.0
        %4719 = vmatprep.subr.mxu0 0.0
        %4720 = vmatpush1.msra.mxu0 0.0
        %4721 = vmatprep.subr.mxu0 0.0
        %4722 = vmatpush1.msra.mxu0 0.0
        %4723 = vmatprep.subr.mxu0 0.0
        %4724 = vmatpush1.msra.mxu0 0.0
        %4725 = vmatprep.subr.mxu0 0.0
        %4726 = vmatpush1.msra.mxu0 0.0
        %4727 = vmatprep.subr.mxu0 0.0
        %4728 = vmatpush1.msra.mxu0 0.0
        %4729 = vmatprep.subr.mxu0 0.0
        %4730 = vmatpush1.msra.mxu0 0.0
        %4731 = vmatprep.subr.mxu0 0.0
        %4732 = vmatpush1.msra.mxu0 0.0
        %4733 = vmatprep.subr.mxu0 0.0
        %4734 = vmatpush1.msra.mxu0 0.0
        %4735 = vmatprep.subr.mxu0 0.0
        %4736 = vmatpush1.msra.mxu0 0.0
        %4737 = vmatprep.subr.mxu0 0.0
        %4738 = vmatpush1.msra.mxu0 0.0
        %4739 = vmatprep.subr.mxu0 0.0
        %4740 = vmatpush1.msra.mxu0 0.0
        %4741 = vmatprep.subr.mxu0 0.0
        %4742 = vmatpush1.msra.mxu0 0.0
        %4743 = vmatprep.subr.mxu0 0.0
        %4744 = vmatpush1.msra.mxu0 0.0
        %4745 = vmatprep.subr.mxu0 0.0
        %4746 = vmatpush1.msra.mxu0 0.0
        %4747 = vmatprep.subr.mxu0 0.0
        %4748 = vmatpush1.msra.mxu0 0.0
        %4749 = vmatprep.subr.mxu0 0.0
        %4750 = vmatpush1.msra.mxu0 0.0
        %4751 = vmatprep.subr.mxu0 0.0
        %4752 = vmatpush1.msra.mxu0 0.0
        %4753 = vmatprep.subr.mxu0 0.0
        %4754 = vmatpush1.msra.mxu0 0.0
        %4755 = vmatprep.subr.mxu0 0.0
        %4756 = vmatpush1.msra.mxu0 0.0
        %4757 = vmatprep.subr.mxu0 0.0
        %4758 = vmatpush1.msra.mxu0 0.0
        %4759 = vmatprep.subr.mxu0 0.0
        %4760 = vmatpush1.msra.mxu0 0.0
        %4761 = vmatprep.subr.mxu0 0.0
        %4762 = vmatpush1.msra.mxu0 0.0
        %4763 = vmatprep.subr.mxu0 0.0
        %4764 = vmatpush1.msra.mxu0 0.0
        %4765 = vmatprep.subr.mxu0 0.0
        %4766 = vmatpush1.msra.mxu0 0.0
        %4767 = vmatprep.subr.mxu0 0.0
        %4768 = vmatpush1.msra.mxu0 0.0
        %4769 = vmatprep.subr.mxu0 0.0
        %4770 = vmatpush1.msra.mxu0 0.0
        %4771 = vmatprep.mubr.f32.mxu0 0.0
        %4772 = vmatmul.mubr.f32.gmra.mrb[0].mxu0 %v4699
        %v4773 = vpop.f32.mrb[0].mxu0
        %v4774 = vadd.f32 0.0, %v4773
        %v4775 = vpop.f32.mrb[0].mxu0
        %4776 = vmatprep.mubr.f32.mxu0 0.0
        %4777 = vmatmul.mubr.f32.gmra.mrb[0].mxu0 %v4702
        %v4778 = vpop.f32.mrb[0].mxu0
        %v4779 = vadd.f32 0.0, %v4778
        %v4780 = vpop.f32.mrb[0].mxu0
        %4781 = vmatprep.mubr.f32.mxu0 0.0
        %4782 = vmatmul.mubr.f32.gmra.mrb[0].mxu0 %v4705
        %v4783 = vpop.f32.mrb[0].mxu0
        %v4784 = vadd.f32 0.0, %v4783
        %v4785 = vpop.f32.mrb[0].mxu0
        %4786 = vdwg.mxu0
        %4790 = vrot.lane.b32.xlu0 %v4528, 64
        %v4791 = vpop.permute.xlu0 %4790
        %4792 = vrot.lane.b32.xlu0 %v4529, 64
        %v4793 = vpop.permute.xlu0 %4792
        %4794 = vrot.lane.b32.xlu0 %v4530, 64
        %v4795 = vpop.permute.xlu0 %4794
        %v4800 = vsel %vm4466, %v4522, 0
        %v4803 = vsel %vm4466, %v4523, 0
        %v4806 = vsel %vm4466, %v4524, 0
        %4808 = vmatprep.subr.mxu0 0.0
        %4809 = vmatpush1.msra.mxu0 %v4791
        %4810 = vmatprep.subr.mxu0 0.0
        %4811 = vmatpush1.msra.mxu0 %v4793
        %4812 = vmatprep.subr.mxu0 0.0
        %4813 = vmatpush1.msra.mxu0 %v4795
        %4814 = vmatprep.subr.mxu0 0.0
        %4815 = vmatpush1.msra.mxu0 0.0
        %4816 = vmatprep.subr.mxu0 0.0
        %4817 = vmatpush1.msra.mxu0 0.0
        %4818 = vmatprep.subr.mxu0 0.0
        %4819 = vmatpush1.msra.mxu0 0.0
        %4820 = vmatprep.subr.mxu0 0.0
        %4821 = vmatpush1.msra.mxu0 0.0
        %4822 = vmatprep.subr.mxu0 0.0
        %4823 = vmatpush1.msra.mxu0 0.0
        %4824 = vmatprep.subr.mxu0 0.0
        %4825 = vmatpush1.msra.mxu0 0.0
        %4826 = vmatprep.subr.mxu0 0.0
        %4827 = vmatpush1.msra.mxu0 0.0
        %4828 = vmatprep.subr.mxu0 0.0
        %4829 = vmatpush1.msra.mxu0 0.0
        %4830 = vmatprep.subr.mxu0 0.0
        %4831 = vmatpush1.msra.mxu0 0.0
        %4832 = vmatprep.subr.mxu0 0.0
        %4833 = vmatpush1.msra.mxu0 0.0
        %4834 = vmatprep.subr.mxu0 0.0
        %4835 = vmatpush1.msra.mxu0 0.0
        %4836 = vmatprep.subr.mxu0 0.0
        %4837 = vmatpush1.msra.mxu0 0.0
        %4838 = vmatprep.subr.mxu0 0.0
        %4839 = vmatpush1.msra.mxu0 0.0
        %4840 = vmatprep.subr.mxu0 0.0
        %4841 = vmatpush1.msra.mxu0 0.0
        %4842 = vmatprep.subr.mxu0 0.0
        %4843 = vmatpush1.msra.mxu0 0.0
        %4844 = vmatprep.subr.mxu0 0.0
        %4845 = vmatpush1.msra.mxu0 0.0
        %4846 = vmatprep.subr.mxu0 0.0
        %4847 = vmatpush1.msra.mxu0 0.0
        %4848 = vmatprep.subr.mxu0 0.0
        %4849 = vmatpush1.msra.mxu0 0.0
        %4850 = vmatprep.subr.mxu0 0.0
        %4851 = vmatpush1.msra.mxu0 0.0
        %4852 = vmatprep.subr.mxu0 0.0
        %4853 = vmatpush1.msra.mxu0 0.0
        %4854 = vmatprep.subr.mxu0 0.0
        %4855 = vmatpush1.msra.mxu0 0.0
        %4856 = vmatprep.subr.mxu0 0.0
        %4857 = vmatpush1.msra.mxu0 0.0
        %4858 = vmatprep.subr.mxu0 0.0
        %4859 = vmatpush1.msra.mxu0 0.0
        %4860 = vmatprep.subr.mxu0 0.0
        %4861 = vmatpush1.msra.mxu0 0.0
        %4862 = vmatprep.subr.mxu0 0.0
        %4863 = vmatpush1.msra.mxu0 0.0
        %4864 = vmatprep.subr.mxu0 0.0
        %4865 = vmatpush1.msra.mxu0 0.0
        %4866 = vmatprep.subr.mxu0 0.0
        %4867 = vmatpush1.msra.mxu0 0.0
        %4868 = vmatprep.subr.mxu0 0.0
        %4869 = vmatpush1.msra.mxu0 0.0
        %4870 = vmatprep.subr.mxu0 0.0
        %4871 = vmatpush1.msra.mxu0 0.0
        %4872 = vmatprep.mubr.f32.mxu0 0.0
        %4873 = vmatmul.mubr.f32.gmra.mrb[0].mxu0 %v4800
        %v4874 = vpop.f32.mrb[0].mxu0
        %v4875 = vadd.f32 %v4774, %v4874
        %v4876 = vpop.f32.mrb[0].mxu0
        %4877 = vmatprep.mubr.f32.mxu0 0.0
        %4878 = vmatmul.mubr.f32.gmra.mrb[0].mxu0 %v4803
        %v4879 = vpop.f32.mrb[0].mxu0
        %v4880 = vadd.f32 %v4779, %v4879
        %v4881 = vpop.f32.mrb[0].mxu0
        %4882 = vmatprep.mubr.f32.mxu0 0.0
        %4883 = vmatmul.mubr.f32.gmra.mrb[0].mxu0 %v4806
        %v4884 = vpop.f32.mrb[0].mxu0
        %v4885 = vadd.f32 %v4784, %v4884
        %v4886 = vpop.f32.mrb[0].mxu0
        %4887 = vdwg.mxu0
        %v4888 = vmul.f32 %v4343, %v2147
        %v4889 = vmul.f32 %v4348, %v2147
        %v4890 = vmul.f32 %v4353, %v2147
        %v4892 = vsel %vm1169, %v4888, 0
        %v4895 = vsel %vm1169, %v4889, 0
        %v4898 = vsel %vm1169, %v4890, 0
        %4900 = vmatprep.subr.mxu0 0.0
        %4901 = vmatpush1.xpose.msra.mxu0 %v4377
        %4902 = vmatprep.subr.mxu0 0.0
        %4903 = vmatpush1.xpose.msra.mxu0 %v4379
        %4904 = vmatprep.subr.mxu0 0.0
        %4905 = vmatpush1.xpose.msra.mxu0 %v4381
        %4906 = vmatprep.subr.mxu0 0.0
        %4907 = vmatpush1.xpose.msra.mxu0 0.0
        %4908 = vmatprep.subr.mxu0 0.0
        %4909 = vmatpush1.xpose.msra.mxu0 0.0
        %4910 = vmatprep.subr.mxu0 0.0
        %4911 = vmatpush1.xpose.msra.mxu0 0.0
        %4912 = vmatprep.subr.mxu0 0.0
        %4913 = vmatpush1.xpose.msra.mxu0 0.0
        %4914 = vmatprep.subr.mxu0 0.0
        %4915 = vmatpush1.xpose.msra.mxu0 0.0
        %4916 = vmatprep.subr.mxu0 0.0
        %4917 = vmatpush1.xpose.msra.mxu0 0.0
        %4918 = vmatprep.subr.mxu0 0.0
        %4919 = vmatpush1.xpose.msra.mxu0 0.0
        %4920 = vmatprep.subr.mxu0 0.0
        %4921 = vmatpush1.xpose.msra.mxu0 0.0
        %4922 = vmatprep.subr.mxu0 0.0
        %4923 = vmatpush1.xpose.msra.mxu0 0.0
        %4924 = vmatprep.subr.mxu0 0.0
        %4925 = vmatpush1.xpose.msra.mxu0 0.0
        %4926 = vmatprep.subr.mxu0 0.0
        %4927 = vmatpush1.xpose.msra.mxu0 0.0
        %4928 = vmatprep.subr.mxu0 0.0
        %4929 = vmatpush1.xpose.msra.mxu0 0.0
        %4930 = vmatprep.subr.mxu0 0.0
        %4931 = vmatpush1.xpose.msra.mxu0 0.0
        %4932 = vmatprep.subr.mxu0 0.0
        %4933 = vmatpush1.xpose.msra.mxu0 0.0
        %4934 = vmatprep.subr.mxu0 0.0
        %4935 = vmatpush1.xpose.msra.mxu0 0.0
        %4936 = vmatprep.subr.mxu0 0.0
        %4937 = vmatpush1.xpose.msra.mxu0 0.0
        %4938 = vmatprep.subr.mxu0 0.0
        %4939 = vmatpush1.xpose.msra.mxu0 0.0
        %4940 = vmatprep.subr.mxu0 0.0
        %4941 = vmatpush1.xpose.msra.mxu0 0.0
        %4942 = vmatprep.subr.mxu0 0.0
        %4943 = vmatpush1.xpose.msra.mxu0 0.0
        %4944 = vmatprep.subr.mxu0 0.0
        %4945 = vmatpush1.xpose.msra.mxu0 0.0
        %4946 = vmatprep.subr.mxu0 0.0
        %4947 = vmatpush1.xpose.msra.mxu0 0.0
        %4948 = vmatprep.subr.mxu0 0.0
        %4949 = vmatpush1.xpose.msra.mxu0 0.0
        %4950 = vmatprep.subr.mxu0 0.0
        %4951 = vmatpush1.xpose.msra.mxu0 0.0
        %4952 = vmatprep.subr.mxu0 0.0
        %4953 = vmatpush1.xpose.msra.mxu0 0.0
        %4954 = vmatprep.subr.mxu0 0.0
        %4955 = vmatpush1.xpose.msra.mxu0 0.0
        %4956 = vmatprep.subr.mxu0 0.0
        %4957 = vmatpush1.xpose.msra.mxu0 0.0
        %4958 = vmatprep.subr.mxu0 0.0
        %4959 = vmatpush1.xpose.msra.mxu0 0.0
        %4960 = vmatprep.subr.mxu0 0.0
        %4961 = vmatpush1.xpose.msra.mxu0 0.0
        %4962 = vmatprep.subr.mxu0 0.0
        %4963 = vmatpush1.xpose.msra.mxu0 0.0
        %4964 = vmatprep.mubr.f32.mxu0 0.0
        %4965 = vmatmul.mubr.f32.gmra.mrb[0].mxu0 %v4892
        %v4966 = vpop.f32.mrb[0].mxu0
        %v4967 = vadd.f32 0.0, %v4966
        %v4968 = vpop.f32.mrb[0].mxu0
        %4969 = vmatprep.mubr.f32.mxu0 0.0
        %4970 = vmatmul.mubr.f32.gmra.mrb[0].mxu0 %v4895
        %v4971 = vpop.f32.mrb[0].mxu0
        %v4972 = vadd.f32 0.0, %v4971
        %v4973 = vpop.f32.mrb[0].mxu0
        %4974 = vmatprep.mubr.f32.mxu0 0.0
        %4975 = vmatmul.mubr.f32.gmra.mrb[0].mxu0 %v4898
        %v4976 = vpop.f32.mrb[0].mxu0
        %v4977 = vadd.f32 0.0, %v4976
        %v4978 = vpop.f32.mrb[0].mxu0
        %4979 = vdwg.mxu0
        %v4980 = vmul.f32 %v4967, 0.35355338
        %v4981 = vmul.f32 %v4972, 0.35355338
        %v4982 = vmul.f32 %v4977, 0.35355338
        %v4983 = vsel %vm4466, %v4980, -inf
        %4984 = vmax.xlane.f32.xlu0 %v4983
        %v4985 = vpop.xlane.xlu0 %4984
        %v4986 = vsel %vm4466, %v4981, -inf
        %4987 = vmax.xlane.f32.xlu0 %v4986
        %v4988 = vpop.xlane.xlu0 %4987
        %v4989 = vsel %vm4466, %v4982, -inf
        %4990 = vmax.xlane.f32.xlu0 %v4989
        %v4991 = vpop.xlane.xlu0 %4990
        %v4992 = vsub.f32 %v4980, %v4985
        %v4993 = vsub.f32 %v4981, %v4988
        %v4994 = vsub.f32 %v4982, %v4991
        %v4995 = vmul.f32 %v4992, 1.442695
        %v4996 = vpow.pop %v4995
        %v4997 = vmul.f32 %v4993, 1.442695
        %v4998 = vpow.pop %v4997
        %v4999 = vmul.f32 %v4994, 1.442695
        %v5000 = vpow.pop %v4999
        %v5001 = vmul.f32 %v4996, %v4488
        %v5002 = vmul.f32 %v4998, %v4488
        %v5003 = vmul.f32 %v5000, %v4488
        %v5004 = vsel %vm4466, %v5001, 0.0
        %5005 = vadd.xlane.f32.xlu0 %v5004
        %v5006 = vpop.xlane.xlu0 %5005
        %v5007 = vsel %vm4466, %v5002, 0.0
        %5008 = vadd.xlane.f32.xlu0 %v5007
        %v5009 = vpop.xlane.xlu0 %5008
        %v5010 = vsel %vm4466, %v5003, 0.0
        %5011 = vadd.xlane.f32.xlu0 %v5010
        %v5012 = vpop.xlane.xlu0 %5011
        %vm5013 = vcmp.gt.f32.partialorder %v5006, 0.0
        %vm5014 = vcmp.gt.f32.partialorder %v5009, 0.0
        %vm5015 = vcmp.gt.f32.partialorder %v5012, 0.0
        %v5016 = vsel %vm5013, %v5006, 1.0
        %v5017 = vsel %vm5014, %v5009, 1.0
        %v5018 = vsel %vm5015, %v5012, 1.0
        %v5019 = vrcp.pop %v5016
        %v5020 = vrcp.pop %v5017
        %v5021 = vrcp.pop %v5018
        %v5022 = vmul.f32 %v5001, %v5019
        %v5023 = vmul.f32 %v5002, %v5020
        %v5024 = vmul.f32 %v5003, %v5021
        %v5025 = vsel %vm5013, 1, 0
        %v5026 = vsel %vm5014, 1, 0
        %v5027 = vsel %vm5015, 1, 0
        %vm5028 = vcmp.eq.s32.totalorder %v5025, 1
        %vm5029 = vcmp.eq.s32.totalorder %v5026, 1
        %vm5030 = vcmp.eq.s32.totalorder %v5027, 1
        %v5031 = vsel %vm5028, %v5022, 0.041666668
        %v5032 = vsel %vm5029, %v5023, 0.041666668
        %v5033 = vsel %vm5030, %v5024, 0.041666668
        %v5034 = vadd.f32 %v5031, 0.0
        %v5035 = vadd.f32 %v5032, 0.0
        %v5036 = vadd.f32 %v5033, 0.0
        %5037 = vrot.lane.b32.xlu0 %v2147, 64
        %v5038 = vpop.permute.xlu0 %5037
        %v5040 = vmul.f32 %v4343, %v5038
        %v5041 = vmul.f32 %v4348, %v5038
        %v5042 = vmul.f32 %v4353, %v5038
        %5046 = vrot.lane.b32.xlu0 %v5040, 64
        %v5047 = vpop.permute.xlu0 %5046
        %5048 = vrot.lane.b32.xlu0 %v5041, 64
        %v5049 = vpop.permute.xlu0 %5048
        %5050 = vrot.lane.b32.xlu0 %v5042, 64
        %v5051 = vpop.permute.xlu0 %5050
        %v5056 = vsel %vm4466, %v5034, 0
        %v5059 = vsel %vm4466, %v5035, 0
        %v5062 = vsel %vm4466, %v5036, 0
        %5064 = vmatprep.subr.mxu0 0.0
        %5065 = vmatpush1.msra.mxu0 %v5047
        %5066 = vmatprep.subr.mxu0 0.0
        %5067 = vmatpush1.msra.mxu0 %v5049
        %5068 = vmatprep.subr.mxu0 0.0
        %5069 = vmatpush1.msra.mxu0 %v5051
        %5070 = vmatprep.subr.mxu0 0.0
        %5071 = vmatpush1.msra.mxu0 0.0
        %5072 = vmatprep.subr.mxu0 0.0
        %5073 = vmatpush1.msra.mxu0 0.0
        %5074 = vmatprep.subr.mxu0 0.0
        %5075 = vmatpush1.msra.mxu0 0.0
        %5076 = vmatprep.subr.mxu0 0.0
        %5077 = vmatpush1.msra.mxu0 0.0
        %5078 = vmatprep.subr.mxu0 0.0
        %5079 = vmatpush1.msra.mxu0 0.0
        %5080 = vmatprep.subr.mxu0 0.0
        %5081 = vmatpush1.msra.mxu0 0.0
        %5082 = vmatprep.subr.mxu0 0.0
        %5083 = vmatpush1.msra.mxu0 0.0
        %5084 = vmatprep.subr.mxu0 0.0
        %5085 = vmatpush1.msra.mxu0 0.0
        %5086 = vmatprep.subr.mxu0 0.0
        %5087 = vmatpush1.msra.mxu0 0.0
        %5088 = vmatprep.subr.mxu0 0.0
        %5089 = vmatpush1.msra.mxu0 0.0
        %5090 = vmatprep.subr.mxu0 0.0
        %5091 = vmatpush1.msra.mxu0 0.0
        %5092 = vmatprep.subr.mxu0 0.0
        %5093 = vmatpush1.msra.mxu0 0.0
        %5094 = vmatprep.subr.mxu0 0.0
        %5095 = vmatpush1.msra.mxu0 0.0
        %5096 = vmatprep.subr.mxu0 0.0
        %5097 = vmatpush1.msra.mxu0 0.0
        %5098 = vmatprep.subr.mxu0 0.0
        %5099 = vmatpush1.msra.mxu0 0.0
        %5100 = vmatprep.subr.mxu0 0.0
        %5101 = vmatpush1.msra.mxu0 0.0
        %5102 = vmatprep.subr.mxu0 0.0
        %5103 = vmatpush1.msra.mxu0 0.0
        %5104 = vmatprep.subr.mxu0 0.0
        %5105 = vmatpush1.msra.mxu0 0.0
        %5106 = vmatprep.subr.mxu0 0.0
        %5107 = vmatpush1.msra.mxu0 0.0
        %5108 = vmatprep.subr.mxu0 0.0
        %5109 = vmatpush1.msra.mxu0 0.0
        %5110 = vmatprep.subr.mxu0 0.0
        %5111 = vmatpush1.msra.mxu0 0.0
        %5112 = vmatprep.subr.mxu0 0.0
        %5113 = vmatpush1.msra.mxu0 0.0
        %5114 = vmatprep.subr.mxu0 0.0
        %5115 = vmatpush1.msra.mxu0 0.0
        %5116 = vmatprep.subr.mxu0 0.0
        %5117 = vmatpush1.msra.mxu0 0.0
        %5118 = vmatprep.subr.mxu0 0.0
        %5119 = vmatpush1.msra.mxu0 0.0
        %5120 = vmatprep.subr.mxu0 0.0
        %5121 = vmatpush1.msra.mxu0 0.0
        %5122 = vmatprep.subr.mxu0 0.0
        %5123 = vmatpush1.msra.mxu0 0.0
        %5124 = vmatprep.subr.mxu0 0.0
        %5125 = vmatpush1.msra.mxu0 0.0
        %5126 = vmatprep.subr.mxu0 0.0
        %5127 = vmatpush1.msra.mxu0 0.0
        %5128 = vmatprep.mubr.f32.mxu0 0.0
        %5129 = vmatmul.mubr.f32.gmra.mrb[0].mxu0 %v5056
        %v5130 = vpop.f32.mrb[0].mxu0
        %v5131 = vadd.f32 0.0, %v5130
        %v5132 = vpop.f32.mrb[0].mxu0
        %5133 = vmatprep.mubr.f32.mxu0 0.0
        %5134 = vmatmul.mubr.f32.gmra.mrb[0].mxu0 %v5059
        %v5135 = vpop.f32.mrb[0].mxu0
        %v5136 = vadd.f32 0.0, %v5135
        %v5137 = vpop.f32.mrb[0].mxu0
        %5138 = vmatprep.mubr.f32.mxu0 0.0
        %5139 = vmatmul.mubr.f32.gmra.mrb[0].mxu0 %v5062
        %v5140 = vpop.f32.mrb[0].mxu0
        %v5141 = vadd.f32 0.0, %v5140
        %v5142 = vpop.f32.mrb[0].mxu0
        %5143 = vdwg.mxu0
        %v5144 = vadd.f32 %v4875, %v5131
        %v5145 = vadd.f32 %v4880, %v5136
        %v5146 = vadd.f32 %v4885, %v5141
        %v5147 = vmul.f32 %v4343, %v2445
        %v5148 = vmul.f32 %v4348, %v2445
        %v5149 = vmul.f32 %v4353, %v2445
        %v5151 = vsel %vm1169, %v5147, 0
        %v5154 = vsel %vm1169, %v5148, 0
        %v5157 = vsel %vm1169, %v5149, 0
        %5159 = vmatprep.subr.mxu0 0.0
        %5160 = vmatpush1.xpose.msra.mxu0 %v4377
        %5161 = vmatprep.subr.mxu0 0.0
        %5162 = vmatpush1.xpose.msra.mxu0 %v4379
        %5163 = vmatprep.subr.mxu0 0.0
        %5164 = vmatpush1.xpose.msra.mxu0 %v4381
        %5165 = vmatprep.subr.mxu0 0.0
        %5166 = vmatpush1.xpose.msra.mxu0 0.0
        %5167 = vmatprep.subr.mxu0 0.0
        %5168 = vmatpush1.xpose.msra.mxu0 0.0
        %5169 = vmatprep.subr.mxu0 0.0
        %5170 = vmatpush1.xpose.msra.mxu0 0.0
        %5171 = vmatprep.subr.mxu0 0.0
        %5172 = vmatpush1.xpose.msra.mxu0 0.0
        %5173 = vmatprep.subr.mxu0 0.0
        %5174 = vmatpush1.xpose.msra.mxu0 0.0
        %5175 = vmatprep.subr.mxu0 0.0
        %5176 = vmatpush1.xpose.msra.mxu0 0.0
        %5177 = vmatprep.subr.mxu0 0.0
        %5178 = vmatpush1.xpose.msra.mxu0 0.0
        %5179 = vmatprep.subr.mxu0 0.0
        %5180 = vmatpush1.xpose.msra.mxu0 0.0
        %5181 = vmatprep.subr.mxu0 0.0
        %5182 = vmatpush1.xpose.msra.mxu0 0.0
        %5183 = vmatprep.subr.mxu0 0.0
        %5184 = vmatpush1.xpose.msra.mxu0 0.0
        %5185 = vmatprep.subr.mxu0 0.0
        %5186 = vmatpush1.xpose.msra.mxu0 0.0
        %5187 = vmatprep.subr.mxu0 0.0
        %5188 = vmatpush1.xpose.msra.mxu0 0.0
        %5189 = vmatprep.subr.mxu0 0.0
        %5190 = vmatpush1.xpose.msra.mxu0 0.0
        %5191 = vmatprep.subr.mxu0 0.0
        %5192 = vmatpush1.xpose.msra.mxu0 0.0
        %5193 = vmatprep.subr.mxu0 0.0
        %5194 = vmatpush1.xpose.msra.mxu0 0.0
        %5195 = vmatprep.subr.mxu0 0.0
        %5196 = vmatpush1.xpose.msra.mxu0 0.0
        %5197 = vmatprep.subr.mxu0 0.0
        %5198 = vmatpush1.xpose.msra.mxu0 0.0
        %5199 = vmatprep.subr.mxu0 0.0
        %5200 = vmatpush1.xpose.msra.mxu0 0.0
        %5201 = vmatprep.subr.mxu0 0.0
        %5202 = vmatpush1.xpose.msra.mxu0 0.0
        %5203 = vmatprep.subr.mxu0 0.0
        %5204 = vmatpush1.xpose.msra.mxu0 0.0
        %5205 = vmatprep.subr.mxu0 0.0
        %5206 = vmatpush1.xpose.msra.mxu0 0.0
        %5207 = vmatprep.subr.mxu0 0.0
        %5208 = vmatpush1.xpose.msra.mxu0 0.0
        %5209 = vmatprep.subr.mxu0 0.0
        %5210 = vmatpush1.xpose.msra.mxu0 0.0
        %5211 = vmatprep.subr.mxu0 0.0
        %5212 = vmatpush1.xpose.msra.mxu0 0.0
        %5213 = vmatprep.subr.mxu0 0.0
        %5214 = vmatpush1.xpose.msra.mxu0 0.0
        %5215 = vmatprep.subr.mxu0 0.0
        %5216 = vmatpush1.xpose.msra.mxu0 0.0
        %5217 = vmatprep.subr.mxu0 0.0
        %5218 = vmatpush1.xpose.msra.mxu0 0.0
        %5219 = vmatprep.subr.mxu0 0.0
        %5220 = vmatpush1.xpose.msra.mxu0 0.0
        %5221 = vmatprep.subr.mxu0 0.0
        %5222 = vmatpush1.xpose.msra.mxu0 0.0
        %5223 = vmatprep.mubr.f32.mxu0 0.0
        %5224 = vmatmul.mubr.f32.gmra.mrb[0].mxu0 %v5151
        %v5225 = vpop.f32.mrb[0].mxu0
        %v5226 = vadd.f32 0.0, %v5225
        %v5227 = vpop.f32.mrb[0].mxu0
        %5228 = vmatprep.mubr.f32.mxu0 0.0
        %5229 = vmatmul.mubr.f32.gmra.mrb[0].mxu0 %v5154
        %v5230 = vpop.f32.mrb[0].mxu0
        %v5231 = vadd.f32 0.0, %v5230
        %v5232 = vpop.f32.mrb[0].mxu0
        %5233 = vmatprep.mubr.f32.mxu0 0.0
        %5234 = vmatmul.mubr.f32.gmra.mrb[0].mxu0 %v5157
        %v5235 = vpop.f32.mrb[0].mxu0
        %v5236 = vadd.f32 0.0, %v5235
        %v5237 = vpop.f32.mrb[0].mxu0
        %5238 = vdwg.mxu0
        %v5239 = vmul.f32 %v5226, 0.35355338
        %v5240 = vmul.f32 %v5231, 0.35355338
        %v5241 = vmul.f32 %v5236, 0.35355338
        %v5242 = vsel %vm4466, %v5239, -inf
        %5243 = vmax.xlane.f32.xlu0 %v5242
        %v5244 = vpop.xlane.xlu0 %5243
        %v5245 = vsel %vm4466, %v5240, -inf
        %5246 = vmax.xlane.f32.xlu0 %v5245
        %v5247 = vpop.xlane.xlu0 %5246
        %v5248 = vsel %vm4466, %v5241, -inf
        %5249 = vmax.xlane.f32.xlu0 %v5248
        %v5250 = vpop.xlane.xlu0 %5249
        %v5251 = vsub.f32 %v5239, %v5244
        %v5252 = vsub.f32 %v5240, %v5247
        %v5253 = vsub.f32 %v5241, %v5250
        %v5254 = vmul.f32 %v5251, 1.442695
        %v5255 = vpow.pop %v5254
        %v5256 = vmul.f32 %v5252, 1.442695
        %v5257 = vpow.pop %v5256
        %v5258 = vmul.f32 %v5253, 1.442695
        %v5259 = vpow.pop %v5258
        %v5260 = vmul.f32 %v5255, %v4488
        %v5261 = vmul.f32 %v5257, %v4488
        %v5262 = vmul.f32 %v5259, %v4488
        %v5263 = vsel %vm4466, %v5260, 0.0
        %5264 = vadd.xlane.f32.xlu0 %v5263
        %v5265 = vpop.xlane.xlu0 %5264
        %v5266 = vsel %vm4466, %v5261, 0.0
        %5267 = vadd.xlane.f32.xlu0 %v5266
        %v5268 = vpop.xlane.xlu0 %5267
        %v5269 = vsel %vm4466, %v5262, 0.0
        %5270 = vadd.xlane.f32.xlu0 %v5269
        %v5271 = vpop.xlane.xlu0 %5270
        %vm5272 = vcmp.gt.f32.partialorder %v5265, 0.0
        %vm5273 = vcmp.gt.f32.partialorder %v5268, 0.0
        %vm5274 = vcmp.gt.f32.partialorder %v5271, 0.0
        %v5275 = vsel %vm5272, %v5265, 1.0
        %v5276 = vsel %vm5273, %v5268, 1.0
        %v5277 = vsel %vm5274, %v5271, 1.0
        %v5278 = vrcp.pop %v5275
        %v5279 = vrcp.pop %v5276
        %v5280 = vrcp.pop %v5277
        %v5281 = vmul.f32 %v5260, %v5278
        %v5282 = vmul.f32 %v5261, %v5279
        %v5283 = vmul.f32 %v5262, %v5280
        %v5284 = vsel %vm5272, 1, 0
        %v5285 = vsel %vm5273, 1, 0
        %v5286 = vsel %vm5274, 1, 0
        %vm5287 = vcmp.eq.s32.totalorder %v5284, 1
        %vm5288 = vcmp.eq.s32.totalorder %v5285, 1
        %vm5289 = vcmp.eq.s32.totalorder %v5286, 1
        %v5290 = vsel %vm5287, %v5281, 0.041666668
        %v5291 = vsel %vm5288, %v5282, 0.041666668
        %v5292 = vsel %vm5289, %v5283, 0.041666668
        %v5293 = vadd.f32 %v5290, 0.0
        %v5294 = vadd.f32 %v5291, 0.0
        %v5295 = vadd.f32 %v5292, 0.0
        %5296 = vrot.lane.b32.xlu0 %v2445, 64
        %v5297 = vpop.permute.xlu0 %5296
        %v5299 = vmul.f32 %v4343, %v5297
        %v5300 = vmul.f32 %v4348, %v5297
        %v5301 = vmul.f32 %v4353, %v5297
        %5305 = vrot.lane.b32.xlu0 %v5299, 64
        %v5306 = vpop.permute.xlu0 %5305
        %5307 = vrot.lane.b32.xlu0 %v5300, 64
        %v5308 = vpop.permute.xlu0 %5307
        %5309 = vrot.lane.b32.xlu0 %v5301, 64
        %v5310 = vpop.permute.xlu0 %5309
        %v5315 = vsel %vm4466, %v5293, 0
        %v5318 = vsel %vm4466, %v5294, 0
        %v5321 = vsel %vm4466, %v5295, 0
        %5323 = vmatprep.subr.mxu0 0.0
        %5324 = vmatpush1.msra.mxu0 %v5306
        %5325 = vmatprep.subr.mxu0 0.0
        %5326 = vmatpush1.msra.mxu0 %v5308
        %5327 = vmatprep.subr.mxu0 0.0
        %5328 = vmatpush1.msra.mxu0 %v5310
        %5329 = vmatprep.subr.mxu0 0.0
        %5330 = vmatpush1.msra.mxu0 0.0
        %5331 = vmatprep.subr.mxu0 0.0
        %5332 = vmatpush1.msra.mxu0 0.0
        %5333 = vmatprep.subr.mxu0 0.0
        %5334 = vmatpush1.msra.mxu0 0.0
        %5335 = vmatprep.subr.mxu0 0.0
        %5336 = vmatpush1.msra.mxu0 0.0
        %5337 = vmatprep.subr.mxu0 0.0
        %5338 = vmatpush1.msra.mxu0 0.0
        %5339 = vmatprep.subr.mxu0 0.0
        %5340 = vmatpush1.msra.mxu0 0.0
        %5341 = vmatprep.subr.mxu0 0.0
        %5342 = vmatpush1.msra.mxu0 0.0
        %5343 = vmatprep.subr.mxu0 0.0
        %5344 = vmatpush1.msra.mxu0 0.0
        %5345 = vmatprep.subr.mxu0 0.0
        %5346 = vmatpush1.msra.mxu0 0.0
        %5347 = vmatprep.subr.mxu0 0.0
        %5348 = vmatpush1.msra.mxu0 0.0
        %5349 = vmatprep.subr.mxu0 0.0
        %5350 = vmatpush1.msra.mxu0 0.0
        %5351 = vmatprep.subr.mxu0 0.0
        %5352 = vmatpush1.msra.mxu0 0.0
        %5353 = vmatprep.subr.mxu0 0.0
        %5354 = vmatpush1.msra.mxu0 0.0
        %5355 = vmatprep.subr.mxu0 0.0
        %5356 = vmatpush1.msra.mxu0 0.0
        %5357 = vmatprep.subr.mxu0 0.0
        %5358 = vmatpush1.msra.mxu0 0.0
        %5359 = vmatprep.subr.mxu0 0.0
        %5360 = vmatpush1.msra.mxu0 0.0
        %5361 = vmatprep.subr.mxu0 0.0
        %5362 = vmatpush1.msra.mxu0 0.0
        %5363 = vmatprep.subr.mxu0 0.0
        %5364 = vmatpush1.msra.mxu0 0.0
        %5365 = vmatprep.subr.mxu0 0.0
        %5366 = vmatpush1.msra.mxu0 0.0
        %5367 = vmatprep.subr.mxu0 0.0
        %5368 = vmatpush1.msra.mxu0 0.0
        %5369 = vmatprep.subr.mxu0 0.0
        %5370 = vmatpush1.msra.mxu0 0.0
        %5371 = vmatprep.subr.mxu0 0.0
        %5372 = vmatpush1.msra.mxu0 0.0
        %5373 = vmatprep.subr.mxu0 0.0
        %5374 = vmatpush1.msra.mxu0 0.0
        %5375 = vmatprep.subr.mxu0 0.0
        %5376 = vmatpush1.msra.mxu0 0.0
        %5377 = vmatprep.subr.mxu0 0.0
        %5378 = vmatpush1.msra.mxu0 0.0
        %5379 = vmatprep.subr.mxu0 0.0
        %5380 = vmatpush1.msra.mxu0 0.0
        %5381 = vmatprep.subr.mxu0 0.0
        %5382 = vmatpush1.msra.mxu0 0.0
        %5383 = vmatprep.subr.mxu0 0.0
        %5384 = vmatpush1.msra.mxu0 0.0
        %5385 = vmatprep.subr.mxu0 0.0
        %5386 = vmatpush1.msra.mxu0 0.0
        %5387 = vmatprep.mubr.f32.mxu0 0.0
        %5388 = vmatmul.mubr.f32.gmra.mrb[0].mxu0 %v5315
        %v5389 = vpop.f32.mrb[0].mxu0
        %v5390 = vadd.f32 0.0, %v5389
        %v5391 = vpop.f32.mrb[0].mxu0
        %5392 = vmatprep.mubr.f32.mxu0 0.0
        %5393 = vmatmul.mubr.f32.gmra.mrb[0].mxu0 %v5318
        %v5394 = vpop.f32.mrb[0].mxu0
        %v5395 = vadd.f32 0.0, %v5394
        %v5396 = vpop.f32.mrb[0].mxu0
        %5397 = vmatprep.mubr.f32.mxu0 0.0
        %5398 = vmatmul.mubr.f32.gmra.mrb[0].mxu0 %v5321
        %v5399 = vpop.f32.mrb[0].mxu0
        %v5400 = vadd.f32 0.0, %v5399
        %v5401 = vpop.f32.mrb[0].mxu0
        %5402 = vdwg.mxu0
        %v5403 = vadd.f32 %v5144, %v5390
        %v5404 = vadd.f32 %v5145, %v5395
        %v5405 = vadd.f32 %v5146, %v5400
        %v5406 = vld [vmem:[%s53] sm:$0xff]
        %v5407 = vld [vmem:[%s53 + $0x8] sm:$0xff]
        %v5408 = vld [vmem:[%s53 + $0x10] sm:$0xff]
        %v5409 = vld [vmem:[%s53 + $0x18] sm:$0xff]
        %v5411 = vsel %vm1169, %v5403, 0
        %v5414 = vsel %vm1169, %v5404, 0
        %v5417 = vsel %vm1169, %v5405, 0
        %5419 = vmatprep.subr.mxu0 0.0
        %5420 = vmatpush1.msra.mxu0 %v5406
        %5421 = vmatprep.subr.mxu0 0.0
        %5422 = vmatpush1.msra.mxu0 %v5407
        %5423 = vmatprep.subr.mxu0 0.0
        %5424 = vmatpush1.msra.mxu0 %v5408
        %5425 = vmatprep.subr.mxu0 0.0
        %5426 = vmatpush1.msra.mxu0 %v5409
        %5427 = vmatprep.subr.mxu0 0.0
        %5428 = vmatpush1.msra.mxu0 0.0
        %5429 = vmatprep.subr.mxu0 0.0
        %5430 = vmatpush1.msra.mxu0 0.0
        %5431 = vmatprep.subr.mxu0 0.0
        %5432 = vmatpush1.msra.mxu0 0.0
        %5433 = vmatprep.subr.mxu0 0.0
        %5434 = vmatpush1.msra.mxu0 0.0
        %5435 = vmatprep.subr.mxu0 0.0
        %5436 = vmatpush1.msra.mxu0 0.0
        %5437 = vmatprep.subr.mxu0 0.0
        %5438 = vmatpush1.msra.mxu0 0.0
        %5439 = vmatprep.subr.mxu0 0.0
        %5440 = vmatpush1.msra.mxu0 0.0
        %5441 = vmatprep.subr.mxu0 0.0
        %5442 = vmatpush1.msra.mxu0 0.0
        %5443 = vmatprep.subr.mxu0 0.0
        %5444 = vmatpush1.msra.mxu0 0.0
        %5445 = vmatprep.subr.mxu0 0.0
        %5446 = vmatpush1.msra.mxu0 0.0
        %5447 = vmatprep.subr.mxu0 0.0
        %5448 = vmatpush1.msra.mxu0 0.0
        %5449 = vmatprep.subr.mxu0 0.0
        %5450 = vmatpush1.msra.mxu0 0.0
        %5451 = vmatprep.subr.mxu0 0.0
        %5452 = vmatpush1.msra.mxu0 0.0
        %5453 = vmatprep.subr.mxu0 0.0
        %5454 = vmatpush1.msra.mxu0 0.0
        %5455 = vmatprep.subr.mxu0 0.0
        %5456 = vmatpush1.msra.mxu0 0.0
        %5457 = vmatprep.subr.mxu0 0.0
        %5458 = vmatpush1.msra.mxu0 0.0
        %5459 = vmatprep.subr.mxu0 0.0
        %5460 = vmatpush1.msra.mxu0 0.0
        %5461 = vmatprep.subr.mxu0 0.0
        %5462 = vmatpush1.msra.mxu0 0.0
        %5463 = vmatprep.subr.mxu0 0.0
        %5464 = vmatpush1.msra.mxu0 0.0
        %5465 = vmatprep.subr.mxu0 0.0
        %5466 = vmatpush1.msra.mxu0 0.0
        %5467 = vmatprep.subr.mxu0 0.0
        %5468 = vmatpush1.msra.mxu0 0.0
        %5469 = vmatprep.subr.mxu0 0.0
        %5470 = vmatpush1.msra.mxu0 0.0
        %5471 = vmatprep.subr.mxu0 0.0
        %5472 = vmatpush1.msra.mxu0 0.0
        %5473 = vmatprep.subr.mxu0 0.0
        %5474 = vmatpush1.msra.mxu0 0.0
        %5475 = vmatprep.subr.mxu0 0.0
        %5476 = vmatpush1.msra.mxu0 0.0
        %5477 = vmatprep.subr.mxu0 0.0
        %5478 = vmatpush1.msra.mxu0 0.0
        %5479 = vmatprep.subr.mxu0 0.0
        %5480 = vmatpush1.msra.mxu0 0.0
        %5481 = vmatprep.subr.mxu0 0.0
        %5482 = vmatpush1.msra.mxu0 0.0
        %5483 = vmatprep.mubr.f32.mxu0 0.0
        %5484 = vmatmul.mubr.f32.gmra.mrb[0].mxu0 %v5411
        %v5485 = vpop.f32.mrb[0].mxu0
        %v5486 = vadd.f32 0.0, %v5485
        %v5487 = vpop.f32.mrb[0].mxu0
        %5488 = vmatprep.mubr.f32.mxu0 0.0
        %5489 = vmatmul.mubr.f32.gmra.mrb[0].mxu0 %v5414
        %v5490 = vpop.f32.mrb[0].mxu0
        %v5491 = vadd.f32 0.0, %v5490
        %v5492 = vpop.f32.mrb[0].mxu0
        %5493 = vmatprep.mubr.f32.mxu0 0.0
        %5494 = vmatmul.mubr.f32.gmra.mrb[0].mxu0 %v5417
        %v5495 = vpop.f32.mrb[0].mxu0
        %v5496 = vadd.f32 0.0, %v5495
        %v5497 = vpop.f32.mrb[0].mxu0
        %5498 = vdwg.mxu0
        %v5499 = vadd.f32 %v2886, %v5486
        %v5500 = vadd.f32 %v2887, %v5491
        %v5501 = vadd.f32 %v4254, %v5496
        %v5502 = vld [vmem:[%s55] sm:$0x1]
        %v5504 = vlaneseq
        %v5505 = vshrl.u32 %v5504, 7
        %v5506 = vsub.s32 0, %v5505
        %v5507 = vrot.slane %v5502, %v5506
        %v5509 = vadd.f32 %v5499, %v5507
        %v5510 = vadd.f32 %v5500, %v5507
        %v5511 = vadd.f32 %v5501, %v5507
        %v5512 = vsel %vm1169, %v5509, 0.0
        %5513 = vadd.xlane.f32.xlu0 %v5512
        %v5514 = vpop.xlane.xlu0 %5513
        %v5515 = vsel %vm1169, %v5510, 0.0
        %5516 = vadd.xlane.f32.xlu0 %v5515
        %v5517 = vpop.xlane.xlu0 %5516
        %v5518 = vsel %vm1169, %v5511, 0.0
        %5519 = vadd.xlane.f32.xlu0 %v5518
        %v5520 = vpop.xlane.xlu0 %5519
        %v5521 = vmul.f32 %v5514, %v2841
        %v5522 = vmul.f32 %v5517, %v2841
        %v5523 = vmul.f32 %v5520, %v2841
        %v5524 = vsub.f32 %v5509, %v5521
        %v5525 = vsub.f32 %v5510, %v5522
        %v5526 = vsub.f32 %v5511, %v5523
        %v5527 = vmul.f32 %v5524, %v5524
        %v5528 = vmul.f32 %v5525, %v5525
        %v5529 = vmul.f32 %v5526, %v5526
        %v5530 = vsel %vm1169, %v5527, 0.0
        %5531 = vadd.xlane.f32.xlu0 %v5530
        %v5532 = vpop.xlane.xlu0 %5531
        %v5533 = vsel %vm1169, %v5528, 0.0
        %5534 = vadd.xlane.f32.xlu0 %v5533
        %v5535 = vpop.xlane.xlu0 %5534
        %v5536 = vsel %vm1169, %v5529, 0.0
        %5537 = vadd.xlane.f32.xlu0 %v5536
        %v5538 = vpop.xlane.xlu0 %5537
        %v5539 = vmul.f32 %v5532, 0.032258064
        %v5540 = vmul.f32 %v5535, 0.032258064
        %v5541 = vmul.f32 %v5538, 0.032258064
        %v5542 = vrsqrt.pop %v5539
        %v5543 = vmul.f32 %v5539, %v5542
        %vm5544 = vcmp.eq.f32.partialorder %v5539, inf
        %v5545 = vsel %vm5544, %v5539, %v5543
        %vm5546 = vcmp.eq.f32.partialorder %v5539, 0.0
        %v5547 = vand.u32 %v5539, 2147483648
        %v5548 = vsel %vm5546, %v5547, %v5545
        %v5549 = vrsqrt.pop %v5540
        %v5550 = vmul.f32 %v5540, %v5549
        %vm5551 = vcmp.eq.f32.partialorder %v5540, inf
        %v5552 = vsel %vm5551, %v5540, %v5550
        %vm5553 = vcmp.eq.f32.partialorder %v5540, 0.0
        %v5554 = vand.u32 %v5540, 2147483648
        %v5555 = vsel %vm5553, %v5554, %v5552
        %v5556 = vrsqrt.pop %v5541
        %v5557 = vmul.f32 %v5541, %v5556
        %vm5558 = vcmp.eq.f32.partialorder %v5541, inf
        %v5559 = vsel %vm5558, %v5541, %v5557
        %vm5560 = vcmp.eq.f32.partialorder %v5541, 0.0
        %v5561 = vand.u32 %v5541, 2147483648
        %v5562 = vsel %vm5560, %v5561, %v5559
        %v5563 = vadd.f32 %v5548, 1e-06
        %v5564 = vadd.f32 %v5555, 1e-06
        %v5565 = vadd.f32 %v5562, 1e-06
        %v5566 = vrcp.pop %v5563
        %v5567 = vmul.f32 %v5524, %v5566
        %v5568 = vrcp.pop %v5564
        %v5569 = vmul.f32 %v5525, %v5568
        %v5570 = vrcp.pop %v5565
        %v5571 = vmul.f32 %v5526, %v5570
        %v5572 = vlaneseq
        %v5573 = vshrl.u32 %v5572, 7
        %v5574 = vsub.s32 2, %v5573
        %v5575 = vrot.slane %v1132, %v5574
        %v5576 = vmul.f32 %v5575, %v5567
        %v5577 = vmul.f32 %v5575, %v5569
        %v5578 = vmul.f32 %v5575, %v5571
        %v5579 = vlaneseq
        %v5580 = vshrl.u32 %v5579, 7
        %v5581 = vsub.s32 2, %v5580
        %v5582 = vrot.slane %v1133, %v5581
        %v5583 = vadd.f32 %v5576, %v5582
        %v5584 = vadd.f32 %v5577, %v5582
        %v5585 = vadd.f32 %v5578, %v5582
        %v5586 = vld [vmem:[%s57] sm:$0xff]
        %v5587 = vld [vmem:[%s57 + $0x8] sm:$0xff]
        %v5588 = vld [vmem:[%s57 + $0x10] sm:$0xff]
        %v5589 = vld [vmem:[%s57 + $0x18] sm:$0xff]
        %v5590 = vld [vmem:[%s59] sm:$0x1]
        %v5592 = vlaneseq
        %v5593 = vshrl.u32 %v5592, 7
        %v5594 = vsub.s32 0, %v5593
        %v5595 = vrot.slane %v5590, %v5594
        %v5598 = vsel %vm1169, %v5583, 0
        %v5601 = vsel %vm1169, %v5584, 0
        %v5604 = vsel %vm1169, %v5585, 0
        %5606 = vmatprep.subr.mxu0 0.0
        %5607 = vmatpush1.msra.mxu0 %v5586
        %5608 = vmatprep.subr.mxu0 0.0
        %5609 = vmatpush1.msra.mxu0 %v5587
        %5610 = vmatprep.subr.mxu0 0.0
        %5611 = vmatpush1.msra.mxu0 %v5588
        %5612 = vmatprep.subr.mxu0 0.0
        %5613 = vmatpush1.msra.mxu0 %v5589
        %5614 = vmatprep.subr.mxu0 0.0
        %5615 = vmatpush1.msra.mxu0 0.0
        %5616 = vmatprep.subr.mxu0 0.0
        %5617 = vmatpush1.msra.mxu0 0.0
        %5618 = vmatprep.subr.mxu0 0.0
        %5619 = vmatpush1.msra.mxu0 0.0
        %5620 = vmatprep.subr.mxu0 0.0
        %5621 = vmatpush1.msra.mxu0 0.0
        %5622 = vmatprep.subr.mxu0 0.0
        %5623 = vmatpush1.msra.mxu0 0.0
        %5624 = vmatprep.subr.mxu0 0.0
        %5625 = vmatpush1.msra.mxu0 0.0
        %5626 = vmatprep.subr.mxu0 0.0
        %5627 = vmatpush1.msra.mxu0 0.0
        %5628 = vmatprep.subr.mxu0 0.0
        %5629 = vmatpush1.msra.mxu0 0.0
        %5630 = vmatprep.subr.mxu0 0.0
        %5631 = vmatpush1.msra.mxu0 0.0
        %5632 = vmatprep.subr.mxu0 0.0
        %5633 = vmatpush1.msra.mxu0 0.0
        %5634 = vmatprep.subr.mxu0 0.0
        %5635 = vmatpush1.msra.mxu0 0.0
        %5636 = vmatprep.subr.mxu0 0.0
        %5637 = vmatpush1.msra.mxu0 0.0
        %5638 = vmatprep.subr.mxu0 0.0
        %5639 = vmatpush1.msra.mxu0 0.0
        %5640 = vmatprep.subr.mxu0 0.0
        %5641 = vmatpush1.msra.mxu0 0.0
        %5642 = vmatprep.subr.mxu0 0.0
        %5643 = vmatpush1.msra.mxu0 0.0
        %5644 = vmatprep.subr.mxu0 0.0
        %5645 = vmatpush1.msra.mxu0 0.0
        %5646 = vmatprep.subr.mxu0 0.0
        %5647 = vmatpush1.msra.mxu0 0.0
        %5648 = vmatprep.subr.mxu0 0.0
        %5649 = vmatpush1.msra.mxu0 0.0
        %5650 = vmatprep.subr.mxu0 0.0
        %5651 = vmatpush1.msra.mxu0 0.0
        %5652 = vmatprep.subr.mxu0 0.0
        %5653 = vmatpush1.msra.mxu0 0.0
        %5654 = vmatprep.subr.mxu0 0.0
        %5655 = vmatpush1.msra.mxu0 0.0
        %5656 = vmatprep.subr.mxu0 0.0
        %5657 = vmatpush1.msra.mxu0 0.0
        %5658 = vmatprep.subr.mxu0 0.0
        %5659 = vmatpush1.msra.mxu0 0.0
        %5660 = vmatprep.subr.mxu0 0.0
        %5661 = vmatpush1.msra.mxu0 0.0
        %5662 = vmatprep.subr.mxu0 0.0
        %5663 = vmatpush1.msra.mxu0 0.0
        %5664 = vmatprep.subr.mxu0 0.0
        %5665 = vmatpush1.msra.mxu0 0.0
        %5666 = vmatprep.subr.mxu0 0.0
        %5667 = vmatpush1.msra.mxu0 0.0
        %5668 = vmatprep.subr.mxu0 0.0
        %5669 = vmatpush1.msra.mxu0 0.0
        %5670 = vmatprep.mubr.f32.mxu0 0.0
        %5671 = vmatmul.mubr.f32.gmra.mrb[0].mxu0 %v5598
        %v5672 = vpop.f32.mrb[0].mxu0
        %v5673 = vadd.f32 %v5595, %v5672
        %v5674 = vpop.f32.mrb[0].mxu0
        %5675 = vmatprep.mubr.f32.mxu0 0.0
        %5676 = vmatmul.mubr.f32.gmra.mrb[0].mxu0 %v5601
        %v5677 = vpop.f32.mrb[0].mxu0
        %v5678 = vadd.f32 %v5595, %v5677
        %v5679 = vpop.f32.mrb[0].mxu0
        %5680 = vmatprep.mubr.f32.mxu0 0.0
        %5681 = vmatmul.mubr.f32.gmra.mrb[0].mxu0 %v5604
        %v5682 = vpop.f32.mrb[0].mxu0
        %v5683 = vadd.f32 %v5595, %v5682
        %v5684 = vpop.f32.mrb[0].mxu0
        %5685 = vdwg.mxu0
        %v5686 = vmax.f32 %v5673, 0.0
        %v5687 = vmax.f32 %v5678, 0.0
        %v5688 = vmax.f32 %v5683, 0.0
        %v5689 = vld [vmem:[%s61] sm:$0xff]
        %v5690 = vld [vmem:[%s61 + $0x8] sm:$0xff]
        %v5691 = vld [vmem:[%s61 + $0x10] sm:$0xff]
        %v5692 = vld [vmem:[%s61 + $0x18] sm:$0xff]
        %v5693 = vld [vmem:[%s61 + $0x20] sm:$0xff]
        %v5694 = vld [vmem:[%s61 + $0x28] sm:$0xff]
        %v5695 = vld [vmem:[%s61 + $0x30] sm:$0xff]
        %v5696 = vld [vmem:[%s61 + $0x38] sm:$0xff]
        %vm5697 = vcmask 523264
        %v5699 = vsel %vm5697, %v5686, 0
        %v5702 = vsel %vm5697, %v5687, 0
        %v5705 = vsel %vm5697, %v5688, 0
        %5707 = vmatprep.subr.mxu0 0.0
        %5708 = vmatpush1.msra.mxu0 %v5689
        %5709 = vmatprep.subr.mxu0 0.0
        %5710 = vmatpush1.msra.mxu0 %v5690
        %5711 = vmatprep.subr.mxu0 0.0
        %5712 = vmatpush1.msra.mxu0 %v5691
        %5713 = vmatprep.subr.mxu0 0.0
        %5714 = vmatpush1.msra.mxu0 %v5692
        %5715 = vmatprep.subr.mxu0 0.0
        %5716 = vmatpush1.msra.mxu0 %v5693
        %5717 = vmatprep.subr.mxu0 0.0
        %5718 = vmatpush1.msra.mxu0 %v5694
        %5719 = vmatprep.subr.mxu0 0.0
        %5720 = vmatpush1.msra.mxu0 %v5695
        %5721 = vmatprep.subr.mxu0 0.0
        %5722 = vmatpush1.msra.mxu0 %v5696
        %5723 = vmatprep.subr.mxu0 0.0
        %5724 = vmatpush1.msra.mxu0 0.0
        %5725 = vmatprep.subr.mxu0 0.0
        %5726 = vmatpush1.msra.mxu0 0.0
        %5727 = vmatprep.subr.mxu0 0.0
        %5728 = vmatpush1.msra.mxu0 0.0
        %5729 = vmatprep.subr.mxu0 0.0
        %5730 = vmatpush1.msra.mxu0 0.0
        %5731 = vmatprep.subr.mxu0 0.0
        %5732 = vmatpush1.msra.mxu0 0.0
        %5733 = vmatprep.subr.mxu0 0.0
        %5734 = vmatpush1.msra.mxu0 0.0
        %5735 = vmatprep.subr.mxu0 0.0
        %5736 = vmatpush1.msra.mxu0 0.0
        %5737 = vmatprep.subr.mxu0 0.0
        %5738 = vmatpush1.msra.mxu0 0.0
        %5739 = vmatprep.subr.mxu0 0.0
        %5740 = vmatpush1.msra.mxu0 0.0
        %5741 = vmatprep.subr.mxu0 0.0
        %5742 = vmatpush1.msra.mxu0 0.0
        %5743 = vmatprep.subr.mxu0 0.0
        %5744 = vmatpush1.msra.mxu0 0.0
        %5745 = vmatprep.subr.mxu0 0.0
        %5746 = vmatpush1.msra.mxu0 0.0
        %5747 = vmatprep.subr.mxu0 0.0
        %5748 = vmatpush1.msra.mxu0 0.0
        %5749 = vmatprep.subr.mxu0 0.0
        %5750 = vmatpush1.msra.mxu0 0.0
        %5751 = vmatprep.subr.mxu0 0.0
        %5752 = vmatpush1.msra.mxu0 0.0
        %5753 = vmatprep.subr.mxu0 0.0
        %5754 = vmatpush1.msra.mxu0 0.0
        %5755 = vmatprep.subr.mxu0 0.0
        %5756 = vmatpush1.msra.mxu0 0.0
        %5757 = vmatprep.subr.mxu0 0.0
        %5758 = vmatpush1.msra.mxu0 0.0
        %5759 = vmatprep.subr.mxu0 0.0
        %5760 = vmatpush1.msra.mxu0 0.0
        %5761 = vmatprep.subr.mxu0 0.0
        %5762 = vmatpush1.msra.mxu0 0.0
        %5763 = vmatprep.subr.mxu0 0.0
        %5764 = vmatpush1.msra.mxu0 0.0
        %5765 = vmatprep.subr.mxu0 0.0
        %5766 = vmatpush1.msra.mxu0 0.0
        %5767 = vmatprep.subr.mxu0 0.0
        %5768 = vmatpush1.msra.mxu0 0.0
        %5769 = vmatprep.subr.mxu0 0.0
        %5770 = vmatpush1.msra.mxu0 0.0
        %5771 = vmatprep.mubr.f32.mxu0 0.0
        %5772 = vmatmul.mubr.f32.gmra.mrb[0].mxu0 %v5699
        %v5773 = vpop.f32.mrb[0].mxu0
        %v5774 = vadd.f32 0.0, %v5773
        %v5775 = vpop.f32.mrb[0].mxu0
        %5776 = vmatprep.mubr.f32.mxu0 0.0
        %5777 = vmatmul.mubr.f32.gmra.mrb[0].mxu0 %v5702
        %v5778 = vpop.f32.mrb[0].mxu0
        %v5779 = vadd.f32 0.0, %v5778
        %v5780 = vpop.f32.mrb[0].mxu0
        %5781 = vmatprep.mubr.f32.mxu0 0.0
        %5782 = vmatmul.mubr.f32.gmra.mrb[0].mxu0 %v5705
        %v5783 = vpop.f32.mrb[0].mxu0
        %v5784 = vadd.f32 0.0, %v5783
        %v5785 = vpop.f32.mrb[0].mxu0
        %5786 = vdwg.mxu0
        %v5787 = vadd.f32 %v5583, %v5774
        %v5788 = vadd.f32 %v5584, %v5779
        %v5789 = vadd.f32 %v5585, %v5784
        %v5790 = vld [vmem:[%s63] sm:$0x1]
        %v5792 = vlaneseq
        %v5793 = vshrl.u32 %v5792, 7
        %v5794 = vsub.s32 0, %v5793
        %v5795 = vrot.slane %v5790, %v5794
        %v5797 = vadd.f32 %v5787, %v5795
        %v5798 = vadd.f32 %v5788, %v5795
        %v5799 = vadd.f32 %v5789, %v5795
        %v5800 = vsel %vm1169, %v5797, 0.0
        %5801 = vadd.xlane.f32.xlu0 %v5800
        %v5802 = vpop.xlane.xlu0 %5801
        %v5803 = vsel %vm1169, %v5798, 0.0
        %5804 = vadd.xlane.f32.xlu0 %v5803
        %v5805 = vpop.xlane.xlu0 %5804
        %v5806 = vsel %vm1169, %v5799, 0.0
        %5807 = vadd.xlane.f32.xlu0 %v5806
        %v5808 = vpop.xlane.xlu0 %5807
        %v5809 = vmul.f32 %v5802, %v2841
        %v5810 = vmul.f32 %v5805, %v2841
        %v5811 = vmul.f32 %v5808, %v2841
        %v5812 = vsub.f32 %v5797, %v5809
        %v5813 = vsub.f32 %v5798, %v5810
        %v5814 = vsub.f32 %v5799, %v5811
        %v5815 = vmul.f32 %v5812, %v5812
        %v5816 = vmul.f32 %v5813, %v5813
        %v5817 = vmul.f32 %v5814, %v5814
        %v5818 = vsel %vm1169, %v5815, 0.0
        %5819 = vadd.xlane.f32.xlu0 %v5818
        %v5820 = vpop.xlane.xlu0 %5819
        %v5821 = vsel %vm1169, %v5816, 0.0
        %5822 = vadd.xlane.f32.xlu0 %v5821
        %v5823 = vpop.xlane.xlu0 %5822
        %v5824 = vsel %vm1169, %v5817, 0.0
        %5825 = vadd.xlane.f32.xlu0 %v5824
        %v5826 = vpop.xlane.xlu0 %5825
        %v5827 = vmul.f32 %v5820, 0.032258064
        %v5828 = vmul.f32 %v5823, 0.032258064
        %v5829 = vmul.f32 %v5826, 0.032258064
        %v5830 = vrsqrt.pop %v5827
        %v5831 = vmul.f32 %v5827, %v5830
        %vm5832 = vcmp.eq.f32.partialorder %v5827, inf
        %v5833 = vsel %vm5832, %v5827, %v5831
        %vm5834 = vcmp.eq.f32.partialorder %v5827, 0.0
        %v5835 = vand.u32 %v5827, 2147483648
        %v5836 = vsel %vm5834, %v5835, %v5833
        %v5837 = vrsqrt.pop %v5828
        %v5838 = vmul.f32 %v5828, %v5837
        %vm5839 = vcmp.eq.f32.partialorder %v5828, inf
        %v5840 = vsel %vm5839, %v5828, %v5838
        %vm5841 = vcmp.eq.f32.partialorder %v5828, 0.0
        %v5842 = vand.u32 %v5828, 2147483648
        %v5843 = vsel %vm5841, %v5842, %v5840
        %v5844 = vrsqrt.pop %v5829
        %v5845 = vmul.f32 %v5829, %v5844
        %vm5846 = vcmp.eq.f32.partialorder %v5829, inf
        %v5847 = vsel %vm5846, %v5829, %v5845
        %vm5848 = vcmp.eq.f32.partialorder %v5829, 0.0
        %v5849 = vand.u32 %v5829, 2147483648
        %v5850 = vsel %vm5848, %v5849, %v5847
        %v5851 = vadd.f32 %v5836, 1e-06
        %v5852 = vadd.f32 %v5843, 1e-06
        %v5853 = vadd.f32 %v5850, 1e-06
        %v5854 = vrcp.pop %v5851
        %v5855 = vmul.f32 %v5812, %v5854
        %v5856 = vrcp.pop %v5852
        %v5857 = vmul.f32 %v5813, %v5856
        %v5858 = vrcp.pop %v5853
        %v5859 = vmul.f32 %v5814, %v5858
        %v5860 = vlaneseq
        %v5861 = vshrl.u32 %v5860, 7
        %v5862 = vsub.s32 3, %v5861
        %v5863 = vrot.slane %v1132, %v5862
        %v5864 = vmul.f32 %v5863, %v5855
        %v5865 = vmul.f32 %v5863, %v5857
        %v5866 = vmul.f32 %v5863, %v5859
        %v5867 = vlaneseq
        %v5868 = vshrl.u32 %v5867, 7
        %v5869 = vsub.s32 3, %v5868
        %v5870 = vrot.slane %v1133, %v5869
        %v5871 = vadd.f32 %v5864, %v5870
        %v5872 = vadd.f32 %v5865, %v5870
        %v5873 = vadd.f32 %v5866, %v5870
        %5874 = vst.msk [vmem:[%s1102] sm:$0xff] %vm1169, %v5871
        %5875 = vst.msk [vmem:[%s1102 + $0x8] sm:$0xff] %vm1169, %v5872
        %5876 = vst.msk [vmem:[%s1109] sm:$0xff] %vm1169, %v5873
        %s5877 = sand.u32 %s831, 1
        %s5878 = scalar_lea.sflag [#allocation3], %s5877
        %s5879 = sand.u32 %s831, 1
        %s5880 = smul.addr %s5879, 16
        %s5881 = scalar_lea.vmem [#allocation2], %s5880
        %s5882 = sand.u32 %s857, 1
        %s5883 = scalar_lea.sflag [#allocation5], %s5882
        %s5884 = sand.u32 %s857, 1
        %s5885 = smul.addr %s5884, 8
        %s5886 = scalar_lea.vmem [#allocation4], %s5885
        // Predicated region
        $region157: #{bi_block_apply.1} parent=155 // pred_check
          %p5887 = pneg %p841
        $region158: #{bi_block_apply.1} parent=155 // pred_check_branch
          %5889 = sbr.rel (%p5887) target = $region160
        $region159: #{bi_block_apply.1} parent=155 // pred_region
          %s5891 = ssub.s32 256, 256
          %5892 = vsyncadd %s5878, %s5891
          %s5893 = smul.addr %s89, 2
          %s5894 = smul.addr %s5893, 128
          %s5895 = scalar_lea.hbm %s69, %s5894
          %s5896 = sshll.u32 %s5881, 4
          %s5897 = int_to_ptr.vmem [resolvable:$true] %s5896
          %5902 = dma.vmem_to_hbm [thread:$0]  %s5897, 256, %s5895, %s5878, 128, 128, 8
        $region160: #{bi_block_apply.1} parent=155 // pred_fallthru
          _
        // Predicated region
        $region161: #{bi_block_apply.1} parent=155 // pred_check
          %p5903 = pneg %p867
        $region162: #{bi_block_apply.1} parent=155 // pred_check_branch
          %5905 = sbr.rel (%p5903) target = $region164
        $region163: #{bi_block_apply.1} parent=155 // pred_region
          %s5907 = ssub.s32 128, 128
          %5908 = vsyncadd %s5883, %s5907
          %s5909 = smul.addr %s89, 128
          %s5910 = scalar_lea.hbm %s71, %s5909
          %s5912 = sshll.u32 %s5886, 4
          %s5913 = int_to_ptr.vmem [resolvable:$true] %s5912
          %5915 = dma.vmem_to_hbm [thread:$0]  %s5913, 128, %s5910, %s5883
        $region164: #{bi_block_apply.1} parent=155 // pred_fallthru
          _
      $region156: #{bi_block_apply.1} parent=5 // pred_fallthru
        _
      %p5916 = scmp.le.s32.totalorder 2, %s84
      // Predicated region
      $region165: #{bi_block_apply.1} parent=5 // pred_check
        %p5917 = pneg %p5916
      $region166: #{bi_block_apply.1} parent=5 // pred_check_branch
        %5919 = sbr.rel (%p5917) target = $region168
      $region167: #{bi_block_apply.1} parent=5 // pred_region
        %s5920 = ssub.s32 %s84, 2
        // Predicated region
        $region169: #{bi_block_apply.1} parent=167 // pred_check
          %p5921 = pneg %p847
        $region170: #{bi_block_apply.1} parent=167 // pred_check_branch
          %5923 = sbr.rel (%p5921) target = $region172
        $region171: #{bi_block_apply.1} parent=167 // pred_region
          %s5924 = sand.u32 %s832, 1
          %s5925 = scalar_lea.sflag [#allocation3], %s5924
          %s5926 = sand.u32 %s832, 1
          %s5927 = smul.addr %s5926, 16
          %s5928 = scalar_lea.vmem [#allocation2], %s5927
          %5929 = dma.done %s5925, 256
        $region172: #{bi_block_apply.1} parent=167 // pred_fallthru
          _
        // Predicated region
        $region173: #{bi_block_apply.1} parent=167 // pred_check
          %p5930 = pneg %p873
        $region174: #{bi_block_apply.1} parent=167 // pred_check_branch
          %5932 = sbr.rel (%p5930) target = $region176
        $region175: #{bi_block_apply.1} parent=167 // pred_region
          %s5933 = sand.u32 %s858, 1
          %s5934 = scalar_lea.sflag [#allocation5], %s5933
          %s5935 = sand.u32 %s858, 1
          %s5936 = smul.addr %s5935, 8
          %s5937 = scalar_lea.vmem [#allocation4], %s5936
          %5938 = dma.done %s5934, 128
        $region176: #{bi_block_apply.1} parent=167 // pred_fallthru
          _
      $region168: #{bi_block_apply.1} parent=5 // pred_fallthru
        _
    $region6: #{bi_block_apply.1} parent=1 // loop_footer
      %s88 = sadd.s32 1, %s84
    $region7: #{bi_block_apply.1} parent=1 // loop_footer_branch
      %83 = sbr.rel target = $region3
    $region8: #{bi_block_apply.1} parent=1 // loop_exit
      _
    %5939 = vsyncpa [#allocation3], 1
    %s5940 = scalar_lea.sflag [#allocation3], 1
    %5941 = vsyncpa %s5940, 1
    %5942 = vsyncpa [#allocation5], 1
    %s5943 = scalar_lea.sflag [#allocation5], 1
    %5944 = vsyncpa %s5943, 1

</llo_original>
